<compile_context>
chip_gen: v7x
topology: tpu7x:2x2x1
jax: 0.10.0
libtpu: 0.0.40
codegen_flags: <defaults>
</compile_context>

<pallas_src>
from functools import partial

import numpy as np

import jax
import jax.numpy as jnp
from jax.experimental import pallas as pl
from jax.experimental.pallas import tpu as pltpu


# ---------------------------------------------------------------------------
# Host-side constants: weight GEMM matrices (bf16) + 0/1 routing selectors (bf16)
# ---------------------------------------------------------------------------
def _sel(n_in, n_out, pairs):
    m = np.zeros((n_in, n_out), dtype=np.float32)
    for r, c in pairs:
        m[r, c] = 1.0
    return m


def _embed_to(src_stride, src_len, h, w, dst_len, dst_pos):
    """Route valid (h, w) pixels (row-stride `src_stride`) into a new flat buffer."""
    pairs = [(i * src_stride + j, dst_pos(i, j)) for i in range(h) for j in range(w)]
    return _sel(src_len, dst_len, pairs)


def _pool_sel(stride, src_len, h_out, w_out, dst_len, dst_pos):
    """Single selector for the fused 2x2 max-pool.

    The kernel first takes an elementwise max of the four lane-shifted slices (offsets
    dh*stride+dw); this selector then picks the dh=dw=0 corner of each pool window and
    scatters it into the next layer's zero-padded / stride-2-dilated flat coordinates."""
    pairs = [((2 * ho) * stride + (2 * wo), dst_pos(ho, wo))
             for ho in range(h_out) for wo in range(w_out)]
    return _sel(src_len, dst_len, pairs)


def _conv_wmat(w_oihw):
    """(Cout, Cin, K, K) -> (Cout, K*K*Cin), columns ordered (kh, kw, cin)."""
    co, ci, kh, kw = w_oihw.shape
    return jnp.transpose(w_oihw, (0, 2, 3, 1)).reshape(co, kh * kw * ci)


def _tconv_wmat(w_t):
    """PyTorch ConvTranspose2d weight (Cin, Cout, K, K) -> equivalent-conv weight matrix."""
    wc = jnp.transpose(w_t[:, :, ::-1, ::-1], (1, 0, 2, 3))  # flip + swap -> (Cout, Cin, K, K)
    return _conv_wmat(wc)


def build_constants(p):
    bf16 = jnp.bfloat16
    c = {}
    # MXU weight matrices in bf16 (native MXU dtype); biases stay f32 (added after accumulation).
    c["w1"] = _conv_wmat(p["conv1_w"]).astype(bf16)    # (32, 9)  conv1 (Cin = 1)
    c["b1"] = p["conv1_b"].reshape(-1, 1)
    c["w2"] = _conv_wmat(p["conv2_w"]).astype(bf16);   c["b2"] = p["conv2_b"].reshape(-1, 1)
    c["w3"] = _conv_wmat(p["conv3_w"]).astype(bf16);   c["b3"] = p["conv3_b"].reshape(-1, 1)
    c["w4"] = _tconv_wmat(p["tconv1_w"]).astype(bf16); c["b4"] = p["tconv1_b"].reshape(-1, 1)
    c["w5"] = _tconv_wmat(p["tconv2_w"]).astype(bf16); c["b5"] = p["tconv2_b"].reshape(-1, 1)
    c["w6"] = _tconv_wmat(p["tconv3_w"]).astype(bf16); c["b6"] = p["tconv3_b"].reshape(-1, 1)
    c["w7"] = _conv_wmat(p["convout_w"]).astype(bf16); c["b7"] = p["convout_b"].reshape(-1, 1)

    # 0/1 routing selectors (exact in bf16), applied as  act(C, P_src) @ R(P_src, P_dst).
    # conv1 out (16x16, stride 18) -pool-> conv2 padded 10x10
    c["t1"] = jnp.asarray(_pool_sel(18, 267, 8, 8, 100,
                                    lambda i, j: (i + 1) * 10 + (j + 1)), dtype=bf16)
    # conv2 out (8x8, stride 10) -pool-> conv3 padded 6x6
    c["t2"] = jnp.asarray(_pool_sel(10, 67, 4, 4, 36,
                                    lambda i, j: (i + 1) * 6 + (j + 1)), dtype=bf16)
    # conv3 out (4x4, stride 6) -pool-> t_conv1 dilated+padded 7x7 (K=3, s=2)
    c["t3"] = jnp.asarray(_pool_sel(6, 15, 2, 2, 49,
                                    lambda i, j: (2 * i + 2) * 7 + (2 * j + 2)), dtype=bf16)
    # t_conv1 out (5x5, stride 7)  -> t_conv2 dilated+padded 11x11 (K=2, s=2)
    c["e4"] = jnp.asarray(_embed_to(7, 33, 5, 5, 121,
                                    lambda i, j: (2 * i + 1) * 11 + (2 * j + 1)), dtype=bf16)
    # t_conv2 out (10x10, stride 11) -> t_conv3 dilated+padded 21x21 (K=2, s=2)
    c["e5"] = jnp.asarray(_embed_to(11, 109, 10, 10, 441,
                                    lambda i, j: (2 * i + 1) * 21 + (2 * j + 1)), dtype=bf16)
    # t_conv3 out (20x20, stride 21) -> conv_out padded 22x22
    c["e6"] = jnp.asarray(_embed_to(21, 419, 20, 20, 484,
                                    lambda i, j: (i + 1) * 22 + (j + 1)), dtype=bf16)
    return c


# ---------------------------------------------------------------------------
# The fused Pallas kernel: `bn` samples lane-packed along the spatial axis
# ---------------------------------------------------------------------------
def _cdae_kernel(x_ref,
                 w1_ref, b1_ref, t1_ref,
                 w2_ref, b2_ref, t2_ref,
                 w3_ref, b3_ref, t3_ref,
                 w4_ref, b4_ref, e4_ref,
                 w5_ref, b5_ref, e5_ref,
                 w6_ref, b6_ref, e6_ref,
                 w7_ref, b7_ref,
                 o_ref, *, bn):
    f32, bf16 = jnp.float32, jnp.bfloat16

    def mm(a, b):
        return jnp.dot(a, b, preferred_element_type=f32)       # bf16 x bf16 -> f32 acc

    def offsets(k, stride):
        return [kh * stride + kw for kh in range(k) for kw in range(k)]

    def conv(a, p_in, w_ref, b_ref, k, stride, span, relu=True):
        """im2col conv: ONE MXU GEMM over all `bn` lane-packed samples.

        a: f32 (Cin, bn*p_in) in the layer's zero-padded / dilated flat coordinates.
        Taps are static lane slices concatenated (samples along lanes, taps along sublanes),
        cast to bf16 once, then  y = act(W @ taps + b)  with f32 accumulation."""
        taps = jnp.concatenate(
            [jnp.concatenate([a[:, n * p_in + d: n * p_in + d + span] for n in range(bn)],
                             axis=1)
             for d in offsets(k, stride)], axis=0).astype(bf16)
        y = mm(w_ref[...], taps) + b_ref[...]
        return jnp.maximum(y, 0.0) if relu else y

    def pool_embed(y, p_in, stride, span_z, t_ref):
        """2x2 maxpool as an elementwise max of 4 shifted slices (VPU) + ONE selector GEMM
        that scatters the pooled pixels into the next layer's padded/dilated coordinates."""
        outs = []
        for n in range(bn):
            base = n * p_in
            z = None
            for dh in (0, 1):
                for dw in (0, 1):
                    off = base + dh * stride + dw
                    s = y[:, off:off + span_z]
                    z = s if z is None else jnp.maximum(z, s)
            outs.append(mm(z.astype(bf16), t_ref[...]))
        return jnp.concatenate(outs, axis=1)

    def embed(y, p_in, e_ref):
        """Scatter a layer's valid pixels into the next layer's padded/dilated coordinates."""
        return jnp.concatenate(
            [mm(y[:, n * p_in:(n + 1) * p_in].astype(bf16), e_ref[...]) for n in range(bn)],
            axis=1)

    # conv1 (Cin = 1): taps come straight from the zero-padded 18x18 input rows -> one GEMM.
    xv = x_ref[...]                                                    # (bn, 1, 324) f32
    taps1 = jnp.concatenate(
        [jnp.concatenate([xv[n, :, d:d + 286] for n in range(bn)], axis=1)
         for d in offsets(3, 18)], axis=0).astype(bf16)                # (9, bn*286)
    y1 = jnp.maximum(mm(w1_ref[...], taps1) + b1_ref[...], 0.0)        # (32, bn*286)

    a1 = pool_embed(y1, 286, 18, 267, t1_ref)                          # (32, bn*100)
    y2 = conv(a1, 100, w2_ref, b2_ref, 3, 10, 78)                      # (16, bn*78)
    a2 = pool_embed(y2, 78, 10, 67, t2_ref)                            # (16, bn*36)
    y3 = conv(a2, 36, w3_ref, b3_ref, 3, 6, 22)                        # (8,  bn*22)
    a3 = pool_embed(y3, 22, 6, 15, t3_ref)                             # (8,  bn*49)
    y4 = conv(a3, 49, w4_ref, b4_ref, 3, 7, 33)                        # (8,  bn*33)  t_conv1
    a4 = embed(y4, 33, e4_ref)                                         # (8,  bn*121)
    y5 = conv(a4, 121, w5_ref, b5_ref, 2, 11, 109)                     # (16, bn*109) t_conv2
    a5 = embed(y5, 109, e5_ref)                                        # (16, bn*441)
    y6 = conv(a5, 441, w6_ref, b6_ref, 2, 21, 419)                     # (32, bn*419) t_conv3
    a6 = embed(y6, 419, e6_ref)                                        # (32, bn*484)
    z7 = conv(a6, 484, w7_ref, b7_ref, 3, 22, 438, relu=False)         # (1,  bn*438) conv_out

    # Gather the valid 20x20 pixels (lane-dense) BEFORE the sigmoid, then exact sigmoid
    # (keeps output strictly in [0, 1] and keeps the EUP off the wrap lanes).
    for n in range(bn):
        g = jnp.concatenate(
            [z7[:, n * 438 + i * 22: n * 438 + i * 22 + 20] for i in range(20)], axis=1)
        o_ref[n] = pl.reciprocal(1.0 + jnp.exp(-g), approx=False)      # (1, 400)


# ---------------------------------------------------------------------------
# Wrapper
# ---------------------------------------------------------------------------
_CONST_ORDER = ["w1", "b1", "t1",
                "w2", "b2", "t2",
                "w3", "b3", "t3",
                "w4", "b4", "e4",
                "w5", "b5", "e5",
                "w6", "b6", "e6",
                "w7", "b7"]


def _const_spec(arr):
    nd = arr.ndim
    return pl.BlockSpec(arr.shape, lambda i, _nd=nd: (0,) * _nd)


def cdae_forward(x_nchw, consts, samples_per_step=None):
    n = x_nchw.shape[0]
    bn = n if samples_per_step is None else samples_per_step   # samples lane-packed per step
    assert n % bn == 0

    # Zero-pad to conv1's 18x18 coordinates in the wrapper (tiny pad; replaces the old
    # 332 KB `epad` routing constant + M=1 GEMM).
    x_pad = jnp.pad(x_nchw.astype(jnp.float32),
                    ((0, 0), (0, 0), (1, 1), (1, 1))).reshape(n, 1, 324)

    const_args = [consts[k] for k in _CONST_ORDER]
    in_specs = [pl.BlockSpec((bn, 1, 324), lambda i: (i, 0, 0))]
    in_specs += [_const_spec(a) for a in const_args]

    out = pl.pallas_call(
        partial(_cdae_kernel, bn=bn),
        out_shape=jax.ShapeDtypeStruct((n, 1, 400), jnp.float32),
        grid=(n // bn,),
        in_specs=in_specs,
        out_specs=pl.BlockSpec((bn, 1, 400), lambda i: (i, 0, 0)),
        compiler_params=pltpu.CompilerParams(
            dimension_semantics=("parallel",),     # with samples_per_step=1, v7x can shard
            vmem_limit_bytes=16 * 1024 * 1024,
        ),
    )(x_pad, *const_args)

    return out.reshape(n, 1, 20, 20)               # metadata-only reshape


# ---------------------------------------------------------------------------
# Parameters (PyTorch-style layouts & init) + a pure-XLA reference for checking
# ---------------------------------------------------------------------------
def init_params(key):
    def conv(key, cout, cin, k):
        bound = 1.0 / (cin * k * k) ** 0.5
        kw_, kb_ = jax.random.split(key)
        w = jax.random.uniform(kw_, (cout, cin, k, k), jnp.float32, -bound, bound)
        b = jax.random.uniform(kb_, (cout,), jnp.float32, -bound, bound)
        return w, b

    def tconv(key, cin, cout, k):
        bound = 1.0 / (cout * k * k) ** 0.5   # PyTorch: fan_in = weight.size(1) * k * k
        kw_, kb_ = jax.random.split(key)
        w = jax.random.uniform(kw_, (cin, cout, k, k), jnp.float32, -bound, bound)
        b = jax.random.uniform(kb_, (cout,), jnp.float32, -bound, bound)
        return w, b

    keys = jax.random.split(key, 7)
    p = {}
    p["conv1_w"], p["conv1_b"] = conv(keys[0], 32, 1, 3)
    p["conv2_w"], p["conv2_b"] = conv(keys[1], 16, 32, 3)
    p["conv3_w"], p["conv3_b"] = conv(keys[2], 8, 16, 3)
    p["tconv1_w"], p["tconv1_b"] = tconv(keys[3], 8, 8, 3)
    p["tconv2_w"], p["tconv2_b"] = tconv(keys[4], 8, 16, 2)
    p["tconv3_w"], p["tconv3_b"] = tconv(keys[5], 16, 32, 2)
    p["convout_w"], p["convout_b"] = conv(keys[6], 1, 32, 3)
    return p


def _ref_forward(x, p):
    """Pure-XLA f32 reference (sanity tolerance check only)."""
    dn = ("NCHW", "OIHW", "NCHW")

    def conv(x, w, b, pad):
        y = jax.lax.conv_general_dilated(x, w, window_strides=(1, 1),
                                         padding=[(pad, pad), (pad, pad)],
                                         dimension_numbers=dn)
        return y + b.reshape(1, -1, 1, 1)

    def tconv(x, w, b, s):
        k = w.shape[-1]
        wf = jnp.transpose(w[:, :, ::-1, ::-1], (1, 0, 2, 3))
        y = jax.lax.conv_general_dilated(x, wf, window_strides=(1, 1),
                                         padding=[(k - 1, k - 1), (k - 1, k - 1)],
                                         lhs_dilation=(s, s), dimension_numbers=dn)
        return y + b.reshape(1, -1, 1, 1)

    def pool(x):
        return jax.lax.reduce_window(x, -jnp.inf, jax.lax.max,
                                     (1, 1, 2, 2), (1, 1, 2, 2), "VALID")

    y = jax.nn.relu(conv(x, p["conv1_w"], p["conv1_b"], 1)); y = pool(y)
    y = jax.nn.relu(conv(y, p["conv2_w"], p["conv2_b"], 1)); y = pool(y)
    y = jax.nn.relu(conv(y, p["conv3_w"], p["conv3_b"], 1)); y = pool(y)
    y = jax.nn.relu(tconv(y, p["tconv1_w"], p["tconv1_b"], 2))
    y = jax.nn.relu(tconv(y, p["tconv2_w"], p["tconv2_b"], 2))
    y = jax.nn.relu(tconv(y, p["tconv3_w"], p["tconv3_b"], 2))
    y = jax.nn.sigmoid(conv(y, p["convout_w"], p["convout_b"], 1))
    return y


if __name__ == "__main__":
    key = jax.random.PRNGKey(0)
    kx, kp = jax.random.split(key)
    x = jax.random.uniform(kx, (2, 1, 16, 16), jnp.float32)   # NCHW, like the PyTorch module
    params = init_params(kp)
    consts = build_constants(params)

    fwd = jax.jit(cdae_forward)
    y = fwd(x, consts)
    jax.block_until_ready(y)

    # 16 -> pool/pool/pool -> 2 ; t_conv1(k3,s2) -> 5 ; t_conv2 -> 10 ; t_conv3 -> 20
    assert y.shape == (2, 1, 20, 20), y.shape
    assert bool(jnp.all(jnp.isfinite(y)))
    assert bool(jnp.all((y >= 0.0) & (y <= 1.0)))             # exact sigmoid range

    y_ref = _ref_forward(x, params)
    err = float(jnp.max(jnp.abs(y - y_ref)))
    assert err < 2e-2, f"mismatch vs reference: {err}"

    print("KERNEL_OK")
</pallas_src>

<mosaic_0001>
module attributes {stable_mosaic.version = 11 : i64} {
  func.func @_cdae_kernel(%arg0: i32, %arg1: memref<2x1x324xf32, #tpu.memory_space<vmem>>, %arg2: memref<32x9xbf16, #tpu.memory_space<vmem>>, %arg3: memref<32x1xf32, #tpu.memory_space<vmem>>, %arg4: memref<267x100xbf16, #tpu.memory_space<vmem>>, %arg5: memref<16x288xbf16, #tpu.memory_space<vmem>>, %arg6: memref<16x1xf32, #tpu.memory_space<vmem>>, %arg7: memref<67x36xbf16, #tpu.memory_space<vmem>>, %arg8: memref<8x144xbf16, #tpu.memory_space<vmem>>, %arg9: memref<8x1xf32, #tpu.memory_space<vmem>>, %arg10: memref<15x49xbf16, #tpu.memory_space<vmem>>, %arg11: memref<8x72xbf16, #tpu.memory_space<vmem>>, %arg12: memref<8x1xf32, #tpu.memory_space<vmem>>, %arg13: memref<33x121xbf16, #tpu.memory_space<vmem>>, %arg14: memref<16x32xbf16, #tpu.memory_space<vmem>>, %arg15: memref<16x1xf32, #tpu.memory_space<vmem>>, %arg16: memref<109x441xbf16, #tpu.memory_space<vmem>>, %arg17: memref<32x64xbf16, #tpu.memory_space<vmem>>, %arg18: memref<32x1xf32, #tpu.memory_space<vmem>>, %arg19: memref<419x484xbf16, #tpu.memory_space<vmem>>, %arg20: memref<1x288xbf16, #tpu.memory_space<vmem>>, %arg21: memref<1x1xf32, #tpu.memory_space<vmem>>, %arg22: memref<2x1x400xf32, #tpu.memory_space<vmem>>) attributes {dimension_semantics = [#tpu.dimension_semantics<parallel>], iteration_bounds = array<i64: 1>, scalar_prefetch = 0 : i64, scratch_operands = 0 : i64, tpu.core_type = #tpu.core_type<tc>, window_params = [{transform_indices = @transform_0, window_bounds = array<i64: 2, 1, 324>}, {pipeline_mode = #tpu.pipeline_mode<synchronous>, transform_indices = @transform_1, window_bounds = array<i64: 32, 9>}, {pipeline_mode = #tpu.pipeline_mode<synchronous>, transform_indices = @transform_2, window_bounds = array<i64: 32, 1>}, {pipeline_mode = #tpu.pipeline_mode<synchronous>, transform_indices = @transform_3, window_bounds = array<i64: 267, 100>}, {pipeline_mode = #tpu.pipeline_mode<synchronous>, transform_indices = @transform_4, window_bounds = array<i64: 16, 288>}, {pipeline_mode = #tpu.pipeline_mode<synchronous>, transform_indices = @transform_5, window_bounds = array<i64: 16, 1>}, {pipeline_mode = #tpu.pipeline_mode<synchronous>, transform_indices = @transform_6, window_bounds = array<i64: 67, 36>}, {pipeline_mode = #tpu.pipeline_mode<synchronous>, transform_indices = @transform_7, window_bounds = array<i64: 8, 144>}, {pipeline_mode = #tpu.pipeline_mode<synchronous>, transform_indices = @transform_8, window_bounds = array<i64: 8, 1>}, {pipeline_mode = #tpu.pipeline_mode<synchronous>, transform_indices = @transform_9, window_bounds = array<i64: 15, 49>}, {pipeline_mode = #tpu.pipeline_mode<synchronous>, transform_indices = @transform_10, window_bounds = array<i64: 8, 72>}, {pipeline_mode = #tpu.pipeline_mode<synchronous>, transform_indices = @transform_11, window_bounds = array<i64: 8, 1>}, {pipeline_mode = #tpu.pipeline_mode<synchronous>, transform_indices = @transform_12, window_bounds = array<i64: 33, 121>}, {pipeline_mode = #tpu.pipeline_mode<synchronous>, transform_indices = @transform_13, window_bounds = array<i64: 16, 32>}, {pipeline_mode = #tpu.pipeline_mode<synchronous>, transform_indices = @transform_14, window_bounds = array<i64: 16, 1>}, {pipeline_mode = #tpu.pipeline_mode<synchronous>, transform_indices = @transform_15, window_bounds = array<i64: 109, 441>}, {pipeline_mode = #tpu.pipeline_mode<synchronous>, transform_indices = @transform_16, window_bounds = array<i64: 32, 64>}, {pipeline_mode = #tpu.pipeline_mode<synchronous>, transform_indices = @transform_17, window_bounds = array<i64: 32, 1>}, {pipeline_mode = #tpu.pipeline_mode<synchronous>, transform_indices = @transform_18, window_bounds = array<i64: 419, 484>}, {pipeline_mode = #tpu.pipeline_mode<synchronous>, transform_indices = @transform_19, window_bounds = array<i64: 1, 288>}, {pipeline_mode = #tpu.pipeline_mode<synchronous>, transform_indices = @transform_20, window_bounds = array<i64: 1, 1>}, {transform_indices = @transform_21, window_bounds = array<i64: 2, 1, 400>}]} {
    %c0 = arith.constant 0 : index
    %c0_0 = arith.constant 0 : index
    %c0_1 = arith.constant 0 : index
    %0 = vector.load %arg1[%c0, %c0_0, %c0_1] : memref<2x1x324xf32, #tpu.memory_space<vmem>>, vector<2x1x324xf32>
    %1 = vector.extract_strided_slice %0 {offsets = [0, 0, 0], sizes = [1, 1, 286], strides = [1, 1, 1]} : vector<2x1x324xf32> to vector<1x1x286xf32>
    %2 = vector.shape_cast %1 : vector<1x1x286xf32> to vector<1x286xf32>
    %3 = vector.extract_strided_slice %0 {offsets = [1, 0, 0], sizes = [1, 1, 286], strides = [1, 1, 1]} : vector<2x1x324xf32> to vector<1x1x286xf32>
    %4 = vector.shape_cast %3 : vector<1x1x286xf32> to vector<1x286xf32>
    %5 = tpu.concatenate %2, %4 in 1 : vector<1x286xf32>, vector<1x286xf32> -> vector<1x572xf32>
    %6 = vector.extract_strided_slice %0 {offsets = [0, 0, 1], sizes = [1, 1, 286], strides = [1, 1, 1]} : vector<2x1x324xf32> to vector<1x1x286xf32>
    %7 = vector.shape_cast %6 : vector<1x1x286xf32> to vector<1x286xf32>
    %8 = vector.extract_strided_slice %0 {offsets = [1, 0, 1], sizes = [1, 1, 286], strides = [1, 1, 1]} : vector<2x1x324xf32> to vector<1x1x286xf32>
    %9 = vector.shape_cast %8 : vector<1x1x286xf32> to vector<1x286xf32>
    %10 = tpu.concatenate %7, %9 in 1 : vector<1x286xf32>, vector<1x286xf32> -> vector<1x572xf32>
    %11 = vector.extract_strided_slice %0 {offsets = [0, 0, 2], sizes = [1, 1, 286], strides = [1, 1, 1]} : vector<2x1x324xf32> to vector<1x1x286xf32>
    %12 = vector.shape_cast %11 : vector<1x1x286xf32> to vector<1x286xf32>
    %13 = vector.extract_strided_slice %0 {offsets = [1, 0, 2], sizes = [1, 1, 286], strides = [1, 1, 1]} : vector<2x1x324xf32> to vector<1x1x286xf32>
    %14 = vector.shape_cast %13 : vector<1x1x286xf32> to vector<1x286xf32>
    %15 = tpu.concatenate %12, %14 in 1 : vector<1x286xf32>, vector<1x286xf32> -> vector<1x572xf32>
    %16 = vector.extract_strided_slice %0 {offsets = [0, 0, 18], sizes = [1, 1, 286], strides = [1, 1, 1]} : vector<2x1x324xf32> to vector<1x1x286xf32>
    %17 = vector.shape_cast %16 : vector<1x1x286xf32> to vector<1x286xf32>
    %18 = vector.extract_strided_slice %0 {offsets = [1, 0, 18], sizes = [1, 1, 286], strides = [1, 1, 1]} : vector<2x1x324xf32> to vector<1x1x286xf32>
    %19 = vector.shape_cast %18 : vector<1x1x286xf32> to vector<1x286xf32>
    %20 = tpu.concatenate %17, %19 in 1 : vector<1x286xf32>, vector<1x286xf32> -> vector<1x572xf32>
    %21 = vector.extract_strided_slice %0 {offsets = [0, 0, 19], sizes = [1, 1, 286], strides = [1, 1, 1]} : vector<2x1x324xf32> to vector<1x1x286xf32>
    %22 = vector.shape_cast %21 : vector<1x1x286xf32> to vector<1x286xf32>
    %23 = vector.extract_strided_slice %0 {offsets = [1, 0, 19], sizes = [1, 1, 286], strides = [1, 1, 1]} : vector<2x1x324xf32> to vector<1x1x286xf32>
    %24 = vector.shape_cast %23 : vector<1x1x286xf32> to vector<1x286xf32>
    %25 = tpu.concatenate %22, %24 in 1 : vector<1x286xf32>, vector<1x286xf32> -> vector<1x572xf32>
    %26 = vector.extract_strided_slice %0 {offsets = [0, 0, 20], sizes = [1, 1, 286], strides = [1, 1, 1]} : vector<2x1x324xf32> to vector<1x1x286xf32>
    %27 = vector.shape_cast %26 : vector<1x1x286xf32> to vector<1x286xf32>
    %28 = vector.extract_strided_slice %0 {offsets = [1, 0, 20], sizes = [1, 1, 286], strides = [1, 1, 1]} : vector<2x1x324xf32> to vector<1x1x286xf32>
    %29 = vector.shape_cast %28 : vector<1x1x286xf32> to vector<1x286xf32>
    %30 = tpu.concatenate %27, %29 in 1 : vector<1x286xf32>, vector<1x286xf32> -> vector<1x572xf32>
    %31 = vector.extract_strided_slice %0 {offsets = [0, 0, 36], sizes = [1, 1, 286], strides = [1, 1, 1]} : vector<2x1x324xf32> to vector<1x1x286xf32>
    %32 = vector.shape_cast %31 : vector<1x1x286xf32> to vector<1x286xf32>
    %33 = vector.extract_strided_slice %0 {offsets = [1, 0, 36], sizes = [1, 1, 286], strides = [1, 1, 1]} : vector<2x1x324xf32> to vector<1x1x286xf32>
    %34 = vector.shape_cast %33 : vector<1x1x286xf32> to vector<1x286xf32>
    %35 = tpu.concatenate %32, %34 in 1 : vector<1x286xf32>, vector<1x286xf32> -> vector<1x572xf32>
    %36 = vector.extract_strided_slice %0 {offsets = [0, 0, 37], sizes = [1, 1, 286], strides = [1, 1, 1]} : vector<2x1x324xf32> to vector<1x1x286xf32>
    %37 = vector.shape_cast %36 : vector<1x1x286xf32> to vector<1x286xf32>
    %38 = vector.extract_strided_slice %0 {offsets = [1, 0, 37], sizes = [1, 1, 286], strides = [1, 1, 1]} : vector<2x1x324xf32> to vector<1x1x286xf32>
    %39 = vector.shape_cast %38 : vector<1x1x286xf32> to vector<1x286xf32>
    %40 = tpu.concatenate %37, %39 in 1 : vector<1x286xf32>, vector<1x286xf32> -> vector<1x572xf32>
    %41 = vector.extract_strided_slice %0 {offsets = [0, 0, 38], sizes = [1, 1, 286], strides = [1, 1, 1]} : vector<2x1x324xf32> to vector<1x1x286xf32>
    %42 = vector.shape_cast %41 : vector<1x1x286xf32> to vector<1x286xf32>
    %43 = vector.extract_strided_slice %0 {offsets = [1, 0, 38], sizes = [1, 1, 286], strides = [1, 1, 1]} : vector<2x1x324xf32> to vector<1x1x286xf32>
    %44 = vector.shape_cast %43 : vector<1x1x286xf32> to vector<1x286xf32>
    %45 = tpu.concatenate %42, %44 in 1 : vector<1x286xf32>, vector<1x286xf32> -> vector<1x572xf32>
    %46 = tpu.concatenate %5, %10, %15, %20, %25, %30, %35, %40, %45 in 0 : vector<1x572xf32>, vector<1x572xf32>, vector<1x572xf32>, vector<1x572xf32>, vector<1x572xf32>, vector<1x572xf32>, vector<1x572xf32>, vector<1x572xf32>, vector<1x572xf32> -> vector<9x572xf32>
    %47 = arith.truncf %46 : vector<9x572xf32> to vector<9x572xbf16>
    %c0_2 = arith.constant 0 : index
    %c0_3 = arith.constant 0 : index
    %48 = vector.load %arg2[%c0_2, %c0_3] : memref<32x9xbf16, #tpu.memory_space<vmem>>, vector<32x9xbf16>
    %cst = arith.constant dense<0.000000e+00> : vector<32x572xf32>
    %49 = tpu.matmul %48, %47, %cst {dimension_numbers = #tpu.dot_dimension_numbers<[1], [0], [0], [1], [0, 0, 1, 1], [], []>} : vector<32x9xbf16>, vector<9x572xbf16>, vector<32x572xf32> -> vector<32x572xf32>
    %c0_4 = arith.constant 0 : index
    %c0_5 = arith.constant 0 : index
    %50 = vector.load %arg3[%c0_4, %c0_5] : memref<32x1xf32, #tpu.memory_space<vmem>>, vector<32x1xf32>
    %51 = vector.broadcast %50 : vector<32x1xf32> to vector<32x572xf32>
    %52 = arith.addf %49, %51 : vector<32x572xf32>
    %cst_6 = arith.constant 0.000000e+00 : f32
    %53 = vector.broadcast %cst_6 : f32 to vector<32x572xf32>
    %54 = arith.maximumf %52, %53 : vector<32x572xf32>
    %55 = vector.extract_strided_slice %54 {offsets = [0, 0], sizes = [32, 267], strides = [1, 1]} : vector<32x572xf32> to vector<32x267xf32>
    %56 = vector.extract_strided_slice %54 {offsets = [0, 1], sizes = [32, 267], strides = [1, 1]} : vector<32x572xf32> to vector<32x267xf32>
    %57 = arith.maximumf %55, %56 : vector<32x267xf32>
    %58 = vector.extract_strided_slice %54 {offsets = [0, 18], sizes = [32, 267], strides = [1, 1]} : vector<32x572xf32> to vector<32x267xf32>
    %59 = arith.maximumf %57, %58 : vector<32x267xf32>
    %60 = vector.extract_strided_slice %54 {offsets = [0, 19], sizes = [32, 267], strides = [1, 1]} : vector<32x572xf32> to vector<32x267xf32>
    %61 = arith.maximumf %59, %60 : vector<32x267xf32>
    %62 = arith.truncf %61 : vector<32x267xf32> to vector<32x267xbf16>
    %c0_7 = arith.constant 0 : index
    %c0_8 = arith.constant 0 : index
    %63 = vector.load %arg4[%c0_7, %c0_8] : memref<267x100xbf16, #tpu.memory_space<vmem>>, vector<267x100xbf16>
    %cst_9 = arith.constant dense<0.000000e+00> : vector<32x100xf32>
    %64 = tpu.matmul %62, %63, %cst_9 {dimension_numbers = #tpu.dot_dimension_numbers<[1], [0], [0], [1], [0, 0, 1, 1], [], []>} : vector<32x267xbf16>, vector<267x100xbf16>, vector<32x100xf32> -> vector<32x100xf32>
    %65 = vector.extract_strided_slice %54 {offsets = [0, 286], sizes = [32, 267], strides = [1, 1]} : vector<32x572xf32> to vector<32x267xf32>
    %66 = vector.extract_strided_slice %54 {offsets = [0, 287], sizes = [32, 267], strides = [1, 1]} : vector<32x572xf32> to vector<32x267xf32>
    %67 = arith.maximumf %65, %66 : vector<32x267xf32>
    %68 = vector.extract_strided_slice %54 {offsets = [0, 304], sizes = [32, 267], strides = [1, 1]} : vector<32x572xf32> to vector<32x267xf32>
    %69 = arith.maximumf %67, %68 : vector<32x267xf32>
    %70 = vector.extract_strided_slice %54 {offsets = [0, 305], sizes = [32, 267], strides = [1, 1]} : vector<32x572xf32> to vector<32x267xf32>
    %71 = arith.maximumf %69, %70 : vector<32x267xf32>
    %72 = arith.truncf %71 : vector<32x267xf32> to vector<32x267xbf16>
    %c0_10 = arith.constant 0 : index
    %c0_11 = arith.constant 0 : index
    %73 = vector.load %arg4[%c0_10, %c0_11] : memref<267x100xbf16, #tpu.memory_space<vmem>>, vector<267x100xbf16>
    %cst_12 = arith.constant dense<0.000000e+00> : vector<32x100xf32>
    %74 = tpu.matmul %72, %73, %cst_12 {dimension_numbers = #tpu.dot_dimension_numbers<[1], [0], [0], [1], [0, 0, 1, 1], [], []>} : vector<32x267xbf16>, vector<267x100xbf16>, vector<32x100xf32> -> vector<32x100xf32>
    %75 = tpu.concatenate %64, %74 in 1 : vector<32x100xf32>, vector<32x100xf32> -> vector<32x200xf32>
    %76 = vector.extract_strided_slice %75 {offsets = [0, 0], sizes = [32, 78], strides = [1, 1]} : vector<32x200xf32> to vector<32x78xf32>
    %77 = vector.extract_strided_slice %75 {offsets = [0, 100], sizes = [32, 78], strides = [1, 1]} : vector<32x200xf32> to vector<32x78xf32>
    %78 = tpu.concatenate %76, %77 in 1 : vector<32x78xf32>, vector<32x78xf32> -> vector<32x156xf32>
    %79 = vector.extract_strided_slice %75 {offsets = [0, 1], sizes = [32, 78], strides = [1, 1]} : vector<32x200xf32> to vector<32x78xf32>
    %80 = vector.extract_strided_slice %75 {offsets = [0, 101], sizes = [32, 78], strides = [1, 1]} : vector<32x200xf32> to vector<32x78xf32>
    %81 = tpu.concatenate %79, %80 in 1 : vector<32x78xf32>, vector<32x78xf32> -> vector<32x156xf32>
    %82 = vector.extract_strided_slice %75 {offsets = [0, 2], sizes = [32, 78], strides = [1, 1]} : vector<32x200xf32> to vector<32x78xf32>
    %83 = vector.extract_strided_slice %75 {offsets = [0, 102], sizes = [32, 78], strides = [1, 1]} : vector<32x200xf32> to vector<32x78xf32>
    %84 = tpu.concatenate %82, %83 in 1 : vector<32x78xf32>, vector<32x78xf32> -> vector<32x156xf32>
    %85 = vector.extract_strided_slice %75 {offsets = [0, 10], sizes = [32, 78], strides = [1, 1]} : vector<32x200xf32> to vector<32x78xf32>
    %86 = vector.extract_strided_slice %75 {offsets = [0, 110], sizes = [32, 78], strides = [1, 1]} : vector<32x200xf32> to vector<32x78xf32>
    %87 = tpu.concatenate %85, %86 in 1 : vector<32x78xf32>, vector<32x78xf32> -> vector<32x156xf32>
    %88 = vector.extract_strided_slice %75 {offsets = [0, 11], sizes = [32, 78], strides = [1, 1]} : vector<32x200xf32> to vector<32x78xf32>
    %89 = vector.extract_strided_slice %75 {offsets = [0, 111], sizes = [32, 78], strides = [1, 1]} : vector<32x200xf32> to vector<32x78xf32>
    %90 = tpu.concatenate %88, %89 in 1 : vector<32x78xf32>, vector<32x78xf32> -> vector<32x156xf32>
    %91 = vector.extract_strided_slice %75 {offsets = [0, 12], sizes = [32, 78], strides = [1, 1]} : vector<32x200xf32> to vector<32x78xf32>
    %92 = vector.extract_strided_slice %75 {offsets = [0, 112], sizes = [32, 78], strides = [1, 1]} : vector<32x200xf32> to vector<32x78xf32>
    %93 = tpu.concatenate %91, %92 in 1 : vector<32x78xf32>, vector<32x78xf32> -> vector<32x156xf32>
    %94 = vector.extract_strided_slice %75 {offsets = [0, 20], sizes = [32, 78], strides = [1, 1]} : vector<32x200xf32> to vector<32x78xf32>
    %95 = vector.extract_strided_slice %75 {offsets = [0, 120], sizes = [32, 78], strides = [1, 1]} : vector<32x200xf32> to vector<32x78xf32>
    %96 = tpu.concatenate %94, %95 in 1 : vector<32x78xf32>, vector<32x78xf32> -> vector<32x156xf32>
    %97 = vector.extract_strided_slice %75 {offsets = [0, 21], sizes = [32, 78], strides = [1, 1]} : vector<32x200xf32> to vector<32x78xf32>
    %98 = vector.extract_strided_slice %75 {offsets = [0, 121], sizes = [32, 78], strides = [1, 1]} : vector<32x200xf32> to vector<32x78xf32>
    %99 = tpu.concatenate %97, %98 in 1 : vector<32x78xf32>, vector<32x78xf32> -> vector<32x156xf32>
    %100 = vector.extract_strided_slice %75 {offsets = [0, 22], sizes = [32, 78], strides = [1, 1]} : vector<32x200xf32> to vector<32x78xf32>
    %101 = vector.extract_strided_slice %75 {offsets = [0, 122], sizes = [32, 78], strides = [1, 1]} : vector<32x200xf32> to vector<32x78xf32>
    %102 = tpu.concatenate %100, %101 in 1 : vector<32x78xf32>, vector<32x78xf32> -> vector<32x156xf32>
    %103 = tpu.concatenate %78, %81, %84, %87, %90, %93, %96, %99, %102 in 0 : vector<32x156xf32>, vector<32x156xf32>, vector<32x156xf32>, vector<32x156xf32>, vector<32x156xf32>, vector<32x156xf32>, vector<32x156xf32>, vector<32x156xf32>, vector<32x156xf32> -> vector<288x156xf32>
    %104 = arith.truncf %103 : vector<288x156xf32> to vector<288x156xbf16>
    %c0_13 = arith.constant 0 : index
    %c0_14 = arith.constant 0 : index
    %105 = vector.load %arg5[%c0_13, %c0_14] : memref<16x288xbf16, #tpu.memory_space<vmem>>, vector<16x288xbf16>
    %cst_15 = arith.constant dense<0.000000e+00> : vector<16x156xf32>
    %106 = tpu.matmul %105, %104, %cst_15 {dimension_numbers = #tpu.dot_dimension_numbers<[1], [0], [0], [1], [0, 0, 1, 1], [], []>} : vector<16x288xbf16>, vector<288x156xbf16>, vector<16x156xf32> -> vector<16x156xf32>
    %c0_16 = arith.constant 0 : index
    %c0_17 = arith.constant 0 : index
    %107 = vector.load %arg6[%c0_16, %c0_17] : memref<16x1xf32, #tpu.memory_space<vmem>>, vector<16x1xf32>
    %108 = vector.broadcast %107 : vector<16x1xf32> to vector<16x156xf32>
    %109 = arith.addf %106, %108 : vector<16x156xf32>
    %cst_18 = arith.constant 0.000000e+00 : f32
    %110 = vector.broadcast %cst_18 : f32 to vector<16x156xf32>
    %111 = arith.maximumf %109, %110 : vector<16x156xf32>
    %112 = vector.extract_strided_slice %111 {offsets = [0, 0], sizes = [16, 67], strides = [1, 1]} : vector<16x156xf32> to vector<16x67xf32>
    %113 = vector.extract_strided_slice %111 {offsets = [0, 1], sizes = [16, 67], strides = [1, 1]} : vector<16x156xf32> to vector<16x67xf32>
    %114 = arith.maximumf %112, %113 : vector<16x67xf32>
    %115 = vector.extract_strided_slice %111 {offsets = [0, 10], sizes = [16, 67], strides = [1, 1]} : vector<16x156xf32> to vector<16x67xf32>
    %116 = arith.maximumf %114, %115 : vector<16x67xf32>
    %117 = vector.extract_strided_slice %111 {offsets = [0, 11], sizes = [16, 67], strides = [1, 1]} : vector<16x156xf32> to vector<16x67xf32>
    %118 = arith.maximumf %116, %117 : vector<16x67xf32>
    %119 = arith.truncf %118 : vector<16x67xf32> to vector<16x67xbf16>
    %c0_19 = arith.constant 0 : index
    %c0_20 = arith.constant 0 : index
    %120 = vector.load %arg7[%c0_19, %c0_20] : memref<67x36xbf16, #tpu.memory_space<vmem>>, vector<67x36xbf16>
    %cst_21 = arith.constant dense<0.000000e+00> : vector<16x36xf32>
    %121 = tpu.matmul %119, %120, %cst_21 {dimension_numbers = #tpu.dot_dimension_numbers<[1], [0], [0], [1], [0, 0, 1, 1], [], []>} : vector<16x67xbf16>, vector<67x36xbf16>, vector<16x36xf32> -> vector<16x36xf32>
    %122 = vector.extract_strided_slice %111 {offsets = [0, 78], sizes = [16, 67], strides = [1, 1]} : vector<16x156xf32> to vector<16x67xf32>
    %123 = vector.extract_strided_slice %111 {offsets = [0, 79], sizes = [16, 67], strides = [1, 1]} : vector<16x156xf32> to vector<16x67xf32>
    %124 = arith.maximumf %122, %123 : vector<16x67xf32>
    %125 = vector.extract_strided_slice %111 {offsets = [0, 88], sizes = [16, 67], strides = [1, 1]} : vector<16x156xf32> to vector<16x67xf32>
    %126 = arith.maximumf %124, %125 : vector<16x67xf32>
    %127 = vector.extract_strided_slice %111 {offsets = [0, 89], sizes = [16, 67], strides = [1, 1]} : vector<16x156xf32> to vector<16x67xf32>
    %128 = arith.maximumf %126, %127 : vector<16x67xf32>
    %129 = arith.truncf %128 : vector<16x67xf32> to vector<16x67xbf16>
    %c0_22 = arith.constant 0 : index
    %c0_23 = arith.constant 0 : index
    %130 = vector.load %arg7[%c0_22, %c0_23] : memref<67x36xbf16, #tpu.memory_space<vmem>>, vector<67x36xbf16>
    %cst_24 = arith.constant dense<0.000000e+00> : vector<16x36xf32>
    %131 = tpu.matmul %129, %130, %cst_24 {dimension_numbers = #tpu.dot_dimension_numbers<[1], [0], [0], [1], [0, 0, 1, 1], [], []>} : vector<16x67xbf16>, vector<67x36xbf16>, vector<16x36xf32> -> vector<16x36xf32>
    %132 = tpu.concatenate %121, %131 in 1 : vector<16x36xf32>, vector<16x36xf32> -> vector<16x72xf32>
    %133 = vector.extract_strided_slice %132 {offsets = [0, 0], sizes = [16, 22], strides = [1, 1]} : vector<16x72xf32> to vector<16x22xf32>
    %134 = vector.extract_strided_slice %132 {offsets = [0, 36], sizes = [16, 22], strides = [1, 1]} : vector<16x72xf32> to vector<16x22xf32>
    %135 = tpu.concatenate %133, %134 in 1 : vector<16x22xf32>, vector<16x22xf32> -> vector<16x44xf32>
    %136 = vector.extract_strided_slice %132 {offsets = [0, 1], sizes = [16, 22], strides = [1, 1]} : vector<16x72xf32> to vector<16x22xf32>
    %137 = vector.extract_strided_slice %132 {offsets = [0, 37], sizes = [16, 22], strides = [1, 1]} : vector<16x72xf32> to vector<16x22xf32>
    %138 = tpu.concatenate %136, %137 in 1 : vector<16x22xf32>, vector<16x22xf32> -> vector<16x44xf32>
    %139 = vector.extract_strided_slice %132 {offsets = [0, 2], sizes = [16, 22], strides = [1, 1]} : vector<16x72xf32> to vector<16x22xf32>
    %140 = vector.extract_strided_slice %132 {offsets = [0, 38], sizes = [16, 22], strides = [1, 1]} : vector<16x72xf32> to vector<16x22xf32>
    %141 = tpu.concatenate %139, %140 in 1 : vector<16x22xf32>, vector<16x22xf32> -> vector<16x44xf32>
    %142 = vector.extract_strided_slice %132 {offsets = [0, 6], sizes = [16, 22], strides = [1, 1]} : vector<16x72xf32> to vector<16x22xf32>
    %143 = vector.extract_strided_slice %132 {offsets = [0, 42], sizes = [16, 22], strides = [1, 1]} : vector<16x72xf32> to vector<16x22xf32>
    %144 = tpu.concatenate %142, %143 in 1 : vector<16x22xf32>, vector<16x22xf32> -> vector<16x44xf32>
    %145 = vector.extract_strided_slice %132 {offsets = [0, 7], sizes = [16, 22], strides = [1, 1]} : vector<16x72xf32> to vector<16x22xf32>
    %146 = vector.extract_strided_slice %132 {offsets = [0, 43], sizes = [16, 22], strides = [1, 1]} : vector<16x72xf32> to vector<16x22xf32>
    %147 = tpu.concatenate %145, %146 in 1 : vector<16x22xf32>, vector<16x22xf32> -> vector<16x44xf32>
    %148 = vector.extract_strided_slice %132 {offsets = [0, 8], sizes = [16, 22], strides = [1, 1]} : vector<16x72xf32> to vector<16x22xf32>
    %149 = vector.extract_strided_slice %132 {offsets = [0, 44], sizes = [16, 22], strides = [1, 1]} : vector<16x72xf32> to vector<16x22xf32>
    %150 = tpu.concatenate %148, %149 in 1 : vector<16x22xf32>, vector<16x22xf32> -> vector<16x44xf32>
    %151 = vector.extract_strided_slice %132 {offsets = [0, 12], sizes = [16, 22], strides = [1, 1]} : vector<16x72xf32> to vector<16x22xf32>
    %152 = vector.extract_strided_slice %132 {offsets = [0, 48], sizes = [16, 22], strides = [1, 1]} : vector<16x72xf32> to vector<16x22xf32>
    %153 = tpu.concatenate %151, %152 in 1 : vector<16x22xf32>, vector<16x22xf32> -> vector<16x44xf32>
    %154 = vector.extract_strided_slice %132 {offsets = [0, 13], sizes = [16, 22], strides = [1, 1]} : vector<16x72xf32> to vector<16x22xf32>
    %155 = vector.extract_strided_slice %132 {offsets = [0, 49], sizes = [16, 22], strides = [1, 1]} : vector<16x72xf32> to vector<16x22xf32>
    %156 = tpu.concatenate %154, %155 in 1 : vector<16x22xf32>, vector<16x22xf32> -> vector<16x44xf32>
    %157 = vector.extract_strided_slice %132 {offsets = [0, 14], sizes = [16, 22], strides = [1, 1]} : vector<16x72xf32> to vector<16x22xf32>
    %158 = vector.extract_strided_slice %132 {offsets = [0, 50], sizes = [16, 22], strides = [1, 1]} : vector<16x72xf32> to vector<16x22xf32>
    %159 = tpu.concatenate %157, %158 in 1 : vector<16x22xf32>, vector<16x22xf32> -> vector<16x44xf32>
    %160 = tpu.concatenate %135, %138, %141, %144, %147, %150, %153, %156, %159 in 0 : vector<16x44xf32>, vector<16x44xf32>, vector<16x44xf32>, vector<16x44xf32>, vector<16x44xf32>, vector<16x44xf32>, vector<16x44xf32>, vector<16x44xf32>, vector<16x44xf32> -> vector<144x44xf32>
    %161 = arith.truncf %160 : vector<144x44xf32> to vector<144x44xbf16>
    %c0_25 = arith.constant 0 : index
    %c0_26 = arith.constant 0 : index
    %162 = vector.load %arg8[%c0_25, %c0_26] : memref<8x144xbf16, #tpu.memory_space<vmem>>, vector<8x144xbf16>
    %cst_27 = arith.constant dense<0.000000e+00> : vector<8x44xf32>
    %163 = tpu.matmul %162, %161, %cst_27 {dimension_numbers = #tpu.dot_dimension_numbers<[1], [0], [0], [1], [0, 0, 1, 1], [], []>} : vector<8x144xbf16>, vector<144x44xbf16>, vector<8x44xf32> -> vector<8x44xf32>
    %c0_28 = arith.constant 0 : index
    %c0_29 = arith.constant 0 : index
    %164 = vector.load %arg9[%c0_28, %c0_29] : memref<8x1xf32, #tpu.memory_space<vmem>>, vector<8x1xf32>
    %165 = vector.broadcast %164 : vector<8x1xf32> to vector<8x44xf32>
    %166 = arith.addf %163, %165 : vector<8x44xf32>
    %cst_30 = arith.constant 0.000000e+00 : f32
    %167 = vector.broadcast %cst_30 : f32 to vector<8x44xf32>
    %168 = arith.maximumf %166, %167 : vector<8x44xf32>
    %169 = vector.extract_strided_slice %168 {offsets = [0, 0], sizes = [8, 15], strides = [1, 1]} : vector<8x44xf32> to vector<8x15xf32>
    %170 = vector.extract_strided_slice %168 {offsets = [0, 1], sizes = [8, 15], strides = [1, 1]} : vector<8x44xf32> to vector<8x15xf32>
    %171 = arith.maximumf %169, %170 : vector<8x15xf32>
    %172 = vector.extract_strided_slice %168 {offsets = [0, 6], sizes = [8, 15], strides = [1, 1]} : vector<8x44xf32> to vector<8x15xf32>
    %173 = arith.maximumf %171, %172 : vector<8x15xf32>
    %174 = vector.extract_strided_slice %168 {offsets = [0, 7], sizes = [8, 15], strides = [1, 1]} : vector<8x44xf32> to vector<8x15xf32>
    %175 = arith.maximumf %173, %174 : vector<8x15xf32>
    %176 = arith.truncf %175 : vector<8x15xf32> to vector<8x15xbf16>
    %c0_31 = arith.constant 0 : index
    %c0_32 = arith.constant 0 : index
    %177 = vector.load %arg10[%c0_31, %c0_32] : memref<15x49xbf16, #tpu.memory_space<vmem>>, vector<15x49xbf16>
    %cst_33 = arith.constant dense<0.000000e+00> : vector<8x49xf32>
    %178 = tpu.matmul %176, %177, %cst_33 {dimension_numbers = #tpu.dot_dimension_numbers<[1], [0], [0], [1], [0, 0, 1, 1], [], []>} : vector<8x15xbf16>, vector<15x49xbf16>, vector<8x49xf32> -> vector<8x49xf32>
    %179 = vector.extract_strided_slice %168 {offsets = [0, 22], sizes = [8, 15], strides = [1, 1]} : vector<8x44xf32> to vector<8x15xf32>
    %180 = vector.extract_strided_slice %168 {offsets = [0, 23], sizes = [8, 15], strides = [1, 1]} : vector<8x44xf32> to vector<8x15xf32>
    %181 = arith.maximumf %179, %180 : vector<8x15xf32>
    %182 = vector.extract_strided_slice %168 {offsets = [0, 28], sizes = [8, 15], strides = [1, 1]} : vector<8x44xf32> to vector<8x15xf32>
    %183 = arith.maximumf %181, %182 : vector<8x15xf32>
    %184 = vector.extract_strided_slice %168 {offsets = [0, 29], sizes = [8, 15], strides = [1, 1]} : vector<8x44xf32> to vector<8x15xf32>
    %185 = arith.maximumf %183, %184 : vector<8x15xf32>
    %186 = arith.truncf %185 : vector<8x15xf32> to vector<8x15xbf16>
    %c0_34 = arith.constant 0 : index
    %c0_35 = arith.constant 0 : index
    %187 = vector.load %arg10[%c0_34, %c0_35] : memref<15x49xbf16, #tpu.memory_space<vmem>>, vector<15x49xbf16>
    %cst_36 = arith.constant dense<0.000000e+00> : vector<8x49xf32>
    %188 = tpu.matmul %186, %187, %cst_36 {dimension_numbers = #tpu.dot_dimension_numbers<[1], [0], [0], [1], [0, 0, 1, 1], [], []>} : vector<8x15xbf16>, vector<15x49xbf16>, vector<8x49xf32> -> vector<8x49xf32>
    %189 = tpu.concatenate %178, %188 in 1 : vector<8x49xf32>, vector<8x49xf32> -> vector<8x98xf32>
    %190 = vector.extract_strided_slice %189 {offsets = [0, 0], sizes = [8, 33], strides = [1, 1]} : vector<8x98xf32> to vector<8x33xf32>
    %191 = vector.extract_strided_slice %189 {offsets = [0, 49], sizes = [8, 33], strides = [1, 1]} : vector<8x98xf32> to vector<8x33xf32>
    %192 = tpu.concatenate %190, %191 in 1 : vector<8x33xf32>, vector<8x33xf32> -> vector<8x66xf32>
    %193 = vector.extract_strided_slice %189 {offsets = [0, 1], sizes = [8, 33], strides = [1, 1]} : vector<8x98xf32> to vector<8x33xf32>
    %194 = vector.extract_strided_slice %189 {offsets = [0, 50], sizes = [8, 33], strides = [1, 1]} : vector<8x98xf32> to vector<8x33xf32>
    %195 = tpu.concatenate %193, %194 in 1 : vector<8x33xf32>, vector<8x33xf32> -> vector<8x66xf32>
    %196 = vector.extract_strided_slice %189 {offsets = [0, 2], sizes = [8, 33], strides = [1, 1]} : vector<8x98xf32> to vector<8x33xf32>
    %197 = vector.extract_strided_slice %189 {offsets = [0, 51], sizes = [8, 33], strides = [1, 1]} : vector<8x98xf32> to vector<8x33xf32>
    %198 = tpu.concatenate %196, %197 in 1 : vector<8x33xf32>, vector<8x33xf32> -> vector<8x66xf32>
    %199 = vector.extract_strided_slice %189 {offsets = [0, 7], sizes = [8, 33], strides = [1, 1]} : vector<8x98xf32> to vector<8x33xf32>
    %200 = vector.extract_strided_slice %189 {offsets = [0, 56], sizes = [8, 33], strides = [1, 1]} : vector<8x98xf32> to vector<8x33xf32>
    %201 = tpu.concatenate %199, %200 in 1 : vector<8x33xf32>, vector<8x33xf32> -> vector<8x66xf32>
    %202 = vector.extract_strided_slice %189 {offsets = [0, 8], sizes = [8, 33], strides = [1, 1]} : vector<8x98xf32> to vector<8x33xf32>
    %203 = vector.extract_strided_slice %189 {offsets = [0, 57], sizes = [8, 33], strides = [1, 1]} : vector<8x98xf32> to vector<8x33xf32>
    %204 = tpu.concatenate %202, %203 in 1 : vector<8x33xf32>, vector<8x33xf32> -> vector<8x66xf32>
    %205 = vector.extract_strided_slice %189 {offsets = [0, 9], sizes = [8, 33], strides = [1, 1]} : vector<8x98xf32> to vector<8x33xf32>
    %206 = vector.extract_strided_slice %189 {offsets = [0, 58], sizes = [8, 33], strides = [1, 1]} : vector<8x98xf32> to vector<8x33xf32>
    %207 = tpu.concatenate %205, %206 in 1 : vector<8x33xf32>, vector<8x33xf32> -> vector<8x66xf32>
    %208 = vector.extract_strided_slice %189 {offsets = [0, 14], sizes = [8, 33], strides = [1, 1]} : vector<8x98xf32> to vector<8x33xf32>
    %209 = vector.extract_strided_slice %189 {offsets = [0, 63], sizes = [8, 33], strides = [1, 1]} : vector<8x98xf32> to vector<8x33xf32>
    %210 = tpu.concatenate %208, %209 in 1 : vector<8x33xf32>, vector<8x33xf32> -> vector<8x66xf32>
    %211 = vector.extract_strided_slice %189 {offsets = [0, 15], sizes = [8, 33], strides = [1, 1]} : vector<8x98xf32> to vector<8x33xf32>
    %212 = vector.extract_strided_slice %189 {offsets = [0, 64], sizes = [8, 33], strides = [1, 1]} : vector<8x98xf32> to vector<8x33xf32>
    %213 = tpu.concatenate %211, %212 in 1 : vector<8x33xf32>, vector<8x33xf32> -> vector<8x66xf32>
    %214 = vector.extract_strided_slice %189 {offsets = [0, 16], sizes = [8, 33], strides = [1, 1]} : vector<8x98xf32> to vector<8x33xf32>
    %215 = vector.extract_strided_slice %189 {offsets = [0, 65], sizes = [8, 33], strides = [1, 1]} : vector<8x98xf32> to vector<8x33xf32>
    %216 = tpu.concatenate %214, %215 in 1 : vector<8x33xf32>, vector<8x33xf32> -> vector<8x66xf32>
    %217 = tpu.concatenate %192, %195, %198, %201, %204, %207, %210, %213, %216 in 0 : vector<8x66xf32>, vector<8x66xf32>, vector<8x66xf32>, vector<8x66xf32>, vector<8x66xf32>, vector<8x66xf32>, vector<8x66xf32>, vector<8x66xf32>, vector<8x66xf32> -> vector<72x66xf32>
    %218 = arith.truncf %217 : vector<72x66xf32> to vector<72x66xbf16>
    %c0_37 = arith.constant 0 : index
    %c0_38 = arith.constant 0 : index
    %219 = vector.load %arg11[%c0_37, %c0_38] : memref<8x72xbf16, #tpu.memory_space<vmem>>, vector<8x72xbf16>
    %cst_39 = arith.constant dense<0.000000e+00> : vector<8x66xf32>
    %220 = tpu.matmul %219, %218, %cst_39 {dimension_numbers = #tpu.dot_dimension_numbers<[1], [0], [0], [1], [0, 0, 1, 1], [], []>} : vector<8x72xbf16>, vector<72x66xbf16>, vector<8x66xf32> -> vector<8x66xf32>
    %c0_40 = arith.constant 0 : index
    %c0_41 = arith.constant 0 : index
    %221 = vector.load %arg12[%c0_40, %c0_41] : memref<8x1xf32, #tpu.memory_space<vmem>>, vector<8x1xf32>
    %222 = vector.broadcast %221 : vector<8x1xf32> to vector<8x66xf32>
    %223 = arith.addf %220, %222 : vector<8x66xf32>
    %cst_42 = arith.constant 0.000000e+00 : f32
    %224 = vector.broadcast %cst_42 : f32 to vector<8x66xf32>
    %225 = arith.maximumf %223, %224 : vector<8x66xf32>
    %226 = vector.extract_strided_slice %225 {offsets = [0, 0], sizes = [8, 33], strides = [1, 1]} : vector<8x66xf32> to vector<8x33xf32>
    %227 = arith.truncf %226 : vector<8x33xf32> to vector<8x33xbf16>
    %c0_43 = arith.constant 0 : index
    %c0_44 = arith.constant 0 : index
    %228 = vector.load %arg13[%c0_43, %c0_44] : memref<33x121xbf16, #tpu.memory_space<vmem>>, vector<33x121xbf16>
    %cst_45 = arith.constant dense<0.000000e+00> : vector<8x121xf32>
    %229 = tpu.matmul %227, %228, %cst_45 {dimension_numbers = #tpu.dot_dimension_numbers<[1], [0], [0], [1], [0, 0, 1, 1], [], []>} : vector<8x33xbf16>, vector<33x121xbf16>, vector<8x121xf32> -> vector<8x121xf32>
    %230 = vector.extract_strided_slice %225 {offsets = [0, 33], sizes = [8, 33], strides = [1, 1]} : vector<8x66xf32> to vector<8x33xf32>
    %231 = arith.truncf %230 : vector<8x33xf32> to vector<8x33xbf16>
    %c0_46 = arith.constant 0 : index
    %c0_47 = arith.constant 0 : index
    %232 = vector.load %arg13[%c0_46, %c0_47] : memref<33x121xbf16, #tpu.memory_space<vmem>>, vector<33x121xbf16>
    %cst_48 = arith.constant dense<0.000000e+00> : vector<8x121xf32>
    %233 = tpu.matmul %231, %232, %cst_48 {dimension_numbers = #tpu.dot_dimension_numbers<[1], [0], [0], [1], [0, 0, 1, 1], [], []>} : vector<8x33xbf16>, vector<33x121xbf16>, vector<8x121xf32> -> vector<8x121xf32>
    %234 = tpu.concatenate %229, %233 in 1 : vector<8x121xf32>, vector<8x121xf32> -> vector<8x242xf32>
    %235 = vector.extract_strided_slice %234 {offsets = [0, 0], sizes = [8, 109], strides = [1, 1]} : vector<8x242xf32> to vector<8x109xf32>
    %236 = vector.extract_strided_slice %234 {offsets = [0, 121], sizes = [8, 109], strides = [1, 1]} : vector<8x242xf32> to vector<8x109xf32>
    %237 = tpu.concatenate %235, %236 in 1 : vector<8x109xf32>, vector<8x109xf32> -> vector<8x218xf32>
    %238 = vector.extract_strided_slice %234 {offsets = [0, 1], sizes = [8, 109], strides = [1, 1]} : vector<8x242xf32> to vector<8x109xf32>
    %239 = vector.extract_strided_slice %234 {offsets = [0, 122], sizes = [8, 109], strides = [1, 1]} : vector<8x242xf32> to vector<8x109xf32>
    %240 = tpu.concatenate %238, %239 in 1 : vector<8x109xf32>, vector<8x109xf32> -> vector<8x218xf32>
    %241 = vector.extract_strided_slice %234 {offsets = [0, 11], sizes = [8, 109], strides = [1, 1]} : vector<8x242xf32> to vector<8x109xf32>
    %242 = vector.extract_strided_slice %234 {offsets = [0, 132], sizes = [8, 109], strides = [1, 1]} : vector<8x242xf32> to vector<8x109xf32>
    %243 = tpu.concatenate %241, %242 in 1 : vector<8x109xf32>, vector<8x109xf32> -> vector<8x218xf32>
    %244 = vector.extract_strided_slice %234 {offsets = [0, 12], sizes = [8, 109], strides = [1, 1]} : vector<8x242xf32> to vector<8x109xf32>
    %245 = vector.extract_strided_slice %234 {offsets = [0, 133], sizes = [8, 109], strides = [1, 1]} : vector<8x242xf32> to vector<8x109xf32>
    %246 = tpu.concatenate %244, %245 in 1 : vector<8x109xf32>, vector<8x109xf32> -> vector<8x218xf32>
    %247 = tpu.concatenate %237, %240, %243, %246 in 0 : vector<8x218xf32>, vector<8x218xf32>, vector<8x218xf32>, vector<8x218xf32> -> vector<32x218xf32>
    %248 = arith.truncf %247 : vector<32x218xf32> to vector<32x218xbf16>
    %c0_49 = arith.constant 0 : index
    %c0_50 = arith.constant 0 : index
    %249 = vector.load %arg14[%c0_49, %c0_50] : memref<16x32xbf16, #tpu.memory_space<vmem>>, vector<16x32xbf16>
    %cst_51 = arith.constant dense<0.000000e+00> : vector<16x218xf32>
    %250 = tpu.matmul %249, %248, %cst_51 {dimension_numbers = #tpu.dot_dimension_numbers<[1], [0], [0], [1], [0, 0, 1, 1], [], []>} : vector<16x32xbf16>, vector<32x218xbf16>, vector<16x218xf32> -> vector<16x218xf32>
    %c0_52 = arith.constant 0 : index
    %c0_53 = arith.constant 0 : index
    %251 = vector.load %arg15[%c0_52, %c0_53] : memref<16x1xf32, #tpu.memory_space<vmem>>, vector<16x1xf32>
    %252 = vector.broadcast %251 : vector<16x1xf32> to vector<16x218xf32>
    %253 = arith.addf %250, %252 : vector<16x218xf32>
    %cst_54 = arith.constant 0.000000e+00 : f32
    %254 = vector.broadcast %cst_54 : f32 to vector<16x218xf32>
    %255 = arith.maximumf %253, %254 : vector<16x218xf32>
    %256 = vector.extract_strided_slice %255 {offsets = [0, 0], sizes = [16, 109], strides = [1, 1]} : vector<16x218xf32> to vector<16x109xf32>
    %257 = arith.truncf %256 : vector<16x109xf32> to vector<16x109xbf16>
    %c0_55 = arith.constant 0 : index
    %c0_56 = arith.constant 0 : index
    %258 = vector.load %arg16[%c0_55, %c0_56] : memref<109x441xbf16, #tpu.memory_space<vmem>>, vector<109x441xbf16>
    %cst_57 = arith.constant dense<0.000000e+00> : vector<16x441xf32>
    %259 = tpu.matmul %257, %258, %cst_57 {dimension_numbers = #tpu.dot_dimension_numbers<[1], [0], [0], [1], [0, 0, 1, 1], [], []>} : vector<16x109xbf16>, vector<109x441xbf16>, vector<16x441xf32> -> vector<16x441xf32>
    %260 = vector.extract_strided_slice %255 {offsets = [0, 109], sizes = [16, 109], strides = [1, 1]} : vector<16x218xf32> to vector<16x109xf32>
    %261 = arith.truncf %260 : vector<16x109xf32> to vector<16x109xbf16>
    %c0_58 = arith.constant 0 : index
    %c0_59 = arith.constant 0 : index
    %262 = vector.load %arg16[%c0_58, %c0_59] : memref<109x441xbf16, #tpu.memory_space<vmem>>, vector<109x441xbf16>
    %cst_60 = arith.constant dense<0.000000e+00> : vector<16x441xf32>
    %263 = tpu.matmul %261, %262, %cst_60 {dimension_numbers = #tpu.dot_dimension_numbers<[1], [0], [0], [1], [0, 0, 1, 1], [], []>} : vector<16x109xbf16>, vector<109x441xbf16>, vector<16x441xf32> -> vector<16x441xf32>
    %264 = tpu.concatenate %259, %263 in 1 : vector<16x441xf32>, vector<16x441xf32> -> vector<16x882xf32>
    %265 = vector.extract_strided_slice %264 {offsets = [0, 0], sizes = [16, 419], strides = [1, 1]} : vector<16x882xf32> to vector<16x419xf32>
    %266 = vector.extract_strided_slice %264 {offsets = [0, 441], sizes = [16, 419], strides = [1, 1]} : vector<16x882xf32> to vector<16x419xf32>
    %267 = tpu.concatenate %265, %266 in 1 : vector<16x419xf32>, vector<16x419xf32> -> vector<16x838xf32>
    %268 = vector.extract_strided_slice %264 {offsets = [0, 1], sizes = [16, 419], strides = [1, 1]} : vector<16x882xf32> to vector<16x419xf32>
    %269 = vector.extract_strided_slice %264 {offsets = [0, 442], sizes = [16, 419], strides = [1, 1]} : vector<16x882xf32> to vector<16x419xf32>
    %270 = tpu.concatenate %268, %269 in 1 : vector<16x419xf32>, vector<16x419xf32> -> vector<16x838xf32>
    %271 = vector.extract_strided_slice %264 {offsets = [0, 21], sizes = [16, 419], strides = [1, 1]} : vector<16x882xf32> to vector<16x419xf32>
    %272 = vector.extract_strided_slice %264 {offsets = [0, 462], sizes = [16, 419], strides = [1, 1]} : vector<16x882xf32> to vector<16x419xf32>
    %273 = tpu.concatenate %271, %272 in 1 : vector<16x419xf32>, vector<16x419xf32> -> vector<16x838xf32>
    %274 = vector.extract_strided_slice %264 {offsets = [0, 22], sizes = [16, 419], strides = [1, 1]} : vector<16x882xf32> to vector<16x419xf32>
    %275 = vector.extract_strided_slice %264 {offsets = [0, 463], sizes = [16, 419], strides = [1, 1]} : vector<16x882xf32> to vector<16x419xf32>
    %276 = tpu.concatenate %274, %275 in 1 : vector<16x419xf32>, vector<16x419xf32> -> vector<16x838xf32>
    %277 = tpu.concatenate %267, %270, %273, %276 in 0 : vector<16x838xf32>, vector<16x838xf32>, vector<16x838xf32>, vector<16x838xf32> -> vector<64x838xf32>
    %278 = arith.truncf %277 : vector<64x838xf32> to vector<64x838xbf16>
    %c0_61 = arith.constant 0 : index
    %c0_62 = arith.constant 0 : index
    %279 = vector.load %arg17[%c0_61, %c0_62] : memref<32x64xbf16, #tpu.memory_space<vmem>>, vector<32x64xbf16>
    %cst_63 = arith.constant dense<0.000000e+00> : vector<32x838xf32>
    %280 = tpu.matmul %279, %278, %cst_63 {dimension_numbers = #tpu.dot_dimension_numbers<[1], [0], [0], [1], [0, 0, 1, 1], [], []>} : vector<32x64xbf16>, vector<64x838xbf16>, vector<32x838xf32> -> vector<32x838xf32>
    %c0_64 = arith.constant 0 : index
    %c0_65 = arith.constant 0 : index
    %281 = vector.load %arg18[%c0_64, %c0_65] : memref<32x1xf32, #tpu.memory_space<vmem>>, vector<32x1xf32>
    %282 = vector.broadcast %281 : vector<32x1xf32> to vector<32x838xf32>
    %283 = arith.addf %280, %282 : vector<32x838xf32>
    %cst_66 = arith.constant 0.000000e+00 : f32
    %284 = vector.broadcast %cst_66 : f32 to vector<32x838xf32>
    %285 = arith.maximumf %283, %284 : vector<32x838xf32>
    %286 = vector.extract_strided_slice %285 {offsets = [0, 0], sizes = [32, 419], strides = [1, 1]} : vector<32x838xf32> to vector<32x419xf32>
    %287 = arith.truncf %286 : vector<32x419xf32> to vector<32x419xbf16>
    %c0_67 = arith.constant 0 : index
    %c0_68 = arith.constant 0 : index
    %288 = vector.load %arg19[%c0_67, %c0_68] : memref<419x484xbf16, #tpu.memory_space<vmem>>, vector<419x484xbf16>
    %cst_69 = arith.constant dense<0.000000e+00> : vector<32x484xf32>
    %289 = tpu.matmul %287, %288, %cst_69 {dimension_numbers = #tpu.dot_dimension_numbers<[1], [0], [0], [1], [0, 0, 1, 1], [], []>} : vector<32x419xbf16>, vector<419x484xbf16>, vector<32x484xf32> -> vector<32x484xf32>
    %290 = vector.extract_strided_slice %285 {offsets = [0, 419], sizes = [32, 419], strides = [1, 1]} : vector<32x838xf32> to vector<32x419xf32>
    %291 = arith.truncf %290 : vector<32x419xf32> to vector<32x419xbf16>
    %c0_70 = arith.constant 0 : index
    %c0_71 = arith.constant 0 : index
    %292 = vector.load %arg19[%c0_70, %c0_71] : memref<419x484xbf16, #tpu.memory_space<vmem>>, vector<419x484xbf16>
    %cst_72 = arith.constant dense<0.000000e+00> : vector<32x484xf32>
    %293 = tpu.matmul %291, %292, %cst_72 {dimension_numbers = #tpu.dot_dimension_numbers<[1], [0], [0], [1], [0, 0, 1, 1], [], []>} : vector<32x419xbf16>, vector<419x484xbf16>, vector<32x484xf32> -> vector<32x484xf32>
    %294 = tpu.concatenate %289, %293 in 1 : vector<32x484xf32>, vector<32x484xf32> -> vector<32x968xf32>
    %295 = vector.extract_strided_slice %294 {offsets = [0, 0], sizes = [32, 438], strides = [1, 1]} : vector<32x968xf32> to vector<32x438xf32>
    %296 = vector.extract_strided_slice %294 {offsets = [0, 484], sizes = [32, 438], strides = [1, 1]} : vector<32x968xf32> to vector<32x438xf32>
    %297 = tpu.concatenate %295, %296 in 1 : vector<32x438xf32>, vector<32x438xf32> -> vector<32x876xf32>
    %298 = vector.extract_strided_slice %294 {offsets = [0, 1], sizes = [32, 438], strides = [1, 1]} : vector<32x968xf32> to vector<32x438xf32>
    %299 = vector.extract_strided_slice %294 {offsets = [0, 485], sizes = [32, 438], strides = [1, 1]} : vector<32x968xf32> to vector<32x438xf32>
    %300 = tpu.concatenate %298, %299 in 1 : vector<32x438xf32>, vector<32x438xf32> -> vector<32x876xf32>
    %301 = vector.extract_strided_slice %294 {offsets = [0, 2], sizes = [32, 438], strides = [1, 1]} : vector<32x968xf32> to vector<32x438xf32>
    %302 = vector.extract_strided_slice %294 {offsets = [0, 486], sizes = [32, 438], strides = [1, 1]} : vector<32x968xf32> to vector<32x438xf32>
    %303 = tpu.concatenate %301, %302 in 1 : vector<32x438xf32>, vector<32x438xf32> -> vector<32x876xf32>
    %304 = vector.extract_strided_slice %294 {offsets = [0, 22], sizes = [32, 438], strides = [1, 1]} : vector<32x968xf32> to vector<32x438xf32>
    %305 = vector.extract_strided_slice %294 {offsets = [0, 506], sizes = [32, 438], strides = [1, 1]} : vector<32x968xf32> to vector<32x438xf32>
    %306 = tpu.concatenate %304, %305 in 1 : vector<32x438xf32>, vector<32x438xf32> -> vector<32x876xf32>
    %307 = vector.extract_strided_slice %294 {offsets = [0, 23], sizes = [32, 438], strides = [1, 1]} : vector<32x968xf32> to vector<32x438xf32>
    %308 = vector.extract_strided_slice %294 {offsets = [0, 507], sizes = [32, 438], strides = [1, 1]} : vector<32x968xf32> to vector<32x438xf32>
    %309 = tpu.concatenate %307, %308 in 1 : vector<32x438xf32>, vector<32x438xf32> -> vector<32x876xf32>
    %310 = vector.extract_strided_slice %294 {offsets = [0, 24], sizes = [32, 438], strides = [1, 1]} : vector<32x968xf32> to vector<32x438xf32>
    %311 = vector.extract_strided_slice %294 {offsets = [0, 508], sizes = [32, 438], strides = [1, 1]} : vector<32x968xf32> to vector<32x438xf32>
    %312 = tpu.concatenate %310, %311 in 1 : vector<32x438xf32>, vector<32x438xf32> -> vector<32x876xf32>
    %313 = vector.extract_strided_slice %294 {offsets = [0, 44], sizes = [32, 438], strides = [1, 1]} : vector<32x968xf32> to vector<32x438xf32>
    %314 = vector.extract_strided_slice %294 {offsets = [0, 528], sizes = [32, 438], strides = [1, 1]} : vector<32x968xf32> to vector<32x438xf32>
    %315 = tpu.concatenate %313, %314 in 1 : vector<32x438xf32>, vector<32x438xf32> -> vector<32x876xf32>
    %316 = vector.extract_strided_slice %294 {offsets = [0, 45], sizes = [32, 438], strides = [1, 1]} : vector<32x968xf32> to vector<32x438xf32>
    %317 = vector.extract_strided_slice %294 {offsets = [0, 529], sizes = [32, 438], strides = [1, 1]} : vector<32x968xf32> to vector<32x438xf32>
    %318 = tpu.concatenate %316, %317 in 1 : vector<32x438xf32>, vector<32x438xf32> -> vector<32x876xf32>
    %319 = vector.extract_strided_slice %294 {offsets = [0, 46], sizes = [32, 438], strides = [1, 1]} : vector<32x968xf32> to vector<32x438xf32>
    %320 = vector.extract_strided_slice %294 {offsets = [0, 530], sizes = [32, 438], strides = [1, 1]} : vector<32x968xf32> to vector<32x438xf32>
    %321 = tpu.concatenate %319, %320 in 1 : vector<32x438xf32>, vector<32x438xf32> -> vector<32x876xf32>
    %322 = tpu.concatenate %297, %300, %303, %306, %309, %312, %315, %318, %321 in 0 : vector<32x876xf32>, vector<32x876xf32>, vector<32x876xf32>, vector<32x876xf32>, vector<32x876xf32>, vector<32x876xf32>, vector<32x876xf32>, vector<32x876xf32>, vector<32x876xf32> -> vector<288x876xf32>
    %323 = arith.truncf %322 : vector<288x876xf32> to vector<288x876xbf16>
    %c0_73 = arith.constant 0 : index
    %c0_74 = arith.constant 0 : index
    %324 = vector.load %arg20[%c0_73, %c0_74] : memref<1x288xbf16, #tpu.memory_space<vmem>>, vector<1x288xbf16>
    %cst_75 = arith.constant dense<0.000000e+00> : vector<1x876xf32>
    %325 = tpu.matmul %324, %323, %cst_75 {dimension_numbers = #tpu.dot_dimension_numbers<[1], [0], [0], [1], [0, 0, 1, 1], [], []>} : vector<1x288xbf16>, vector<288x876xbf16>, vector<1x876xf32> -> vector<1x876xf32>
    %c0_76 = arith.constant 0 : index
    %c0_77 = arith.constant 0 : index
    %326 = vector.load %arg21[%c0_76, %c0_77] : memref<1x1xf32, #tpu.memory_space<vmem>>, vector<1x1xf32>
    %327 = vector.broadcast %326 : vector<1x1xf32> to vector<1x876xf32>
    %328 = arith.addf %325, %327 : vector<1x876xf32>
    %329 = vector.extract_strided_slice %328 {offsets = [0, 0], sizes = [1, 20], strides = [1, 1]} : vector<1x876xf32> to vector<1x20xf32>
    %330 = vector.extract_strided_slice %328 {offsets = [0, 22], sizes = [1, 20], strides = [1, 1]} : vector<1x876xf32> to vector<1x20xf32>
    %331 = vector.extract_strided_slice %328 {offsets = [0, 44], sizes = [1, 20], strides = [1, 1]} : vector<1x876xf32> to vector<1x20xf32>
    %332 = vector.extract_strided_slice %328 {offsets = [0, 66], sizes = [1, 20], strides = [1, 1]} : vector<1x876xf32> to vector<1x20xf32>
    %333 = vector.extract_strided_slice %328 {offsets = [0, 88], sizes = [1, 20], strides = [1, 1]} : vector<1x876xf32> to vector<1x20xf32>
    %334 = vector.extract_strided_slice %328 {offsets = [0, 110], sizes = [1, 20], strides = [1, 1]} : vector<1x876xf32> to vector<1x20xf32>
    %335 = vector.extract_strided_slice %328 {offsets = [0, 132], sizes = [1, 20], strides = [1, 1]} : vector<1x876xf32> to vector<1x20xf32>
    %336 = vector.extract_strided_slice %328 {offsets = [0, 154], sizes = [1, 20], strides = [1, 1]} : vector<1x876xf32> to vector<1x20xf32>
    %337 = vector.extract_strided_slice %328 {offsets = [0, 176], sizes = [1, 20], strides = [1, 1]} : vector<1x876xf32> to vector<1x20xf32>
    %338 = vector.extract_strided_slice %328 {offsets = [0, 198], sizes = [1, 20], strides = [1, 1]} : vector<1x876xf32> to vector<1x20xf32>
    %339 = vector.extract_strided_slice %328 {offsets = [0, 220], sizes = [1, 20], strides = [1, 1]} : vector<1x876xf32> to vector<1x20xf32>
    %340 = vector.extract_strided_slice %328 {offsets = [0, 242], sizes = [1, 20], strides = [1, 1]} : vector<1x876xf32> to vector<1x20xf32>
    %341 = vector.extract_strided_slice %328 {offsets = [0, 264], sizes = [1, 20], strides = [1, 1]} : vector<1x876xf32> to vector<1x20xf32>
    %342 = vector.extract_strided_slice %328 {offsets = [0, 286], sizes = [1, 20], strides = [1, 1]} : vector<1x876xf32> to vector<1x20xf32>
    %343 = vector.extract_strided_slice %328 {offsets = [0, 308], sizes = [1, 20], strides = [1, 1]} : vector<1x876xf32> to vector<1x20xf32>
    %344 = vector.extract_strided_slice %328 {offsets = [0, 330], sizes = [1, 20], strides = [1, 1]} : vector<1x876xf32> to vector<1x20xf32>
    %345 = vector.extract_strided_slice %328 {offsets = [0, 352], sizes = [1, 20], strides = [1, 1]} : vector<1x876xf32> to vector<1x20xf32>
    %346 = vector.extract_strided_slice %328 {offsets = [0, 374], sizes = [1, 20], strides = [1, 1]} : vector<1x876xf32> to vector<1x20xf32>
    %347 = vector.extract_strided_slice %328 {offsets = [0, 396], sizes = [1, 20], strides = [1, 1]} : vector<1x876xf32> to vector<1x20xf32>
    %348 = vector.extract_strided_slice %328 {offsets = [0, 418], sizes = [1, 20], strides = [1, 1]} : vector<1x876xf32> to vector<1x20xf32>
    %349 = tpu.concatenate %329, %330, %331, %332, %333, %334, %335, %336, %337, %338, %339, %340, %341, %342, %343, %344 in 1 : vector<1x20xf32>, vector<1x20xf32>, vector<1x20xf32>, vector<1x20xf32>, vector<1x20xf32>, vector<1x20xf32>, vector<1x20xf32>, vector<1x20xf32>, vector<1x20xf32>, vector<1x20xf32>, vector<1x20xf32>, vector<1x20xf32>, vector<1x20xf32>, vector<1x20xf32>, vector<1x20xf32>, vector<1x20xf32> -> vector<1x320xf32>
    %350 = tpu.concatenate %345, %346, %347, %348 in 1 : vector<1x20xf32>, vector<1x20xf32>, vector<1x20xf32>, vector<1x20xf32> -> vector<1x80xf32>
    %351 = tpu.concatenate %349, %350 in 1 : vector<1x320xf32>, vector<1x80xf32> -> vector<1x400xf32>
    %cst_78 = arith.constant 0.000000e+00 : f32
    %352 = vector.broadcast %cst_78 : f32 to vector<1x400xf32>
    %353 = arith.subf %352, %351 : vector<1x400xf32>
    %354 = math.exp %353 : vector<1x400xf32>
    %cst_79 = arith.constant 1.000000e+00 : f32
    %355 = vector.broadcast %cst_79 : f32 to vector<1x400xf32>
    %356 = arith.addf %355, %354 : vector<1x400xf32>
    %357 = tpu.reciprocal %356 : vector<1x400xf32> -> vector<1x400xf32>
    %c0_80 = arith.constant 0 : index
    %c0_81 = arith.constant 0 : index
    %c0_82 = arith.constant 0 : index
    %358 = vector.load %arg22[%c0_80, %c0_81, %c0_82] : memref<2x1x400xf32, #tpu.memory_space<vmem>>, vector<1x1x400xf32>
    %359 = vector.shape_cast %358 : vector<1x1x400xf32> to vector<1x400xf32>
    %360 = vector.shape_cast %357 : vector<1x400xf32> to vector<1x1x400xf32>
    tpu.vector_store %arg22[%c0_80, %c0_81, %c0_82], %360 {strides = array<i32>} : memref<2x1x400xf32, #tpu.memory_space<vmem>>, vector<1x1x400xf32>,
    %361 = vector.extract_strided_slice %328 {offsets = [0, 438], sizes = [1, 20], strides = [1, 1]} : vector<1x876xf32> to vector<1x20xf32>
    %362 = vector.extract_strided_slice %328 {offsets = [0, 460], sizes = [1, 20], strides = [1, 1]} : vector<1x876xf32> to vector<1x20xf32>
    %363 = vector.extract_strided_slice %328 {offsets = [0, 482], sizes = [1, 20], strides = [1, 1]} : vector<1x876xf32> to vector<1x20xf32>
    %364 = vector.extract_strided_slice %328 {offsets = [0, 504], sizes = [1, 20], strides = [1, 1]} : vector<1x876xf32> to vector<1x20xf32>
    %365 = vector.extract_strided_slice %328 {offsets = [0, 526], sizes = [1, 20], strides = [1, 1]} : vector<1x876xf32> to vector<1x20xf32>
    %366 = vector.extract_strided_slice %328 {offsets = [0, 548], sizes = [1, 20], strides = [1, 1]} : vector<1x876xf32> to vector<1x20xf32>
    %367 = vector.extract_strided_slice %328 {offsets = [0, 570], sizes = [1, 20], strides = [1, 1]} : vector<1x876xf32> to vector<1x20xf32>
    %368 = vector.extract_strided_slice %328 {offsets = [0, 592], sizes = [1, 20], strides = [1, 1]} : vector<1x876xf32> to vector<1x20xf32>
    %369 = vector.extract_strided_slice %328 {offsets = [0, 614], sizes = [1, 20], strides = [1, 1]} : vector<1x876xf32> to vector<1x20xf32>
    %370 = vector.extract_strided_slice %328 {offsets = [0, 636], sizes = [1, 20], strides = [1, 1]} : vector<1x876xf32> to vector<1x20xf32>
    %371 = vector.extract_strided_slice %328 {offsets = [0, 658], sizes = [1, 20], strides = [1, 1]} : vector<1x876xf32> to vector<1x20xf32>
    %372 = vector.extract_strided_slice %328 {offsets = [0, 680], sizes = [1, 20], strides = [1, 1]} : vector<1x876xf32> to vector<1x20xf32>
    %373 = vector.extract_strided_slice %328 {offsets = [0, 702], sizes = [1, 20], strides = [1, 1]} : vector<1x876xf32> to vector<1x20xf32>
    %374 = vector.extract_strided_slice %328 {offsets = [0, 724], sizes = [1, 20], strides = [1, 1]} : vector<1x876xf32> to vector<1x20xf32>
    %375 = vector.extract_strided_slice %328 {offsets = [0, 746], sizes = [1, 20], strides = [1, 1]} : vector<1x876xf32> to vector<1x20xf32>
    %376 = vector.extract_strided_slice %328 {offsets = [0, 768], sizes = [1, 20], strides = [1, 1]} : vector<1x876xf32> to vector<1x20xf32>
    %377 = vector.extract_strided_slice %328 {offsets = [0, 790], sizes = [1, 20], strides = [1, 1]} : vector<1x876xf32> to vector<1x20xf32>
    %378 = vector.extract_strided_slice %328 {offsets = [0, 812], sizes = [1, 20], strides = [1, 1]} : vector<1x876xf32> to vector<1x20xf32>
    %379 = vector.extract_strided_slice %328 {offsets = [0, 834], sizes = [1, 20], strides = [1, 1]} : vector<1x876xf32> to vector<1x20xf32>
    %380 = vector.extract_strided_slice %328 {offsets = [0, 856], sizes = [1, 20], strides = [1, 1]} : vector<1x876xf32> to vector<1x20xf32>
    %381 = tpu.concatenate %361, %362, %363, %364, %365, %366, %367, %368, %369, %370, %371, %372, %373, %374, %375, %376 in 1 : vector<1x20xf32>, vector<1x20xf32>, vector<1x20xf32>, vector<1x20xf32>, vector<1x20xf32>, vector<1x20xf32>, vector<1x20xf32>, vector<1x20xf32>, vector<1x20xf32>, vector<1x20xf32>, vector<1x20xf32>, vector<1x20xf32>, vector<1x20xf32>, vector<1x20xf32>, vector<1x20xf32>, vector<1x20xf32> -> vector<1x320xf32>
    %382 = tpu.concatenate %377, %378, %379, %380 in 1 : vector<1x20xf32>, vector<1x20xf32>, vector<1x20xf32>, vector<1x20xf32> -> vector<1x80xf32>
    %383 = tpu.concatenate %381, %382 in 1 : vector<1x320xf32>, vector<1x80xf32> -> vector<1x400xf32>
    %cst_83 = arith.constant 0.000000e+00 : f32
    %384 = vector.broadcast %cst_83 : f32 to vector<1x400xf32>
    %385 = arith.subf %384, %383 : vector<1x400xf32>
    %386 = math.exp %385 : vector<1x400xf32>
    %cst_84 = arith.constant 1.000000e+00 : f32
    %387 = vector.broadcast %cst_84 : f32 to vector<1x400xf32>
    %388 = arith.addf %387, %386 : vector<1x400xf32>
    %389 = tpu.reciprocal %388 : vector<1x400xf32> -> vector<1x400xf32>
    %c1 = arith.constant 1 : index
    %c0_85 = arith.constant 0 : index
    %c0_86 = arith.constant 0 : index
    %390 = vector.load %arg22[%c1, %c0_85, %c0_86] : memref<2x1x400xf32, #tpu.memory_space<vmem>>, vector<1x1x400xf32>
    %391 = vector.shape_cast %390 : vector<1x1x400xf32> to vector<1x400xf32>
    %392 = vector.shape_cast %389 : vector<1x400xf32> to vector<1x1x400xf32>
    tpu.vector_store %arg22[%c1, %c0_85, %c0_86], %392 {strides = array<i32>} : memref<2x1x400xf32, #tpu.memory_space<vmem>>, vector<1x1x400xf32>,
    return
  }
  func.func @transform_0(%arg0: i32) -> (i32, i32, i32) {
    %c0_i32 = arith.constant 0 : i32
    %c0_i32_0 = arith.constant 0 : i32
    %c0_i32_1 = arith.constant 0 : i32
    return %arg0, %c0_i32, %c0_i32_0 : i32, i32, i32
  }
  func.func @transform_1(%arg0: i32) -> (i32, i32) {
    %c0_i32 = arith.constant 0 : i32
    %c0_i32_0 = arith.constant 0 : i32
    %c0_i32_1 = arith.constant 0 : i32
    return %c0_i32, %c0_i32_0 : i32, i32
  }
  func.func @transform_2(%arg0: i32) -> (i32, i32) {
    %c0_i32 = arith.constant 0 : i32
    %c0_i32_0 = arith.constant 0 : i32
    %c0_i32_1 = arith.constant 0 : i32
    return %c0_i32, %c0_i32_0 : i32, i32
  }
  func.func @transform_3(%arg0: i32) -> (i32, i32) {
    %c0_i32 = arith.constant 0 : i32
    %c0_i32_0 = arith.constant 0 : i32
    %c0_i32_1 = arith.constant 0 : i32
    return %c0_i32, %c0_i32_0 : i32, i32
  }
  func.func @transform_4(%arg0: i32) -> (i32, i32) {
    %c0_i32 = arith.constant 0 : i32
    %c0_i32_0 = arith.constant 0 : i32
    %c0_i32_1 = arith.constant 0 : i32
    return %c0_i32, %c0_i32_0 : i32, i32
  }
  func.func @transform_5(%arg0: i32) -> (i32, i32) {
    %c0_i32 = arith.constant 0 : i32
    %c0_i32_0 = arith.constant 0 : i32
    %c0_i32_1 = arith.constant 0 : i32
    return %c0_i32, %c0_i32_0 : i32, i32
  }
  func.func @transform_6(%arg0: i32) -> (i32, i32) {
    %c0_i32 = arith.constant 0 : i32
    %c0_i32_0 = arith.constant 0 : i32
    %c0_i32_1 = arith.constant 0 : i32
    return %c0_i32, %c0_i32_0 : i32, i32
  }
  func.func @transform_7(%arg0: i32) -> (i32, i32) {
    %c0_i32 = arith.constant 0 : i32
    %c0_i32_0 = arith.constant 0 : i32
    %c0_i32_1 = arith.constant 0 : i32
    return %c0_i32, %c0_i32_0 : i32, i32
  }
  func.func @transform_8(%arg0: i32) -> (i32, i32) {
    %c0_i32 = arith.constant 0 : i32
    %c0_i32_0 = arith.constant 0 : i32
    %c0_i32_1 = arith.constant 0 : i32
    return %c0_i32, %c0_i32_0 : i32, i32
  }
  func.func @transform_9(%arg0: i32) -> (i32, i32) {
    %c0_i32 = arith.constant 0 : i32
    %c0_i32_0 = arith.constant 0 : i32
    %c0_i32_1 = arith.constant 0 : i32
    return %c0_i32, %c0_i32_0 : i32, i32
  }
  func.func @transform_10(%arg0: i32) -> (i32, i32) {
    %c0_i32 = arith.constant 0 : i32
    %c0_i32_0 = arith.constant 0 : i32
    %c0_i32_1 = arith.constant 0 : i32
    return %c0_i32, %c0_i32_0 : i32, i32
  }
  func.func @transform_11(%arg0: i32) -> (i32, i32) {
    %c0_i32 = arith.constant 0 : i32
    %c0_i32_0 = arith.constant 0 : i32
    %c0_i32_1 = arith.constant 0 : i32
    return %c0_i32, %c0_i32_0 : i32, i32
  }
  func.func @transform_12(%arg0: i32) -> (i32, i32) {
    %c0_i32 = arith.constant 0 : i32
    %c0_i32_0 = arith.constant 0 : i32
    %c0_i32_1 = arith.constant 0 : i32
    return %c0_i32, %c0_i32_0 : i32, i32
  }
  func.func @transform_13(%arg0: i32) -> (i32, i32) {
    %c0_i32 = arith.constant 0 : i32
    %c0_i32_0 = arith.constant 0 : i32
    %c0_i32_1 = arith.constant 0 : i32
    return %c0_i32, %c0_i32_0 : i32, i32
  }
  func.func @transform_14(%arg0: i32) -> (i32, i32) {
    %c0_i32 = arith.constant 0 : i32
    %c0_i32_0 = arith.constant 0 : i32
    %c0_i32_1 = arith.constant 0 : i32
    return %c0_i32, %c0_i32_0 : i32, i32
  }
  func.func @transform_15(%arg0: i32) -> (i32, i32) {
    %c0_i32 = arith.constant 0 : i32
    %c0_i32_0 = arith.constant 0 : i32
    %c0_i32_1 = arith.constant 0 : i32
    return %c0_i32, %c0_i32_0 : i32, i32
  }
  func.func @transform_16(%arg0: i32) -> (i32, i32) {
    %c0_i32 = arith.constant 0 : i32
    %c0_i32_0 = arith.constant 0 : i32
    %c0_i32_1 = arith.constant 0 : i32
    return %c0_i32, %c0_i32_0 : i32, i32
  }
  func.func @transform_17(%arg0: i32) -> (i32, i32) {
    %c0_i32 = arith.constant 0 : i32
    %c0_i32_0 = arith.constant 0 : i32
    %c0_i32_1 = arith.constant 0 : i32
    return %c0_i32, %c0_i32_0 : i32, i32
  }
  func.func @transform_18(%arg0: i32) -> (i32, i32) {
    %c0_i32 = arith.constant 0 : i32
    %c0_i32_0 = arith.constant 0 : i32
    %c0_i32_1 = arith.constant 0 : i32
    return %c0_i32, %c0_i32_0 : i32, i32
  }
  func.func @transform_19(%arg0: i32) -> (i32, i32) {
    %c0_i32 = arith.constant 0 : i32
    %c0_i32_0 = arith.constant 0 : i32
    %c0_i32_1 = arith.constant 0 : i32
    return %c0_i32, %c0_i32_0 : i32, i32
  }
  func.func @transform_20(%arg0: i32) -> (i32, i32) {
    %c0_i32 = arith.constant 0 : i32
    %c0_i32_0 = arith.constant 0 : i32
    %c0_i32_1 = arith.constant 0 : i32
    return %c0_i32, %c0_i32_0 : i32, i32
  }
  func.func @transform_21(%arg0: i32) -> (i32, i32, i32) {
    %c0_i32 = arith.constant 0 : i32
    %c0_i32_0 = arith.constant 0 : i32
    %c0_i32_1 = arith.constant 0 : i32
    return %arg0, %c0_i32, %c0_i32_0 : i32, i32, i32
  }
}

</mosaic_0001>

<llo_original>
// kernel: cdae_forward.1
$region0: #{cdae_forward.1}
  #allocation0 [shape = 'u32[]', space=smem, size = 0x4, offset = 0x4, fixed_abs, tag = 'smem constant byte address 0x4 - core index']
  #allocation1 [shape = 'u32[144,128]{1,0:T(1,128)}', space=vmem, size = 0x12000, scoped, tag = 'internal scratch']
  #allocation2 [shape = 'f32[1,1]{1,0:T(1,128)S(1)}', space=vmem, size = 0x200, scoped, tag = 'scoped memory for cdae_forward.1']
  %s0 = inlined_call_operand.vmem [shape: f32[2,1,324], index: 0, kind: input, shape index: {}]
  %s1 = inlined_call_operand.vmem [shape: bf16[32,9], index: 1, kind: input, shape index: {}]
  %s2 = inlined_call_operand.vmem [shape: f32[32,1], index: 2, kind: input, shape index: {}]
  %s3 = inlined_call_operand.vmem [shape: bf16[267,100], index: 3, kind: input, shape index: {}]
  %s4 = inlined_call_operand.hbm [shape: bf16[16,288], index: 4, kind: input, shape index: {}]
  %s5 = inlined_call_operand.vmem [shape: f32[16,1], index: 5, kind: input, shape index: {}]
  %s6 = inlined_call_operand.vmem [shape: bf16[67,36], index: 6, kind: input, shape index: {}]
  %s7 = inlined_call_operand.vmem [shape: bf16[8,144], index: 7, kind: input, shape index: {}]
  %s8 = inlined_call_operand.vmem [shape: f32[8,1], index: 8, kind: input, shape index: {}]
  %s9 = inlined_call_operand.hbm [shape: bf16[15,49], index: 9, kind: input, shape index: {}]
  %s10 = inlined_call_operand.hbm [shape: bf16[8,72], index: 10, kind: input, shape index: {}]
  %s11 = inlined_call_operand.vmem [shape: f32[8,1], index: 11, kind: input, shape index: {}]
  %s12 = inlined_call_operand.hbm [shape: bf16[33,121], index: 12, kind: input, shape index: {}]
  %s13 = inlined_call_operand.hbm [shape: bf16[16,32], index: 13, kind: input, shape index: {}]
  %s14 = inlined_call_operand.vmem [shape: f32[16,1], index: 14, kind: input, shape index: {}]
  %s15 = inlined_call_operand.vmem [shape: bf16[109,441], index: 15, kind: input, shape index: {}]
  %s16 = inlined_call_operand.hbm [shape: bf16[32,64], index: 16, kind: input, shape index: {}]
  %s17 = inlined_call_operand.vmem [shape: f32[32,1], index: 17, kind: input, shape index: {}]
  %s18 = inlined_call_operand.hbm [shape: bf16[419,484], index: 18, kind: input, shape index: {}]
  %s19 = inlined_call_operand.hbm [shape: bf16[1,288], index: 19, kind: input, shape index: {}]
  %s20 = inlined_call_operand.<no memory space> [shape: f32[1,1], index: 20, kind: input, shape index: {}]
  %s21 = inlined_call_operand.vmem [shape: f32[2,1,400], index: 21, kind: output, shape index: {}]
  %s22 = sld [smem:[#allocation0]]
  $region126: #{cdae_forward.1} parent=0
    _
  %s24 = ssub.s32 1, %s22
  %s25 = scalar_select 0, %s24, %s22
  %v26 = vstv %s20
  %27 = vst [vmem:[#allocation2] sm:$0x1] %v26
  $region1: #{cdae_forward.1} parent=0
    #allocation3 [shape = 'u8[12288]{0}', space=vmem, size = 0x3000, scoped, tag = 'input window, operand 4, single buffered']
    #allocation4 [shape = 's32[1]{0}', space=sflag, size = 0x4, scoped, tag = 'scoped memory for cdae_forward.1']
    #allocation5 [shape = 'u8[4096]{0}', space=vmem, size = 0x1000, scoped, tag = 'input window, operand 9, single buffered']
    #allocation6 [shape = 's32[1]{0}', space=sflag, size = 0x4, scoped, tag = 'scoped memory for cdae_forward.1']
    #allocation7 [shape = 'u8[2048]{0}', space=vmem, size = 0x800, scoped, tag = 'input window, operand 10, single buffered']
    #allocation8 [shape = 'u8[10240]{0}', space=vmem, size = 0x2800, scoped, tag = 'input window, operand 12, single buffered']
    #allocation9 [shape = 's32[1]{0}', space=sflag, size = 0x4, scoped, tag = 'scoped memory for cdae_forward.1']
    #allocation10 [shape = 'u8[4096]{0}', space=vmem, size = 0x1000, scoped, tag = 'input window, operand 13, single buffered']
    #allocation11 [shape = 'u8[8192]{0}', space=vmem, size = 0x2000, scoped, tag = 'input window, operand 16, single buffered']
    #allocation12 [shape = 's32[1]{0}', space=sflag, size = 0x4, scoped, tag = 'scoped memory for cdae_forward.1']
    #allocation13 [shape = 'u8[434176]{0}', space=vmem, size = 0x6a000, scoped, tag = 'input window, operand 18, single buffered']
    #allocation14 [shape = 'u8[1536]{0}', space=vmem, size = 0x800, scoped, tag = 'input window, operand 19, single buffered']
    #allocation15 [shape = 's32[1]{0}', space=sflag, size = 0x4, scoped, tag = 'scoped memory for cdae_forward.1']
    %28 = vsyncpa [#allocation4], 0
    %29 = vsyncpa [#allocation6], 0
    %30 = vsyncpa [#allocation9], 0
    %31 = vsyncpa [#allocation12], 0
    %32 = vsyncpa [#allocation15], 0
    // Predicated region
    $region2: #{cdae_forward.1} parent=1 // pred_check
      _
    $region3: #{cdae_forward.1} parent=1 // pred_check_branch
      %34 = sbr.rel (0) target = $region5
    $region4: #{cdae_forward.1} parent=1 // pred_region
      _
    $region5: #{cdae_forward.1} parent=1 // pred_fallthru
      _
    // Predicated region
    $region6: #{cdae_forward.1} parent=1 // pred_check
      _
    $region7: #{cdae_forward.1} parent=1 // pred_check_branch
      %36 = sbr.rel (0) target = $region9
    $region8: #{cdae_forward.1} parent=1 // pred_region
      _
    $region9: #{cdae_forward.1} parent=1 // pred_fallthru
      _
    // Predicated region
    $region10: #{cdae_forward.1} parent=1 // pred_check
      _
    $region11: #{cdae_forward.1} parent=1 // pred_check_branch
      %38 = sbr.rel (0) target = $region13
    $region12: #{cdae_forward.1} parent=1 // pred_region
      _
    $region13: #{cdae_forward.1} parent=1 // pred_fallthru
      _
    // Predicated region
    $region14: #{cdae_forward.1} parent=1 // pred_check
      _
    $region15: #{cdae_forward.1} parent=1 // pred_check_branch
      %40 = sbr.rel (0) target = $region17
    $region16: #{cdae_forward.1} parent=1 // pred_region
      _
    $region17: #{cdae_forward.1} parent=1 // pred_fallthru
      _
    // Predicated region
    $region18: #{cdae_forward.1} parent=1 // pred_check
      _
    $region19: #{cdae_forward.1} parent=1 // pred_check_branch
      %42 = sbr.rel (0) target = $region21
    $region20: #{cdae_forward.1} parent=1 // pred_region
      %s44 = ssub.s32 384, 384
      %45 = vsyncadd [#allocation4], %s44
      %s46 = sshll.u32 [#allocation3], 4
      %s47 = int_to_ptr.vmem [resolvable:$true] %s46
      %52 = dma.hbm_to_vmem [thread:$0]  %s4, 384, %s47, [#allocation4], 192, 192, 12
    $region21: #{cdae_forward.1} parent=1 // pred_fallthru
      _
    // Predicated region
    $region22: #{cdae_forward.1} parent=1 // pred_check
      _
    $region23: #{cdae_forward.1} parent=1 // pred_check_branch
      %54 = sbr.rel (0) target = $region25
    $region24: #{cdae_forward.1} parent=1 // pred_region
      _
    $region25: #{cdae_forward.1} parent=1 // pred_fallthru
      _
    // Predicated region
    $region26: #{cdae_forward.1} parent=1 // pred_check
      _
    $region27: #{cdae_forward.1} parent=1 // pred_check_branch
      %56 = sbr.rel (0) target = $region29
    $region28: #{cdae_forward.1} parent=1 // pred_region
      _
    $region29: #{cdae_forward.1} parent=1 // pred_fallthru
      _
    // Predicated region
    $region30: #{cdae_forward.1} parent=1 // pred_check
      _
    $region31: #{cdae_forward.1} parent=1 // pred_check_branch
      %58 = sbr.rel (0) target = $region33
    $region32: #{cdae_forward.1} parent=1 // pred_region
      _
    $region33: #{cdae_forward.1} parent=1 // pred_fallthru
      _
    // Predicated region
    $region34: #{cdae_forward.1} parent=1 // pred_check
      _
    $region35: #{cdae_forward.1} parent=1 // pred_check_branch
      %60 = sbr.rel (0) target = $region37
    $region36: #{cdae_forward.1} parent=1 // pred_region
      _
    $region37: #{cdae_forward.1} parent=1 // pred_fallthru
      _
    // Predicated region
    $region38: #{cdae_forward.1} parent=1 // pred_check
      _
    $region39: #{cdae_forward.1} parent=1 // pred_check_branch
      %62 = sbr.rel (0) target = $region41
    $region40: #{cdae_forward.1} parent=1 // pred_region
      %s64 = ssub.s32 128, 128
      %65 = vsyncadd [#allocation6], %s64
      %s66 = sshll.u32 [#allocation5], 4
      %s67 = int_to_ptr.vmem [resolvable:$true] %s66
      %72 = dma.hbm_to_vmem [thread:$0]  %s9, 128, %s67, [#allocation6], 64, 64, 4
    $region41: #{cdae_forward.1} parent=1 // pred_fallthru
      _
    // Predicated region
    $region42: #{cdae_forward.1} parent=1 // pred_check
      _
    $region43: #{cdae_forward.1} parent=1 // pred_check_branch
      %74 = sbr.rel (0) target = $region45
    $region44: #{cdae_forward.1} parent=1 // pred_region
      %s76 = ssub.s32 64, 64
      %77 = vsyncadd [#allocation6], %s76
      %s79 = sshll.u32 [#allocation7], 4
      %s80 = int_to_ptr.vmem [resolvable:$true] %s79
      %82 = dma.hbm_to_vmem [thread:$0]  %s10, 64, %s80, [#allocation6]
    $region45: #{cdae_forward.1} parent=1 // pred_fallthru
      _
    // Predicated region
    $region46: #{cdae_forward.1} parent=1 // pred_check
      _
    $region47: #{cdae_forward.1} parent=1 // pred_check_branch
      %84 = sbr.rel (0) target = $region49
    $region48: #{cdae_forward.1} parent=1 // pred_region
      _
    $region49: #{cdae_forward.1} parent=1 // pred_fallthru
      _
    // Predicated region
    $region50: #{cdae_forward.1} parent=1 // pred_check
      _
    $region51: #{cdae_forward.1} parent=1 // pred_check_branch
      %86 = sbr.rel (0) target = $region53
    $region52: #{cdae_forward.1} parent=1 // pred_region
      %s88 = ssub.s32 320, 320
      %89 = vsyncadd [#allocation9], %s88
      %s90 = sshll.u32 [#allocation8], 4
      %s91 = int_to_ptr.vmem [resolvable:$true] %s90
      %96 = dma.hbm_to_vmem [thread:$0]  %s12, 320, %s91, [#allocation9], 64, 64, 4
    $region53: #{cdae_forward.1} parent=1 // pred_fallthru
      _
    // Predicated region
    $region54: #{cdae_forward.1} parent=1 // pred_check
      _
    $region55: #{cdae_forward.1} parent=1 // pred_check_branch
      %98 = sbr.rel (0) target = $region57
    $region56: #{cdae_forward.1} parent=1 // pred_region
      %s100 = ssub.s32 128, 128
      %101 = vsyncadd [#allocation9], %s100
      %s102 = sshll.u32 [#allocation10], 4
      %s103 = int_to_ptr.vmem [resolvable:$true] %s102
      %108 = dma.hbm_to_vmem [thread:$0]  %s13, 128, %s103, [#allocation9], 64, 64, 4
    $region57: #{cdae_forward.1} parent=1 // pred_fallthru
      _
    // Predicated region
    $region58: #{cdae_forward.1} parent=1 // pred_check
      _
    $region59: #{cdae_forward.1} parent=1 // pred_check_branch
      %110 = sbr.rel (0) target = $region61
    $region60: #{cdae_forward.1} parent=1 // pred_region
      _
    $region61: #{cdae_forward.1} parent=1 // pred_fallthru
      _
    // Predicated region
    $region62: #{cdae_forward.1} parent=1 // pred_check
      _
    $region63: #{cdae_forward.1} parent=1 // pred_check_branch
      %112 = sbr.rel (0) target = $region65
    $region64: #{cdae_forward.1} parent=1 // pred_region
      _
    $region65: #{cdae_forward.1} parent=1 // pred_fallthru
      _
    // Predicated region
    $region66: #{cdae_forward.1} parent=1 // pred_check
      _
    $region67: #{cdae_forward.1} parent=1 // pred_check_branch
      %114 = sbr.rel (0) target = $region69
    $region68: #{cdae_forward.1} parent=1 // pred_region
      %s116 = ssub.s32 256, 256
      %117 = vsyncadd [#allocation12], %s116
      %s118 = sshll.u32 [#allocation11], 4
      %s119 = int_to_ptr.vmem [resolvable:$true] %s118
      %124 = dma.hbm_to_vmem [thread:$0]  %s16, 256, %s119, [#allocation12], 64, 64, 4
    $region69: #{cdae_forward.1} parent=1 // pred_fallthru
      _
    // Predicated region
    $region70: #{cdae_forward.1} parent=1 // pred_check
      _
    $region71: #{cdae_forward.1} parent=1 // pred_check_branch
      %126 = sbr.rel (0) target = $region73
    $region72: #{cdae_forward.1} parent=1 // pred_region
      _
    $region73: #{cdae_forward.1} parent=1 // pred_fallthru
      _
    // Predicated region
    $region74: #{cdae_forward.1} parent=1 // pred_check
      _
    $region75: #{cdae_forward.1} parent=1 // pred_check_branch
      %128 = sbr.rel (0) target = $region77
    $region76: #{cdae_forward.1} parent=1 // pred_region
      %s130 = ssub.s32 13568, 13568
      %131 = vsyncadd [#allocation12], %s130
      %s132 = sshll.u32 [#allocation13], 4
      %s133 = int_to_ptr.vmem [resolvable:$true] %s132
      %138 = dma.hbm_to_vmem [thread:$0]  %s18, 13568, %s133, [#allocation12], 256, 256, 16
    $region77: #{cdae_forward.1} parent=1 // pred_fallthru
      _
    // Predicated region
    $region78: #{cdae_forward.1} parent=1 // pred_check
      _
    $region79: #{cdae_forward.1} parent=1 // pred_check_branch
      %140 = sbr.rel (0) target = $region81
    $region80: #{cdae_forward.1} parent=1 // pred_region
      %s142 = ssub.s32 48, 48
      %143 = vsyncadd [#allocation15], %s142
      %s145 = sshll.u32 [#allocation14], 4
      %s146 = int_to_ptr.vmem [resolvable:$true] %s145
      %148 = dma.hbm_to_vmem [thread:$0]  %s19, 48, %s146, [#allocation15]
    $region81: #{cdae_forward.1} parent=1 // pred_fallthru
      _
    // Predicated region
    $region82: #{cdae_forward.1} parent=1 // pred_check
      _
    $region83: #{cdae_forward.1} parent=1 // pred_check_branch
      %150 = sbr.rel (0) target = $region85
    $region84: #{cdae_forward.1} parent=1 // pred_region
      _
    $region85: #{cdae_forward.1} parent=1 // pred_fallthru
      _
    // Predicated region
    $region86: #{cdae_forward.1} parent=1 // pred_check
      _
    $region87: #{cdae_forward.1} parent=1 // pred_check_branch
      %152 = sbr.rel (0) target = $region89
    $region88: #{cdae_forward.1} parent=1 // pred_region
      %153 = dma.done [#allocation4], 384
    $region89: #{cdae_forward.1} parent=1 // pred_fallthru
      _
    // Predicated region
    $region90: #{cdae_forward.1} parent=1 // pred_check
      _
    $region91: #{cdae_forward.1} parent=1 // pred_check_branch
      %155 = sbr.rel (0) target = $region93
    $region92: #{cdae_forward.1} parent=1 // pred_region
      %156 = dma.done [#allocation6], 128
    $region93: #{cdae_forward.1} parent=1 // pred_fallthru
      _
    // Predicated region
    $region94: #{cdae_forward.1} parent=1 // pred_check
      _
    $region95: #{cdae_forward.1} parent=1 // pred_check_branch
      %158 = sbr.rel (0) target = $region97
    $region96: #{cdae_forward.1} parent=1 // pred_region
      %159 = dma.done [#allocation6], 64
    $region97: #{cdae_forward.1} parent=1 // pred_fallthru
      _
    // Predicated region
    $region98: #{cdae_forward.1} parent=1 // pred_check
      _
    $region99: #{cdae_forward.1} parent=1 // pred_check_branch
      %161 = sbr.rel (0) target = $region101
    $region100: #{cdae_forward.1} parent=1 // pred_region
      %162 = dma.done [#allocation9], 320
    $region101: #{cdae_forward.1} parent=1 // pred_fallthru
      _
    // Predicated region
    $region102: #{cdae_forward.1} parent=1 // pred_check
      _
    $region103: #{cdae_forward.1} parent=1 // pred_check_branch
      %164 = sbr.rel (0) target = $region105
    $region104: #{cdae_forward.1} parent=1 // pred_region
      %165 = dma.done [#allocation9], 128
    $region105: #{cdae_forward.1} parent=1 // pred_fallthru
      _
    // Predicated region
    $region106: #{cdae_forward.1} parent=1 // pred_check
      _
    $region107: #{cdae_forward.1} parent=1 // pred_check_branch
      %167 = sbr.rel (0) target = $region109
    $region108: #{cdae_forward.1} parent=1 // pred_region
      %168 = dma.done [#allocation12], 256
    $region109: #{cdae_forward.1} parent=1 // pred_fallthru
      _
    // Predicated region
    $region110: #{cdae_forward.1} parent=1 // pred_check
      _
    $region111: #{cdae_forward.1} parent=1 // pred_check_branch
      %170 = sbr.rel (0) target = $region113
    $region112: #{cdae_forward.1} parent=1 // pred_region
      %171 = dma.done [#allocation12], 13568
    $region113: #{cdae_forward.1} parent=1 // pred_fallthru
      _
    // Predicated region
    $region114: #{cdae_forward.1} parent=1 // pred_check
      _
    $region115: #{cdae_forward.1} parent=1 // pred_check_branch
      %173 = sbr.rel (0) target = $region117
    $region116: #{cdae_forward.1} parent=1 // pred_region
      %174 = dma.done [#allocation15], 48
    $region117: #{cdae_forward.1} parent=1 // pred_fallthru
      _
    %v176 = vld [vmem:[%s0] sm:$0x7]
    %v177 = vld [vmem:[%s0 + $0x3] sm:$0x7]
    %v179 = vlaneseq
    %v180 = vshrl.u32 %v179, 7
    %v181 = vsub.s32 0, %v180
    %v182 = vrot.slane %v176, %v181
    %v183 = vlaneseq
    %v184 = vshrl.u32 %v183, 7
    %v185 = vsub.s32 1, %v184
    %v186 = vrot.slane %v176, %v185
    %v187 = vlaneseq
    %v188 = vshrl.u32 %v187, 7
    %v189 = vsub.s32 2, %v188
    %v190 = vrot.slane %v176, %v189
    %v195 = vlaneseq
    %v196 = vshrl.u32 %v195, 7
    %v197 = vsub.s32 0, %v196
    %v198 = vrot.slane %v177, %v197
    %v199 = vlaneseq
    %v200 = vshrl.u32 %v199, 7
    %v201 = vsub.s32 1, %v200
    %v202 = vrot.slane %v177, %v201
    %v203 = vlaneseq
    %v204 = vshrl.u32 %v203, 7
    %v205 = vsub.s32 2, %v204
    %v206 = vrot.slane %v177, %v205
    %207 = vrot.lane.b32.xlu0 %v198, 30
    %v208 = vpop.permute.xlu0 %207
    %209 = vrot.lane.b32.xlu0 %v202, 30
    %v210 = vpop.permute.xlu0 %209
    %211 = vrot.lane.b32.xlu0 %v206, 30
    %v212 = vpop.permute.xlu0 %211
    %vm213 = vcmask 244736
    %v214 = vsel %vm213, %v208, %v210
    %v215 = vsel %vm213, %v210, %v212
    %v219 = vsel %vm213, %v190, %v208
    %220 = vrot.lane.b32.xlu0 %v182, 127
    %v221 = vpop.permute.xlu0 %220
    %222 = vrot.lane.b32.xlu0 %v186, 127
    %v223 = vpop.permute.xlu0 %222
    %224 = vrot.lane.b32.xlu0 %v190, 127
    %v225 = vpop.permute.xlu0 %224
    %vm226 = vcmask 1039360
    %v227 = vsel %vm226, %v221, %v223
    %v228 = vsel %vm226, %v223, %v225
    %230 = vrot.lane.b32.xlu0 %v198, 29
    %v231 = vpop.permute.xlu0 %230
    %232 = vrot.lane.b32.xlu0 %v202, 29
    %v233 = vpop.permute.xlu0 %232
    %234 = vrot.lane.b32.xlu0 %v206, 29
    %v235 = vpop.permute.xlu0 %234
    %vm236 = vcmask 236544
    %v237 = vsel %vm236, %v231, %v233
    %v238 = vsel %vm236, %v233, %v235
    %v240 = vsel %vm213, %v225, %v231
    %241 = vrot.lane.b32.xlu0 %v182, 126
    %v242 = vpop.permute.xlu0 %241
    %243 = vrot.lane.b32.xlu0 %v186, 126
    %v244 = vpop.permute.xlu0 %243
    %245 = vrot.lane.b32.xlu0 %v190, 126
    %v246 = vpop.permute.xlu0 %245
    %vm247 = vcmask 1031168
    %v248 = vsel %vm247, %v242, %v244
    %v249 = vsel %vm247, %v244, %v246
    %251 = vrot.lane.b32.xlu0 %v198, 28
    %v252 = vpop.permute.xlu0 %251
    %253 = vrot.lane.b32.xlu0 %v202, 28
    %v254 = vpop.permute.xlu0 %253
    %255 = vrot.lane.b32.xlu0 %v206, 28
    %v256 = vpop.permute.xlu0 %255
    %vm257 = vcmask 228352
    %v258 = vsel %vm257, %v252, %v254
    %v259 = vsel %vm257, %v254, %v256
    %v261 = vsel %vm213, %v246, %v252
    %262 = vrot.lane.b32.xlu0 %v182, 110
    %v263 = vpop.permute.xlu0 %262
    %264 = vrot.lane.b32.xlu0 %v186, 110
    %v265 = vpop.permute.xlu0 %264
    %266 = vrot.lane.b32.xlu0 %v190, 110
    %v267 = vpop.permute.xlu0 %266
    %vm268 = vcmask 900096
    %v269 = vsel %vm268, %v263, %v265
    %v270 = vsel %vm268, %v265, %v267
    %272 = vrot.lane.b32.xlu0 %v198, 12
    %v273 = vpop.permute.xlu0 %272
    %274 = vrot.lane.b32.xlu0 %v202, 12
    %v275 = vpop.permute.xlu0 %274
    %276 = vrot.lane.b32.xlu0 %v206, 12
    %v277 = vpop.permute.xlu0 %276
    %vm278 = vcmask 97280
    %v279 = vsel %vm278, %v273, %v275
    %v280 = vsel %vm278, %v275, %v277
    %v282 = vsel %vm213, %v267, %v273
    %283 = vrot.lane.b32.xlu0 %v182, 109
    %v284 = vpop.permute.xlu0 %283
    %285 = vrot.lane.b32.xlu0 %v186, 109
    %v286 = vpop.permute.xlu0 %285
    %287 = vrot.lane.b32.xlu0 %v190, 109
    %v288 = vpop.permute.xlu0 %287
    %vm289 = vcmask 891904
    %v290 = vsel %vm289, %v284, %v286
    %v291 = vsel %vm289, %v286, %v288
    %293 = vrot.lane.b32.xlu0 %v198, 11
    %v294 = vpop.permute.xlu0 %293
    %295 = vrot.lane.b32.xlu0 %v202, 11
    %v296 = vpop.permute.xlu0 %295
    %297 = vrot.lane.b32.xlu0 %v206, 11
    %v298 = vpop.permute.xlu0 %297
    %vm299 = vcmask 89088
    %v300 = vsel %vm299, %v294, %v296
    %v301 = vsel %vm299, %v296, %v298
    %v303 = vsel %vm213, %v288, %v294
    %304 = vrot.lane.b32.xlu0 %v182, 108
    %v305 = vpop.permute.xlu0 %304
    %306 = vrot.lane.b32.xlu0 %v186, 108
    %v307 = vpop.permute.xlu0 %306
    %308 = vrot.lane.b32.xlu0 %v190, 108
    %v309 = vpop.permute.xlu0 %308
    %vm310 = vcmask 883712
    %v311 = vsel %vm310, %v305, %v307
    %v312 = vsel %vm310, %v307, %v309
    %314 = vrot.lane.b32.xlu0 %v198, 10
    %v315 = vpop.permute.xlu0 %314
    %316 = vrot.lane.b32.xlu0 %v202, 10
    %v317 = vpop.permute.xlu0 %316
    %318 = vrot.lane.b32.xlu0 %v206, 10
    %v319 = vpop.permute.xlu0 %318
    %vm320 = vcmask 80896
    %v321 = vsel %vm320, %v315, %v317
    %v322 = vsel %vm320, %v317, %v319
    %v324 = vsel %vm213, %v309, %v315
    %325 = vrot.lane.b32.xlu0 %v182, 92
    %v326 = vpop.permute.xlu0 %325
    %327 = vrot.lane.b32.xlu0 %v186, 92
    %v328 = vpop.permute.xlu0 %327
    %329 = vrot.lane.b32.xlu0 %v190, 92
    %v330 = vpop.permute.xlu0 %329
    %vm331 = vcmask 752640
    %v332 = vsel %vm331, %v326, %v328
    %v333 = vsel %vm331, %v328, %v330
    %335 = vrot.lane.b32.xlu0 %v198, 122
    %v336 = vpop.permute.xlu0 %335
    %337 = vrot.lane.b32.xlu0 %v202, 122
    %v338 = vpop.permute.xlu0 %337
    %339 = vrot.lane.b32.xlu0 %v206, 122
    %v340 = vpop.permute.xlu0 %339
    %vm341 = vcmask 998400
    %v342 = vsel %vm341, %v336, %v338
    %v343 = vsel %vm341, %v338, %v340
    %v345 = vsel %vm213, %v330, %v342
    %346 = vrot.lane.b32.xlu0 %v182, 91
    %v347 = vpop.permute.xlu0 %346
    %348 = vrot.lane.b32.xlu0 %v186, 91
    %v349 = vpop.permute.xlu0 %348
    %350 = vrot.lane.b32.xlu0 %v190, 91
    %v351 = vpop.permute.xlu0 %350
    %vm352 = vcmask 744448
    %v353 = vsel %vm352, %v347, %v349
    %v354 = vsel %vm352, %v349, %v351
    %356 = vrot.lane.b32.xlu0 %v198, 121
    %v357 = vpop.permute.xlu0 %356
    %358 = vrot.lane.b32.xlu0 %v202, 121
    %v359 = vpop.permute.xlu0 %358
    %360 = vrot.lane.b32.xlu0 %v206, 121
    %v361 = vpop.permute.xlu0 %360
    %vm362 = vcmask 990208
    %v363 = vsel %vm362, %v357, %v359
    %v364 = vsel %vm362, %v359, %v361
    %v366 = vsel %vm213, %v351, %v363
    %367 = vrot.lane.b32.xlu0 %v182, 90
    %v368 = vpop.permute.xlu0 %367
    %369 = vrot.lane.b32.xlu0 %v186, 90
    %v370 = vpop.permute.xlu0 %369
    %371 = vrot.lane.b32.xlu0 %v190, 90
    %v372 = vpop.permute.xlu0 %371
    %vm373 = vcmask 736256
    %v374 = vsel %vm373, %v368, %v370
    %v375 = vsel %vm373, %v370, %v372
    %379 = vrot.lane.b32.xlu0 %v198, 120
    %v380 = vpop.permute.xlu0 %379
    %381 = vrot.lane.b32.xlu0 %v202, 120
    %v382 = vpop.permute.xlu0 %381
    %383 = vrot.lane.b32.xlu0 %v206, 120
    %v384 = vpop.permute.xlu0 %383
    %vm385 = vcmask 982016
    %v386 = vsel %vm385, %v380, %v382
    %v387 = vsel %vm385, %v382, %v384
    %v391 = vsel %vm213, %v372, %v386
    %v393 = vrot.slane %v227, 7
    %v394 = vrot.slane %v228, 7
    %v395 = vrot.slane %v240, 7
    %v396 = vrot.slane %v237, 7
    %v397 = vrot.slane %v238, 7
    %v404 = vrot.slane %v248, 6
    %v405 = vrot.slane %v249, 6
    %v406 = vrot.slane %v261, 6
    %v407 = vrot.slane %v258, 6
    %v408 = vrot.slane %v259, 6
    %v415 = vrot.slane %v269, 5
    %v416 = vrot.slane %v270, 5
    %v417 = vrot.slane %v282, 5
    %v418 = vrot.slane %v279, 5
    %v419 = vrot.slane %v280, 5
    %v426 = vrot.slane %v290, 4
    %v427 = vrot.slane %v291, 4
    %v428 = vrot.slane %v303, 4
    %v429 = vrot.slane %v300, 4
    %v430 = vrot.slane %v301, 4
    %v437 = vrot.slane %v311, 3
    %v438 = vrot.slane %v312, 3
    %v439 = vrot.slane %v324, 3
    %v440 = vrot.slane %v321, 3
    %v441 = vrot.slane %v322, 3
    %v448 = vrot.slane %v332, 2
    %v449 = vrot.slane %v333, 2
    %v450 = vrot.slane %v345, 2
    %v451 = vrot.slane %v343, 2
    %v452 = vrot.slane %v340, 2
    %v459 = vrot.slane %v353, 1
    %v460 = vrot.slane %v354, 1
    %v461 = vrot.slane %v366, 1
    %v462 = vrot.slane %v364, 1
    %v463 = vrot.slane %v361, 1
    %vm469 = vcmask 1040384
    %v470 = vsel %vm469, %v182, %v393
    %v471 = vsel %vm469, %v186, %v394
    %v472 = vsel %vm469, %v219, %v395
    %v473 = vsel %vm469, %v214, %v396
    %v474 = vsel %vm469, %v215, %v397
    %vm475 = vcmask 1041408
    %v476 = vsel %vm475, %v470, %v404
    %v477 = vsel %vm475, %v471, %v405
    %v478 = vsel %vm475, %v472, %v406
    %v479 = vsel %vm475, %v473, %v407
    %v480 = vsel %vm475, %v474, %v408
    %vm481 = vcmask 1042432
    %v482 = vsel %vm481, %v476, %v415
    %v483 = vsel %vm481, %v477, %v416
    %v484 = vsel %vm481, %v478, %v417
    %v485 = vsel %vm481, %v479, %v418
    %v486 = vsel %vm481, %v480, %v419
    %vm487 = vcmask 1043456
    %v488 = vsel %vm487, %v482, %v426
    %v489 = vsel %vm487, %v483, %v427
    %v490 = vsel %vm487, %v484, %v428
    %v491 = vsel %vm487, %v485, %v429
    %v492 = vsel %vm487, %v486, %v430
    %vm493 = vcmask 1044480
    %v494 = vsel %vm493, %v488, %v437
    %v495 = vsel %vm493, %v489, %v438
    %v496 = vsel %vm493, %v490, %v439
    %v497 = vsel %vm493, %v491, %v440
    %v498 = vsel %vm493, %v492, %v441
    %vm499 = vcmask 1045504
    %v500 = vsel %vm499, %v494, %v448
    %v501 = vsel %vm499, %v495, %v449
    %v502 = vsel %vm499, %v496, %v450
    %v503 = vsel %vm499, %v497, %v451
    %v504 = vsel %vm499, %v498, %v452
    %vm505 = vcmask 1046528
    %v506 = vsel %vm505, %v500, %v459
    %v507 = vsel %vm505, %v501, %v460
    %v508 = vsel %vm505, %v502, %v461
    %v509 = vsel %vm505, %v503, %v462
    %v510 = vsel %vm505, %v504, %v463
    %v511 = vpack.c.bf16 %v374, %v506
    %v512 = vpack.c.bf16 %v375, %v507
    %v513 = vpack.c.bf16 %v391, %v508
    %v514 = vpack.c.bf16 %v387, %v509
    %v515 = vpack.c.bf16 %v384, %v510
    %v516 = vld [vmem:[%s1] sm:$0xf]
    %v517 = vld [vmem:[%s1 + $0x4] sm:$0xf]
    %v518 = vld [vmem:[%s1 + $0x8] sm:$0xf]
    %v519 = vld [vmem:[%s1 + $0xc] sm:$0xf]
    %v520 = vld [vmem:[%s2] sm:$0xff]
    %v521 = vld [vmem:[%s2 + $0x8] sm:$0xff]
    %v522 = vld [vmem:[%s2 + $0x10] sm:$0xff]
    %v523 = vld [vmem:[%s2 + $0x18] sm:$0xff]
    %525 = vset.pattern.permute.xlu0 0
    %526 = vperm.xlu0 %525, %v520
    %v527 = vpop.permute.xlu0 %526
    %530 = vset.pattern.permute.xlu0 0
    %531 = vperm.xlu0 %530, %v521
    %v532 = vpop.permute.xlu0 %531
    %535 = vset.pattern.permute.xlu0 0
    %536 = vperm.xlu0 %535, %v522
    %v537 = vpop.permute.xlu0 %536
    %540 = vset.pattern.permute.xlu0 0
    %541 = vperm.xlu0 %540, %v523
    %v542 = vpop.permute.xlu0 %541
    %v548 = vunpack.c.l.b16 %v516
    %v549 = vunpack.c.l.b16 %v517
    %v550 = vunpack.c.l.b16 %v518
    %v551 = vunpack.c.l.b16 %v519
    %v552 = vpack.c.b16 %v549, %v548
    %v553 = vpack.c.b16 %v551, %v550
    %vm554 = vcmask 72704
    %v556 = vsel %vm554, %v552, 0
    %v559 = vsel %vm554, %v553, 0
    %v561 = vsel %vm487, 4294967295, 65535
    %v562 = vsel %vm493, %v561, 0
    %v564 = vand.u32 %v511, %v562
    %v567 = vand.u32 %v512, %v562
    %v570 = vand.u32 %v513, %v562
    %v573 = vand.u32 %v514, %v562
    %v576 = vand.u32 %v515, %v562
    %578 = vmatprep.subr.bf16.mxu0 %v567
    %579 = vmatpush1.bf16.msra.mxu0 %v564
    %580 = vmatprep.subr.bf16.mxu0 0
    %581 = vmatpush1.bf16.msra.mxu0 0
    %582 = vmatprep.subr.bf16.mxu0 0
    %583 = vmatpush1.bf16.msra.mxu0 0
    %584 = vmatprep.subr.bf16.mxu0 0
    %585 = vmatpush1.bf16.msra.mxu0 0
    %586 = vmatprep.subr.bf16.mxu0 0
    %587 = vmatpush1.bf16.msra.mxu0 0
    %588 = vmatprep.subr.bf16.mxu0 0
    %589 = vmatpush1.bf16.msra.mxu0 0
    %590 = vmatprep.subr.bf16.mxu0 0
    %591 = vmatpush1.bf16.msra.mxu0 0
    %592 = vmatprep.subr.bf16.mxu0 0
    %593 = vmatpush1.bf16.msra.mxu0 0
    %594 = vmatprep.subr.bf16.mxu0 0
    %595 = vmatpush1.bf16.msra.mxu0 0
    %596 = vmatprep.subr.bf16.mxu0 0
    %597 = vmatpush1.bf16.msra.mxu0 0
    %598 = vmatprep.subr.bf16.mxu0 0
    %599 = vmatpush1.bf16.msra.mxu0 0
    %600 = vmatprep.subr.bf16.mxu0 0
    %601 = vmatpush1.bf16.msra.mxu0 0
    %602 = vmatprep.subr.bf16.mxu0 0
    %603 = vmatpush1.bf16.msra.mxu0 0
    %604 = vmatprep.subr.bf16.mxu0 0
    %605 = vmatpush1.bf16.msra.mxu0 0
    %606 = vmatprep.subr.bf16.mxu0 0
    %607 = vmatpush1.bf16.msra.mxu0 0
    %608 = vmatprep.subr.bf16.mxu0 0
    %609 = vmatpush1.bf16.msra.mxu0 0
    %610 = vmatprep.mubr.bf16.mxu0 0
    %611 = vmatmul.mubr.bf16.gmra.mrb[0].mxu0 %v556
    %v612 = vpop.f32.mrb[0].mxu0
    %v613 = vadd.f32 %v527, %v612
    %v614 = vpop.f32.mrb[0].mxu0
    %v615 = vadd.f32 %v527, %v614
    %v616 = vpop.f32.mrb[0].mxu0
    %v617 = vadd.f32 %v532, %v616
    %v618 = vpop.f32.mrb[0].mxu0
    %v619 = vadd.f32 %v532, %v618
    %620 = vmatprep.mubr.bf16.mxu0 0
    %621 = vmatmul.mubr.bf16.gmra.mrb[0].mxu0 %v559
    %v622 = vpop.f32.mrb[0].mxu0
    %v623 = vadd.f32 %v537, %v622
    %v624 = vpop.f32.mrb[0].mxu0
    %v625 = vadd.f32 %v537, %v624
    %v626 = vpop.f32.mrb[0].mxu0
    %v627 = vadd.f32 %v542, %v626
    %v628 = vpop.f32.mrb[0].mxu0
    %v629 = vadd.f32 %v542, %v628
    %630 = vdwg.mxu0
    %631 = vmatprep.subr.bf16.mxu0 %v573
    %632 = vmatpush1.bf16.msra.mxu0 %v570
    %633 = vmatprep.subr.bf16.mxu0 0
    %634 = vmatpush1.bf16.msra.mxu0 0
    %635 = vmatprep.subr.bf16.mxu0 0
    %636 = vmatpush1.bf16.msra.mxu0 0
    %637 = vmatprep.subr.bf16.mxu0 0
    %638 = vmatpush1.bf16.msra.mxu0 0
    %639 = vmatprep.subr.bf16.mxu0 0
    %640 = vmatpush1.bf16.msra.mxu0 0
    %641 = vmatprep.subr.bf16.mxu0 0
    %642 = vmatpush1.bf16.msra.mxu0 0
    %643 = vmatprep.subr.bf16.mxu0 0
    %644 = vmatpush1.bf16.msra.mxu0 0
    %645 = vmatprep.subr.bf16.mxu0 0
    %646 = vmatpush1.bf16.msra.mxu0 0
    %647 = vmatprep.subr.bf16.mxu0 0
    %648 = vmatpush1.bf16.msra.mxu0 0
    %649 = vmatprep.subr.bf16.mxu0 0
    %650 = vmatpush1.bf16.msra.mxu0 0
    %651 = vmatprep.subr.bf16.mxu0 0
    %652 = vmatpush1.bf16.msra.mxu0 0
    %653 = vmatprep.subr.bf16.mxu0 0
    %654 = vmatpush1.bf16.msra.mxu0 0
    %655 = vmatprep.subr.bf16.mxu0 0
    %656 = vmatpush1.bf16.msra.mxu0 0
    %657 = vmatprep.subr.bf16.mxu0 0
    %658 = vmatpush1.bf16.msra.mxu0 0
    %659 = vmatprep.subr.bf16.mxu0 0
    %660 = vmatpush1.bf16.msra.mxu0 0
    %661 = vmatprep.subr.bf16.mxu0 0
    %662 = vmatpush1.bf16.msra.mxu0 0
    %663 = vmatprep.mubr.bf16.mxu0 0
    %664 = vmatmul.mubr.bf16.gmra.mrb[0].mxu0 %v556
    %v665 = vpop.f32.mrb[0].mxu0
    %v666 = vadd.f32 %v527, %v665
    %v667 = vpop.f32.mrb[0].mxu0
    %v668 = vadd.f32 %v527, %v667
    %v669 = vpop.f32.mrb[0].mxu0
    %v670 = vadd.f32 %v532, %v669
    %v671 = vpop.f32.mrb[0].mxu0
    %v672 = vadd.f32 %v532, %v671
    %673 = vmatprep.mubr.bf16.mxu0 0
    %674 = vmatmul.mubr.bf16.gmra.mrb[0].mxu0 %v559
    %v675 = vpop.f32.mrb[0].mxu0
    %v676 = vadd.f32 %v537, %v675
    %v677 = vpop.f32.mrb[0].mxu0
    %v678 = vadd.f32 %v537, %v677
    %v679 = vpop.f32.mrb[0].mxu0
    %v680 = vadd.f32 %v542, %v679
    %v681 = vpop.f32.mrb[0].mxu0
    %v682 = vadd.f32 %v542, %v681
    %683 = vdwg.mxu0
    %684 = vmatprep.subr.bf16.mxu0 0
    %685 = vmatpush1.bf16.msra.mxu0 %v576
    %686 = vmatprep.subr.bf16.mxu0 0
    %687 = vmatpush1.bf16.msra.mxu0 0
    %688 = vmatprep.subr.bf16.mxu0 0
    %689 = vmatpush1.bf16.msra.mxu0 0
    %690 = vmatprep.subr.bf16.mxu0 0
    %691 = vmatpush1.bf16.msra.mxu0 0
    %692 = vmatprep.subr.bf16.mxu0 0
    %693 = vmatpush1.bf16.msra.mxu0 0
    %694 = vmatprep.subr.bf16.mxu0 0
    %695 = vmatpush1.bf16.msra.mxu0 0
    %696 = vmatprep.subr.bf16.mxu0 0
    %697 = vmatpush1.bf16.msra.mxu0 0
    %698 = vmatprep.subr.bf16.mxu0 0
    %699 = vmatpush1.bf16.msra.mxu0 0
    %700 = vmatprep.subr.bf16.mxu0 0
    %701 = vmatpush1.bf16.msra.mxu0 0
    %702 = vmatprep.subr.bf16.mxu0 0
    %703 = vmatpush1.bf16.msra.mxu0 0
    %704 = vmatprep.subr.bf16.mxu0 0
    %705 = vmatpush1.bf16.msra.mxu0 0
    %706 = vmatprep.subr.bf16.mxu0 0
    %707 = vmatpush1.bf16.msra.mxu0 0
    %708 = vmatprep.subr.bf16.mxu0 0
    %709 = vmatpush1.bf16.msra.mxu0 0
    %710 = vmatprep.subr.bf16.mxu0 0
    %711 = vmatpush1.bf16.msra.mxu0 0
    %712 = vmatprep.subr.bf16.mxu0 0
    %713 = vmatpush1.bf16.msra.mxu0 0
    %714 = vmatprep.subr.bf16.mxu0 0
    %715 = vmatpush1.bf16.msra.mxu0 0
    %716 = vmatprep.mubr.bf16.mxu0 0
    %717 = vmatmul.mubr.bf16.gmra.mrb[0].mxu0 %v556
    %v718 = vpop.f32.mrb[0].mxu0
    %v719 = vadd.f32 %v527, %v718
    %v720 = vpop.f32.mrb[0].mxu0
    %v721 = vpop.f32.mrb[0].mxu0
    %v722 = vadd.f32 %v532, %v721
    %v723 = vpop.f32.mrb[0].mxu0
    %724 = vmatprep.mubr.bf16.mxu0 0
    %725 = vmatmul.mubr.bf16.gmra.mrb[0].mxu0 %v559
    %v726 = vpop.f32.mrb[0].mxu0
    %v727 = vadd.f32 %v537, %v726
    %v728 = vpop.f32.mrb[0].mxu0
    %v729 = vpop.f32.mrb[0].mxu0
    %v730 = vadd.f32 %v542, %v729
    %v731 = vpop.f32.mrb[0].mxu0
    %732 = vdwg.mxu0
    %v733 = vmax.f32 %v613, 0.0
    %v734 = vmax.f32 %v615, 0.0
    %v735 = vmax.f32 %v666, 0.0
    %v736 = vmax.f32 %v668, 0.0
    %v737 = vmax.f32 %v719, 0.0
    %v738 = vmax.f32 %v617, 0.0
    %v739 = vmax.f32 %v619, 0.0
    %v740 = vmax.f32 %v670, 0.0
    %v741 = vmax.f32 %v672, 0.0
    %v742 = vmax.f32 %v722, 0.0
    %v743 = vmax.f32 %v623, 0.0
    %v744 = vmax.f32 %v625, 0.0
    %v745 = vmax.f32 %v676, 0.0
    %v746 = vmax.f32 %v678, 0.0
    %v747 = vmax.f32 %v727, 0.0
    %v748 = vmax.f32 %v627, 0.0
    %v749 = vmax.f32 %v629, 0.0
    %v750 = vmax.f32 %v680, 0.0
    %v751 = vmax.f32 %v682, 0.0
    %v752 = vmax.f32 %v730, 0.0
    %765 = vrot.lane.b32.xlu0 %v733, 127
    %v766 = vpop.permute.xlu0 %765
    %767 = vrot.lane.b32.xlu0 %v734, 127
    %v768 = vpop.permute.xlu0 %767
    %769 = vrot.lane.b32.xlu0 %v735, 127
    %v770 = vpop.permute.xlu0 %769
    %771 = vrot.lane.b32.xlu0 %v738, 127
    %v772 = vpop.permute.xlu0 %771
    %773 = vrot.lane.b32.xlu0 %v739, 127
    %v774 = vpop.permute.xlu0 %773
    %775 = vrot.lane.b32.xlu0 %v740, 127
    %v776 = vpop.permute.xlu0 %775
    %777 = vrot.lane.b32.xlu0 %v743, 127
    %v778 = vpop.permute.xlu0 %777
    %779 = vrot.lane.b32.xlu0 %v744, 127
    %v780 = vpop.permute.xlu0 %779
    %781 = vrot.lane.b32.xlu0 %v745, 127
    %v782 = vpop.permute.xlu0 %781
    %783 = vrot.lane.b32.xlu0 %v748, 127
    %v784 = vpop.permute.xlu0 %783
    %785 = vrot.lane.b32.xlu0 %v749, 127
    %v786 = vpop.permute.xlu0 %785
    %787 = vrot.lane.b32.xlu0 %v750, 127
    %v788 = vpop.permute.xlu0 %787
    %v789 = vsel %vm226, %v766, %v768
    %v790 = vsel %vm226, %v768, %v770
    %v791 = vsel %vm226, %v772, %v774
    %v792 = vsel %vm226, %v774, %v776
    %v793 = vsel %vm226, %v778, %v780
    %v794 = vsel %vm226, %v780, %v782
    %v795 = vsel %vm226, %v784, %v786
    %v796 = vsel %vm226, %v786, %v788
    %v809 = vmax.f32 %v733, %v789
    %v810 = vmax.f32 %v734, %v790
    %v811 = vmax.f32 %v735, %v770
    %v812 = vmax.f32 %v738, %v791
    %v813 = vmax.f32 %v739, %v792
    %v814 = vmax.f32 %v740, %v776
    %v815 = vmax.f32 %v743, %v793
    %v816 = vmax.f32 %v744, %v794
    %v817 = vmax.f32 %v745, %v782
    %v818 = vmax.f32 %v748, %v795
    %v819 = vmax.f32 %v749, %v796
    %v820 = vmax.f32 %v750, %v788
    %821 = vrot.lane.b32.xlu0 %v733, 110
    %v822 = vpop.permute.xlu0 %821
    %823 = vrot.lane.b32.xlu0 %v734, 110
    %v824 = vpop.permute.xlu0 %823
    %825 = vrot.lane.b32.xlu0 %v735, 110
    %v826 = vpop.permute.xlu0 %825
    %827 = vrot.lane.b32.xlu0 %v738, 110
    %v828 = vpop.permute.xlu0 %827
    %829 = vrot.lane.b32.xlu0 %v739, 110
    %v830 = vpop.permute.xlu0 %829
    %831 = vrot.lane.b32.xlu0 %v740, 110
    %v832 = vpop.permute.xlu0 %831
    %833 = vrot.lane.b32.xlu0 %v743, 110
    %v834 = vpop.permute.xlu0 %833
    %835 = vrot.lane.b32.xlu0 %v744, 110
    %v836 = vpop.permute.xlu0 %835
    %837 = vrot.lane.b32.xlu0 %v745, 110
    %v838 = vpop.permute.xlu0 %837
    %839 = vrot.lane.b32.xlu0 %v748, 110
    %v840 = vpop.permute.xlu0 %839
    %841 = vrot.lane.b32.xlu0 %v749, 110
    %v842 = vpop.permute.xlu0 %841
    %843 = vrot.lane.b32.xlu0 %v750, 110
    %v844 = vpop.permute.xlu0 %843
    %v845 = vsel %vm268, %v822, %v824
    %v846 = vsel %vm268, %v824, %v826
    %v847 = vsel %vm268, %v828, %v830
    %v848 = vsel %vm268, %v830, %v832
    %v849 = vsel %vm268, %v834, %v836
    %v850 = vsel %vm268, %v836, %v838
    %v851 = vsel %vm268, %v840, %v842
    %v852 = vsel %vm268, %v842, %v844
    %v865 = vmax.f32 %v809, %v845
    %v866 = vmax.f32 %v810, %v846
    %v867 = vmax.f32 %v811, %v826
    %v868 = vmax.f32 %v812, %v847
    %v869 = vmax.f32 %v813, %v848
    %v870 = vmax.f32 %v814, %v832
    %v871 = vmax.f32 %v815, %v849
    %v872 = vmax.f32 %v816, %v850
    %v873 = vmax.f32 %v817, %v838
    %v874 = vmax.f32 %v818, %v851
    %v875 = vmax.f32 %v819, %v852
    %v876 = vmax.f32 %v820, %v844
    %877 = vrot.lane.b32.xlu0 %v733, 109
    %v878 = vpop.permute.xlu0 %877
    %879 = vrot.lane.b32.xlu0 %v734, 109
    %v880 = vpop.permute.xlu0 %879
    %881 = vrot.lane.b32.xlu0 %v735, 109
    %v882 = vpop.permute.xlu0 %881
    %883 = vrot.lane.b32.xlu0 %v738, 109
    %v884 = vpop.permute.xlu0 %883
    %885 = vrot.lane.b32.xlu0 %v739, 109
    %v886 = vpop.permute.xlu0 %885
    %887 = vrot.lane.b32.xlu0 %v740, 109
    %v888 = vpop.permute.xlu0 %887
    %889 = vrot.lane.b32.xlu0 %v743, 109
    %v890 = vpop.permute.xlu0 %889
    %891 = vrot.lane.b32.xlu0 %v744, 109
    %v892 = vpop.permute.xlu0 %891
    %893 = vrot.lane.b32.xlu0 %v745, 109
    %v894 = vpop.permute.xlu0 %893
    %895 = vrot.lane.b32.xlu0 %v748, 109
    %v896 = vpop.permute.xlu0 %895
    %897 = vrot.lane.b32.xlu0 %v749, 109
    %v898 = vpop.permute.xlu0 %897
    %899 = vrot.lane.b32.xlu0 %v750, 109
    %v900 = vpop.permute.xlu0 %899
    %v901 = vsel %vm289, %v878, %v880
    %v902 = vsel %vm289, %v880, %v882
    %v903 = vsel %vm289, %v884, %v886
    %v904 = vsel %vm289, %v886, %v888
    %v905 = vsel %vm289, %v890, %v892
    %v906 = vsel %vm289, %v892, %v894
    %v907 = vsel %vm289, %v896, %v898
    %v908 = vsel %vm289, %v898, %v900
    %v921 = vmax.f32 %v865, %v901
    %v922 = vmax.f32 %v866, %v902
    %v923 = vmax.f32 %v867, %v882
    %v924 = vmax.f32 %v868, %v903
    %v925 = vmax.f32 %v869, %v904
    %v926 = vmax.f32 %v870, %v888
    %v927 = vmax.f32 %v871, %v905
    %v928 = vmax.f32 %v872, %v906
    %v929 = vmax.f32 %v873, %v894
    %v930 = vmax.f32 %v874, %v907
    %v931 = vmax.f32 %v875, %v908
    %v932 = vmax.f32 %v876, %v900
    %v933 = vpack.c.bf16 %v924, %v921
    %v934 = vpack.c.bf16 %v925, %v922
    %v935 = vpack.c.bf16 %v926, %v923
    %v936 = vpack.c.bf16 %v930, %v927
    %v937 = vpack.c.bf16 %v931, %v928
    %v938 = vpack.c.bf16 %v932, %v929
    %v939 = vld [vmem:[%s3] sm:$0xf]
    %v940 = vld [vmem:[%s3 + $0x4] sm:$0xf]
    %v941 = vld [vmem:[%s3 + $0x8] sm:$0xf]
    %v942 = vld [vmem:[%s3 + $0xc] sm:$0xf]
    %v943 = vld [vmem:[%s3 + $0x10] sm:$0xf]
    %v944 = vld [vmem:[%s3 + $0x14] sm:$0xf]
    %v945 = vld [vmem:[%s3 + $0x18] sm:$0xf]
    %v946 = vld [vmem:[%s3 + $0x1c] sm:$0xf]
    %v947 = vld [vmem:[%s3 + $0x20] sm:$0xf]
    %v948 = vld [vmem:[%s3 + $0x24] sm:$0xf]
    %v949 = vld [vmem:[%s3 + $0x28] sm:$0xf]
    %v950 = vld [vmem:[%s3 + $0x2c] sm:$0xf]
    %v951 = vld [vmem:[%s3 + $0x30] sm:$0xf]
    %v952 = vld [vmem:[%s3 + $0x34] sm:$0xf]
    %v953 = vld [vmem:[%s3 + $0x38] sm:$0xf]
    %v954 = vld [vmem:[%s3 + $0x3c] sm:$0xf]
    %v955 = vld [vmem:[%s3 + $0x40] sm:$0xf]
    %v956 = vld [vmem:[%s3 + $0x44] sm:$0xf]
    %v957 = vld [vmem:[%s3 + $0x48] sm:$0xf]
    %v958 = vld [vmem:[%s3 + $0x4c] sm:$0xf]
    %v959 = vld [vmem:[%s3 + $0x50] sm:$0xf]
    %v960 = vld [vmem:[%s3 + $0x54] sm:$0xf]
    %v961 = vld [vmem:[%s3 + $0x58] sm:$0xf]
    %v962 = vld [vmem:[%s3 + $0x5c] sm:$0xf]
    %v963 = vld [vmem:[%s3 + $0x60] sm:$0xf]
    %v964 = vld [vmem:[%s3 + $0x64] sm:$0xf]
    %v965 = vld [vmem:[%s3 + $0x68] sm:$0xf]
    %v966 = vld [vmem:[%s3 + $0x6c] sm:$0xf]
    %v967 = vld [vmem:[%s3 + $0x70] sm:$0xf]
    %v968 = vld [vmem:[%s3 + $0x74] sm:$0xf]
    %v969 = vld [vmem:[%s3 + $0x78] sm:$0xf]
    %v970 = vld [vmem:[%s3 + $0x7c] sm:$0xf]
    %v971 = vld [vmem:[%s3 + $0x80] sm:$0xf]
    %v972 = vld [vmem:[%s3 + $0x84] sm:$0x3]
    %v1007 = vunpack.c.l.b16 %v939
    %v1008 = vunpack.c.l.b16 %v940
    %v1009 = vunpack.c.l.b16 %v941
    %v1010 = vunpack.c.l.b16 %v942
    %v1011 = vunpack.c.l.b16 %v943
    %v1012 = vunpack.c.l.b16 %v944
    %v1013 = vunpack.c.l.b16 %v945
    %v1014 = vunpack.c.l.b16 %v946
    %v1015 = vunpack.c.l.b16 %v947
    %v1016 = vunpack.c.l.b16 %v948
    %v1017 = vunpack.c.l.b16 %v949
    %v1018 = vunpack.c.l.b16 %v950
    %v1019 = vunpack.c.l.b16 %v951
    %v1020 = vunpack.c.l.b16 %v952
    %v1021 = vunpack.c.l.b16 %v953
    %v1022 = vunpack.c.l.b16 %v954
    %v1023 = vunpack.c.l.b16 %v955
    %v1024 = vunpack.c.l.b16 %v956
    %v1025 = vunpack.c.l.b16 %v957
    %v1026 = vunpack.c.l.b16 %v958
    %v1027 = vunpack.c.l.b16 %v959
    %v1028 = vunpack.c.l.b16 %v960
    %v1029 = vunpack.c.l.b16 %v961
    %v1030 = vunpack.c.l.b16 %v962
    %v1031 = vunpack.c.l.b16 %v963
    %v1032 = vunpack.c.l.b16 %v964
    %v1033 = vunpack.c.l.b16 %v965
    %v1034 = vunpack.c.l.b16 %v966
    %v1035 = vunpack.c.l.b16 %v967
    %v1036 = vunpack.c.l.b16 %v968
    %v1037 = vunpack.c.l.b16 %v969
    %v1038 = vunpack.c.l.b16 %v970
    %v1039 = vunpack.c.l.b16 %v971
    %v1040 = vunpack.c.l.b16 %v972
    %v1041 = vpack.c.b16 %v1008, %v1007
    %v1042 = vpack.c.b16 %v1010, %v1009
    %v1043 = vpack.c.b16 %v1012, %v1011
    %v1044 = vpack.c.b16 %v1014, %v1013
    %v1045 = vpack.c.b16 %v1016, %v1015
    %v1046 = vpack.c.b16 %v1018, %v1017
    %v1047 = vpack.c.b16 %v1020, %v1019
    %v1048 = vpack.c.b16 %v1022, %v1021
    %v1049 = vpack.c.b16 %v1024, %v1023
    %v1050 = vpack.c.b16 %v1026, %v1025
    %v1051 = vpack.c.b16 %v1028, %v1027
    %v1052 = vpack.c.b16 %v1030, %v1029
    %v1053 = vpack.c.b16 %v1032, %v1031
    %v1054 = vpack.c.b16 %v1034, %v1033
    %v1055 = vpack.c.b16 %v1036, %v1035
    %v1056 = vpack.c.b16 %v1038, %v1037
    %v1057 = vpack.c.b16 %v1040, %v1039
    %v1075 = vsel %vm299, %v935, 0
    %v1078 = vsel %vm299, %v938, 0
    %v1080 = vsel %vm493, 4294967295, 65535
    %v1081 = vsel %vm499, %v1080, 0
    %v1083 = vand.u32 %v1057, %v1081
    %1085 = vmatprep.subr.bf16.mxu0 0
    %1086 = vmatpush1.bf16.msra.mxu0 %v1041
    %1087 = vmatprep.subr.bf16.mxu0 0
    %1088 = vmatpush1.bf16.msra.mxu0 %v1042
    %1089 = vmatprep.subr.bf16.mxu0 0
    %1090 = vmatpush1.bf16.msra.mxu0 %v1043
    %1091 = vmatprep.subr.bf16.mxu0 0
    %1092 = vmatpush1.bf16.msra.mxu0 %v1044
    %1093 = vmatprep.subr.bf16.mxu0 0
    %1094 = vmatpush1.bf16.msra.mxu0 %v1045
    %1095 = vmatprep.subr.bf16.mxu0 0
    %1096 = vmatpush1.bf16.msra.mxu0 %v1046
    %1097 = vmatprep.subr.bf16.mxu0 0
    %1098 = vmatpush1.bf16.msra.mxu0 %v1047
    %1099 = vmatprep.subr.bf16.mxu0 0
    %1100 = vmatpush1.bf16.msra.mxu0 %v1048
    %1101 = vmatprep.subr.bf16.mxu0 0
    %1102 = vmatpush1.bf16.msra.mxu0 %v1049
    %1103 = vmatprep.subr.bf16.mxu0 0
    %1104 = vmatpush1.bf16.msra.mxu0 %v1050
    %1105 = vmatprep.subr.bf16.mxu0 0
    %1106 = vmatpush1.bf16.msra.mxu0 %v1051
    %1107 = vmatprep.subr.bf16.mxu0 0
    %1108 = vmatpush1.bf16.msra.mxu0 %v1052
    %1109 = vmatprep.subr.bf16.mxu0 0
    %1110 = vmatpush1.bf16.msra.mxu0 %v1053
    %1111 = vmatprep.subr.bf16.mxu0 0
    %1112 = vmatpush1.bf16.msra.mxu0 %v1054
    %1113 = vmatprep.subr.bf16.mxu0 0
    %1114 = vmatpush1.bf16.msra.mxu0 %v1055
    %1115 = vmatprep.subr.bf16.mxu0 0
    %1116 = vmatpush1.bf16.msra.mxu0 %v1056
    %1117 = vmatprep.mubr.bf16.mxu0 %v934
    %1118 = vmatmul.mubr.bf16.gmra.mrb[0].mxu0 %v933
    %v1119 = vpop.f32.mrb[0].mxu0
    %v1120 = vadd.f32 0.0, %v1119
    %v1121 = vpop.f32.mrb[0].mxu0
    %v1122 = vpop.f32.mrb[0].mxu0
    %v1123 = vadd.f32 0.0, %v1122
    %v1124 = vpop.f32.mrb[0].mxu0
    %1125 = vmatprep.mubr.bf16.mxu0 %v937
    %1126 = vmatmul.mubr.bf16.gmra.mrb[0].mxu0 %v936
    %v1127 = vpop.f32.mrb[0].mxu0
    %v1128 = vadd.f32 0.0, %v1127
    %v1129 = vpop.f32.mrb[0].mxu0
    %v1130 = vpop.f32.mrb[0].mxu0
    %v1131 = vadd.f32 0.0, %v1130
    %v1132 = vpop.f32.mrb[0].mxu0
    %1133 = vdwg.mxu0
    %1134 = vmatprep.subr.bf16.mxu0 0
    %1135 = vmatpush1.bf16.msra.mxu0 %v1083
    %1136 = vmatprep.subr.bf16.mxu0 0
    %1137 = vmatpush1.bf16.msra.mxu0 0
    %1138 = vmatprep.subr.bf16.mxu0 0
    %1139 = vmatpush1.bf16.msra.mxu0 0
    %1140 = vmatprep.subr.bf16.mxu0 0
    %1141 = vmatpush1.bf16.msra.mxu0 0
    %1142 = vmatprep.subr.bf16.mxu0 0
    %1143 = vmatpush1.bf16.msra.mxu0 0
    %1144 = vmatprep.subr.bf16.mxu0 0
    %1145 = vmatpush1.bf16.msra.mxu0 0
    %1146 = vmatprep.subr.bf16.mxu0 0
    %1147 = vmatpush1.bf16.msra.mxu0 0
    %1148 = vmatprep.subr.bf16.mxu0 0
    %1149 = vmatpush1.bf16.msra.mxu0 0
    %1150 = vmatprep.subr.bf16.mxu0 0
    %1151 = vmatpush1.bf16.msra.mxu0 0
    %1152 = vmatprep.subr.bf16.mxu0 0
    %1153 = vmatpush1.bf16.msra.mxu0 0
    %1154 = vmatprep.subr.bf16.mxu0 0
    %1155 = vmatpush1.bf16.msra.mxu0 0
    %1156 = vmatprep.subr.bf16.mxu0 0
    %1157 = vmatpush1.bf16.msra.mxu0 0
    %1158 = vmatprep.subr.bf16.mxu0 0
    %1159 = vmatpush1.bf16.msra.mxu0 0
    %1160 = vmatprep.subr.bf16.mxu0 0
    %1161 = vmatpush1.bf16.msra.mxu0 0
    %1162 = vmatprep.subr.bf16.mxu0 0
    %1163 = vmatpush1.bf16.msra.mxu0 0
    %1164 = vmatprep.subr.bf16.mxu0 0
    %1165 = vmatpush1.bf16.msra.mxu0 0
    %1166 = vmatprep.mubr.bf16.mxu0 0
    %1167 = vmatmul.mubr.bf16.gmra.mrb[0].mxu0 %v1075
    %v1168 = vpop.f32.mrb[0].mxu0
    %v1169 = vadd.f32 %v1120, %v1168
    %v1170 = vpop.f32.mrb[0].mxu0
    %v1171 = vpop.f32.mrb[0].mxu0
    %v1172 = vadd.f32 %v1123, %v1171
    %v1173 = vpop.f32.mrb[0].mxu0
    %1174 = vmatprep.mubr.bf16.mxu0 0
    %1175 = vmatmul.mubr.bf16.gmra.mrb[0].mxu0 %v1078
    %v1176 = vpop.f32.mrb[0].mxu0
    %v1177 = vadd.f32 %v1128, %v1176
    %v1178 = vpop.f32.mrb[0].mxu0
    %v1179 = vpop.f32.mrb[0].mxu0
    %v1180 = vadd.f32 %v1131, %v1179
    %v1181 = vpop.f32.mrb[0].mxu0
    %1182 = vdwg.mxu0
    %1191 = vrot.lane.b32.xlu0 %v736, 127
    %v1192 = vpop.permute.xlu0 %1191
    %1193 = vrot.lane.b32.xlu0 %v737, 127
    %v1194 = vpop.permute.xlu0 %1193
    %1195 = vrot.lane.b32.xlu0 %v741, 127
    %v1196 = vpop.permute.xlu0 %1195
    %1197 = vrot.lane.b32.xlu0 %v742, 127
    %v1198 = vpop.permute.xlu0 %1197
    %1199 = vrot.lane.b32.xlu0 %v746, 127
    %v1200 = vpop.permute.xlu0 %1199
    %1201 = vrot.lane.b32.xlu0 %v747, 127
    %v1202 = vpop.permute.xlu0 %1201
    %1203 = vrot.lane.b32.xlu0 %v751, 127
    %v1204 = vpop.permute.xlu0 %1203
    %1205 = vrot.lane.b32.xlu0 %v752, 127
    %v1206 = vpop.permute.xlu0 %1205
    %v1207 = vsel %vm226, %v770, %v1192
    %v1208 = vsel %vm226, %v1192, %v1194
    %v1209 = vsel %vm226, %v776, %v1196
    %v1210 = vsel %vm226, %v1196, %v1198
    %v1211 = vsel %vm226, %v782, %v1200
    %v1212 = vsel %vm226, %v1200, %v1202
    %v1213 = vsel %vm226, %v788, %v1204
    %v1214 = vsel %vm226, %v1204, %v1206
    %v1227 = vmax.f32 %v735, %v1207
    %v1228 = vmax.f32 %v736, %v1208
    %v1229 = vmax.f32 %v737, %v1194
    %v1230 = vmax.f32 %v740, %v1209
    %v1231 = vmax.f32 %v741, %v1210
    %v1232 = vmax.f32 %v742, %v1198
    %v1233 = vmax.f32 %v745, %v1211
    %v1234 = vmax.f32 %v746, %v1212
    %v1235 = vmax.f32 %v747, %v1202
    %v1236 = vmax.f32 %v750, %v1213
    %v1237 = vmax.f32 %v751, %v1214
    %v1238 = vmax.f32 %v752, %v1206
    %1239 = vrot.lane.b32.xlu0 %v736, 110
    %v1240 = vpop.permute.xlu0 %1239
    %1241 = vrot.lane.b32.xlu0 %v737, 110
    %v1242 = vpop.permute.xlu0 %1241
    %1243 = vrot.lane.b32.xlu0 %v741, 110
    %v1244 = vpop.permute.xlu0 %1243
    %1245 = vrot.lane.b32.xlu0 %v742, 110
    %v1246 = vpop.permute.xlu0 %1245
    %1247 = vrot.lane.b32.xlu0 %v746, 110
    %v1248 = vpop.permute.xlu0 %1247
    %1249 = vrot.lane.b32.xlu0 %v747, 110
    %v1250 = vpop.permute.xlu0 %1249
    %1251 = vrot.lane.b32.xlu0 %v751, 110
    %v1252 = vpop.permute.xlu0 %1251
    %1253 = vrot.lane.b32.xlu0 %v752, 110
    %v1254 = vpop.permute.xlu0 %1253
    %v1255 = vsel %vm268, %v826, %v1240
    %v1256 = vsel %vm268, %v1240, %v1242
    %v1257 = vsel %vm268, %v832, %v1244
    %v1258 = vsel %vm268, %v1244, %v1246
    %v1259 = vsel %vm268, %v838, %v1248
    %v1260 = vsel %vm268, %v1248, %v1250
    %v1261 = vsel %vm268, %v844, %v1252
    %v1262 = vsel %vm268, %v1252, %v1254
    %v1275 = vmax.f32 %v1227, %v1255
    %v1276 = vmax.f32 %v1228, %v1256
    %v1277 = vmax.f32 %v1229, %v1242
    %v1278 = vmax.f32 %v1230, %v1257
    %v1279 = vmax.f32 %v1231, %v1258
    %v1280 = vmax.f32 %v1232, %v1246
    %v1281 = vmax.f32 %v1233, %v1259
    %v1282 = vmax.f32 %v1234, %v1260
    %v1283 = vmax.f32 %v1235, %v1250
    %v1284 = vmax.f32 %v1236, %v1261
    %v1285 = vmax.f32 %v1237, %v1262
    %v1286 = vmax.f32 %v1238, %v1254
    %1287 = vrot.lane.b32.xlu0 %v736, 109
    %v1288 = vpop.permute.xlu0 %1287
    %1289 = vrot.lane.b32.xlu0 %v737, 109
    %v1290 = vpop.permute.xlu0 %1289
    %1291 = vrot.lane.b32.xlu0 %v741, 109
    %v1292 = vpop.permute.xlu0 %1291
    %1293 = vrot.lane.b32.xlu0 %v742, 109
    %v1294 = vpop.permute.xlu0 %1293
    %1295 = vrot.lane.b32.xlu0 %v746, 109
    %v1296 = vpop.permute.xlu0 %1295
    %1297 = vrot.lane.b32.xlu0 %v747, 109
    %v1298 = vpop.permute.xlu0 %1297
    %1299 = vrot.lane.b32.xlu0 %v751, 109
    %v1300 = vpop.permute.xlu0 %1299
    %1301 = vrot.lane.b32.xlu0 %v752, 109
    %v1302 = vpop.permute.xlu0 %1301
    %v1303 = vsel %vm289, %v882, %v1288
    %v1304 = vsel %vm289, %v1288, %v1290
    %v1305 = vsel %vm289, %v888, %v1292
    %v1306 = vsel %vm289, %v1292, %v1294
    %v1307 = vsel %vm289, %v894, %v1296
    %v1308 = vsel %vm289, %v1296, %v1298
    %v1309 = vsel %vm289, %v900, %v1300
    %v1310 = vsel %vm289, %v1300, %v1302
    %v1323 = vmax.f32 %v1275, %v1303
    %v1324 = vmax.f32 %v1276, %v1304
    %v1325 = vmax.f32 %v1277, %v1290
    %v1326 = vmax.f32 %v1278, %v1305
    %v1327 = vmax.f32 %v1279, %v1306
    %v1328 = vmax.f32 %v1280, %v1294
    %v1329 = vmax.f32 %v1281, %v1307
    %v1330 = vmax.f32 %v1282, %v1308
    %v1331 = vmax.f32 %v1283, %v1298
    %v1332 = vmax.f32 %v1284, %v1309
    %v1333 = vmax.f32 %v1285, %v1310
    %v1334 = vmax.f32 %v1286, %v1302
    %v1335 = vpack.c.bf16 %v1326, %v1323
    %v1336 = vpack.c.bf16 %v1327, %v1324
    %v1337 = vpack.c.bf16 %v1328, %v1325
    %v1338 = vpack.c.bf16 %v1332, %v1329
    %v1339 = vpack.c.bf16 %v1333, %v1330
    %v1340 = vpack.c.bf16 %v1334, %v1331
    %1347 = vrot.lane.b32.xlu0 %v1335, 98
    %v1348 = vpop.permute.xlu0 %1347
    %1349 = vrot.lane.b32.xlu0 %v1336, 98
    %v1350 = vpop.permute.xlu0 %1349
    %1351 = vrot.lane.b32.xlu0 %v1337, 98
    %v1352 = vpop.permute.xlu0 %1351
    %1353 = vrot.lane.b32.xlu0 %v1338, 98
    %v1354 = vpop.permute.xlu0 %1353
    %1355 = vrot.lane.b32.xlu0 %v1339, 98
    %v1356 = vpop.permute.xlu0 %1355
    %1357 = vrot.lane.b32.xlu0 %v1340, 98
    %v1358 = vpop.permute.xlu0 %1357
    %vm1359 = vcmask 801792
    %v1360 = vsel %vm1359, %v1348, %v1350
    %v1361 = vsel %vm1359, %v1350, %v1352
    %v1362 = vsel %vm1359, %v1354, %v1356
    %v1363 = vsel %vm1359, %v1356, %v1358
    %v1369 = vsel %vm299, %v1352, 0
    %v1372 = vsel %vm299, %v1358, 0
    %1374 = vmatprep.subr.bf16.mxu0 0
    %1375 = vmatpush1.bf16.msra.mxu0 %v1041
    %1376 = vmatprep.subr.bf16.mxu0 0
    %1377 = vmatpush1.bf16.msra.mxu0 %v1042
    %1378 = vmatprep.subr.bf16.mxu0 0
    %1379 = vmatpush1.bf16.msra.mxu0 %v1043
    %1380 = vmatprep.subr.bf16.mxu0 0
    %1381 = vmatpush1.bf16.msra.mxu0 %v1044
    %1382 = vmatprep.subr.bf16.mxu0 0
    %1383 = vmatpush1.bf16.msra.mxu0 %v1045
    %1384 = vmatprep.subr.bf16.mxu0 0
    %1385 = vmatpush1.bf16.msra.mxu0 %v1046
    %1386 = vmatprep.subr.bf16.mxu0 0
    %1387 = vmatpush1.bf16.msra.mxu0 %v1047
    %1388 = vmatprep.subr.bf16.mxu0 0
    %1389 = vmatpush1.bf16.msra.mxu0 %v1048
    %1390 = vmatprep.subr.bf16.mxu0 0
    %1391 = vmatpush1.bf16.msra.mxu0 %v1049
    %1392 = vmatprep.subr.bf16.mxu0 0
    %1393 = vmatpush1.bf16.msra.mxu0 %v1050
    %1394 = vmatprep.subr.bf16.mxu0 0
    %1395 = vmatpush1.bf16.msra.mxu0 %v1051
    %1396 = vmatprep.subr.bf16.mxu0 0
    %1397 = vmatpush1.bf16.msra.mxu0 %v1052
    %1398 = vmatprep.subr.bf16.mxu0 0
    %1399 = vmatpush1.bf16.msra.mxu0 %v1053
    %1400 = vmatprep.subr.bf16.mxu0 0
    %1401 = vmatpush1.bf16.msra.mxu0 %v1054
    %1402 = vmatprep.subr.bf16.mxu0 0
    %1403 = vmatpush1.bf16.msra.mxu0 %v1055
    %1404 = vmatprep.subr.bf16.mxu0 0
    %1405 = vmatpush1.bf16.msra.mxu0 %v1056
    %1406 = vmatprep.mubr.bf16.mxu0 %v1361
    %1407 = vmatmul.mubr.bf16.gmra.mrb[0].mxu0 %v1360
    %v1408 = vpop.f32.mrb[0].mxu0
    %v1409 = vadd.f32 0.0, %v1408
    %v1410 = vpop.f32.mrb[0].mxu0
    %v1411 = vpop.f32.mrb[0].mxu0
    %v1412 = vadd.f32 0.0, %v1411
    %v1413 = vpop.f32.mrb[0].mxu0
    %1414 = vmatprep.mubr.bf16.mxu0 %v1363
    %1415 = vmatmul.mubr.bf16.gmra.mrb[0].mxu0 %v1362
    %v1416 = vpop.f32.mrb[0].mxu0
    %v1417 = vadd.f32 0.0, %v1416
    %v1418 = vpop.f32.mrb[0].mxu0
    %v1419 = vpop.f32.mrb[0].mxu0
    %v1420 = vadd.f32 0.0, %v1419
    %v1421 = vpop.f32.mrb[0].mxu0
    %1422 = vdwg.mxu0
    %1423 = vmatprep.subr.bf16.mxu0 0
    %1424 = vmatpush1.bf16.msra.mxu0 %v1083
    %1425 = vmatprep.subr.bf16.mxu0 0
    %1426 = vmatpush1.bf16.msra.mxu0 0
    %1427 = vmatprep.subr.bf16.mxu0 0
    %1428 = vmatpush1.bf16.msra.mxu0 0
    %1429 = vmatprep.subr.bf16.mxu0 0
    %1430 = vmatpush1.bf16.msra.mxu0 0
    %1431 = vmatprep.subr.bf16.mxu0 0
    %1432 = vmatpush1.bf16.msra.mxu0 0
    %1433 = vmatprep.subr.bf16.mxu0 0
    %1434 = vmatpush1.bf16.msra.mxu0 0
    %1435 = vmatprep.subr.bf16.mxu0 0
    %1436 = vmatpush1.bf16.msra.mxu0 0
    %1437 = vmatprep.subr.bf16.mxu0 0
    %1438 = vmatpush1.bf16.msra.mxu0 0
    %1439 = vmatprep.subr.bf16.mxu0 0
    %1440 = vmatpush1.bf16.msra.mxu0 0
    %1441 = vmatprep.subr.bf16.mxu0 0
    %1442 = vmatpush1.bf16.msra.mxu0 0
    %1443 = vmatprep.subr.bf16.mxu0 0
    %1444 = vmatpush1.bf16.msra.mxu0 0
    %1445 = vmatprep.subr.bf16.mxu0 0
    %1446 = vmatpush1.bf16.msra.mxu0 0
    %1447 = vmatprep.subr.bf16.mxu0 0
    %1448 = vmatpush1.bf16.msra.mxu0 0
    %1449 = vmatprep.subr.bf16.mxu0 0
    %1450 = vmatpush1.bf16.msra.mxu0 0
    %1451 = vmatprep.subr.bf16.mxu0 0
    %1452 = vmatpush1.bf16.msra.mxu0 0
    %1453 = vmatprep.subr.bf16.mxu0 0
    %1454 = vmatpush1.bf16.msra.mxu0 0
    %1455 = vmatprep.mubr.bf16.mxu0 0
    %1456 = vmatmul.mubr.bf16.gmra.mrb[0].mxu0 %v1369
    %v1457 = vpop.f32.mrb[0].mxu0
    %v1458 = vadd.f32 %v1409, %v1457
    %v1459 = vpop.f32.mrb[0].mxu0
    %v1460 = vpop.f32.mrb[0].mxu0
    %v1461 = vadd.f32 %v1412, %v1460
    %v1462 = vpop.f32.mrb[0].mxu0
    %1463 = vmatprep.mubr.bf16.mxu0 0
    %1464 = vmatmul.mubr.bf16.gmra.mrb[0].mxu0 %v1372
    %v1465 = vpop.f32.mrb[0].mxu0
    %v1466 = vadd.f32 %v1417, %v1465
    %v1467 = vpop.f32.mrb[0].mxu0
    %v1468 = vpop.f32.mrb[0].mxu0
    %v1469 = vadd.f32 %v1420, %v1468
    %v1470 = vpop.f32.mrb[0].mxu0
    %1471 = vdwg.mxu0
    %1476 = vrot.lane.b32.xlu0 %v1458, 100
    %v1477 = vpop.permute.xlu0 %1476
    %1478 = vrot.lane.b32.xlu0 %v1461, 100
    %v1479 = vpop.permute.xlu0 %1478
    %1480 = vrot.lane.b32.xlu0 %v1466, 100
    %v1481 = vpop.permute.xlu0 %1480
    %1482 = vrot.lane.b32.xlu0 %v1469, 100
    %v1483 = vpop.permute.xlu0 %1482
    %vm1488 = vcmask 818176
    %v1489 = vsel %vm1488, %v1169, %v1477
    %v1490 = vsel %vm1488, %v1172, %v1479
    %v1491 = vsel %vm1488, %v1177, %v1481
    %v1492 = vsel %vm1488, %v1180, %v1483
    %1497 = vrot.lane.b32.xlu0 %v1489, 106
    %v1498 = vpop.permute.xlu0 %1497
    %1499 = vrot.lane.b32.xlu0 %v1477, 106
    %v1500 = vpop.permute.xlu0 %1499
    %1501 = vrot.lane.b32.xlu0 %v1490, 106
    %v1502 = vpop.permute.xlu0 %1501
    %1503 = vrot.lane.b32.xlu0 %v1479, 106
    %v1504 = vpop.permute.xlu0 %1503
    %1505 = vrot.lane.b32.xlu0 %v1491, 106
    %v1506 = vpop.permute.xlu0 %1505
    %1507 = vrot.lane.b32.xlu0 %v1481, 106
    %v1508 = vpop.permute.xlu0 %1507
    %1509 = vrot.lane.b32.xlu0 %v1492, 106
    %v1510 = vpop.permute.xlu0 %1509
    %1511 = vrot.lane.b32.xlu0 %v1483, 106
    %v1512 = vpop.permute.xlu0 %1511
    %vm1513 = vcmask 867328
    %v1514 = vsel %vm1513, %v1498, %v1500
    %v1515 = vsel %vm1513, %v1502, %v1504
    %v1516 = vsel %vm1513, %v1506, %v1508
    %v1517 = vsel %vm1513, %v1510, %v1512
    %vm1526 = vcmask 637952
    %v1527 = vsel %vm1526, %v1489, %v1514
    %v1528 = vsel %vm1526, %v1490, %v1515
    %v1529 = vsel %vm1526, %v1491, %v1516
    %v1530 = vsel %vm1526, %v1492, %v1517
    %1531 = vrot.lane.b32.xlu0 %v1489, 127
    %v1532 = vpop.permute.xlu0 %1531
    %1533 = vrot.lane.b32.xlu0 %v1490, 127
    %v1534 = vpop.permute.xlu0 %1533
    %1535 = vrot.lane.b32.xlu0 %v1491, 127
    %v1536 = vpop.permute.xlu0 %1535
    %1537 = vrot.lane.b32.xlu0 %v1492, 127
    %v1538 = vpop.permute.xlu0 %1537
    %1543 = vrot.lane.b32.xlu0 %v1489, 105
    %v1544 = vpop.permute.xlu0 %1543
    %1545 = vrot.lane.b32.xlu0 %v1477, 105
    %v1546 = vpop.permute.xlu0 %1545
    %1547 = vrot.lane.b32.xlu0 %v1490, 105
    %v1548 = vpop.permute.xlu0 %1547
    %1549 = vrot.lane.b32.xlu0 %v1479, 105
    %v1550 = vpop.permute.xlu0 %1549
    %1551 = vrot.lane.b32.xlu0 %v1491, 105
    %v1552 = vpop.permute.xlu0 %1551
    %1553 = vrot.lane.b32.xlu0 %v1481, 105
    %v1554 = vpop.permute.xlu0 %1553
    %1555 = vrot.lane.b32.xlu0 %v1492, 105
    %v1556 = vpop.permute.xlu0 %1555
    %1557 = vrot.lane.b32.xlu0 %v1483, 105
    %v1558 = vpop.permute.xlu0 %1557
    %vm1559 = vcmask 859136
    %v1560 = vsel %vm1559, %v1544, %v1546
    %v1561 = vsel %vm1559, %v1548, %v1550
    %v1562 = vsel %vm1559, %v1552, %v1554
    %v1563 = vsel %vm1559, %v1556, %v1558
    %v1572 = vsel %vm1526, %v1532, %v1560
    %v1573 = vsel %vm1526, %v1534, %v1561
    %v1574 = vsel %vm1526, %v1536, %v1562
    %v1575 = vsel %vm1526, %v1538, %v1563
    %1576 = vrot.lane.b32.xlu0 %v1489, 126
    %v1577 = vpop.permute.xlu0 %1576
    %1578 = vrot.lane.b32.xlu0 %v1490, 126
    %v1579 = vpop.permute.xlu0 %1578
    %1580 = vrot.lane.b32.xlu0 %v1491, 126
    %v1581 = vpop.permute.xlu0 %1580
    %1582 = vrot.lane.b32.xlu0 %v1492, 126
    %v1583 = vpop.permute.xlu0 %1582
    %1588 = vrot.lane.b32.xlu0 %v1489, 104
    %v1589 = vpop.permute.xlu0 %1588
    %1590 = vrot.lane.b32.xlu0 %v1477, 104
    %v1591 = vpop.permute.xlu0 %1590
    %1592 = vrot.lane.b32.xlu0 %v1490, 104
    %v1593 = vpop.permute.xlu0 %1592
    %1594 = vrot.lane.b32.xlu0 %v1479, 104
    %v1595 = vpop.permute.xlu0 %1594
    %1596 = vrot.lane.b32.xlu0 %v1491, 104
    %v1597 = vpop.permute.xlu0 %1596
    %1598 = vrot.lane.b32.xlu0 %v1481, 104
    %v1599 = vpop.permute.xlu0 %1598
    %1600 = vrot.lane.b32.xlu0 %v1492, 104
    %v1601 = vpop.permute.xlu0 %1600
    %1602 = vrot.lane.b32.xlu0 %v1483, 104
    %v1603 = vpop.permute.xlu0 %1602
    %vm1604 = vcmask 850944
    %v1605 = vsel %vm1604, %v1589, %v1591
    %v1606 = vsel %vm1604, %v1593, %v1595
    %v1607 = vsel %vm1604, %v1597, %v1599
    %v1608 = vsel %vm1604, %v1601, %v1603
    %v1617 = vsel %vm1526, %v1577, %v1605
    %v1618 = vsel %vm1526, %v1579, %v1606
    %v1619 = vsel %vm1526, %v1581, %v1607
    %v1620 = vsel %vm1526, %v1583, %v1608
    %1621 = vrot.lane.b32.xlu0 %v1489, 118
    %v1622 = vpop.permute.xlu0 %1621
    %1623 = vrot.lane.b32.xlu0 %v1490, 118
    %v1624 = vpop.permute.xlu0 %1623
    %1625 = vrot.lane.b32.xlu0 %v1491, 118
    %v1626 = vpop.permute.xlu0 %1625
    %1627 = vrot.lane.b32.xlu0 %v1492, 118
    %v1628 = vpop.permute.xlu0 %1627
    %1633 = vrot.lane.b32.xlu0 %v1489, 96
    %v1634 = vpop.permute.xlu0 %1633
    %1635 = vrot.lane.b32.xlu0 %v1477, 96
    %v1636 = vpop.permute.xlu0 %1635
    %1637 = vrot.lane.b32.xlu0 %v1490, 96
    %v1638 = vpop.permute.xlu0 %1637
    %1639 = vrot.lane.b32.xlu0 %v1479, 96
    %v1640 = vpop.permute.xlu0 %1639
    %1641 = vrot.lane.b32.xlu0 %v1491, 96
    %v1642 = vpop.permute.xlu0 %1641
    %1643 = vrot.lane.b32.xlu0 %v1481, 96
    %v1644 = vpop.permute.xlu0 %1643
    %1645 = vrot.lane.b32.xlu0 %v1492, 96
    %v1646 = vpop.permute.xlu0 %1645
    %1647 = vrot.lane.b32.xlu0 %v1483, 96
    %v1648 = vpop.permute.xlu0 %1647
    %vm1649 = vcmask 785408
    %v1650 = vsel %vm1649, %v1634, %v1636
    %v1651 = vsel %vm1649, %v1638, %v1640
    %v1652 = vsel %vm1649, %v1642, %v1644
    %v1653 = vsel %vm1649, %v1646, %v1648
    %v1662 = vsel %vm1526, %v1622, %v1650
    %v1663 = vsel %vm1526, %v1624, %v1651
    %v1664 = vsel %vm1526, %v1626, %v1652
    %v1665 = vsel %vm1526, %v1628, %v1653
    %1666 = vrot.lane.b32.xlu0 %v1489, 117
    %v1667 = vpop.permute.xlu0 %1666
    %1668 = vrot.lane.b32.xlu0 %v1490, 117
    %v1669 = vpop.permute.xlu0 %1668
    %1670 = vrot.lane.b32.xlu0 %v1491, 117
    %v1671 = vpop.permute.xlu0 %1670
    %1672 = vrot.lane.b32.xlu0 %v1492, 117
    %v1673 = vpop.permute.xlu0 %1672
    %1678 = vrot.lane.b32.xlu0 %v1489, 95
    %v1679 = vpop.permute.xlu0 %1678
    %1680 = vrot.lane.b32.xlu0 %v1477, 95
    %v1681 = vpop.permute.xlu0 %1680
    %1682 = vrot.lane.b32.xlu0 %v1490, 95
    %v1683 = vpop.permute.xlu0 %1682
    %1684 = vrot.lane.b32.xlu0 %v1479, 95
    %v1685 = vpop.permute.xlu0 %1684
    %1686 = vrot.lane.b32.xlu0 %v1491, 95
    %v1687 = vpop.permute.xlu0 %1686
    %1688 = vrot.lane.b32.xlu0 %v1481, 95
    %v1689 = vpop.permute.xlu0 %1688
    %1690 = vrot.lane.b32.xlu0 %v1492, 95
    %v1691 = vpop.permute.xlu0 %1690
    %1692 = vrot.lane.b32.xlu0 %v1483, 95
    %v1693 = vpop.permute.xlu0 %1692
    %vm1694 = vcmask 777216
    %v1695 = vsel %vm1694, %v1679, %v1681
    %v1696 = vsel %vm1694, %v1683, %v1685
    %v1697 = vsel %vm1694, %v1687, %v1689
    %v1698 = vsel %vm1694, %v1691, %v1693
    %v1707 = vsel %vm1526, %v1667, %v1695
    %v1708 = vsel %vm1526, %v1669, %v1696
    %v1709 = vsel %vm1526, %v1671, %v1697
    %v1710 = vsel %vm1526, %v1673, %v1698
    %1711 = vrot.lane.b32.xlu0 %v1489, 116
    %v1712 = vpop.permute.xlu0 %1711
    %1713 = vrot.lane.b32.xlu0 %v1490, 116
    %v1714 = vpop.permute.xlu0 %1713
    %1715 = vrot.lane.b32.xlu0 %v1491, 116
    %v1716 = vpop.permute.xlu0 %1715
    %1717 = vrot.lane.b32.xlu0 %v1492, 116
    %v1718 = vpop.permute.xlu0 %1717
    %1723 = vrot.lane.b32.xlu0 %v1489, 94
    %v1724 = vpop.permute.xlu0 %1723
    %1725 = vrot.lane.b32.xlu0 %v1477, 94
    %v1726 = vpop.permute.xlu0 %1725
    %1727 = vrot.lane.b32.xlu0 %v1490, 94
    %v1728 = vpop.permute.xlu0 %1727
    %1729 = vrot.lane.b32.xlu0 %v1479, 94
    %v1730 = vpop.permute.xlu0 %1729
    %1731 = vrot.lane.b32.xlu0 %v1491, 94
    %v1732 = vpop.permute.xlu0 %1731
    %1733 = vrot.lane.b32.xlu0 %v1481, 94
    %v1734 = vpop.permute.xlu0 %1733
    %1735 = vrot.lane.b32.xlu0 %v1492, 94
    %v1736 = vpop.permute.xlu0 %1735
    %1737 = vrot.lane.b32.xlu0 %v1483, 94
    %v1738 = vpop.permute.xlu0 %1737
    %vm1739 = vcmask 769024
    %v1740 = vsel %vm1739, %v1724, %v1726
    %v1741 = vsel %vm1739, %v1728, %v1730
    %v1742 = vsel %vm1739, %v1732, %v1734
    %v1743 = vsel %vm1739, %v1736, %v1738
    %v1752 = vsel %vm1526, %v1712, %v1740
    %v1753 = vsel %vm1526, %v1714, %v1741
    %v1754 = vsel %vm1526, %v1716, %v1742
    %v1755 = vsel %vm1526, %v1718, %v1743
    %1756 = vrot.lane.b32.xlu0 %v1489, 108
    %v1757 = vpop.permute.xlu0 %1756
    %1758 = vrot.lane.b32.xlu0 %v1490, 108
    %v1759 = vpop.permute.xlu0 %1758
    %1760 = vrot.lane.b32.xlu0 %v1491, 108
    %v1761 = vpop.permute.xlu0 %1760
    %1762 = vrot.lane.b32.xlu0 %v1492, 108
    %v1763 = vpop.permute.xlu0 %1762
    %1768 = vrot.lane.b32.xlu0 %v1489, 86
    %v1769 = vpop.permute.xlu0 %1768
    %1770 = vrot.lane.b32.xlu0 %v1477, 86
    %v1771 = vpop.permute.xlu0 %1770
    %1772 = vrot.lane.b32.xlu0 %v1490, 86
    %v1773 = vpop.permute.xlu0 %1772
    %1774 = vrot.lane.b32.xlu0 %v1479, 86
    %v1775 = vpop.permute.xlu0 %1774
    %1776 = vrot.lane.b32.xlu0 %v1491, 86
    %v1777 = vpop.permute.xlu0 %1776
    %1778 = vrot.lane.b32.xlu0 %v1481, 86
    %v1779 = vpop.permute.xlu0 %1778
    %1780 = vrot.lane.b32.xlu0 %v1492, 86
    %v1781 = vpop.permute.xlu0 %1780
    %1782 = vrot.lane.b32.xlu0 %v1483, 86
    %v1783 = vpop.permute.xlu0 %1782
    %vm1784 = vcmask 703488
    %v1785 = vsel %vm1784, %v1769, %v1771
    %v1786 = vsel %vm1784, %v1773, %v1775
    %v1787 = vsel %vm1784, %v1777, %v1779
    %v1788 = vsel %vm1784, %v1781, %v1783
    %v1797 = vsel %vm1526, %v1757, %v1785
    %v1798 = vsel %vm1526, %v1759, %v1786
    %v1799 = vsel %vm1526, %v1761, %v1787
    %v1800 = vsel %vm1526, %v1763, %v1788
    %1801 = vrot.lane.b32.xlu0 %v1489, 107
    %v1802 = vpop.permute.xlu0 %1801
    %1803 = vrot.lane.b32.xlu0 %v1490, 107
    %v1804 = vpop.permute.xlu0 %1803
    %1805 = vrot.lane.b32.xlu0 %v1491, 107
    %v1806 = vpop.permute.xlu0 %1805
    %1807 = vrot.lane.b32.xlu0 %v1492, 107
    %v1808 = vpop.permute.xlu0 %1807
    %1813 = vrot.lane.b32.xlu0 %v1489, 85
    %v1814 = vpop.permute.xlu0 %1813
    %1815 = vrot.lane.b32.xlu0 %v1477, 85
    %v1816 = vpop.permute.xlu0 %1815
    %1817 = vrot.lane.b32.xlu0 %v1490, 85
    %v1818 = vpop.permute.xlu0 %1817
    %1819 = vrot.lane.b32.xlu0 %v1479, 85
    %v1820 = vpop.permute.xlu0 %1819
    %1821 = vrot.lane.b32.xlu0 %v1491, 85
    %v1822 = vpop.permute.xlu0 %1821
    %1823 = vrot.lane.b32.xlu0 %v1481, 85
    %v1824 = vpop.permute.xlu0 %1823
    %1825 = vrot.lane.b32.xlu0 %v1492, 85
    %v1826 = vpop.permute.xlu0 %1825
    %1827 = vrot.lane.b32.xlu0 %v1483, 85
    %v1828 = vpop.permute.xlu0 %1827
    %vm1829 = vcmask 695296
    %v1830 = vsel %vm1829, %v1814, %v1816
    %v1831 = vsel %vm1829, %v1818, %v1820
    %v1832 = vsel %vm1829, %v1822, %v1824
    %v1833 = vsel %vm1829, %v1826, %v1828
    %v1842 = vsel %vm1526, %v1802, %v1830
    %v1843 = vsel %vm1526, %v1804, %v1831
    %v1844 = vsel %vm1526, %v1806, %v1832
    %v1845 = vsel %vm1526, %v1808, %v1833
    %1850 = vrot.lane.b32.xlu0 %v1489, 84
    %v1851 = vpop.permute.xlu0 %1850
    %1852 = vrot.lane.b32.xlu0 %v1477, 84
    %v1853 = vpop.permute.xlu0 %1852
    %1854 = vrot.lane.b32.xlu0 %v1490, 84
    %v1855 = vpop.permute.xlu0 %1854
    %1856 = vrot.lane.b32.xlu0 %v1479, 84
    %v1857 = vpop.permute.xlu0 %1856
    %1858 = vrot.lane.b32.xlu0 %v1491, 84
    %v1859 = vpop.permute.xlu0 %1858
    %1860 = vrot.lane.b32.xlu0 %v1481, 84
    %v1861 = vpop.permute.xlu0 %1860
    %1862 = vrot.lane.b32.xlu0 %v1492, 84
    %v1863 = vpop.permute.xlu0 %1862
    %1864 = vrot.lane.b32.xlu0 %v1483, 84
    %v1865 = vpop.permute.xlu0 %1864
    %vm1866 = vcmask 687104
    %v1867 = vsel %vm1866, %v1851, %v1853
    %v1868 = vsel %vm1866, %v1855, %v1857
    %v1869 = vsel %vm1866, %v1859, %v1861
    %v1870 = vsel %vm1866, %v1863, %v1865
    %v1879 = vsel %vm1526, %v1498, %v1867
    %v1880 = vsel %vm1526, %v1502, %v1868
    %v1881 = vsel %vm1526, %v1506, %v1869
    %v1882 = vsel %vm1526, %v1510, %v1870
    %v1883 = vpack.c.bf16 %v1528, %v1527
    %v1884 = vpack.c.bf16 %v1504, %v1500
    %v1885 = vpack.c.bf16 %v1530, %v1529
    %v1886 = vpack.c.bf16 %v1512, %v1508
    %v1887 = vpack.c.bf16 %v1573, %v1572
    %v1888 = vpack.c.bf16 %v1550, %v1546
    %v1889 = vpack.c.bf16 %v1575, %v1574
    %v1890 = vpack.c.bf16 %v1558, %v1554
    %v1891 = vpack.c.bf16 %v1618, %v1617
    %v1892 = vpack.c.bf16 %v1595, %v1591
    %v1893 = vpack.c.bf16 %v1620, %v1619
    %v1894 = vpack.c.bf16 %v1603, %v1599
    %v1895 = vpack.c.bf16 %v1663, %v1662
    %v1896 = vpack.c.bf16 %v1640, %v1636
    %v1897 = vpack.c.bf16 %v1665, %v1664
    %v1898 = vpack.c.bf16 %v1648, %v1644
    %v1899 = vpack.c.bf16 %v1708, %v1707
    %v1900 = vpack.c.bf16 %v1685, %v1681
    %v1901 = vpack.c.bf16 %v1710, %v1709
    %v1902 = vpack.c.bf16 %v1693, %v1689
    %v1903 = vpack.c.bf16 %v1753, %v1752
    %v1904 = vpack.c.bf16 %v1730, %v1726
    %v1905 = vpack.c.bf16 %v1755, %v1754
    %v1906 = vpack.c.bf16 %v1738, %v1734
    %v1907 = vpack.c.bf16 %v1798, %v1797
    %v1908 = vpack.c.bf16 %v1775, %v1771
    %v1909 = vpack.c.bf16 %v1800, %v1799
    %v1910 = vpack.c.bf16 %v1783, %v1779
    %v1911 = vpack.c.bf16 %v1843, %v1842
    %v1912 = vpack.c.bf16 %v1820, %v1816
    %v1913 = vpack.c.bf16 %v1845, %v1844
    %v1914 = vpack.c.bf16 %v1828, %v1824
    %v1915 = vpack.c.bf16 %v1880, %v1879
    %v1916 = vpack.c.bf16 %v1857, %v1853
    %v1917 = vpack.c.bf16 %v1882, %v1881
    %v1918 = vpack.c.bf16 %v1865, %v1861
    %v1919 = vld [vmem:[#allocation3] sm:$0xff]
    %v1920 = vld [vmem:[#allocation3 + $0x8] sm:$0xf]
    %v1921 = vld [vmem:[#allocation3 + $0xc] sm:$0xff]
    %v1922 = vld [vmem:[#allocation3 + $0x14] sm:$0xf]
    %v1923 = vld [vmem:[%s5] sm:$0xff]
    %v1924 = vld [vmem:[%s5 + $0x8] sm:$0xff]
    %1926 = vset.pattern.permute.xlu0 0
    %1927 = vperm.xlu0 %1926, %v1923
    %v1928 = vpop.permute.xlu0 %1927
    %1931 = vset.pattern.permute.xlu0 0
    %1932 = vperm.xlu0 %1931, %v1924
    %v1933 = vpop.permute.xlu0 %1932
    %v1939 = vunpack.c.l.b16 %v1919
    %v1940 = vunpack.c.h.b16 %v1919
    %v1941 = vunpack.c.l.b16 %v1920
    %v1942 = vunpack.c.l.b16 %v1921
    %v1943 = vunpack.c.h.b16 %v1921
    %v1944 = vunpack.c.l.b16 %v1922
    %v1945 = vpack.c.b16 %v1942, %v1939
    %v1946 = vpack.c.b16 %v1943, %v1940
    %v1947 = vpack.c.b16 %v1944, %v1941
    %vm1950 = vcmask 261120
    %v1952 = vsel %vm1950, %v1947, 0
    %1954 = vmatprep.subr.bf16.mxu0 %v1884
    %1955 = vmatpush1.bf16.msra.mxu0 %v1883
    %1956 = vmatprep.subr.bf16.mxu0 %v1886
    %1957 = vmatpush1.bf16.msra.mxu0 %v1885
    %1958 = vmatprep.subr.bf16.mxu0 %v1888
    %1959 = vmatpush1.bf16.msra.mxu0 %v1887
    %1960 = vmatprep.subr.bf16.mxu0 %v1890
    %1961 = vmatpush1.bf16.msra.mxu0 %v1889
    %1962 = vmatprep.subr.bf16.mxu0 %v1892
    %1963 = vmatpush1.bf16.msra.mxu0 %v1891
    %1964 = vmatprep.subr.bf16.mxu0 %v1894
    %1965 = vmatpush1.bf16.msra.mxu0 %v1893
    %1966 = vmatprep.subr.bf16.mxu0 %v1896
    %1967 = vmatpush1.bf16.msra.mxu0 %v1895
    %1968 = vmatprep.subr.bf16.mxu0 %v1898
    %1969 = vmatpush1.bf16.msra.mxu0 %v1897
    %1970 = vmatprep.subr.bf16.mxu0 %v1900
    %1971 = vmatpush1.bf16.msra.mxu0 %v1899
    %1972 = vmatprep.subr.bf16.mxu0 %v1902
    %1973 = vmatpush1.bf16.msra.mxu0 %v1901
    %1974 = vmatprep.subr.bf16.mxu0 %v1904
    %1975 = vmatpush1.bf16.msra.mxu0 %v1903
    %1976 = vmatprep.subr.bf16.mxu0 %v1906
    %1977 = vmatpush1.bf16.msra.mxu0 %v1905
    %1978 = vmatprep.subr.bf16.mxu0 %v1908
    %1979 = vmatpush1.bf16.msra.mxu0 %v1907
    %1980 = vmatprep.subr.bf16.mxu0 %v1910
    %1981 = vmatpush1.bf16.msra.mxu0 %v1909
    %1982 = vmatprep.subr.bf16.mxu0 %v1912
    %1983 = vmatpush1.bf16.msra.mxu0 %v1911
    %1984 = vmatprep.subr.bf16.mxu0 %v1914
    %1985 = vmatpush1.bf16.msra.mxu0 %v1913
    %1986 = vmatprep.mubr.bf16.mxu0 %v1946
    %1987 = vmatmul.mubr.bf16.gmra.mrb[0].mxu0 %v1945
    %v1988 = vpop.f32.mrb[0].mxu0
    %v1989 = vadd.f32 %v1928, %v1988
    %v1990 = vpop.f32.mrb[0].mxu0
    %v1991 = vadd.f32 %v1928, %v1990
    %v1992 = vpop.f32.mrb[0].mxu0
    %v1993 = vadd.f32 %v1933, %v1992
    %v1994 = vpop.f32.mrb[0].mxu0
    %v1995 = vadd.f32 %v1933, %v1994
    %1996 = vdwg.mxu0
    %1997 = vmatprep.subr.bf16.mxu0 %v1916
    %1998 = vmatpush1.bf16.msra.mxu0 %v1915
    %1999 = vmatprep.subr.bf16.mxu0 %v1918
    %2000 = vmatpush1.bf16.msra.mxu0 %v1917
    %2001 = vmatprep.subr.bf16.mxu0 0
    %2002 = vmatpush1.bf16.msra.mxu0 0
    %2003 = vmatprep.subr.bf16.mxu0 0
    %2004 = vmatpush1.bf16.msra.mxu0 0
    %2005 = vmatprep.subr.bf16.mxu0 0
    %2006 = vmatpush1.bf16.msra.mxu0 0
    %2007 = vmatprep.subr.bf16.mxu0 0
    %2008 = vmatpush1.bf16.msra.mxu0 0
    %2009 = vmatprep.subr.bf16.mxu0 0
    %2010 = vmatpush1.bf16.msra.mxu0 0
    %2011 = vmatprep.subr.bf16.mxu0 0
    %2012 = vmatpush1.bf16.msra.mxu0 0
    %2013 = vmatprep.subr.bf16.mxu0 0
    %2014 = vmatpush1.bf16.msra.mxu0 0
    %2015 = vmatprep.subr.bf16.mxu0 0
    %2016 = vmatpush1.bf16.msra.mxu0 0
    %2017 = vmatprep.subr.bf16.mxu0 0
    %2018 = vmatpush1.bf16.msra.mxu0 0
    %2019 = vmatprep.subr.bf16.mxu0 0
    %2020 = vmatpush1.bf16.msra.mxu0 0
    %2021 = vmatprep.subr.bf16.mxu0 0
    %2022 = vmatpush1.bf16.msra.mxu0 0
    %2023 = vmatprep.subr.bf16.mxu0 0
    %2024 = vmatpush1.bf16.msra.mxu0 0
    %2025 = vmatprep.subr.bf16.mxu0 0
    %2026 = vmatpush1.bf16.msra.mxu0 0
    %2027 = vmatprep.subr.bf16.mxu0 0
    %2028 = vmatpush1.bf16.msra.mxu0 0
    %2029 = vmatprep.mubr.bf16.mxu0 0
    %2030 = vmatmul.mubr.bf16.gmra.mrb[0].mxu0 %v1952
    %v2031 = vpop.f32.mrb[0].mxu0
    %v2032 = vadd.f32 %v1989, %v2031
    %v2033 = vpop.f32.mrb[0].mxu0
    %v2034 = vadd.f32 %v1991, %v2033
    %v2035 = vpop.f32.mrb[0].mxu0
    %v2036 = vadd.f32 %v1993, %v2035
    %v2037 = vpop.f32.mrb[0].mxu0
    %v2038 = vadd.f32 %v1995, %v2037
    %2039 = vdwg.mxu0
    %v2040 = vmax.f32 %v2032, 0.0
    %v2041 = vmax.f32 %v2034, 0.0
    %v2042 = vmax.f32 %v2036, 0.0
    %v2043 = vmax.f32 %v2038, 0.0
    %2046 = vrot.lane.b32.xlu0 %v2040, 127
    %v2047 = vpop.permute.xlu0 %2046
    %2048 = vrot.lane.b32.xlu0 %v2042, 127
    %v2049 = vpop.permute.xlu0 %2048
    %v2052 = vmax.f32 %v2040, %v2047
    %v2053 = vmax.f32 %v2042, %v2049
    %2054 = vrot.lane.b32.xlu0 %v2040, 118
    %v2055 = vpop.permute.xlu0 %2054
    %2056 = vrot.lane.b32.xlu0 %v2042, 118
    %v2057 = vpop.permute.xlu0 %2056
    %v2060 = vmax.f32 %v2052, %v2055
    %v2061 = vmax.f32 %v2053, %v2057
    %2062 = vrot.lane.b32.xlu0 %v2040, 117
    %v2063 = vpop.permute.xlu0 %2062
    %2064 = vrot.lane.b32.xlu0 %v2042, 117
    %v2065 = vpop.permute.xlu0 %2064
    %v2068 = vmax.f32 %v2060, %v2063
    %v2069 = vmax.f32 %v2061, %v2065
    %v2070 = vpack.c.bf16 %v2069, %v2068
    %v2071 = vld [vmem:[%s6] sm:$0xf]
    %v2072 = vld [vmem:[%s6 + $0x4] sm:$0xf]
    %v2073 = vld [vmem:[%s6 + $0x8] sm:$0xf]
    %v2074 = vld [vmem:[%s6 + $0xc] sm:$0xf]
    %v2075 = vld [vmem:[%s6 + $0x10] sm:$0xf]
    %v2076 = vld [vmem:[%s6 + $0x14] sm:$0xf]
    %v2077 = vld [vmem:[%s6 + $0x18] sm:$0xf]
    %v2078 = vld [vmem:[%s6 + $0x1c] sm:$0xf]
    %v2079 = vld [vmem:[%s6 + $0x20] sm:$0x3]
    %v2089 = vunpack.c.l.b16 %v2071
    %v2090 = vunpack.c.l.b16 %v2072
    %v2091 = vunpack.c.l.b16 %v2073
    %v2092 = vunpack.c.l.b16 %v2074
    %v2093 = vunpack.c.l.b16 %v2075
    %v2094 = vunpack.c.l.b16 %v2076
    %v2095 = vunpack.c.l.b16 %v2077
    %v2096 = vunpack.c.l.b16 %v2078
    %v2097 = vunpack.c.l.b16 %v2079
    %v2098 = vpack.c.b16 %v2090, %v2089
    %v2099 = vpack.c.b16 %v2092, %v2091
    %v2100 = vpack.c.b16 %v2094, %v2093
    %v2101 = vpack.c.b16 %v2096, %v2095
    %v2102 = vpack.c.b16 %v2097, %v2097
    %vm2107 = vcmask 547840
    %v2109 = vsel %vm2107, %v2070, 0
    %v2111 = vsel %vm469, 4294967295, 65535
    %v2112 = vsel %vm475, %v2111, 0
    %v2114 = vand.u32 %v2102, %v2112
    %2116 = vmatprep.subr.bf16.mxu0 0
    %2117 = vmatpush1.bf16.msra.mxu0 %v2098
    %2118 = vmatprep.subr.bf16.mxu0 0
    %2119 = vmatpush1.bf16.msra.mxu0 %v2099
    %2120 = vmatprep.subr.bf16.mxu0 0
    %2121 = vmatpush1.bf16.msra.mxu0 %v2100
    %2122 = vmatprep.subr.bf16.mxu0 0
    %2123 = vmatpush1.bf16.msra.mxu0 %v2101
    %2124 = vmatprep.subr.bf16.mxu0 0
    %2125 = vmatpush1.bf16.msra.mxu0 %v2114
    %2126 = vmatprep.subr.bf16.mxu0 0
    %2127 = vmatpush1.bf16.msra.mxu0 0
    %2128 = vmatprep.subr.bf16.mxu0 0
    %2129 = vmatpush1.bf16.msra.mxu0 0
    %2130 = vmatprep.subr.bf16.mxu0 0
    %2131 = vmatpush1.bf16.msra.mxu0 0
    %2132 = vmatprep.subr.bf16.mxu0 0
    %2133 = vmatpush1.bf16.msra.mxu0 0
    %2134 = vmatprep.subr.bf16.mxu0 0
    %2135 = vmatpush1.bf16.msra.mxu0 0
    %2136 = vmatprep.subr.bf16.mxu0 0
    %2137 = vmatpush1.bf16.msra.mxu0 0
    %2138 = vmatprep.subr.bf16.mxu0 0
    %2139 = vmatpush1.bf16.msra.mxu0 0
    %2140 = vmatprep.subr.bf16.mxu0 0
    %2141 = vmatpush1.bf16.msra.mxu0 0
    %2142 = vmatprep.subr.bf16.mxu0 0
    %2143 = vmatpush1.bf16.msra.mxu0 0
    %2144 = vmatprep.subr.bf16.mxu0 0
    %2145 = vmatpush1.bf16.msra.mxu0 0
    %2146 = vmatprep.subr.bf16.mxu0 0
    %2147 = vmatpush1.bf16.msra.mxu0 0
    %2148 = vmatprep.mubr.bf16.mxu0 0
    %2149 = vmatmul.mubr.bf16.gmra.mrb[0].mxu0 %v2109
    %v2150 = vpop.f32.mrb[0].mxu0
    %v2151 = vadd.f32 0.0, %v2150
    %v2152 = vpop.f32.mrb[0].mxu0
    %v2153 = vpop.f32.mrb[0].mxu0
    %v2154 = vadd.f32 0.0, %v2153
    %v2155 = vpop.f32.mrb[0].mxu0
    %2156 = vdwg.mxu0
    %2159 = vrot.lane.b32.xlu0 %v2041, 127
    %v2160 = vpop.permute.xlu0 %2159
    %2161 = vrot.lane.b32.xlu0 %v2043, 127
    %v2162 = vpop.permute.xlu0 %2161
    %v2163 = vsel %vm226, %v2047, %v2160
    %v2164 = vsel %vm226, %v2049, %v2162
    %v2169 = vmax.f32 %v2040, %v2163
    %v2170 = vmax.f32 %v2041, %v2160
    %v2171 = vmax.f32 %v2042, %v2164
    %v2172 = vmax.f32 %v2043, %v2162
    %2173 = vrot.lane.b32.xlu0 %v2041, 118
    %v2174 = vpop.permute.xlu0 %2173
    %2175 = vrot.lane.b32.xlu0 %v2043, 118
    %v2176 = vpop.permute.xlu0 %2175
    %vm2177 = vcmask 965632
    %v2178 = vsel %vm2177, %v2055, %v2174
    %v2179 = vsel %vm2177, %v2057, %v2176
    %v2184 = vmax.f32 %v2169, %v2178
    %v2185 = vmax.f32 %v2170, %v2174
    %v2186 = vmax.f32 %v2171, %v2179
    %v2187 = vmax.f32 %v2172, %v2176
    %2188 = vrot.lane.b32.xlu0 %v2041, 117
    %v2189 = vpop.permute.xlu0 %2188
    %2190 = vrot.lane.b32.xlu0 %v2043, 117
    %v2191 = vpop.permute.xlu0 %2190
    %vm2192 = vcmask 957440
    %v2193 = vsel %vm2192, %v2063, %v2189
    %v2194 = vsel %vm2192, %v2065, %v2191
    %v2199 = vmax.f32 %v2184, %v2193
    %v2200 = vmax.f32 %v2185, %v2189
    %v2201 = vmax.f32 %v2186, %v2194
    %v2202 = vmax.f32 %v2187, %v2191
    %v2203 = vpack.c.bf16 %v2201, %v2199
    %v2204 = vpack.c.bf16 %v2202, %v2200
    %2207 = vrot.lane.b32.xlu0 %v2203, 50
    %v2208 = vpop.permute.xlu0 %2207
    %2209 = vrot.lane.b32.xlu0 %v2204, 50
    %v2210 = vpop.permute.xlu0 %2209
    %vm2211 = vcmask 408576
    %v2212 = vsel %vm2211, %v2208, %v2210
    %v2214 = vsel %vm2107, %v2212, 0
    %2216 = vmatprep.subr.bf16.mxu0 0
    %2217 = vmatpush1.bf16.msra.mxu0 %v2098
    %2218 = vmatprep.subr.bf16.mxu0 0
    %2219 = vmatpush1.bf16.msra.mxu0 %v2099
    %2220 = vmatprep.subr.bf16.mxu0 0
    %2221 = vmatpush1.bf16.msra.mxu0 %v2100
    %2222 = vmatprep.subr.bf16.mxu0 0
    %2223 = vmatpush1.bf16.msra.mxu0 %v2101
    %2224 = vmatprep.subr.bf16.mxu0 0
    %2225 = vmatpush1.bf16.msra.mxu0 %v2114
    %2226 = vmatprep.subr.bf16.mxu0 0
    %2227 = vmatpush1.bf16.msra.mxu0 0
    %2228 = vmatprep.subr.bf16.mxu0 0
    %2229 = vmatpush1.bf16.msra.mxu0 0
    %2230 = vmatprep.subr.bf16.mxu0 0
    %2231 = vmatpush1.bf16.msra.mxu0 0
    %2232 = vmatprep.subr.bf16.mxu0 0
    %2233 = vmatpush1.bf16.msra.mxu0 0
    %2234 = vmatprep.subr.bf16.mxu0 0
    %2235 = vmatpush1.bf16.msra.mxu0 0
    %2236 = vmatprep.subr.bf16.mxu0 0
    %2237 = vmatpush1.bf16.msra.mxu0 0
    %2238 = vmatprep.subr.bf16.mxu0 0
    %2239 = vmatpush1.bf16.msra.mxu0 0
    %2240 = vmatprep.subr.bf16.mxu0 0
    %2241 = vmatpush1.bf16.msra.mxu0 0
    %2242 = vmatprep.subr.bf16.mxu0 0
    %2243 = vmatpush1.bf16.msra.mxu0 0
    %2244 = vmatprep.subr.bf16.mxu0 0
    %2245 = vmatpush1.bf16.msra.mxu0 0
    %2246 = vmatprep.subr.bf16.mxu0 0
    %2247 = vmatpush1.bf16.msra.mxu0 0
    %2248 = vmatprep.mubr.bf16.mxu0 0
    %2249 = vmatmul.mubr.bf16.gmra.mrb[0].mxu0 %v2214
    %v2250 = vpop.f32.mrb[0].mxu0
    %v2251 = vadd.f32 0.0, %v2250
    %v2252 = vpop.f32.mrb[0].mxu0
    %v2253 = vpop.f32.mrb[0].mxu0
    %v2254 = vadd.f32 0.0, %v2253
    %v2255 = vpop.f32.mrb[0].mxu0
    %2256 = vdwg.mxu0
    %2259 = vrot.lane.b32.xlu0 %v2251, 36
    %v2260 = vpop.permute.xlu0 %2259
    %2261 = vrot.lane.b32.xlu0 %v2254, 36
    %v2262 = vpop.permute.xlu0 %2261
    %vm2265 = vcmask 293888
    %v2266 = vsel %vm2265, %v2151, %v2260
    %v2267 = vsel %vm2265, %v2154, %v2262
    %2270 = vrot.lane.b32.xlu0 %v2266, 114
    %v2271 = vpop.permute.xlu0 %2270
    %2272 = vrot.lane.b32.xlu0 %v2267, 114
    %v2273 = vpop.permute.xlu0 %2272
    %vm2276 = vcmask 179200
    %v2277 = vsel %vm2276, %v2266, %v2271
    %v2278 = vsel %vm2276, %v2267, %v2273
    %2279 = vrot.lane.b32.xlu0 %v2266, 127
    %v2280 = vpop.permute.xlu0 %2279
    %2281 = vrot.lane.b32.xlu0 %v2267, 127
    %v2282 = vpop.permute.xlu0 %2281
    %2285 = vrot.lane.b32.xlu0 %v2266, 113
    %v2286 = vpop.permute.xlu0 %2285
    %2287 = vrot.lane.b32.xlu0 %v2267, 113
    %v2288 = vpop.permute.xlu0 %2287
    %v2291 = vsel %vm2276, %v2280, %v2286
    %v2292 = vsel %vm2276, %v2282, %v2288
    %2293 = vrot.lane.b32.xlu0 %v2266, 126
    %v2294 = vpop.permute.xlu0 %2293
    %2295 = vrot.lane.b32.xlu0 %v2267, 126
    %v2296 = vpop.permute.xlu0 %2295
    %2299 = vrot.lane.b32.xlu0 %v2266, 112
    %v2300 = vpop.permute.xlu0 %2299
    %2301 = vrot.lane.b32.xlu0 %v2267, 112
    %v2302 = vpop.permute.xlu0 %2301
    %v2305 = vsel %vm2276, %v2294, %v2300
    %v2306 = vsel %vm2276, %v2296, %v2302
    %2307 = vrot.lane.b32.xlu0 %v2266, 122
    %v2308 = vpop.permute.xlu0 %2307
    %2309 = vrot.lane.b32.xlu0 %v2267, 122
    %v2310 = vpop.permute.xlu0 %2309
    %2313 = vrot.lane.b32.xlu0 %v2266, 108
    %v2314 = vpop.permute.xlu0 %2313
    %2315 = vrot.lane.b32.xlu0 %v2267, 108
    %v2316 = vpop.permute.xlu0 %2315
    %v2319 = vsel %vm2276, %v2308, %v2314
    %v2320 = vsel %vm2276, %v2310, %v2316
    %2321 = vrot.lane.b32.xlu0 %v2266, 121
    %v2322 = vpop.permute.xlu0 %2321
    %2323 = vrot.lane.b32.xlu0 %v2267, 121
    %v2324 = vpop.permute.xlu0 %2323
    %2327 = vrot.lane.b32.xlu0 %v2266, 107
    %v2328 = vpop.permute.xlu0 %2327
    %2329 = vrot.lane.b32.xlu0 %v2267, 107
    %v2330 = vpop.permute.xlu0 %2329
    %v2333 = vsel %vm2276, %v2322, %v2328
    %v2334 = vsel %vm2276, %v2324, %v2330
    %2335 = vrot.lane.b32.xlu0 %v2266, 120
    %v2336 = vpop.permute.xlu0 %2335
    %2337 = vrot.lane.b32.xlu0 %v2267, 120
    %v2338 = vpop.permute.xlu0 %2337
    %2341 = vrot.lane.b32.xlu0 %v2266, 106
    %v2342 = vpop.permute.xlu0 %2341
    %2343 = vrot.lane.b32.xlu0 %v2267, 106
    %v2344 = vpop.permute.xlu0 %2343
    %v2347 = vsel %vm2276, %v2336, %v2342
    %v2348 = vsel %vm2276, %v2338, %v2344
    %2349 = vrot.lane.b32.xlu0 %v2266, 116
    %v2350 = vpop.permute.xlu0 %2349
    %2351 = vrot.lane.b32.xlu0 %v2267, 116
    %v2352 = vpop.permute.xlu0 %2351
    %2355 = vrot.lane.b32.xlu0 %v2266, 102
    %v2356 = vpop.permute.xlu0 %2355
    %2357 = vrot.lane.b32.xlu0 %v2267, 102
    %v2358 = vpop.permute.xlu0 %2357
    %v2361 = vsel %vm2276, %v2350, %v2356
    %v2362 = vsel %vm2276, %v2352, %v2358
    %2363 = vrot.lane.b32.xlu0 %v2266, 115
    %v2364 = vpop.permute.xlu0 %2363
    %2365 = vrot.lane.b32.xlu0 %v2267, 115
    %v2366 = vpop.permute.xlu0 %2365
    %2369 = vrot.lane.b32.xlu0 %v2266, 101
    %v2370 = vpop.permute.xlu0 %2369
    %2371 = vrot.lane.b32.xlu0 %v2267, 101
    %v2372 = vpop.permute.xlu0 %2371
    %v2375 = vsel %vm2276, %v2364, %v2370
    %v2376 = vsel %vm2276, %v2366, %v2372
    %2377 = vrot.lane.b32.xlu0 %v2266, 100
    %v2378 = vpop.permute.xlu0 %2377
    %2379 = vrot.lane.b32.xlu0 %v2267, 100
    %v2380 = vpop.permute.xlu0 %2379
    %v2383 = vsel %vm2276, %v2271, %v2378
    %v2384 = vsel %vm2276, %v2273, %v2380
    %v2385 = vpack.c.bf16 %v2278, %v2277
    %v2386 = vpack.c.bf16 %v2292, %v2291
    %v2387 = vpack.c.bf16 %v2306, %v2305
    %v2388 = vpack.c.bf16 %v2320, %v2319
    %v2389 = vpack.c.bf16 %v2334, %v2333
    %v2390 = vpack.c.bf16 %v2348, %v2347
    %v2391 = vpack.c.bf16 %v2362, %v2361
    %v2392 = vpack.c.bf16 %v2376, %v2375
    %v2393 = vpack.c.bf16 %v2384, %v2383
    %v2394 = vld [vmem:[%s7] sm:$0xff]
    %v2395 = vld [vmem:[%s8] sm:$0xff]
    %2397 = vset.pattern.permute.xlu0 0
    %2398 = vperm.xlu0 %2397, %v2395
    %v2399 = vpop.permute.xlu0 %2398
    %v2402 = vunpack.c.l.b16 %v2394
    %v2403 = vunpack.c.h.b16 %v2394
    %v2404 = vpack.c.b16 %v2402, %v2402
    %v2405 = vpack.c.b16 %v2403, %v2403
    %vm2407 = vcmask 130048
    %v2409 = vsel %vm2407, %v2405, 0
    %2411 = vmatprep.subr.bf16.mxu0 0
    %2412 = vmatpush1.bf16.msra.mxu0 %v2385
    %2413 = vmatprep.subr.bf16.mxu0 0
    %2414 = vmatpush1.bf16.msra.mxu0 %v2386
    %2415 = vmatprep.subr.bf16.mxu0 0
    %2416 = vmatpush1.bf16.msra.mxu0 %v2387
    %2417 = vmatprep.subr.bf16.mxu0 0
    %2418 = vmatpush1.bf16.msra.mxu0 %v2388
    %2419 = vmatprep.subr.bf16.mxu0 0
    %2420 = vmatpush1.bf16.msra.mxu0 %v2389
    %2421 = vmatprep.subr.bf16.mxu0 0
    %2422 = vmatpush1.bf16.msra.mxu0 %v2390
    %2423 = vmatprep.subr.bf16.mxu0 0
    %2424 = vmatpush1.bf16.msra.mxu0 %v2391
    %2425 = vmatprep.subr.bf16.mxu0 0
    %2426 = vmatpush1.bf16.msra.mxu0 %v2392
    %2427 = vmatprep.subr.bf16.mxu0 0
    %2428 = vmatpush1.bf16.msra.mxu0 %v2393
    %2429 = vmatprep.subr.bf16.mxu0 0
    %2430 = vmatpush1.bf16.msra.mxu0 0
    %2431 = vmatprep.subr.bf16.mxu0 0
    %2432 = vmatpush1.bf16.msra.mxu0 0
    %2433 = vmatprep.subr.bf16.mxu0 0
    %2434 = vmatpush1.bf16.msra.mxu0 0
    %2435 = vmatprep.subr.bf16.mxu0 0
    %2436 = vmatpush1.bf16.msra.mxu0 0
    %2437 = vmatprep.subr.bf16.mxu0 0
    %2438 = vmatpush1.bf16.msra.mxu0 0
    %2439 = vmatprep.subr.bf16.mxu0 0
    %2440 = vmatpush1.bf16.msra.mxu0 0
    %2441 = vmatprep.subr.bf16.mxu0 0
    %2442 = vmatpush1.bf16.msra.mxu0 0
    %2443 = vmatprep.mubr.bf16.mxu0 %v2409
    %2444 = vmatmul.mubr.bf16.gmra.mrb[0].mxu0 %v2404
    %v2445 = vpop.f32.mrb[0].mxu0
    %v2446 = vadd.f32 %v2399, %v2445
    %v2447 = vpop.f32.mrb[0].mxu0
    %v2448 = vpop.f32.mrb[0].mxu0
    %v2449 = vpop.f32.mrb[0].mxu0
    %2450 = vdwg.mxu0
    %v2451 = vmax.f32 %v2446, 0.0
    %2453 = vrot.lane.b32.xlu0 %v2451, 127
    %v2454 = vpop.permute.xlu0 %2453
    %v2456 = vmax.f32 %v2451, %v2454
    %2457 = vrot.lane.b32.xlu0 %v2451, 122
    %v2458 = vpop.permute.xlu0 %2457
    %v2460 = vmax.f32 %v2456, %v2458
    %2461 = vrot.lane.b32.xlu0 %v2451, 121
    %v2462 = vpop.permute.xlu0 %2461
    %v2464 = vmax.f32 %v2460, %v2462
    %v2465 = vpack.c.bf16 %v2464, %v2464
    %v2466 = vld [vmem:[#allocation5] sm:$0xf]
    %v2467 = vld [vmem:[#allocation5 + $0x4] sm:$0xf]
    %v2470 = vunpack.c.l.b16 %v2466
    %v2471 = vunpack.c.l.b16 %v2467
    %v2472 = vpack.c.b16 %v2471, %v2470
    %vm2473 = vcmask 121856
    %v2475 = vsel %vm2473, %v2465, 0
    %vm2477 = vcmask 1047552
    %v2478 = vsel %vm505, 4294967295, 65535
    %v2479 = vsel %vm2477, %v2478, 0
    %v2481 = vand.u32 %v2472, %v2479
    %2483 = vmatprep.subr.bf16.mxu0 0
    %2484 = vmatpush1.bf16.msra.mxu0 %v2481
    %2485 = vmatprep.subr.bf16.mxu0 0
    %2486 = vmatpush1.bf16.msra.mxu0 0
    %2487 = vmatprep.subr.bf16.mxu0 0
    %2488 = vmatpush1.bf16.msra.mxu0 0
    %2489 = vmatprep.subr.bf16.mxu0 0
    %2490 = vmatpush1.bf16.msra.mxu0 0
    %2491 = vmatprep.subr.bf16.mxu0 0
    %2492 = vmatpush1.bf16.msra.mxu0 0
    %2493 = vmatprep.subr.bf16.mxu0 0
    %2494 = vmatpush1.bf16.msra.mxu0 0
    %2495 = vmatprep.subr.bf16.mxu0 0
    %2496 = vmatpush1.bf16.msra.mxu0 0
    %2497 = vmatprep.subr.bf16.mxu0 0
    %2498 = vmatpush1.bf16.msra.mxu0 0
    %2499 = vmatprep.subr.bf16.mxu0 0
    %2500 = vmatpush1.bf16.msra.mxu0 0
    %2501 = vmatprep.subr.bf16.mxu0 0
    %2502 = vmatpush1.bf16.msra.mxu0 0
    %2503 = vmatprep.subr.bf16.mxu0 0
    %2504 = vmatpush1.bf16.msra.mxu0 0
    %2505 = vmatprep.subr.bf16.mxu0 0
    %2506 = vmatpush1.bf16.msra.mxu0 0
    %2507 = vmatprep.subr.bf16.mxu0 0
    %2508 = vmatpush1.bf16.msra.mxu0 0
    %2509 = vmatprep.subr.bf16.mxu0 0
    %2510 = vmatpush1.bf16.msra.mxu0 0
    %2511 = vmatprep.subr.bf16.mxu0 0
    %2512 = vmatpush1.bf16.msra.mxu0 0
    %2513 = vmatprep.subr.bf16.mxu0 0
    %2514 = vmatpush1.bf16.msra.mxu0 0
    %2515 = vmatprep.mubr.bf16.mxu0 0
    %2516 = vmatmul.mubr.bf16.gmra.mrb[0].mxu0 %v2475
    %v2517 = vpop.f32.mrb[0].mxu0
    %v2518 = vadd.f32 0.0, %v2517
    %v2519 = vpop.f32.mrb[0].mxu0
    %v2520 = vpop.f32.mrb[0].mxu0
    %v2521 = vpop.f32.mrb[0].mxu0
    %2522 = vdwg.mxu0
    %2524 = vrot.lane.b32.xlu0 %v2465, 106
    %v2525 = vpop.permute.xlu0 %2524
    %v2527 = vsel %vm2473, %v2525, 0
    %2529 = vmatprep.subr.bf16.mxu0 0
    %2530 = vmatpush1.bf16.msra.mxu0 %v2481
    %2531 = vmatprep.subr.bf16.mxu0 0
    %2532 = vmatpush1.bf16.msra.mxu0 0
    %2533 = vmatprep.subr.bf16.mxu0 0
    %2534 = vmatpush1.bf16.msra.mxu0 0
    %2535 = vmatprep.subr.bf16.mxu0 0
    %2536 = vmatpush1.bf16.msra.mxu0 0
    %2537 = vmatprep.subr.bf16.mxu0 0
    %2538 = vmatpush1.bf16.msra.mxu0 0
    %2539 = vmatprep.subr.bf16.mxu0 0
    %2540 = vmatpush1.bf16.msra.mxu0 0
    %2541 = vmatprep.subr.bf16.mxu0 0
    %2542 = vmatpush1.bf16.msra.mxu0 0
    %2543 = vmatprep.subr.bf16.mxu0 0
    %2544 = vmatpush1.bf16.msra.mxu0 0
    %2545 = vmatprep.subr.bf16.mxu0 0
    %2546 = vmatpush1.bf16.msra.mxu0 0
    %2547 = vmatprep.subr.bf16.mxu0 0
    %2548 = vmatpush1.bf16.msra.mxu0 0
    %2549 = vmatprep.subr.bf16.mxu0 0
    %2550 = vmatpush1.bf16.msra.mxu0 0
    %2551 = vmatprep.subr.bf16.mxu0 0
    %2552 = vmatpush1.bf16.msra.mxu0 0
    %2553 = vmatprep.subr.bf16.mxu0 0
    %2554 = vmatpush1.bf16.msra.mxu0 0
    %2555 = vmatprep.subr.bf16.mxu0 0
    %2556 = vmatpush1.bf16.msra.mxu0 0
    %2557 = vmatprep.subr.bf16.mxu0 0
    %2558 = vmatpush1.bf16.msra.mxu0 0
    %2559 = vmatprep.subr.bf16.mxu0 0
    %2560 = vmatpush1.bf16.msra.mxu0 0
    %2561 = vmatprep.mubr.bf16.mxu0 0
    %2562 = vmatmul.mubr.bf16.gmra.mrb[0].mxu0 %v2527
    %v2563 = vpop.f32.mrb[0].mxu0
    %v2564 = vadd.f32 0.0, %v2563
    %v2565 = vpop.f32.mrb[0].mxu0
    %v2566 = vpop.f32.mrb[0].mxu0
    %v2567 = vpop.f32.mrb[0].mxu0
    %2568 = vdwg.mxu0
    %2570 = vrot.lane.b32.xlu0 %v2564, 49
    %v2571 = vpop.permute.xlu0 %2570
    %vm2573 = vcmask 400384
    %v2574 = vsel %vm2573, %v2518, %v2571
    %2576 = vrot.lane.b32.xlu0 %v2574, 112
    %v2577 = vpop.permute.xlu0 %2576
    %vm2579 = vcmask 269312
    %v2580 = vsel %vm2579, %v2574, %v2577
    %2581 = vrot.lane.b32.xlu0 %v2574, 127
    %v2582 = vpop.permute.xlu0 %2581
    %2584 = vrot.lane.b32.xlu0 %v2574, 111
    %v2585 = vpop.permute.xlu0 %2584
    %v2587 = vsel %vm2579, %v2582, %v2585
    %2588 = vrot.lane.b32.xlu0 %v2574, 126
    %v2589 = vpop.permute.xlu0 %2588
    %2591 = vrot.lane.b32.xlu0 %v2574, 110
    %v2592 = vpop.permute.xlu0 %2591
    %v2594 = vsel %vm2579, %v2589, %v2592
    %2595 = vrot.lane.b32.xlu0 %v2574, 121
    %v2596 = vpop.permute.xlu0 %2595
    %2598 = vrot.lane.b32.xlu0 %v2574, 105
    %v2599 = vpop.permute.xlu0 %2598
    %v2601 = vsel %vm2579, %v2596, %v2599
    %2602 = vrot.lane.b32.xlu0 %v2574, 120
    %v2603 = vpop.permute.xlu0 %2602
    %2605 = vrot.lane.b32.xlu0 %v2574, 104
    %v2606 = vpop.permute.xlu0 %2605
    %v2608 = vsel %vm2579, %v2603, %v2606
    %2609 = vrot.lane.b32.xlu0 %v2574, 119
    %v2610 = vpop.permute.xlu0 %2609
    %2612 = vrot.lane.b32.xlu0 %v2574, 103
    %v2613 = vpop.permute.xlu0 %2612
    %v2615 = vsel %vm2579, %v2610, %v2613
    %2616 = vrot.lane.b32.xlu0 %v2574, 114
    %v2617 = vpop.permute.xlu0 %2616
    %2619 = vrot.lane.b32.xlu0 %v2574, 98
    %v2620 = vpop.permute.xlu0 %2619
    %v2622 = vsel %vm2579, %v2617, %v2620
    %2623 = vrot.lane.b32.xlu0 %v2574, 113
    %v2624 = vpop.permute.xlu0 %2623
    %2626 = vrot.lane.b32.xlu0 %v2574, 97
    %v2627 = vpop.permute.xlu0 %2626
    %v2629 = vsel %vm2579, %v2624, %v2627
    %2630 = vrot.lane.b32.xlu0 %v2574, 96
    %v2631 = vpop.permute.xlu0 %2630
    %v2633 = vsel %vm2579, %v2577, %v2631
    %v2634 = vpack.c.bf16 %v2587, %v2580
    %v2635 = vpack.c.bf16 %v2601, %v2594
    %v2636 = vpack.c.bf16 %v2615, %v2608
    %v2637 = vpack.c.bf16 %v2629, %v2622
    %v2638 = vpack.c.bf16 %v2633, %v2633
    %v2639 = vld [vmem:[#allocation7] sm:$0xf]
    %v2640 = vld [vmem:[%s11] sm:$0xff]
    %2642 = vset.pattern.permute.xlu0 0
    %2643 = vperm.xlu0 %2642, %v2640
    %v2644 = vpop.permute.xlu0 %2643
    %vm2646 = vcmask 588800
    %v2648 = vsel %vm2646, %v2639, 0
    %v2651 = vsel %vm487, %v2638, 0
    %2653 = vmatprep.subr.bf16.mxu0 0
    %2654 = vmatpush1.bf16.msra.mxu0 %v2634
    %2655 = vmatprep.subr.bf16.mxu0 0
    %2656 = vmatpush1.bf16.msra.mxu0 %v2635
    %2657 = vmatprep.subr.bf16.mxu0 0
    %2658 = vmatpush1.bf16.msra.mxu0 %v2636
    %2659 = vmatprep.subr.bf16.mxu0 0
    %2660 = vmatpush1.bf16.msra.mxu0 %v2637
    %2661 = vmatprep.subr.bf16.mxu0 0
    %2662 = vmatpush1.bf16.msra.mxu0 %v2651
    %2663 = vmatprep.subr.bf16.mxu0 0
    %2664 = vmatpush1.bf16.msra.mxu0 0
    %2665 = vmatprep.subr.bf16.mxu0 0
    %2666 = vmatpush1.bf16.msra.mxu0 0
    %2667 = vmatprep.subr.bf16.mxu0 0
    %2668 = vmatpush1.bf16.msra.mxu0 0
    %2669 = vmatprep.subr.bf16.mxu0 0
    %2670 = vmatpush1.bf16.msra.mxu0 0
    %2671 = vmatprep.subr.bf16.mxu0 0
    %2672 = vmatpush1.bf16.msra.mxu0 0
    %2673 = vmatprep.subr.bf16.mxu0 0
    %2674 = vmatpush1.bf16.msra.mxu0 0
    %2675 = vmatprep.subr.bf16.mxu0 0
    %2676 = vmatpush1.bf16.msra.mxu0 0
    %2677 = vmatprep.subr.bf16.mxu0 0
    %2678 = vmatpush1.bf16.msra.mxu0 0
    %2679 = vmatprep.subr.bf16.mxu0 0
    %2680 = vmatpush1.bf16.msra.mxu0 0
    %2681 = vmatprep.subr.bf16.mxu0 0
    %2682 = vmatpush1.bf16.msra.mxu0 0
    %2683 = vmatprep.subr.bf16.mxu0 0
    %2684 = vmatpush1.bf16.msra.mxu0 0
    %2685 = vmatprep.mubr.bf16.mxu0 0
    %2686 = vmatmul.mubr.bf16.gmra.mrb[0].mxu0 %v2648
    %v2687 = vpop.f32.mrb[0].mxu0
    %v2688 = vadd.f32 %v2644, %v2687
    %v2689 = vpop.f32.mrb[0].mxu0
    %v2690 = vpop.f32.mrb[0].mxu0
    %v2691 = vpop.f32.mrb[0].mxu0
    %2692 = vdwg.mxu0
    %v2693 = vmax.f32 %v2688, 0.0
    %v2694 = vpack.c.bf16 %v2693, %v2693
    %v2695 = vld [vmem:[#allocation8] sm:$0xf]
    %v2696 = vld [vmem:[#allocation8 + $0x4] sm:$0xf]
    %v2697 = vld [vmem:[#allocation8 + $0x8] sm:$0xf]
    %v2698 = vld [vmem:[#allocation8 + $0xc] sm:$0xf]
    %v2699 = vld [vmem:[#allocation8 + $0x10] sm:$0x1]
    %v2705 = vunpack.c.l.b16 %v2695
    %v2706 = vunpack.c.l.b16 %v2696
    %v2707 = vunpack.c.l.b16 %v2697
    %v2708 = vunpack.c.l.b16 %v2698
    %v2709 = vunpack.c.l.b16 %v2699
    %v2710 = vpack.c.b16 %v2706, %v2705
    %v2711 = vpack.c.b16 %v2708, %v2707
    %v2712 = vpack.c.b16 %v2709, %v2709
    %v2716 = vsel %vm2579, %v2694, 0
    %v2718 = vsel 0, 4294967295, 65535
    %v2719 = vsel %vm469, %v2718, 0
    %v2721 = vand.u32 %v2712, %v2719
    %2723 = vmatprep.subr.bf16.mxu0 0
    %2724 = vmatpush1.bf16.msra.mxu0 %v2710
    %2725 = vmatprep.subr.bf16.mxu0 0
    %2726 = vmatpush1.bf16.msra.mxu0 %v2711
    %2727 = vmatprep.subr.bf16.mxu0 0
    %2728 = vmatpush1.bf16.msra.mxu0 %v2721
    %2729 = vmatprep.subr.bf16.mxu0 0
    %2730 = vmatpush1.bf16.msra.mxu0 0
    %2731 = vmatprep.subr.bf16.mxu0 0
    %2732 = vmatpush1.bf16.msra.mxu0 0
    %2733 = vmatprep.subr.bf16.mxu0 0
    %2734 = vmatpush1.bf16.msra.mxu0 0
    %2735 = vmatprep.subr.bf16.mxu0 0
    %2736 = vmatpush1.bf16.msra.mxu0 0
    %2737 = vmatprep.subr.bf16.mxu0 0
    %2738 = vmatpush1.bf16.msra.mxu0 0
    %2739 = vmatprep.subr.bf16.mxu0 0
    %2740 = vmatpush1.bf16.msra.mxu0 0
    %2741 = vmatprep.subr.bf16.mxu0 0
    %2742 = vmatpush1.bf16.msra.mxu0 0
    %2743 = vmatprep.subr.bf16.mxu0 0
    %2744 = vmatpush1.bf16.msra.mxu0 0
    %2745 = vmatprep.subr.bf16.mxu0 0
    %2746 = vmatpush1.bf16.msra.mxu0 0
    %2747 = vmatprep.subr.bf16.mxu0 0
    %2748 = vmatpush1.bf16.msra.mxu0 0
    %2749 = vmatprep.subr.bf16.mxu0 0
    %2750 = vmatpush1.bf16.msra.mxu0 0
    %2751 = vmatprep.subr.bf16.mxu0 0
    %2752 = vmatpush1.bf16.msra.mxu0 0
    %2753 = vmatprep.subr.bf16.mxu0 0
    %2754 = vmatpush1.bf16.msra.mxu0 0
    %2755 = vmatprep.mubr.bf16.mxu0 0
    %2756 = vmatmul.mubr.bf16.gmra.mrb[0].mxu0 %v2716
    %v2757 = vpop.f32.mrb[0].mxu0
    %v2758 = vadd.f32 0.0, %v2757
    %v2759 = vpop.f32.mrb[0].mxu0
    %v2760 = vpop.f32.mrb[0].mxu0
    %v2761 = vpop.f32.mrb[0].mxu0
    %2762 = vdwg.mxu0
    %2764 = vrot.lane.b32.xlu0 %v2694, 95
    %v2765 = vpop.permute.xlu0 %2764
    %v2767 = vsel %vm2579, %v2765, 0
    %2769 = vmatprep.subr.bf16.mxu0 0
    %2770 = vmatpush1.bf16.msra.mxu0 %v2710
    %2771 = vmatprep.subr.bf16.mxu0 0
    %2772 = vmatpush1.bf16.msra.mxu0 %v2711
    %2773 = vmatprep.subr.bf16.mxu0 0
    %2774 = vmatpush1.bf16.msra.mxu0 %v2721
    %2775 = vmatprep.subr.bf16.mxu0 0
    %2776 = vmatpush1.bf16.msra.mxu0 0
    %2777 = vmatprep.subr.bf16.mxu0 0
    %2778 = vmatpush1.bf16.msra.mxu0 0
    %2779 = vmatprep.subr.bf16.mxu0 0
    %2780 = vmatpush1.bf16.msra.mxu0 0
    %2781 = vmatprep.subr.bf16.mxu0 0
    %2782 = vmatpush1.bf16.msra.mxu0 0
    %2783 = vmatprep.subr.bf16.mxu0 0
    %2784 = vmatpush1.bf16.msra.mxu0 0
    %2785 = vmatprep.subr.bf16.mxu0 0
    %2786 = vmatpush1.bf16.msra.mxu0 0
    %2787 = vmatprep.subr.bf16.mxu0 0
    %2788 = vmatpush1.bf16.msra.mxu0 0
    %2789 = vmatprep.subr.bf16.mxu0 0
    %2790 = vmatpush1.bf16.msra.mxu0 0
    %2791 = vmatprep.subr.bf16.mxu0 0
    %2792 = vmatpush1.bf16.msra.mxu0 0
    %2793 = vmatprep.subr.bf16.mxu0 0
    %2794 = vmatpush1.bf16.msra.mxu0 0
    %2795 = vmatprep.subr.bf16.mxu0 0
    %2796 = vmatpush1.bf16.msra.mxu0 0
    %2797 = vmatprep.subr.bf16.mxu0 0
    %2798 = vmatpush1.bf16.msra.mxu0 0
    %2799 = vmatprep.subr.bf16.mxu0 0
    %2800 = vmatpush1.bf16.msra.mxu0 0
    %2801 = vmatprep.mubr.bf16.mxu0 0
    %2802 = vmatmul.mubr.bf16.gmra.mrb[0].mxu0 %v2767
    %v2803 = vpop.f32.mrb[0].mxu0
    %v2804 = vadd.f32 0.0, %v2803
    %v2805 = vpop.f32.mrb[0].mxu0
    %v2806 = vpop.f32.mrb[0].mxu0
    %v2807 = vpop.f32.mrb[0].mxu0
    %2808 = vdwg.mxu0
    %2810 = vrot.lane.b32.xlu0 %v2804, 121
    %v2811 = vpop.permute.xlu0 %2810
    %v2813 = vsel %vm362, %v2758, %v2811
    %2815 = vrot.lane.b32.xlu0 %v2813, 116
    %v2816 = vpop.permute.xlu0 %2815
    %2817 = vrot.lane.b32.xlu0 %v2811, 116
    %v2818 = vpop.permute.xlu0 %2817
    %vm2819 = vcmask 949248
    %v2820 = vsel %vm2819, %v2816, %v2818
    %v2823 = vsel %vm289, %v2813, %v2820
    %2824 = vrot.lane.b32.xlu0 %v2813, 127
    %v2825 = vpop.permute.xlu0 %2824
    %2827 = vrot.lane.b32.xlu0 %v2813, 115
    %v2828 = vpop.permute.xlu0 %2827
    %2829 = vrot.lane.b32.xlu0 %v2811, 115
    %v2830 = vpop.permute.xlu0 %2829
    %vm2831 = vcmask 941056
    %v2832 = vsel %vm2831, %v2828, %v2830
    %v2835 = vsel %vm289, %v2825, %v2832
    %2836 = vrot.lane.b32.xlu0 %v2813, 117
    %v2837 = vpop.permute.xlu0 %2836
    %2839 = vrot.lane.b32.xlu0 %v2811, 105
    %v2840 = vpop.permute.xlu0 %2839
    %v2842 = vsel %vm289, %v2837, %v2840
    %2844 = vrot.lane.b32.xlu0 %v2811, 104
    %v2845 = vpop.permute.xlu0 %2844
    %v2847 = vsel %vm289, %v2816, %v2845
    %v2848 = vpack.c.bf16 %v2835, %v2823
    %v2849 = vpack.c.bf16 %v2830, %v2818
    %v2850 = vpack.c.bf16 %v2847, %v2842
    %v2851 = vpack.c.bf16 %v2845, %v2840
    %v2852 = vld [vmem:[#allocation10] sm:$0xf]
    %v2853 = vld [vmem:[#allocation10 + $0x4] sm:$0xf]
    %v2854 = vld [vmem:[%s14] sm:$0xff]
    %v2855 = vld [vmem:[%s14 + $0x8] sm:$0xff]
    %2857 = vset.pattern.permute.xlu0 0
    %2858 = vperm.xlu0 %2857, %v2854
    %v2859 = vpop.permute.xlu0 %2858
    %2862 = vset.pattern.permute.xlu0 0
    %2863 = vperm.xlu0 %2862, %v2855
    %v2864 = vpop.permute.xlu0 %2863
    %v2868 = vunpack.c.l.b16 %v2852
    %v2869 = vunpack.c.l.b16 %v2853
    %v2870 = vpack.c.b16 %v2869, %v2868
    %v2872 = vsel %vm1950, %v2870, 0
    %2874 = vmatprep.subr.bf16.mxu0 %v2849
    %2875 = vmatpush1.bf16.msra.mxu0 %v2848
    %2876 = vmatprep.subr.bf16.mxu0 %v2851
    %2877 = vmatpush1.bf16.msra.mxu0 %v2850
    %2878 = vmatprep.subr.bf16.mxu0 0
    %2879 = vmatpush1.bf16.msra.mxu0 0
    %2880 = vmatprep.subr.bf16.mxu0 0
    %2881 = vmatpush1.bf16.msra.mxu0 0
    %2882 = vmatprep.subr.bf16.mxu0 0
    %2883 = vmatpush1.bf16.msra.mxu0 0
    %2884 = vmatprep.subr.bf16.mxu0 0
    %2885 = vmatpush1.bf16.msra.mxu0 0
    %2886 = vmatprep.subr.bf16.mxu0 0
    %2887 = vmatpush1.bf16.msra.mxu0 0
    %2888 = vmatprep.subr.bf16.mxu0 0
    %2889 = vmatpush1.bf16.msra.mxu0 0
    %2890 = vmatprep.subr.bf16.mxu0 0
    %2891 = vmatpush1.bf16.msra.mxu0 0
    %2892 = vmatprep.subr.bf16.mxu0 0
    %2893 = vmatpush1.bf16.msra.mxu0 0
    %2894 = vmatprep.subr.bf16.mxu0 0
    %2895 = vmatpush1.bf16.msra.mxu0 0
    %2896 = vmatprep.subr.bf16.mxu0 0
    %2897 = vmatpush1.bf16.msra.mxu0 0
    %2898 = vmatprep.subr.bf16.mxu0 0
    %2899 = vmatpush1.bf16.msra.mxu0 0
    %2900 = vmatprep.subr.bf16.mxu0 0
    %2901 = vmatpush1.bf16.msra.mxu0 0
    %2902 = vmatprep.subr.bf16.mxu0 0
    %2903 = vmatpush1.bf16.msra.mxu0 0
    %2904 = vmatprep.subr.bf16.mxu0 0
    %2905 = vmatpush1.bf16.msra.mxu0 0
    %2906 = vmatprep.mubr.bf16.mxu0 0
    %2907 = vmatmul.mubr.bf16.gmra.mrb[0].mxu0 %v2872
    %v2908 = vpop.f32.mrb[0].mxu0
    %v2909 = vadd.f32 %v2859, %v2908
    %v2910 = vpop.f32.mrb[0].mxu0
    %v2911 = vadd.f32 %v2859, %v2910
    %v2912 = vpop.f32.mrb[0].mxu0
    %v2913 = vadd.f32 %v2864, %v2912
    %v2914 = vpop.f32.mrb[0].mxu0
    %v2915 = vadd.f32 %v2864, %v2914
    %2916 = vdwg.mxu0
    %v2917 = vmax.f32 %v2909, 0.0
    %v2918 = vmax.f32 %v2911, 0.0
    %v2919 = vmax.f32 %v2913, 0.0
    %v2920 = vmax.f32 %v2915, 0.0
    %v2921 = vpack.c.bf16 %v2919, %v2917
    %v2922 = vld [vmem:[%s15] sm:$0xff]
    %v2923 = vld [vmem:[%s15 + $0x8] sm:$0xff]
    %v2924 = vld [vmem:[%s15 + $0x10] sm:$0xff]
    %v2925 = vld [vmem:[%s15 + $0x18] sm:$0xff]
    %v2926 = vld [vmem:[%s15 + $0x20] sm:$0xff]
    %v2927 = vld [vmem:[%s15 + $0x28] sm:$0xff]
    %v2928 = vld [vmem:[%s15 + $0x30] sm:$0xff]
    %v2929 = vld [vmem:[%s15 + $0x38] sm:$0xff]
    %v2930 = vld [vmem:[%s15 + $0x40] sm:$0xff]
    %v2931 = vld [vmem:[%s15 + $0x48] sm:$0xff]
    %v2932 = vld [vmem:[%s15 + $0x50] sm:$0xff]
    %v2933 = vld [vmem:[%s15 + $0x58] sm:$0xff]
    %v2934 = vld [vmem:[%s15 + $0x60] sm:$0xff]
    %v2935 = vld [vmem:[%s15 + $0x68] sm:$0xff]
    %v2936 = vld [vmem:[%s15 + $0x70] sm:$0xff]
    %v2937 = vld [vmem:[%s15 + $0x78] sm:$0xff]
    %v2938 = vld [vmem:[%s15 + $0x80] sm:$0xff]
    %v2939 = vld [vmem:[%s15 + $0x88] sm:$0xff]
    %v2940 = vld [vmem:[%s15 + $0x90] sm:$0xff]
    %v2941 = vld [vmem:[%s15 + $0x98] sm:$0xff]
    %v2942 = vld [vmem:[%s15 + $0xa0] sm:$0xff]
    %v2943 = vld [vmem:[%s15 + $0xa8] sm:$0xff]
    %v2944 = vld [vmem:[%s15 + $0xb0] sm:$0xff]
    %v2945 = vld [vmem:[%s15 + $0xb8] sm:$0xff]
    %v2946 = vld [vmem:[%s15 + $0xc0] sm:$0xff]
    %v2947 = vld [vmem:[%s15 + $0xc8] sm:$0xff]
    %v2948 = vld [vmem:[%s15 + $0xd0] sm:$0x77]
    %v2949 = vld [vmem:[%s15 + $0xd8] sm:$0x77]
    %v2978 = vunpack.c.l.b16 %v2922
    %v2979 = vunpack.c.h.b16 %v2922
    %v2980 = vunpack.c.l.b16 %v2923
    %v2981 = vunpack.c.h.b16 %v2923
    %v2982 = vunpack.c.l.b16 %v2924
    %v2983 = vunpack.c.h.b16 %v2924
    %v2984 = vunpack.c.l.b16 %v2925
    %v2985 = vunpack.c.h.b16 %v2925
    %v2986 = vunpack.c.l.b16 %v2926
    %v2987 = vunpack.c.h.b16 %v2926
    %v2988 = vunpack.c.l.b16 %v2927
    %v2989 = vunpack.c.h.b16 %v2927
    %v2990 = vunpack.c.l.b16 %v2928
    %v2991 = vunpack.c.h.b16 %v2928
    %v2992 = vunpack.c.l.b16 %v2929
    %v2993 = vunpack.c.h.b16 %v2929
    %v2994 = vunpack.c.l.b16 %v2930
    %v2995 = vunpack.c.h.b16 %v2930
    %v2996 = vunpack.c.l.b16 %v2931
    %v2997 = vunpack.c.h.b16 %v2931
    %v2998 = vunpack.c.l.b16 %v2932
    %v2999 = vunpack.c.h.b16 %v2932
    %v3000 = vunpack.c.l.b16 %v2933
    %v3001 = vunpack.c.h.b16 %v2933
    %v3002 = vunpack.c.l.b16 %v2934
    %v3003 = vunpack.c.h.b16 %v2934
    %v3004 = vunpack.c.l.b16 %v2935
    %v3005 = vunpack.c.h.b16 %v2935
    %v3006 = vunpack.c.l.b16 %v2936
    %v3007 = vunpack.c.h.b16 %v2936
    %v3008 = vunpack.c.l.b16 %v2937
    %v3009 = vunpack.c.h.b16 %v2937
    %v3010 = vunpack.c.l.b16 %v2938
    %v3011 = vunpack.c.h.b16 %v2938
    %v3012 = vunpack.c.l.b16 %v2939
    %v3013 = vunpack.c.h.b16 %v2939
    %v3014 = vunpack.c.l.b16 %v2940
    %v3015 = vunpack.c.h.b16 %v2940
    %v3016 = vunpack.c.l.b16 %v2941
    %v3017 = vunpack.c.h.b16 %v2941
    %v3018 = vunpack.c.l.b16 %v2942
    %v3019 = vunpack.c.h.b16 %v2942
    %v3020 = vunpack.c.l.b16 %v2943
    %v3021 = vunpack.c.h.b16 %v2943
    %v3022 = vunpack.c.l.b16 %v2944
    %v3023 = vunpack.c.h.b16 %v2944
    %v3024 = vunpack.c.l.b16 %v2945
    %v3025 = vunpack.c.h.b16 %v2945
    %v3026 = vunpack.c.l.b16 %v2946
    %v3027 = vunpack.c.h.b16 %v2946
    %v3028 = vunpack.c.l.b16 %v2947
    %v3029 = vunpack.c.h.b16 %v2947
    %v3030 = vunpack.c.l.b16 %v2948
    %v3031 = vunpack.c.h.b16 %v2948
    %v3032 = vunpack.c.l.b16 %v2949
    %v3033 = vunpack.c.h.b16 %v2949
    %v3034 = vpack.c.b16 %v2982, %v2978
    %v3035 = vpack.c.b16 %v2983, %v2979
    %v3036 = vpack.c.b16 %v2984, %v2980
    %v3037 = vpack.c.b16 %v2985, %v2981
    %v3038 = vpack.c.b16 %v2990, %v2986
    %v3039 = vpack.c.b16 %v2991, %v2987
    %v3040 = vpack.c.b16 %v2992, %v2988
    %v3041 = vpack.c.b16 %v2993, %v2989
    %v3042 = vpack.c.b16 %v2998, %v2994
    %v3043 = vpack.c.b16 %v2999, %v2995
    %v3044 = vpack.c.b16 %v3000, %v2996
    %v3045 = vpack.c.b16 %v3001, %v2997
    %v3046 = vpack.c.b16 %v3006, %v3002
    %v3047 = vpack.c.b16 %v3007, %v3003
    %v3048 = vpack.c.b16 %v3008, %v3004
    %v3049 = vpack.c.b16 %v3009, %v3005
    %v3050 = vpack.c.b16 %v3014, %v3010
    %v3051 = vpack.c.b16 %v3015, %v3011
    %v3052 = vpack.c.b16 %v3016, %v3012
    %v3053 = vpack.c.b16 %v3017, %v3013
    %v3054 = vpack.c.b16 %v3022, %v3018
    %v3055 = vpack.c.b16 %v3023, %v3019
    %v3056 = vpack.c.b16 %v3024, %v3020
    %v3057 = vpack.c.b16 %v3025, %v3021
    %v3058 = vpack.c.b16 %v3030, %v3026
    %v3059 = vpack.c.b16 %v3031, %v3027
    %v3060 = vpack.c.b16 %v3032, %v3028
    %v3061 = vpack.c.b16 %v3033, %v3029
    %v3087 = vsel %vm289, %v2921, 0
    %v3089 = vsel %vm499, 4294967295, 65535
    %v3090 = vsel %vm505, %v3089, 0
    %v3092 = vand.u32 %v3058, %v3090
    %v3095 = vand.u32 %v3059, %v3090
    %v3098 = vand.u32 %v3060, %v3090
    %v3101 = vand.u32 %v3061, %v3090
    %3103 = vmatprep.subr.bf16.mxu0 %v3035
    %3104 = vmatpush1.bf16.msra.mxu0 %v3034
    %3105 = vmatprep.subr.bf16.mxu0 %v3039
    %3106 = vmatpush1.bf16.msra.mxu0 %v3038
    %3107 = vmatprep.subr.bf16.mxu0 %v3043
    %3108 = vmatpush1.bf16.msra.mxu0 %v3042
    %3109 = vmatprep.subr.bf16.mxu0 %v3047
    %3110 = vmatpush1.bf16.msra.mxu0 %v3046
    %3111 = vmatprep.subr.bf16.mxu0 %v3051
    %3112 = vmatpush1.bf16.msra.mxu0 %v3050
    %3113 = vmatprep.subr.bf16.mxu0 %v3055
    %3114 = vmatpush1.bf16.msra.mxu0 %v3054
    %3115 = vmatprep.subr.bf16.mxu0 %v3095
    %3116 = vmatpush1.bf16.msra.mxu0 %v3092
    %3117 = vmatprep.subr.bf16.mxu0 0
    %3118 = vmatpush1.bf16.msra.mxu0 0
    %3119 = vmatprep.subr.bf16.mxu0 0
    %3120 = vmatpush1.bf16.msra.mxu0 0
    %3121 = vmatprep.subr.bf16.mxu0 0
    %3122 = vmatpush1.bf16.msra.mxu0 0
    %3123 = vmatprep.subr.bf16.mxu0 0
    %3124 = vmatpush1.bf16.msra.mxu0 0
    %3125 = vmatprep.subr.bf16.mxu0 0
    %3126 = vmatpush1.bf16.msra.mxu0 0
    %3127 = vmatprep.subr.bf16.mxu0 0
    %3128 = vmatpush1.bf16.msra.mxu0 0
    %3129 = vmatprep.subr.bf16.mxu0 0
    %3130 = vmatpush1.bf16.msra.mxu0 0
    %3131 = vmatprep.subr.bf16.mxu0 0
    %3132 = vmatpush1.bf16.msra.mxu0 0
    %3133 = vmatprep.subr.bf16.mxu0 0
    %3134 = vmatpush1.bf16.msra.mxu0 0
    %3135 = vmatprep.mubr.bf16.mxu0 0
    %3136 = vmatmul.mubr.bf16.gmra.mrb[0].mxu0 %v3087
    %v3137 = vpop.f32.mrb[0].mxu0
    %v3138 = vadd.f32 0.0, %v3137
    %v3139 = vpop.f32.mrb[0].mxu0
    %v3140 = vadd.f32 0.0, %v3139
    %v3141 = vpop.f32.mrb[0].mxu0
    %v3142 = vadd.f32 0.0, %v3141
    %v3143 = vpop.f32.mrb[0].mxu0
    %v3144 = vadd.f32 0.0, %v3143
    %3145 = vdwg.mxu0
    %3146 = vmatprep.subr.bf16.mxu0 %v3037
    %3147 = vmatpush1.bf16.msra.mxu0 %v3036
    %3148 = vmatprep.subr.bf16.mxu0 %v3041
    %3149 = vmatpush1.bf16.msra.mxu0 %v3040
    %3150 = vmatprep.subr.bf16.mxu0 %v3045
    %3151 = vmatpush1.bf16.msra.mxu0 %v3044
    %3152 = vmatprep.subr.bf16.mxu0 %v3049
    %3153 = vmatpush1.bf16.msra.mxu0 %v3048
    %3154 = vmatprep.subr.bf16.mxu0 %v3053
    %3155 = vmatpush1.bf16.msra.mxu0 %v3052
    %3156 = vmatprep.subr.bf16.mxu0 %v3057
    %3157 = vmatpush1.bf16.msra.mxu0 %v3056
    %3158 = vmatprep.subr.bf16.mxu0 %v3101
    %3159 = vmatpush1.bf16.msra.mxu0 %v3098
    %3160 = vmatprep.subr.bf16.mxu0 0
    %3161 = vmatpush1.bf16.msra.mxu0 0
    %3162 = vmatprep.subr.bf16.mxu0 0
    %3163 = vmatpush1.bf16.msra.mxu0 0
    %3164 = vmatprep.subr.bf16.mxu0 0
    %3165 = vmatpush1.bf16.msra.mxu0 0
    %3166 = vmatprep.subr.bf16.mxu0 0
    %3167 = vmatpush1.bf16.msra.mxu0 0
    %3168 = vmatprep.subr.bf16.mxu0 0
    %3169 = vmatpush1.bf16.msra.mxu0 0
    %3170 = vmatprep.subr.bf16.mxu0 0
    %3171 = vmatpush1.bf16.msra.mxu0 0
    %3172 = vmatprep.subr.bf16.mxu0 0
    %3173 = vmatpush1.bf16.msra.mxu0 0
    %3174 = vmatprep.subr.bf16.mxu0 0
    %3175 = vmatpush1.bf16.msra.mxu0 0
    %3176 = vmatprep.subr.bf16.mxu0 0
    %3177 = vmatpush1.bf16.msra.mxu0 0
    %3178 = vmatprep.mubr.bf16.mxu0 0
    %3179 = vmatmul.mubr.bf16.gmra.mrb[0].mxu0 %v3087
    %v3180 = vpop.f32.mrb[0].mxu0
    %v3181 = vadd.f32 0.0, %v3180
    %v3182 = vpop.f32.mrb[0].mxu0
    %v3183 = vadd.f32 0.0, %v3182
    %v3184 = vpop.f32.mrb[0].mxu0
    %v3185 = vadd.f32 0.0, %v3184
    %v3186 = vpop.f32.mrb[0].mxu0
    %v3187 = vadd.f32 0.0, %v3186
    %3188 = vdwg.mxu0
    %v3189 = vpack.c.bf16 %v2920, %v2918
    %3192 = vrot.lane.b32.xlu0 %v2921, 19
    %v3193 = vpop.permute.xlu0 %3192
    %3194 = vrot.lane.b32.xlu0 %v3189, 19
    %v3195 = vpop.permute.xlu0 %3194
    %vm3196 = vcmask 154624
    %v3197 = vsel %vm3196, %v3193, %v3195
    %v3199 = vsel %vm289, %v3197, 0
    %3201 = vmatprep.subr.bf16.mxu0 %v3035
    %3202 = vmatpush1.bf16.msra.mxu0 %v3034
    %3203 = vmatprep.subr.bf16.mxu0 %v3039
    %3204 = vmatpush1.bf16.msra.mxu0 %v3038
    %3205 = vmatprep.subr.bf16.mxu0 %v3043
    %3206 = vmatpush1.bf16.msra.mxu0 %v3042
    %3207 = vmatprep.subr.bf16.mxu0 %v3047
    %3208 = vmatpush1.bf16.msra.mxu0 %v3046
    %3209 = vmatprep.subr.bf16.mxu0 %v3051
    %3210 = vmatpush1.bf16.msra.mxu0 %v3050
    %3211 = vmatprep.subr.bf16.mxu0 %v3055
    %3212 = vmatpush1.bf16.msra.mxu0 %v3054
    %3213 = vmatprep.subr.bf16.mxu0 %v3095
    %3214 = vmatpush1.bf16.msra.mxu0 %v3092
    %3215 = vmatprep.subr.bf16.mxu0 0
    %3216 = vmatpush1.bf16.msra.mxu0 0
    %3217 = vmatprep.subr.bf16.mxu0 0
    %3218 = vmatpush1.bf16.msra.mxu0 0
    %3219 = vmatprep.subr.bf16.mxu0 0
    %3220 = vmatpush1.bf16.msra.mxu0 0
    %3221 = vmatprep.subr.bf16.mxu0 0
    %3222 = vmatpush1.bf16.msra.mxu0 0
    %3223 = vmatprep.subr.bf16.mxu0 0
    %3224 = vmatpush1.bf16.msra.mxu0 0
    %3225 = vmatprep.subr.bf16.mxu0 0
    %3226 = vmatpush1.bf16.msra.mxu0 0
    %3227 = vmatprep.subr.bf16.mxu0 0
    %3228 = vmatpush1.bf16.msra.mxu0 0
    %3229 = vmatprep.subr.bf16.mxu0 0
    %3230 = vmatpush1.bf16.msra.mxu0 0
    %3231 = vmatprep.subr.bf16.mxu0 0
    %3232 = vmatpush1.bf16.msra.mxu0 0
    %3233 = vmatprep.mubr.bf16.mxu0 0
    %3234 = vmatmul.mubr.bf16.gmra.mrb[0].mxu0 %v3199
    %v3235 = vpop.f32.mrb[0].mxu0
    %v3236 = vadd.f32 0.0, %v3235
    %v3237 = vpop.f32.mrb[0].mxu0
    %v3238 = vadd.f32 0.0, %v3237
    %v3239 = vpop.f32.mrb[0].mxu0
    %v3240 = vadd.f32 0.0, %v3239
    %v3241 = vpop.f32.mrb[0].mxu0
    %v3242 = vadd.f32 0.0, %v3241
    %3243 = vdwg.mxu0
    %3244 = vmatprep.subr.bf16.mxu0 %v3037
    %3245 = vmatpush1.bf16.msra.mxu0 %v3036
    %3246 = vmatprep.subr.bf16.mxu0 %v3041
    %3247 = vmatpush1.bf16.msra.mxu0 %v3040
    %3248 = vmatprep.subr.bf16.mxu0 %v3045
    %3249 = vmatpush1.bf16.msra.mxu0 %v3044
    %3250 = vmatprep.subr.bf16.mxu0 %v3049
    %3251 = vmatpush1.bf16.msra.mxu0 %v3048
    %3252 = vmatprep.subr.bf16.mxu0 %v3053
    %3253 = vmatpush1.bf16.msra.mxu0 %v3052
    %3254 = vmatprep.subr.bf16.mxu0 %v3057
    %3255 = vmatpush1.bf16.msra.mxu0 %v3056
    %3256 = vmatprep.subr.bf16.mxu0 %v3101
    %3257 = vmatpush1.bf16.msra.mxu0 %v3098
    %3258 = vmatprep.subr.bf16.mxu0 0
    %3259 = vmatpush1.bf16.msra.mxu0 0
    %3260 = vmatprep.subr.bf16.mxu0 0
    %3261 = vmatpush1.bf16.msra.mxu0 0
    %3262 = vmatprep.subr.bf16.mxu0 0
    %3263 = vmatpush1.bf16.msra.mxu0 0
    %3264 = vmatprep.subr.bf16.mxu0 0
    %3265 = vmatpush1.bf16.msra.mxu0 0
    %3266 = vmatprep.subr.bf16.mxu0 0
    %3267 = vmatpush1.bf16.msra.mxu0 0
    %3268 = vmatprep.subr.bf16.mxu0 0
    %3269 = vmatpush1.bf16.msra.mxu0 0
    %3270 = vmatprep.subr.bf16.mxu0 0
    %3271 = vmatpush1.bf16.msra.mxu0 0
    %3272 = vmatprep.subr.bf16.mxu0 0
    %3273 = vmatpush1.bf16.msra.mxu0 0
    %3274 = vmatprep.subr.bf16.mxu0 0
    %3275 = vmatpush1.bf16.msra.mxu0 0
    %3276 = vmatprep.mubr.bf16.mxu0 0
    %3277 = vmatmul.mubr.bf16.gmra.mrb[0].mxu0 %v3199
    %v3278 = vpop.f32.mrb[0].mxu0
    %v3279 = vadd.f32 0.0, %v3278
    %v3280 = vpop.f32.mrb[0].mxu0
    %v3281 = vadd.f32 0.0, %v3280
    %v3282 = vpop.f32.mrb[0].mxu0
    %v3283 = vadd.f32 0.0, %v3282
    %v3284 = vpop.f32.mrb[0].mxu0
    %v3285 = vadd.f32 0.0, %v3284
    %3286 = vdwg.mxu0
    %3295 = vrot.lane.b32.xlu0 %v3236, 57
    %v3296 = vpop.permute.xlu0 %3295
    %3297 = vrot.lane.b32.xlu0 %v3238, 57
    %v3298 = vpop.permute.xlu0 %3297
    %3299 = vrot.lane.b32.xlu0 %v3279, 57
    %v3300 = vpop.permute.xlu0 %3299
    %3301 = vrot.lane.b32.xlu0 %v3281, 57
    %v3302 = vpop.permute.xlu0 %3301
    %3303 = vrot.lane.b32.xlu0 %v3240, 57
    %v3304 = vpop.permute.xlu0 %3303
    %3305 = vrot.lane.b32.xlu0 %v3242, 57
    %v3306 = vpop.permute.xlu0 %3305
    %3307 = vrot.lane.b32.xlu0 %v3283, 57
    %v3308 = vpop.permute.xlu0 %3307
    %3309 = vrot.lane.b32.xlu0 %v3285, 57
    %v3310 = vpop.permute.xlu0 %3309
    %vm3311 = vcmask 465920
    %v3312 = vsel %vm3311, %v3296, %v3298
    %v3313 = vsel %vm3311, %v3298, %v3300
    %v3314 = vsel %vm3311, %v3300, %v3302
    %v3315 = vsel %vm3311, %v3304, %v3306
    %v3316 = vsel %vm3311, %v3306, %v3308
    %v3317 = vsel %vm3311, %v3308, %v3310
    %v3320 = vsel %vm3311, %v3183, %v3296
    %v3321 = vsel %vm3311, %v3187, %v3304
    %3324 = vrot.lane.b32.xlu0 %v3320, 106
    %v3325 = vpop.permute.xlu0 %3324
    %3326 = vrot.lane.b32.xlu0 %v3312, 106
    %v3327 = vpop.permute.xlu0 %3326
    %3328 = vrot.lane.b32.xlu0 %v3313, 106
    %v3329 = vpop.permute.xlu0 %3328
    %3330 = vrot.lane.b32.xlu0 %v3314, 106
    %v3331 = vpop.permute.xlu0 %3330
    %3332 = vrot.lane.b32.xlu0 %v3321, 106
    %v3333 = vpop.permute.xlu0 %3332
    %3334 = vrot.lane.b32.xlu0 %v3315, 106
    %v3335 = vpop.permute.xlu0 %3334
    %3336 = vrot.lane.b32.xlu0 %v3316, 106
    %v3337 = vpop.permute.xlu0 %3336
    %3338 = vrot.lane.b32.xlu0 %v3317, 106
    %v3339 = vpop.permute.xlu0 %3338
    %v3340 = vsel %vm1513, %v3325, %v3327
    %v3341 = vsel %vm1513, %v3327, %v3329
    %v3342 = vsel %vm1513, %v3329, %v3331
    %v3343 = vsel %vm1513, %v3333, %v3335
    %v3344 = vsel %vm1513, %v3335, %v3337
    %v3345 = vsel %vm1513, %v3337, %v3339
    %vm3354 = vcmask 285696
    %v3355 = vsel %vm3354, %v3320, %v3340
    %v3356 = vsel %vm3354, %v3321, %v3343
    %3363 = vrot.lane.b32.xlu0 %v3138, 127
    %v3364 = vpop.permute.xlu0 %3363
    %3365 = vrot.lane.b32.xlu0 %v3140, 127
    %v3366 = vpop.permute.xlu0 %3365
    %3367 = vrot.lane.b32.xlu0 %v3181, 127
    %v3368 = vpop.permute.xlu0 %3367
    %3369 = vrot.lane.b32.xlu0 %v3320, 127
    %v3370 = vpop.permute.xlu0 %3369
    %3371 = vrot.lane.b32.xlu0 %v3142, 127
    %v3372 = vpop.permute.xlu0 %3371
    %3373 = vrot.lane.b32.xlu0 %v3144, 127
    %v3374 = vpop.permute.xlu0 %3373
    %3375 = vrot.lane.b32.xlu0 %v3185, 127
    %v3376 = vpop.permute.xlu0 %3375
    %3377 = vrot.lane.b32.xlu0 %v3321, 127
    %v3378 = vpop.permute.xlu0 %3377
    %v3379 = vsel %vm226, %v3364, %v3366
    %v3380 = vsel %vm226, %v3366, %v3368
    %v3381 = vsel %vm226, %v3368, %v3370
    %v3382 = vsel %vm226, %v3372, %v3374
    %v3383 = vsel %vm226, %v3374, %v3376
    %v3384 = vsel %vm226, %v3376, %v3378
    %3393 = vrot.lane.b32.xlu0 %v3320, 105
    %v3394 = vpop.permute.xlu0 %3393
    %3395 = vrot.lane.b32.xlu0 %v3312, 105
    %v3396 = vpop.permute.xlu0 %3395
    %3397 = vrot.lane.b32.xlu0 %v3313, 105
    %v3398 = vpop.permute.xlu0 %3397
    %3399 = vrot.lane.b32.xlu0 %v3314, 105
    %v3400 = vpop.permute.xlu0 %3399
    %3401 = vrot.lane.b32.xlu0 %v3321, 105
    %v3402 = vpop.permute.xlu0 %3401
    %3403 = vrot.lane.b32.xlu0 %v3315, 105
    %v3404 = vpop.permute.xlu0 %3403
    %3405 = vrot.lane.b32.xlu0 %v3316, 105
    %v3406 = vpop.permute.xlu0 %3405
    %3407 = vrot.lane.b32.xlu0 %v3317, 105
    %v3408 = vpop.permute.xlu0 %3407
    %v3409 = vsel %vm1559, %v3394, %v3396
    %v3410 = vsel %vm1559, %v3396, %v3398
    %v3411 = vsel %vm1559, %v3398, %v3400
    %v3412 = vsel %vm1559, %v3402, %v3404
    %v3413 = vsel %vm1559, %v3404, %v3406
    %v3414 = vsel %vm1559, %v3406, %v3408
    %v3423 = vsel %vm3354, %v3370, %v3409
    %v3424 = vsel %vm3354, %v3378, %v3412
    %3425 = vrot.lane.b32.xlu0 %v3138, 107
    %v3426 = vpop.permute.xlu0 %3425
    %3427 = vrot.lane.b32.xlu0 %v3140, 107
    %v3428 = vpop.permute.xlu0 %3427
    %3429 = vrot.lane.b32.xlu0 %v3181, 107
    %v3430 = vpop.permute.xlu0 %3429
    %3431 = vrot.lane.b32.xlu0 %v3320, 107
    %v3432 = vpop.permute.xlu0 %3431
    %3433 = vrot.lane.b32.xlu0 %v3142, 107
    %v3434 = vpop.permute.xlu0 %3433
    %3435 = vrot.lane.b32.xlu0 %v3144, 107
    %v3436 = vpop.permute.xlu0 %3435
    %3437 = vrot.lane.b32.xlu0 %v3185, 107
    %v3438 = vpop.permute.xlu0 %3437
    %3439 = vrot.lane.b32.xlu0 %v3321, 107
    %v3440 = vpop.permute.xlu0 %3439
    %vm3441 = vcmask 875520
    %v3442 = vsel %vm3441, %v3426, %v3428
    %v3443 = vsel %vm3441, %v3428, %v3430
    %v3444 = vsel %vm3441, %v3430, %v3432
    %v3445 = vsel %vm3441, %v3434, %v3436
    %v3446 = vsel %vm3441, %v3436, %v3438
    %v3447 = vsel %vm3441, %v3438, %v3440
    %3456 = vrot.lane.b32.xlu0 %v3320, 85
    %v3457 = vpop.permute.xlu0 %3456
    %3458 = vrot.lane.b32.xlu0 %v3312, 85
    %v3459 = vpop.permute.xlu0 %3458
    %3460 = vrot.lane.b32.xlu0 %v3313, 85
    %v3461 = vpop.permute.xlu0 %3460
    %3462 = vrot.lane.b32.xlu0 %v3314, 85
    %v3463 = vpop.permute.xlu0 %3462
    %3464 = vrot.lane.b32.xlu0 %v3321, 85
    %v3465 = vpop.permute.xlu0 %3464
    %3466 = vrot.lane.b32.xlu0 %v3315, 85
    %v3467 = vpop.permute.xlu0 %3466
    %3468 = vrot.lane.b32.xlu0 %v3316, 85
    %v3469 = vpop.permute.xlu0 %3468
    %3470 = vrot.lane.b32.xlu0 %v3317, 85
    %v3471 = vpop.permute.xlu0 %3470
    %v3472 = vsel %vm1829, %v3457, %v3459
    %v3473 = vsel %vm1829, %v3459, %v3461
    %v3474 = vsel %vm1829, %v3461, %v3463
    %v3475 = vsel %vm1829, %v3465, %v3467
    %v3476 = vsel %vm1829, %v3467, %v3469
    %v3477 = vsel %vm1829, %v3469, %v3471
    %v3486 = vsel %vm3354, %v3432, %v3472
    %v3487 = vsel %vm3354, %v3440, %v3475
    %3488 = vrot.lane.b32.xlu0 %v3138, 106
    %v3489 = vpop.permute.xlu0 %3488
    %3490 = vrot.lane.b32.xlu0 %v3140, 106
    %v3491 = vpop.permute.xlu0 %3490
    %3492 = vrot.lane.b32.xlu0 %v3181, 106
    %v3493 = vpop.permute.xlu0 %3492
    %3494 = vrot.lane.b32.xlu0 %v3142, 106
    %v3495 = vpop.permute.xlu0 %3494
    %3496 = vrot.lane.b32.xlu0 %v3144, 106
    %v3497 = vpop.permute.xlu0 %3496
    %3498 = vrot.lane.b32.xlu0 %v3185, 106
    %v3499 = vpop.permute.xlu0 %3498
    %v3500 = vsel %vm1513, %v3489, %v3491
    %v3501 = vsel %vm1513, %v3491, %v3493
    %v3502 = vsel %vm1513, %v3493, %v3325
    %v3503 = vsel %vm1513, %v3495, %v3497
    %v3504 = vsel %vm1513, %v3497, %v3499
    %v3505 = vsel %vm1513, %v3499, %v3333
    %3514 = vrot.lane.b32.xlu0 %v3320, 84
    %v3515 = vpop.permute.xlu0 %3514
    %3516 = vrot.lane.b32.xlu0 %v3312, 84
    %v3517 = vpop.permute.xlu0 %3516
    %3518 = vrot.lane.b32.xlu0 %v3313, 84
    %v3519 = vpop.permute.xlu0 %3518
    %3520 = vrot.lane.b32.xlu0 %v3314, 84
    %v3521 = vpop.permute.xlu0 %3520
    %3522 = vrot.lane.b32.xlu0 %v3321, 84
    %v3523 = vpop.permute.xlu0 %3522
    %3524 = vrot.lane.b32.xlu0 %v3315, 84
    %v3525 = vpop.permute.xlu0 %3524
    %3526 = vrot.lane.b32.xlu0 %v3316, 84
    %v3527 = vpop.permute.xlu0 %3526
    %3528 = vrot.lane.b32.xlu0 %v3317, 84
    %v3529 = vpop.permute.xlu0 %3528
    %v3530 = vsel %vm1866, %v3515, %v3517
    %v3531 = vsel %vm1866, %v3517, %v3519
    %v3532 = vsel %vm1866, %v3519, %v3521
    %v3533 = vsel %vm1866, %v3523, %v3525
    %v3534 = vsel %vm1866, %v3525, %v3527
    %v3535 = vsel %vm1866, %v3527, %v3529
    %v3544 = vsel %vm3354, %v3325, %v3530
    %v3545 = vsel %vm3354, %v3333, %v3533
    %v3546 = vpack.c.bf16 %v3142, %v3138
    %v3547 = vpack.c.bf16 %v3144, %v3140
    %v3548 = vpack.c.bf16 %v3185, %v3181
    %v3549 = vpack.c.bf16 %v3356, %v3355
    %v3550 = vpack.c.bf16 %v3344, %v3341
    %v3551 = vpack.c.bf16 %v3345, %v3342
    %v3552 = vpack.c.bf16 %v3339, %v3331
    %v3553 = vpack.c.bf16 %v3382, %v3379
    %v3554 = vpack.c.bf16 %v3383, %v3380
    %v3555 = vpack.c.bf16 %v3384, %v3381
    %v3556 = vpack.c.bf16 %v3424, %v3423
    %v3557 = vpack.c.bf16 %v3413, %v3410
    %v3558 = vpack.c.bf16 %v3414, %v3411
    %v3559 = vpack.c.bf16 %v3408, %v3400
    %v3560 = vpack.c.bf16 %v3445, %v3442
    %v3561 = vpack.c.bf16 %v3446, %v3443
    %v3562 = vpack.c.bf16 %v3447, %v3444
    %v3563 = vpack.c.bf16 %v3487, %v3486
    %v3564 = vpack.c.bf16 %v3476, %v3473
    %v3565 = vpack.c.bf16 %v3477, %v3474
    %v3566 = vpack.c.bf16 %v3471, %v3463
    %v3567 = vpack.c.bf16 %v3503, %v3500
    %v3568 = vpack.c.bf16 %v3504, %v3501
    %v3569 = vpack.c.bf16 %v3505, %v3502
    %v3570 = vpack.c.bf16 %v3545, %v3544
    %v3571 = vpack.c.bf16 %v3534, %v3531
    %v3572 = vpack.c.bf16 %v3535, %v3532
    %v3573 = vpack.c.bf16 %v3529, %v3521
    %v3574 = vld [vmem:[#allocation11] sm:$0xf]
    %v3575 = vld [vmem:[#allocation11 + $0x4] sm:$0xf]
    %v3576 = vld [vmem:[#allocation11 + $0x8] sm:$0xf]
    %v3577 = vld [vmem:[#allocation11 + $0xc] sm:$0xf]
    %v3578 = vld [vmem:[%s17] sm:$0xff]
    %v3579 = vld [vmem:[%s17 + $0x8] sm:$0xff]
    %v3580 = vld [vmem:[%s17 + $0x10] sm:$0xff]
    %v3581 = vld [vmem:[%s17 + $0x18] sm:$0xff]
    %3583 = vset.pattern.permute.xlu0 0
    %3584 = vperm.xlu0 %3583, %v3578
    %v3585 = vpop.permute.xlu0 %3584
    %3588 = vset.pattern.permute.xlu0 0
    %3589 = vperm.xlu0 %3588, %v3579
    %v3590 = vpop.permute.xlu0 %3589
    %3593 = vset.pattern.permute.xlu0 0
    %3594 = vperm.xlu0 %3593, %v3580
    %v3595 = vpop.permute.xlu0 %3594
    %3598 = vset.pattern.permute.xlu0 0
    %3599 = vperm.xlu0 %3598, %v3581
    %v3600 = vpop.permute.xlu0 %3599
    %v3606 = vunpack.c.l.b16 %v3574
    %v3607 = vunpack.c.l.b16 %v3575
    %v3608 = vunpack.c.l.b16 %v3576
    %v3609 = vunpack.c.l.b16 %v3577
    %v3610 = vpack.c.b16 %v3607, %v3606
    %v3611 = vpack.c.b16 %v3609, %v3608
    %vm3612 = vcmask 523264
    %v3614 = vsel %vm3612, %v3610, 0
    %v3617 = vsel %vm3612, %v3611, 0
    %3619 = vmatprep.subr.bf16.mxu0 %v3547
    %3620 = vmatpush1.bf16.msra.mxu0 %v3546
    %3621 = vmatprep.subr.bf16.mxu0 %v3554
    %3622 = vmatpush1.bf16.msra.mxu0 %v3553
    %3623 = vmatprep.subr.bf16.mxu0 %v3561
    %3624 = vmatpush1.bf16.msra.mxu0 %v3560
    %3625 = vmatprep.subr.bf16.mxu0 %v3568
    %3626 = vmatpush1.bf16.msra.mxu0 %v3567
    %3627 = vmatprep.subr.bf16.mxu0 0
    %3628 = vmatpush1.bf16.msra.mxu0 0
    %3629 = vmatprep.subr.bf16.mxu0 0
    %3630 = vmatpush1.bf16.msra.mxu0 0
    %3631 = vmatprep.subr.bf16.mxu0 0
    %3632 = vmatpush1.bf16.msra.mxu0 0
    %3633 = vmatprep.subr.bf16.mxu0 0
    %3634 = vmatpush1.bf16.msra.mxu0 0
    %3635 = vmatprep.subr.bf16.mxu0 0
    %3636 = vmatpush1.bf16.msra.mxu0 0
    %3637 = vmatprep.subr.bf16.mxu0 0
    %3638 = vmatpush1.bf16.msra.mxu0 0
    %3639 = vmatprep.subr.bf16.mxu0 0
    %3640 = vmatpush1.bf16.msra.mxu0 0
    %3641 = vmatprep.subr.bf16.mxu0 0
    %3642 = vmatpush1.bf16.msra.mxu0 0
    %3643 = vmatprep.subr.bf16.mxu0 0
    %3644 = vmatpush1.bf16.msra.mxu0 0
    %3645 = vmatprep.subr.bf16.mxu0 0
    %3646 = vmatpush1.bf16.msra.mxu0 0
    %3647 = vmatprep.subr.bf16.mxu0 0
    %3648 = vmatpush1.bf16.msra.mxu0 0
    %3649 = vmatprep.subr.bf16.mxu0 0
    %3650 = vmatpush1.bf16.msra.mxu0 0
    %3651 = vmatprep.mubr.bf16.mxu0 0
    %3652 = vmatmul.mubr.bf16.gmra.mrb[0].mxu0 %v3614
    %v3653 = vpop.f32.mrb[0].mxu0
    %v3654 = vadd.f32 %v3585, %v3653
    %v3655 = vpop.f32.mrb[0].mxu0
    %v3656 = vadd.f32 %v3585, %v3655
    %v3657 = vpop.f32.mrb[0].mxu0
    %v3658 = vadd.f32 %v3590, %v3657
    %v3659 = vpop.f32.mrb[0].mxu0
    %v3660 = vadd.f32 %v3590, %v3659
    %3661 = vmatprep.mubr.bf16.mxu0 0
    %3662 = vmatmul.mubr.bf16.gmra.mrb[0].mxu0 %v3617
    %v3663 = vpop.f32.mrb[0].mxu0
    %v3664 = vadd.f32 %v3595, %v3663
    %v3665 = vpop.f32.mrb[0].mxu0
    %v3666 = vadd.f32 %v3595, %v3665
    %v3667 = vpop.f32.mrb[0].mxu0
    %v3668 = vadd.f32 %v3600, %v3667
    %v3669 = vpop.f32.mrb[0].mxu0
    %v3670 = vadd.f32 %v3600, %v3669
    %3671 = vdwg.mxu0
    %3672 = vmatprep.subr.bf16.mxu0 %v3549
    %3673 = vmatpush1.bf16.msra.mxu0 %v3548
    %3674 = vmatprep.subr.bf16.mxu0 %v3556
    %3675 = vmatpush1.bf16.msra.mxu0 %v3555
    %3676 = vmatprep.subr.bf16.mxu0 %v3563
    %3677 = vmatpush1.bf16.msra.mxu0 %v3562
    %3678 = vmatprep.subr.bf16.mxu0 %v3570
    %3679 = vmatpush1.bf16.msra.mxu0 %v3569
    %3680 = vmatprep.subr.bf16.mxu0 0
    %3681 = vmatpush1.bf16.msra.mxu0 0
    %3682 = vmatprep.subr.bf16.mxu0 0
    %3683 = vmatpush1.bf16.msra.mxu0 0
    %3684 = vmatprep.subr.bf16.mxu0 0
    %3685 = vmatpush1.bf16.msra.mxu0 0
    %3686 = vmatprep.subr.bf16.mxu0 0
    %3687 = vmatpush1.bf16.msra.mxu0 0
    %3688 = vmatprep.subr.bf16.mxu0 0
    %3689 = vmatpush1.bf16.msra.mxu0 0
    %3690 = vmatprep.subr.bf16.mxu0 0
    %3691 = vmatpush1.bf16.msra.mxu0 0
    %3692 = vmatprep.subr.bf16.mxu0 0
    %3693 = vmatpush1.bf16.msra.mxu0 0
    %3694 = vmatprep.subr.bf16.mxu0 0
    %3695 = vmatpush1.bf16.msra.mxu0 0
    %3696 = vmatprep.subr.bf16.mxu0 0
    %3697 = vmatpush1.bf16.msra.mxu0 0
    %3698 = vmatprep.subr.bf16.mxu0 0
    %3699 = vmatpush1.bf16.msra.mxu0 0
    %3700 = vmatprep.subr.bf16.mxu0 0
    %3701 = vmatpush1.bf16.msra.mxu0 0
    %3702 = vmatprep.subr.bf16.mxu0 0
    %3703 = vmatpush1.bf16.msra.mxu0 0
    %3704 = vmatprep.mubr.bf16.mxu0 0
    %3705 = vmatmul.mubr.bf16.gmra.mrb[0].mxu0 %v3614
    %v3706 = vpop.f32.mrb[0].mxu0
    %v3707 = vadd.f32 %v3585, %v3706
    %v3708 = vpop.f32.mrb[0].mxu0
    %v3709 = vadd.f32 %v3585, %v3708
    %v3710 = vpop.f32.mrb[0].mxu0
    %v3711 = vadd.f32 %v3590, %v3710
    %v3712 = vpop.f32.mrb[0].mxu0
    %v3713 = vadd.f32 %v3590, %v3712
    %3714 = vmatprep.mubr.bf16.mxu0 0
    %3715 = vmatmul.mubr.bf16.gmra.mrb[0].mxu0 %v3617
    %v3716 = vpop.f32.mrb[0].mxu0
    %v3717 = vadd.f32 %v3595, %v3716
    %v3718 = vpop.f32.mrb[0].mxu0
    %v3719 = vadd.f32 %v3595, %v3718
    %v3720 = vpop.f32.mrb[0].mxu0
    %v3721 = vadd.f32 %v3600, %v3720
    %v3722 = vpop.f32.mrb[0].mxu0
    %v3723 = vadd.f32 %v3600, %v3722
    %3724 = vdwg.mxu0
    %3725 = vmatprep.subr.bf16.mxu0 %v3551
    %3726 = vmatpush1.bf16.msra.mxu0 %v3550
    %3727 = vmatprep.subr.bf16.mxu0 %v3558
    %3728 = vmatpush1.bf16.msra.mxu0 %v3557
    %3729 = vmatprep.subr.bf16.mxu0 %v3565
    %3730 = vmatpush1.bf16.msra.mxu0 %v3564
    %3731 = vmatprep.subr.bf16.mxu0 %v3572
    %3732 = vmatpush1.bf16.msra.mxu0 %v3571
    %3733 = vmatprep.subr.bf16.mxu0 0
    %3734 = vmatpush1.bf16.msra.mxu0 0
    %3735 = vmatprep.subr.bf16.mxu0 0
    %3736 = vmatpush1.bf16.msra.mxu0 0
    %3737 = vmatprep.subr.bf16.mxu0 0
    %3738 = vmatpush1.bf16.msra.mxu0 0
    %3739 = vmatprep.subr.bf16.mxu0 0
    %3740 = vmatpush1.bf16.msra.mxu0 0
    %3741 = vmatprep.subr.bf16.mxu0 0
    %3742 = vmatpush1.bf16.msra.mxu0 0
    %3743 = vmatprep.subr.bf16.mxu0 0
    %3744 = vmatpush1.bf16.msra.mxu0 0
    %3745 = vmatprep.subr.bf16.mxu0 0
    %3746 = vmatpush1.bf16.msra.mxu0 0
    %3747 = vmatprep.subr.bf16.mxu0 0
    %3748 = vmatpush1.bf16.msra.mxu0 0
    %3749 = vmatprep.subr.bf16.mxu0 0
    %3750 = vmatpush1.bf16.msra.mxu0 0
    %3751 = vmatprep.subr.bf16.mxu0 0
    %3752 = vmatpush1.bf16.msra.mxu0 0
    %3753 = vmatprep.subr.bf16.mxu0 0
    %3754 = vmatpush1.bf16.msra.mxu0 0
    %3755 = vmatprep.subr.bf16.mxu0 0
    %3756 = vmatpush1.bf16.msra.mxu0 0
    %3757 = vmatprep.mubr.bf16.mxu0 0
    %3758 = vmatmul.mubr.bf16.gmra.mrb[0].mxu0 %v3614
    %v3759 = vpop.f32.mrb[0].mxu0
    %v3760 = vadd.f32 %v3585, %v3759
    %v3761 = vpop.f32.mrb[0].mxu0
    %v3762 = vadd.f32 %v3585, %v3761
    %v3763 = vpop.f32.mrb[0].mxu0
    %v3764 = vadd.f32 %v3590, %v3763
    %v3765 = vpop.f32.mrb[0].mxu0
    %v3766 = vadd.f32 %v3590, %v3765
    %3767 = vmatprep.mubr.bf16.mxu0 0
    %3768 = vmatmul.mubr.bf16.gmra.mrb[0].mxu0 %v3617
    %v3769 = vpop.f32.mrb[0].mxu0
    %v3770 = vadd.f32 %v3595, %v3769
    %v3771 = vpop.f32.mrb[0].mxu0
    %v3772 = vadd.f32 %v3595, %v3771
    %v3773 = vpop.f32.mrb[0].mxu0
    %v3774 = vadd.f32 %v3600, %v3773
    %v3775 = vpop.f32.mrb[0].mxu0
    %v3776 = vadd.f32 %v3600, %v3775
    %3777 = vdwg.mxu0
    %3778 = vmatprep.subr.bf16.mxu0 0
    %3779 = vmatpush1.bf16.msra.mxu0 %v3552
    %3780 = vmatprep.subr.bf16.mxu0 0
    %3781 = vmatpush1.bf16.msra.mxu0 %v3559
    %3782 = vmatprep.subr.bf16.mxu0 0
    %3783 = vmatpush1.bf16.msra.mxu0 %v3566
    %3784 = vmatprep.subr.bf16.mxu0 0
    %3785 = vmatpush1.bf16.msra.mxu0 %v3573
    %3786 = vmatprep.subr.bf16.mxu0 0
    %3787 = vmatpush1.bf16.msra.mxu0 0
    %3788 = vmatprep.subr.bf16.mxu0 0
    %3789 = vmatpush1.bf16.msra.mxu0 0
    %3790 = vmatprep.subr.bf16.mxu0 0
    %3791 = vmatpush1.bf16.msra.mxu0 0
    %3792 = vmatprep.subr.bf16.mxu0 0
    %3793 = vmatpush1.bf16.msra.mxu0 0
    %3794 = vmatprep.subr.bf16.mxu0 0
    %3795 = vmatpush1.bf16.msra.mxu0 0
    %3796 = vmatprep.subr.bf16.mxu0 0
    %3797 = vmatpush1.bf16.msra.mxu0 0
    %3798 = vmatprep.subr.bf16.mxu0 0
    %3799 = vmatpush1.bf16.msra.mxu0 0
    %3800 = vmatprep.subr.bf16.mxu0 0
    %3801 = vmatpush1.bf16.msra.mxu0 0
    %3802 = vmatprep.subr.bf16.mxu0 0
    %3803 = vmatpush1.bf16.msra.mxu0 0
    %3804 = vmatprep.subr.bf16.mxu0 0
    %3805 = vmatpush1.bf16.msra.mxu0 0
    %3806 = vmatprep.subr.bf16.mxu0 0
    %3807 = vmatpush1.bf16.msra.mxu0 0
    %3808 = vmatprep.subr.bf16.mxu0 0
    %3809 = vmatpush1.bf16.msra.mxu0 0
    %3810 = vmatprep.mubr.bf16.mxu0 0
    %3811 = vmatmul.mubr.bf16.gmra.mrb[0].mxu0 %v3614
    %v3812 = vpop.f32.mrb[0].mxu0
    %v3813 = vadd.f32 %v3585, %v3812
    %v3814 = vpop.f32.mrb[0].mxu0
    %v3815 = vpop.f32.mrb[0].mxu0
    %v3816 = vadd.f32 %v3590, %v3815
    %v3817 = vpop.f32.mrb[0].mxu0
    %3818 = vmatprep.mubr.bf16.mxu0 0
    %3819 = vmatmul.mubr.bf16.gmra.mrb[0].mxu0 %v3617
    %v3820 = vpop.f32.mrb[0].mxu0
    %v3821 = vadd.f32 %v3595, %v3820
    %v3822 = vpop.f32.mrb[0].mxu0
    %v3823 = vpop.f32.mrb[0].mxu0
    %v3824 = vadd.f32 %v3600, %v3823
    %v3825 = vpop.f32.mrb[0].mxu0
    %3826 = vdwg.mxu0
    %v3827 = vmax.f32 %v3654, 0.0
    %v3828 = vmax.f32 %v3656, 0.0
    %v3829 = vmax.f32 %v3707, 0.0
    %v3830 = vmax.f32 %v3709, 0.0
    %v3831 = vmax.f32 %v3760, 0.0
    %v3832 = vmax.f32 %v3762, 0.0
    %v3833 = vmax.f32 %v3813, 0.0
    %v3834 = vmax.f32 %v3658, 0.0
    %v3835 = vmax.f32 %v3660, 0.0
    %v3836 = vmax.f32 %v3711, 0.0
    %v3837 = vmax.f32 %v3713, 0.0
    %v3838 = vmax.f32 %v3764, 0.0
    %v3839 = vmax.f32 %v3766, 0.0
    %v3840 = vmax.f32 %v3816, 0.0
    %v3841 = vmax.f32 %v3664, 0.0
    %v3842 = vmax.f32 %v3666, 0.0
    %v3843 = vmax.f32 %v3717, 0.0
    %v3844 = vmax.f32 %v3719, 0.0
    %v3845 = vmax.f32 %v3770, 0.0
    %v3846 = vmax.f32 %v3772, 0.0
    %v3847 = vmax.f32 %v3821, 0.0
    %v3848 = vmax.f32 %v3668, 0.0
    %v3849 = vmax.f32 %v3670, 0.0
    %v3850 = vmax.f32 %v3721, 0.0
    %v3851 = vmax.f32 %v3723, 0.0
    %v3852 = vmax.f32 %v3774, 0.0
    %v3853 = vmax.f32 %v3776, 0.0
    %v3854 = vmax.f32 %v3824, 0.0
    %v3855 = vpack.c.bf16 %v3834, %v3827
    %v3856 = vpack.c.bf16 %v3835, %v3828
    %v3857 = vpack.c.bf16 %v3836, %v3829
    %v3858 = vpack.c.bf16 %v3837, %v3830
    %v3859 = vpack.c.bf16 %v3848, %v3841
    %v3860 = vpack.c.bf16 %v3849, %v3842
    %v3861 = vpack.c.bf16 %v3850, %v3843
    %v3862 = vpack.c.bf16 %v3851, %v3844
    %v3863 = vld [vmem:[#allocation13] sm:$0xff]
    %v3864 = vld [vmem:[#allocation13 + $0x8] sm:$0xff]
    %v3865 = vld [vmem:[#allocation13 + $0x10] sm:$0xff]
    %v3866 = vld [vmem:[#allocation13 + $0x18] sm:$0xff]
    %v3867 = vld [vmem:[#allocation13 + $0x20] sm:$0xff]
    %v3868 = vld [vmem:[#allocation13 + $0x28] sm:$0xff]
    %v3869 = vld [vmem:[#allocation13 + $0x30] sm:$0xff]
    %v3870 = vld [vmem:[#allocation13 + $0x38] sm:$0xff]
    %v3871 = vld [vmem:[#allocation13 + $0x40] sm:$0xff]
    %v3872 = vld [vmem:[#allocation13 + $0x48] sm:$0xff]
    %v3873 = vld [vmem:[#allocation13 + $0x50] sm:$0xff]
    %v3874 = vld [vmem:[#allocation13 + $0x58] sm:$0xff]
    %v3875 = vld [vmem:[#allocation13 + $0x60] sm:$0xff]
    %v3876 = vld [vmem:[#allocation13 + $0x68] sm:$0xff]
    %v3877 = vld [vmem:[#allocation13 + $0x70] sm:$0xff]
    %v3878 = vld [vmem:[#allocation13 + $0x78] sm:$0xff]
    %v3879 = vld [vmem:[#allocation13 + $0x80] sm:$0xff]
    %v3880 = vld [vmem:[#allocation13 + $0x88] sm:$0xff]
    %v3881 = vld [vmem:[#allocation13 + $0x90] sm:$0xff]
    %v3882 = vld [vmem:[#allocation13 + $0x98] sm:$0xff]
    %v3883 = vld [vmem:[#allocation13 + $0xa0] sm:$0xff]
    %v3884 = vld [vmem:[#allocation13 + $0xa8] sm:$0xff]
    %v3885 = vld [vmem:[#allocation13 + $0xb0] sm:$0xff]
    %v3886 = vld [vmem:[#allocation13 + $0xb8] sm:$0xff]
    %v3887 = vld [vmem:[#allocation13 + $0xc0] sm:$0xff]
    %v3888 = vld [vmem:[#allocation13 + $0xc8] sm:$0xff]
    %v3889 = vld [vmem:[#allocation13 + $0xd0] sm:$0xff]
    %v3890 = vld [vmem:[#allocation13 + $0xd8] sm:$0xff]
    %v3891 = vld [vmem:[#allocation13 + $0xe0] sm:$0xff]
    %v3892 = vld [vmem:[#allocation13 + $0xe8] sm:$0xff]
    %v3893 = vld [vmem:[#allocation13 + $0xf0] sm:$0xff]
    %v3894 = vld [vmem:[#allocation13 + $0xf8] sm:$0xff]
    %v3895 = vld [vmem:[#allocation13 + $0x100] sm:$0xff]
    %v3896 = vld [vmem:[#allocation13 + $0x108] sm:$0xff]
    %v3897 = vld [vmem:[#allocation13 + $0x110] sm:$0xff]
    %v3898 = vld [vmem:[#allocation13 + $0x118] sm:$0xff]
    %v3899 = vld [vmem:[#allocation13 + $0x120] sm:$0xff]
    %v3900 = vld [vmem:[#allocation13 + $0x128] sm:$0xff]
    %v3901 = vld [vmem:[#allocation13 + $0x130] sm:$0xff]
    %v3902 = vld [vmem:[#allocation13 + $0x138] sm:$0xff]
    %v3903 = vld [vmem:[#allocation13 + $0x140] sm:$0xff]
    %v3904 = vld [vmem:[#allocation13 + $0x148] sm:$0xff]
    %v3905 = vld [vmem:[#allocation13 + $0x150] sm:$0xff]
    %v3906 = vld [vmem:[#allocation13 + $0x158] sm:$0xff]
    %v3907 = vld [vmem:[#allocation13 + $0x160] sm:$0xff]
    %v3908 = vld [vmem:[#allocation13 + $0x168] sm:$0xff]
    %v3909 = vld [vmem:[#allocation13 + $0x170] sm:$0xff]
    %v3910 = vld [vmem:[#allocation13 + $0x178] sm:$0xff]
    %v3911 = vld [vmem:[#allocation13 + $0x180] sm:$0xff]
    %v3912 = vld [vmem:[#allocation13 + $0x188] sm:$0xff]
    %v3913 = vld [vmem:[#allocation13 + $0x190] sm:$0xff]
    %v3914 = vld [vmem:[#allocation13 + $0x198] sm:$0xff]
    %v3915 = vld [vmem:[#allocation13 + $0x1a0] sm:$0xff]
    %v3916 = vld [vmem:[#allocation13 + $0x1a8] sm:$0xff]
    %v3917 = vld [vmem:[#allocation13 + $0x1b0] sm:$0xff]
    %v3918 = vld [vmem:[#allocation13 + $0x1b8] sm:$0xff]
    %v3919 = vld [vmem:[#allocation13 + $0x1c0] sm:$0xff]
    %v3920 = vld [vmem:[#allocation13 + $0x1c8] sm:$0xff]
    %v3921 = vld [vmem:[#allocation13 + $0x1d0] sm:$0xff]
    %v3922 = vld [vmem:[#allocation13 + $0x1d8] sm:$0xff]
    %v3923 = vld [vmem:[#allocation13 + $0x1e0] sm:$0xff]
    %v3924 = vld [vmem:[#allocation13 + $0x1e8] sm:$0xff]
    %v3925 = vld [vmem:[#allocation13 + $0x1f0] sm:$0xff]
    %v3926 = vld [vmem:[#allocation13 + $0x1f8] sm:$0xff]
    %v3927 = vld [vmem:[#allocation13 + $0x200] sm:$0xff]
    %v3928 = vld [vmem:[#allocation13 + $0x208] sm:$0xff]
    %v3929 = vld [vmem:[#allocation13 + $0x210] sm:$0xff]
    %v3930 = vld [vmem:[#allocation13 + $0x218] sm:$0xff]
    %v3931 = vld [vmem:[#allocation13 + $0x220] sm:$0xff]
    %v3932 = vld [vmem:[#allocation13 + $0x228] sm:$0xff]
    %v3933 = vld [vmem:[#allocation13 + $0x230] sm:$0xff]
    %v3934 = vld [vmem:[#allocation13 + $0x238] sm:$0xff]
    %v3935 = vld [vmem:[#allocation13 + $0x240] sm:$0xff]
    %v3936 = vld [vmem:[#allocation13 + $0x248] sm:$0xff]
    %v3937 = vld [vmem:[#allocation13 + $0x250] sm:$0xff]
    %v3938 = vld [vmem:[#allocation13 + $0x258] sm:$0xff]
    %v3939 = vld [vmem:[#allocation13 + $0x260] sm:$0xff]
    %v3940 = vld [vmem:[#allocation13 + $0x268] sm:$0xff]
    %v3941 = vld [vmem:[#allocation13 + $0x270] sm:$0xff]
    %v3942 = vld [vmem:[#allocation13 + $0x278] sm:$0xff]
    %v3943 = vld [vmem:[#allocation13 + $0x280] sm:$0xff]
    %v3944 = vld [vmem:[#allocation13 + $0x288] sm:$0xff]
    %v3945 = vld [vmem:[#allocation13 + $0x290] sm:$0xff]
    %v3946 = vld [vmem:[#allocation13 + $0x298] sm:$0xff]
    %v3947 = vld [vmem:[#allocation13 + $0x2a0] sm:$0xff]
    %v3948 = vld [vmem:[#allocation13 + $0x2a8] sm:$0xff]
    %v3949 = vld [vmem:[#allocation13 + $0x2b0] sm:$0xff]
    %v3950 = vld [vmem:[#allocation13 + $0x2b8] sm:$0xff]
    %v3951 = vld [vmem:[#allocation13 + $0x2c0] sm:$0xff]
    %v3952 = vld [vmem:[#allocation13 + $0x2c8] sm:$0xff]
    %v3953 = vld [vmem:[#allocation13 + $0x2d0] sm:$0xff]
    %v3954 = vld [vmem:[#allocation13 + $0x2d8] sm:$0xff]
    %v3955 = vld [vmem:[#allocation13 + $0x2e0] sm:$0xff]
    %v3956 = vld [vmem:[#allocation13 + $0x2e8] sm:$0xff]
    %v3957 = vld [vmem:[#allocation13 + $0x2f0] sm:$0xff]
    %v3958 = vld [vmem:[#allocation13 + $0x2f8] sm:$0xff]
    %v3959 = vld [vmem:[#allocation13 + $0x300] sm:$0xff]
    %v3960 = vld [vmem:[#allocation13 + $0x308] sm:$0xff]
    %v3961 = vld [vmem:[#allocation13 + $0x310] sm:$0xff]
    %v3962 = vld [vmem:[#allocation13 + $0x318] sm:$0xff]
    %v3963 = vld [vmem:[#allocation13 + $0x320] sm:$0xff]
    %v3964 = vld [vmem:[#allocation13 + $0x328] sm:$0xff]
    %v3965 = vld [vmem:[#allocation13 + $0x330] sm:$0xff]
    %v3966 = vld [vmem:[#allocation13 + $0x338] sm:$0xff]
    %v3967 = vld [vmem:[#allocation13 + $0x340] sm:$0x33]
    %v3968 = vld [vmem:[#allocation13 + $0x348] sm:$0x33]
    %v4075 = vunpack.c.l.b16 %v3863
    %v4076 = vunpack.c.h.b16 %v3863
    %v4077 = vunpack.c.l.b16 %v3864
    %v4078 = vunpack.c.h.b16 %v3864
    %v4079 = vunpack.c.l.b16 %v3865
    %v4080 = vunpack.c.h.b16 %v3865
    %v4081 = vunpack.c.l.b16 %v3866
    %v4082 = vunpack.c.h.b16 %v3866
    %v4083 = vunpack.c.l.b16 %v3867
    %v4084 = vunpack.c.h.b16 %v3867
    %v4085 = vunpack.c.l.b16 %v3868
    %v4086 = vunpack.c.h.b16 %v3868
    %v4087 = vunpack.c.l.b16 %v3869
    %v4088 = vunpack.c.h.b16 %v3869
    %v4089 = vunpack.c.l.b16 %v3870
    %v4090 = vunpack.c.h.b16 %v3870
    %v4091 = vunpack.c.l.b16 %v3871
    %v4092 = vunpack.c.h.b16 %v3871
    %v4093 = vunpack.c.l.b16 %v3872
    %v4094 = vunpack.c.h.b16 %v3872
    %v4095 = vunpack.c.l.b16 %v3873
    %v4096 = vunpack.c.h.b16 %v3873
    %v4097 = vunpack.c.l.b16 %v3874
    %v4098 = vunpack.c.h.b16 %v3874
    %v4099 = vunpack.c.l.b16 %v3875
    %v4100 = vunpack.c.h.b16 %v3875
    %v4101 = vunpack.c.l.b16 %v3876
    %v4102 = vunpack.c.h.b16 %v3876
    %v4103 = vunpack.c.l.b16 %v3877
    %v4104 = vunpack.c.h.b16 %v3877
    %v4105 = vunpack.c.l.b16 %v3878
    %v4106 = vunpack.c.h.b16 %v3878
    %v4107 = vunpack.c.l.b16 %v3879
    %v4108 = vunpack.c.h.b16 %v3879
    %v4109 = vunpack.c.l.b16 %v3880
    %v4110 = vunpack.c.h.b16 %v3880
    %v4111 = vunpack.c.l.b16 %v3881
    %v4112 = vunpack.c.h.b16 %v3881
    %v4113 = vunpack.c.l.b16 %v3882
    %v4114 = vunpack.c.h.b16 %v3882
    %v4115 = vunpack.c.l.b16 %v3883
    %v4116 = vunpack.c.h.b16 %v3883
    %v4117 = vunpack.c.l.b16 %v3884
    %v4118 = vunpack.c.h.b16 %v3884
    %v4119 = vunpack.c.l.b16 %v3885
    %v4120 = vunpack.c.h.b16 %v3885
    %v4121 = vunpack.c.l.b16 %v3886
    %v4122 = vunpack.c.h.b16 %v3886
    %v4123 = vunpack.c.l.b16 %v3887
    %v4124 = vunpack.c.h.b16 %v3887
    %v4125 = vunpack.c.l.b16 %v3888
    %v4126 = vunpack.c.h.b16 %v3888
    %v4127 = vunpack.c.l.b16 %v3889
    %v4128 = vunpack.c.h.b16 %v3889
    %v4129 = vunpack.c.l.b16 %v3890
    %v4130 = vunpack.c.h.b16 %v3890
    %v4131 = vunpack.c.l.b16 %v3891
    %v4132 = vunpack.c.h.b16 %v3891
    %v4133 = vunpack.c.l.b16 %v3892
    %v4134 = vunpack.c.h.b16 %v3892
    %v4135 = vunpack.c.l.b16 %v3893
    %v4136 = vunpack.c.h.b16 %v3893
    %v4137 = vunpack.c.l.b16 %v3894
    %v4138 = vunpack.c.h.b16 %v3894
    %v4139 = vunpack.c.l.b16 %v3895
    %v4140 = vunpack.c.h.b16 %v3895
    %v4141 = vunpack.c.l.b16 %v3896
    %v4142 = vunpack.c.h.b16 %v3896
    %v4143 = vunpack.c.l.b16 %v3897
    %v4144 = vunpack.c.h.b16 %v3897
    %v4145 = vunpack.c.l.b16 %v3898
    %v4146 = vunpack.c.h.b16 %v3898
    %v4147 = vunpack.c.l.b16 %v3899
    %v4148 = vunpack.c.h.b16 %v3899
    %v4149 = vunpack.c.l.b16 %v3900
    %v4150 = vunpack.c.h.b16 %v3900
    %v4151 = vunpack.c.l.b16 %v3901
    %v4152 = vunpack.c.h.b16 %v3901
    %v4153 = vunpack.c.l.b16 %v3902
    %v4154 = vunpack.c.h.b16 %v3902
    %v4155 = vunpack.c.l.b16 %v3903
    %v4156 = vunpack.c.h.b16 %v3903
    %v4157 = vunpack.c.l.b16 %v3904
    %v4158 = vunpack.c.h.b16 %v3904
    %v4159 = vunpack.c.l.b16 %v3905
    %v4160 = vunpack.c.h.b16 %v3905
    %v4161 = vunpack.c.l.b16 %v3906
    %v4162 = vunpack.c.h.b16 %v3906
    %v4163 = vunpack.c.l.b16 %v3907
    %v4164 = vunpack.c.h.b16 %v3907
    %v4165 = vunpack.c.l.b16 %v3908
    %v4166 = vunpack.c.h.b16 %v3908
    %v4167 = vunpack.c.l.b16 %v3909
    %v4168 = vunpack.c.h.b16 %v3909
    %v4169 = vunpack.c.l.b16 %v3910
    %v4170 = vunpack.c.h.b16 %v3910
    %v4171 = vunpack.c.l.b16 %v3911
    %v4172 = vunpack.c.h.b16 %v3911
    %v4173 = vunpack.c.l.b16 %v3912
    %v4174 = vunpack.c.h.b16 %v3912
    %v4175 = vunpack.c.l.b16 %v3913
    %v4176 = vunpack.c.h.b16 %v3913
    %v4177 = vunpack.c.l.b16 %v3914
    %v4178 = vunpack.c.h.b16 %v3914
    %v4179 = vunpack.c.l.b16 %v3915
    %v4180 = vunpack.c.h.b16 %v3915
    %v4181 = vunpack.c.l.b16 %v3916
    %v4182 = vunpack.c.h.b16 %v3916
    %v4183 = vunpack.c.l.b16 %v3917
    %v4184 = vunpack.c.h.b16 %v3917
    %v4185 = vunpack.c.l.b16 %v3918
    %v4186 = vunpack.c.h.b16 %v3918
    %v4187 = vunpack.c.l.b16 %v3919
    %v4188 = vunpack.c.h.b16 %v3919
    %v4189 = vunpack.c.l.b16 %v3920
    %v4190 = vunpack.c.h.b16 %v3920
    %v4191 = vunpack.c.l.b16 %v3921
    %v4192 = vunpack.c.h.b16 %v3921
    %v4193 = vunpack.c.l.b16 %v3922
    %v4194 = vunpack.c.h.b16 %v3922
    %v4195 = vunpack.c.l.b16 %v3923
    %v4196 = vunpack.c.h.b16 %v3923
    %v4197 = vunpack.c.l.b16 %v3924
    %v4198 = vunpack.c.h.b16 %v3924
    %v4199 = vunpack.c.l.b16 %v3925
    %v4200 = vunpack.c.h.b16 %v3925
    %v4201 = vunpack.c.l.b16 %v3926
    %v4202 = vunpack.c.h.b16 %v3926
    %v4203 = vunpack.c.l.b16 %v3927
    %v4204 = vunpack.c.h.b16 %v3927
    %v4205 = vunpack.c.l.b16 %v3928
    %v4206 = vunpack.c.h.b16 %v3928
    %v4207 = vunpack.c.l.b16 %v3929
    %v4208 = vunpack.c.h.b16 %v3929
    %v4209 = vunpack.c.l.b16 %v3930
    %v4210 = vunpack.c.h.b16 %v3930
    %v4211 = vunpack.c.l.b16 %v3931
    %v4212 = vunpack.c.h.b16 %v3931
    %v4213 = vunpack.c.l.b16 %v3932
    %v4214 = vunpack.c.h.b16 %v3932
    %v4215 = vunpack.c.l.b16 %v3933
    %v4216 = vunpack.c.h.b16 %v3933
    %v4217 = vunpack.c.l.b16 %v3934
    %v4218 = vunpack.c.h.b16 %v3934
    %v4219 = vunpack.c.l.b16 %v3935
    %v4220 = vunpack.c.h.b16 %v3935
    %v4221 = vunpack.c.l.b16 %v3936
    %v4222 = vunpack.c.h.b16 %v3936
    %v4223 = vunpack.c.l.b16 %v3937
    %v4224 = vunpack.c.h.b16 %v3937
    %v4225 = vunpack.c.l.b16 %v3938
    %v4226 = vunpack.c.h.b16 %v3938
    %v4227 = vunpack.c.l.b16 %v3939
    %v4228 = vunpack.c.h.b16 %v3939
    %v4229 = vunpack.c.l.b16 %v3940
    %v4230 = vunpack.c.h.b16 %v3940
    %v4231 = vunpack.c.l.b16 %v3941
    %v4232 = vunpack.c.h.b16 %v3941
    %v4233 = vunpack.c.l.b16 %v3942
    %v4234 = vunpack.c.h.b16 %v3942
    %v4235 = vunpack.c.l.b16 %v3943
    %v4236 = vunpack.c.h.b16 %v3943
    %v4237 = vunpack.c.l.b16 %v3944
    %v4238 = vunpack.c.h.b16 %v3944
    %v4239 = vunpack.c.l.b16 %v3945
    %v4240 = vunpack.c.h.b16 %v3945
    %v4241 = vunpack.c.l.b16 %v3946
    %v4242 = vunpack.c.h.b16 %v3946
    %v4243 = vunpack.c.l.b16 %v3947
    %v4244 = vunpack.c.h.b16 %v3947
    %v4245 = vunpack.c.l.b16 %v3948
    %v4246 = vunpack.c.h.b16 %v3948
    %v4247 = vunpack.c.l.b16 %v3949
    %v4248 = vunpack.c.h.b16 %v3949
    %v4249 = vunpack.c.l.b16 %v3950
    %v4250 = vunpack.c.h.b16 %v3950
    %v4251 = vunpack.c.l.b16 %v3951
    %v4252 = vunpack.c.h.b16 %v3951
    %v4253 = vunpack.c.l.b16 %v3952
    %v4254 = vunpack.c.h.b16 %v3952
    %v4255 = vunpack.c.l.b16 %v3953
    %v4256 = vunpack.c.h.b16 %v3953
    %v4257 = vunpack.c.l.b16 %v3954
    %v4258 = vunpack.c.h.b16 %v3954
    %v4259 = vunpack.c.l.b16 %v3955
    %v4260 = vunpack.c.h.b16 %v3955
    %v4261 = vunpack.c.l.b16 %v3956
    %v4262 = vunpack.c.h.b16 %v3956
    %v4263 = vunpack.c.l.b16 %v3957
    %v4264 = vunpack.c.h.b16 %v3957
    %v4265 = vunpack.c.l.b16 %v3958
    %v4266 = vunpack.c.h.b16 %v3958
    %v4267 = vunpack.c.l.b16 %v3959
    %v4268 = vunpack.c.h.b16 %v3959
    %v4269 = vunpack.c.l.b16 %v3960
    %v4270 = vunpack.c.h.b16 %v3960
    %v4271 = vunpack.c.l.b16 %v3961
    %v4272 = vunpack.c.h.b16 %v3961
    %v4273 = vunpack.c.l.b16 %v3962
    %v4274 = vunpack.c.h.b16 %v3962
    %v4275 = vunpack.c.l.b16 %v3963
    %v4276 = vunpack.c.h.b16 %v3963
    %v4277 = vunpack.c.l.b16 %v3964
    %v4278 = vunpack.c.h.b16 %v3964
    %v4279 = vunpack.c.l.b16 %v3965
    %v4280 = vunpack.c.h.b16 %v3965
    %v4281 = vunpack.c.l.b16 %v3966
    %v4282 = vunpack.c.h.b16 %v3966
    %v4283 = vunpack.c.l.b16 %v3967
    %v4284 = vunpack.c.h.b16 %v3967
    %v4285 = vunpack.c.l.b16 %v3968
    %v4286 = vunpack.c.h.b16 %v3968
    %v4287 = vpack.c.b16 %v4079, %v4075
    %v4288 = vpack.c.b16 %v4080, %v4076
    %v4289 = vpack.c.b16 %v4081, %v4077
    %v4290 = vpack.c.b16 %v4082, %v4078
    %v4291 = vpack.c.b16 %v4087, %v4083
    %v4292 = vpack.c.b16 %v4088, %v4084
    %v4293 = vpack.c.b16 %v4089, %v4085
    %v4294 = vpack.c.b16 %v4090, %v4086
    %v4295 = vpack.c.b16 %v4095, %v4091
    %v4296 = vpack.c.b16 %v4096, %v4092
    %v4297 = vpack.c.b16 %v4097, %v4093
    %v4298 = vpack.c.b16 %v4098, %v4094
    %v4299 = vpack.c.b16 %v4103, %v4099
    %v4300 = vpack.c.b16 %v4104, %v4100
    %v4301 = vpack.c.b16 %v4105, %v4101
    %v4302 = vpack.c.b16 %v4106, %v4102
    %v4303 = vpack.c.b16 %v4111, %v4107
    %v4304 = vpack.c.b16 %v4112, %v4108
    %v4305 = vpack.c.b16 %v4113, %v4109
    %v4306 = vpack.c.b16 %v4114, %v4110
    %v4307 = vpack.c.b16 %v4119, %v4115
    %v4308 = vpack.c.b16 %v4120, %v4116
    %v4309 = vpack.c.b16 %v4121, %v4117
    %v4310 = vpack.c.b16 %v4122, %v4118
    %v4311 = vpack.c.b16 %v4127, %v4123
    %v4312 = vpack.c.b16 %v4128, %v4124
    %v4313 = vpack.c.b16 %v4129, %v4125
    %v4314 = vpack.c.b16 %v4130, %v4126
    %v4315 = vpack.c.b16 %v4135, %v4131
    %v4316 = vpack.c.b16 %v4136, %v4132
    %v4317 = vpack.c.b16 %v4137, %v4133
    %v4318 = vpack.c.b16 %v4138, %v4134
    %v4319 = vpack.c.b16 %v4143, %v4139
    %v4320 = vpack.c.b16 %v4144, %v4140
    %v4321 = vpack.c.b16 %v4145, %v4141
    %v4322 = vpack.c.b16 %v4146, %v4142
    %v4323 = vpack.c.b16 %v4151, %v4147
    %v4324 = vpack.c.b16 %v4152, %v4148
    %v4325 = vpack.c.b16 %v4153, %v4149
    %v4326 = vpack.c.b16 %v4154, %v4150
    %v4327 = vpack.c.b16 %v4159, %v4155
    %v4328 = vpack.c.b16 %v4160, %v4156
    %v4329 = vpack.c.b16 %v4161, %v4157
    %v4330 = vpack.c.b16 %v4162, %v4158
    %v4331 = vpack.c.b16 %v4167, %v4163
    %v4332 = vpack.c.b16 %v4168, %v4164
    %v4333 = vpack.c.b16 %v4169, %v4165
    %v4334 = vpack.c.b16 %v4170, %v4166
    %v4335 = vpack.c.b16 %v4175, %v4171
    %v4336 = vpack.c.b16 %v4176, %v4172
    %v4337 = vpack.c.b16 %v4177, %v4173
    %v4338 = vpack.c.b16 %v4178, %v4174
    %v4339 = vpack.c.b16 %v4183, %v4179
    %v4340 = vpack.c.b16 %v4184, %v4180
    %v4341 = vpack.c.b16 %v4185, %v4181
    %v4342 = vpack.c.b16 %v4186, %v4182
    %v4343 = vpack.c.b16 %v4191, %v4187
    %v4344 = vpack.c.b16 %v4192, %v4188
    %v4345 = vpack.c.b16 %v4193, %v4189
    %v4346 = vpack.c.b16 %v4194, %v4190
    %v4347 = vpack.c.b16 %v4199, %v4195
    %v4348 = vpack.c.b16 %v4200, %v4196
    %v4349 = vpack.c.b16 %v4201, %v4197
    %v4350 = vpack.c.b16 %v4202, %v4198
    %v4351 = vpack.c.b16 %v4207, %v4203
    %v4352 = vpack.c.b16 %v4208, %v4204
    %v4353 = vpack.c.b16 %v4209, %v4205
    %v4354 = vpack.c.b16 %v4210, %v4206
    %v4355 = vpack.c.b16 %v4215, %v4211
    %v4356 = vpack.c.b16 %v4216, %v4212
    %v4357 = vpack.c.b16 %v4217, %v4213
    %v4358 = vpack.c.b16 %v4218, %v4214
    %v4359 = vpack.c.b16 %v4223, %v4219
    %v4360 = vpack.c.b16 %v4224, %v4220
    %v4361 = vpack.c.b16 %v4225, %v4221
    %v4362 = vpack.c.b16 %v4226, %v4222
    %v4363 = vpack.c.b16 %v4231, %v4227
    %v4364 = vpack.c.b16 %v4232, %v4228
    %v4365 = vpack.c.b16 %v4233, %v4229
    %v4366 = vpack.c.b16 %v4234, %v4230
    %v4367 = vpack.c.b16 %v4239, %v4235
    %v4368 = vpack.c.b16 %v4240, %v4236
    %v4369 = vpack.c.b16 %v4241, %v4237
    %v4370 = vpack.c.b16 %v4242, %v4238
    %v4371 = vpack.c.b16 %v4247, %v4243
    %v4372 = vpack.c.b16 %v4248, %v4244
    %v4373 = vpack.c.b16 %v4249, %v4245
    %v4374 = vpack.c.b16 %v4250, %v4246
    %v4375 = vpack.c.b16 %v4255, %v4251
    %v4376 = vpack.c.b16 %v4256, %v4252
    %v4377 = vpack.c.b16 %v4257, %v4253
    %v4378 = vpack.c.b16 %v4258, %v4254
    %v4379 = vpack.c.b16 %v4263, %v4259
    %v4380 = vpack.c.b16 %v4264, %v4260
    %v4381 = vpack.c.b16 %v4265, %v4261
    %v4382 = vpack.c.b16 %v4266, %v4262
    %v4383 = vpack.c.b16 %v4271, %v4267
    %v4384 = vpack.c.b16 %v4272, %v4268
    %v4385 = vpack.c.b16 %v4273, %v4269
    %v4386 = vpack.c.b16 %v4274, %v4270
    %v4387 = vpack.c.b16 %v4279, %v4275
    %v4388 = vpack.c.b16 %v4280, %v4276
    %v4389 = vpack.c.b16 %v4281, %v4277
    %v4390 = vpack.c.b16 %v4282, %v4278
    %v4391 = vpack.c.b16 %v4283, %v4283
    %v4392 = vpack.c.b16 %v4284, %v4284
    %v4393 = vpack.c.b16 %v4285, %v4285
    %v4394 = vpack.c.b16 %v4286, %v4286
    %v4500 = vsel %vm3354, %v3858, 0
    %v4503 = vsel %vm3354, %v3862, 0
    %v4506 = vand.u32 %v4391, %v2112
    %v4509 = vand.u32 %v4392, %v2112
    %v4512 = vand.u32 %v4393, %v2112
    %v4515 = vand.u32 %v4394, %v2112
    %4517 = vmatprep.subr.bf16.mxu0 %v4288
    %4518 = vmatpush1.bf16.msra.mxu0 %v4287
    %4519 = vmatprep.subr.bf16.mxu0 %v4292
    %4520 = vmatpush1.bf16.msra.mxu0 %v4291
    %4521 = vmatprep.subr.bf16.mxu0 %v4296
    %4522 = vmatpush1.bf16.msra.mxu0 %v4295
    %4523 = vmatprep.subr.bf16.mxu0 %v4300
    %4524 = vmatpush1.bf16.msra.mxu0 %v4299
    %4525 = vmatprep.subr.bf16.mxu0 %v4304
    %4526 = vmatpush1.bf16.msra.mxu0 %v4303
    %4527 = vmatprep.subr.bf16.mxu0 %v4308
    %4528 = vmatpush1.bf16.msra.mxu0 %v4307
    %4529 = vmatprep.subr.bf16.mxu0 %v4312
    %4530 = vmatpush1.bf16.msra.mxu0 %v4311
    %4531 = vmatprep.subr.bf16.mxu0 %v4316
    %4532 = vmatpush1.bf16.msra.mxu0 %v4315
    %4533 = vmatprep.subr.bf16.mxu0 %v4320
    %4534 = vmatpush1.bf16.msra.mxu0 %v4319
    %4535 = vmatprep.subr.bf16.mxu0 %v4324
    %4536 = vmatpush1.bf16.msra.mxu0 %v4323
    %4537 = vmatprep.subr.bf16.mxu0 %v4328
    %4538 = vmatpush1.bf16.msra.mxu0 %v4327
    %4539 = vmatprep.subr.bf16.mxu0 %v4332
    %4540 = vmatpush1.bf16.msra.mxu0 %v4331
    %4541 = vmatprep.subr.bf16.mxu0 %v4336
    %4542 = vmatpush1.bf16.msra.mxu0 %v4335
    %4543 = vmatprep.subr.bf16.mxu0 %v4340
    %4544 = vmatpush1.bf16.msra.mxu0 %v4339
    %4545 = vmatprep.subr.bf16.mxu0 %v4344
    %4546 = vmatpush1.bf16.msra.mxu0 %v4343
    %4547 = vmatprep.subr.bf16.mxu0 %v4348
    %4548 = vmatpush1.bf16.msra.mxu0 %v4347
    %4549 = vmatprep.mubr.bf16.mxu0 %v3856
    %4550 = vmatmul.mubr.bf16.gmra.mrb[0].mxu0 %v3855
    %v4551 = vpop.f32.mrb[0].mxu0
    %v4552 = vadd.f32 0.0, %v4551
    %v4553 = vpop.f32.mrb[0].mxu0
    %v4554 = vadd.f32 0.0, %v4553
    %v4555 = vpop.f32.mrb[0].mxu0
    %v4556 = vadd.f32 0.0, %v4555
    %v4557 = vpop.f32.mrb[0].mxu0
    %v4558 = vadd.f32 0.0, %v4557
    %4559 = vmatprep.mubr.bf16.mxu0 %v3860
    %4560 = vmatmul.mubr.bf16.gmra.mrb[0].mxu0 %v3859
    %v4561 = vpop.f32.mrb[0].mxu0
    %v4562 = vadd.f32 0.0, %v4561
    %v4563 = vpop.f32.mrb[0].mxu0
    %v4564 = vadd.f32 0.0, %v4563
    %v4565 = vpop.f32.mrb[0].mxu0
    %v4566 = vadd.f32 0.0, %v4565
    %v4567 = vpop.f32.mrb[0].mxu0
    %v4568 = vadd.f32 0.0, %v4567
    %4569 = vdwg.mxu0
    %4570 = vmatprep.subr.bf16.mxu0 %v4352
    %4571 = vmatpush1.bf16.msra.mxu0 %v4351
    %4572 = vmatprep.subr.bf16.mxu0 %v4356
    %4573 = vmatpush1.bf16.msra.mxu0 %v4355
    %4574 = vmatprep.subr.bf16.mxu0 %v4360
    %4575 = vmatpush1.bf16.msra.mxu0 %v4359
    %4576 = vmatprep.subr.bf16.mxu0 %v4364
    %4577 = vmatpush1.bf16.msra.mxu0 %v4363
    %4578 = vmatprep.subr.bf16.mxu0 %v4368
    %4579 = vmatpush1.bf16.msra.mxu0 %v4367
    %4580 = vmatprep.subr.bf16.mxu0 %v4372
    %4581 = vmatpush1.bf16.msra.mxu0 %v4371
    %4582 = vmatprep.subr.bf16.mxu0 %v4376
    %4583 = vmatpush1.bf16.msra.mxu0 %v4375
    %4584 = vmatprep.subr.bf16.mxu0 %v4380
    %4585 = vmatpush1.bf16.msra.mxu0 %v4379
    %4586 = vmatprep.subr.bf16.mxu0 %v4384
    %4587 = vmatpush1.bf16.msra.mxu0 %v4383
    %4588 = vmatprep.subr.bf16.mxu0 %v4388
    %4589 = vmatpush1.bf16.msra.mxu0 %v4387
    %4590 = vmatprep.subr.bf16.mxu0 %v4509
    %4591 = vmatpush1.bf16.msra.mxu0 %v4506
    %4592 = vmatprep.subr.bf16.mxu0 0
    %4593 = vmatpush1.bf16.msra.mxu0 0
    %4594 = vmatprep.subr.bf16.mxu0 0
    %4595 = vmatpush1.bf16.msra.mxu0 0
    %4596 = vmatprep.subr.bf16.mxu0 0
    %4597 = vmatpush1.bf16.msra.mxu0 0
    %4598 = vmatprep.subr.bf16.mxu0 0
    %4599 = vmatpush1.bf16.msra.mxu0 0
    %4600 = vmatprep.subr.bf16.mxu0 0
    %4601 = vmatpush1.bf16.msra.mxu0 0
    %4602 = vmatprep.mubr.bf16.mxu0 %v4500
    %4603 = vmatmul.mubr.bf16.gmra.mrb[0].mxu0 %v3857
    %v4604 = vpop.f32.mrb[0].mxu0
    %v4605 = vadd.f32 %v4552, %v4604
    %v4606 = vpop.f32.mrb[0].mxu0
    %v4607 = vadd.f32 %v4554, %v4606
    %v4608 = vpop.f32.mrb[0].mxu0
    %v4609 = vadd.f32 %v4556, %v4608
    %v4610 = vpop.f32.mrb[0].mxu0
    %v4611 = vadd.f32 %v4558, %v4610
    %4612 = vmatprep.mubr.bf16.mxu0 %v4503
    %4613 = vmatmul.mubr.bf16.gmra.mrb[0].mxu0 %v3861
    %v4614 = vpop.f32.mrb[0].mxu0
    %v4615 = vadd.f32 %v4562, %v4614
    %v4616 = vpop.f32.mrb[0].mxu0
    %v4617 = vadd.f32 %v4564, %v4616
    %v4618 = vpop.f32.mrb[0].mxu0
    %v4619 = vadd.f32 %v4566, %v4618
    %v4620 = vpop.f32.mrb[0].mxu0
    %v4621 = vadd.f32 %v4568, %v4620
    %4622 = vdwg.mxu0
    %4623 = vmatprep.subr.bf16.mxu0 %v4290
    %4624 = vmatpush1.bf16.msra.mxu0 %v4289
    %4625 = vmatprep.subr.bf16.mxu0 %v4294
    %4626 = vmatpush1.bf16.msra.mxu0 %v4293
    %4627 = vmatprep.subr.bf16.mxu0 %v4298
    %4628 = vmatpush1.bf16.msra.mxu0 %v4297
    %4629 = vmatprep.subr.bf16.mxu0 %v4302
    %4630 = vmatpush1.bf16.msra.mxu0 %v4301
    %4631 = vmatprep.subr.bf16.mxu0 %v4306
    %4632 = vmatpush1.bf16.msra.mxu0 %v4305
    %4633 = vmatprep.subr.bf16.mxu0 %v4310
    %4634 = vmatpush1.bf16.msra.mxu0 %v4309
    %4635 = vmatprep.subr.bf16.mxu0 %v4314
    %4636 = vmatpush1.bf16.msra.mxu0 %v4313
    %4637 = vmatprep.subr.bf16.mxu0 %v4318
    %4638 = vmatpush1.bf16.msra.mxu0 %v4317
    %4639 = vmatprep.subr.bf16.mxu0 %v4322
    %4640 = vmatpush1.bf16.msra.mxu0 %v4321
    %4641 = vmatprep.subr.bf16.mxu0 %v4326
    %4642 = vmatpush1.bf16.msra.mxu0 %v4325
    %4643 = vmatprep.subr.bf16.mxu0 %v4330
    %4644 = vmatpush1.bf16.msra.mxu0 %v4329
    %4645 = vmatprep.subr.bf16.mxu0 %v4334
    %4646 = vmatpush1.bf16.msra.mxu0 %v4333
    %4647 = vmatprep.subr.bf16.mxu0 %v4338
    %4648 = vmatpush1.bf16.msra.mxu0 %v4337
    %4649 = vmatprep.subr.bf16.mxu0 %v4342
    %4650 = vmatpush1.bf16.msra.mxu0 %v4341
    %4651 = vmatprep.subr.bf16.mxu0 %v4346
    %4652 = vmatpush1.bf16.msra.mxu0 %v4345
    %4653 = vmatprep.subr.bf16.mxu0 %v4350
    %4654 = vmatpush1.bf16.msra.mxu0 %v4349
    %4655 = vmatprep.mubr.bf16.mxu0 %v3856
    %4656 = vmatmul.mubr.bf16.gmra.mrb[0].mxu0 %v3855
    %v4657 = vpop.f32.mrb[0].mxu0
    %v4658 = vadd.f32 0.0, %v4657
    %v4659 = vpop.f32.mrb[0].mxu0
    %v4660 = vadd.f32 0.0, %v4659
    %v4661 = vpop.f32.mrb[0].mxu0
    %v4662 = vadd.f32 0.0, %v4661
    %v4663 = vpop.f32.mrb[0].mxu0
    %v4664 = vadd.f32 0.0, %v4663
    %4665 = vmatprep.mubr.bf16.mxu0 %v3860
    %4666 = vmatmul.mubr.bf16.gmra.mrb[0].mxu0 %v3859
    %v4667 = vpop.f32.mrb[0].mxu0
    %v4668 = vadd.f32 0.0, %v4667
    %v4669 = vpop.f32.mrb[0].mxu0
    %v4670 = vadd.f32 0.0, %v4669
    %v4671 = vpop.f32.mrb[0].mxu0
    %v4672 = vadd.f32 0.0, %v4671
    %v4673 = vpop.f32.mrb[0].mxu0
    %v4674 = vadd.f32 0.0, %v4673
    %4675 = vdwg.mxu0
    %4676 = vmatprep.subr.bf16.mxu0 %v4354
    %4677 = vmatpush1.bf16.msra.mxu0 %v4353
    %4678 = vmatprep.subr.bf16.mxu0 %v4358
    %4679 = vmatpush1.bf16.msra.mxu0 %v4357
    %4680 = vmatprep.subr.bf16.mxu0 %v4362
    %4681 = vmatpush1.bf16.msra.mxu0 %v4361
    %4682 = vmatprep.subr.bf16.mxu0 %v4366
    %4683 = vmatpush1.bf16.msra.mxu0 %v4365
    %4684 = vmatprep.subr.bf16.mxu0 %v4370
    %4685 = vmatpush1.bf16.msra.mxu0 %v4369
    %4686 = vmatprep.subr.bf16.mxu0 %v4374
    %4687 = vmatpush1.bf16.msra.mxu0 %v4373
    %4688 = vmatprep.subr.bf16.mxu0 %v4378
    %4689 = vmatpush1.bf16.msra.mxu0 %v4377
    %4690 = vmatprep.subr.bf16.mxu0 %v4382
    %4691 = vmatpush1.bf16.msra.mxu0 %v4381
    %4692 = vmatprep.subr.bf16.mxu0 %v4386
    %4693 = vmatpush1.bf16.msra.mxu0 %v4385
    %4694 = vmatprep.subr.bf16.mxu0 %v4390
    %4695 = vmatpush1.bf16.msra.mxu0 %v4389
    %4696 = vmatprep.subr.bf16.mxu0 %v4515
    %4697 = vmatpush1.bf16.msra.mxu0 %v4512
    %4698 = vmatprep.subr.bf16.mxu0 0
    %4699 = vmatpush1.bf16.msra.mxu0 0
    %4700 = vmatprep.subr.bf16.mxu0 0
    %4701 = vmatpush1.bf16.msra.mxu0 0
    %4702 = vmatprep.subr.bf16.mxu0 0
    %4703 = vmatpush1.bf16.msra.mxu0 0
    %4704 = vmatprep.subr.bf16.mxu0 0
    %4705 = vmatpush1.bf16.msra.mxu0 0
    %4706 = vmatprep.subr.bf16.mxu0 0
    %4707 = vmatpush1.bf16.msra.mxu0 0
    %4708 = vmatprep.mubr.bf16.mxu0 %v4500
    %4709 = vmatmul.mubr.bf16.gmra.mrb[0].mxu0 %v3857
    %v4710 = vpop.f32.mrb[0].mxu0
    %v4711 = vadd.f32 %v4658, %v4710
    %v4712 = vpop.f32.mrb[0].mxu0
    %v4713 = vadd.f32 %v4660, %v4712
    %v4714 = vpop.f32.mrb[0].mxu0
    %v4715 = vadd.f32 %v4662, %v4714
    %v4716 = vpop.f32.mrb[0].mxu0
    %v4717 = vadd.f32 %v4664, %v4716
    %4718 = vmatprep.mubr.bf16.mxu0 %v4503
    %4719 = vmatmul.mubr.bf16.gmra.mrb[0].mxu0 %v3861
    %v4720 = vpop.f32.mrb[0].mxu0
    %v4721 = vadd.f32 %v4668, %v4720
    %v4722 = vpop.f32.mrb[0].mxu0
    %v4723 = vadd.f32 %v4670, %v4722
    %v4724 = vpop.f32.mrb[0].mxu0
    %v4725 = vadd.f32 %v4672, %v4724
    %v4726 = vpop.f32.mrb[0].mxu0
    %v4727 = vadd.f32 %v4674, %v4726
    %4728 = vdwg.mxu0
    %v4729 = vpack.c.bf16 %v3838, %v3831
    %v4730 = vpack.c.bf16 %v3839, %v3832
    %v4731 = vpack.c.bf16 %v3840, %v3833
    %v4732 = vpack.c.bf16 %v3852, %v3845
    %v4733 = vpack.c.bf16 %v3853, %v3846
    %v4734 = vpack.c.bf16 %v3854, %v3847
    %4743 = vrot.lane.b32.xlu0 %v3858, 93
    %v4744 = vpop.permute.xlu0 %4743
    %4745 = vrot.lane.b32.xlu0 %v4729, 93
    %v4746 = vpop.permute.xlu0 %4745
    %4747 = vrot.lane.b32.xlu0 %v4730, 93
    %v4748 = vpop.permute.xlu0 %4747
    %4749 = vrot.lane.b32.xlu0 %v4731, 93
    %v4750 = vpop.permute.xlu0 %4749
    %4751 = vrot.lane.b32.xlu0 %v3862, 93
    %v4752 = vpop.permute.xlu0 %4751
    %4753 = vrot.lane.b32.xlu0 %v4732, 93
    %v4754 = vpop.permute.xlu0 %4753
    %4755 = vrot.lane.b32.xlu0 %v4733, 93
    %v4756 = vpop.permute.xlu0 %4755
    %4757 = vrot.lane.b32.xlu0 %v4734, 93
    %v4758 = vpop.permute.xlu0 %4757
    %vm4759 = vcmask 760832
    %v4760 = vsel %vm4759, %v4744, %v4746
    %v4761 = vsel %vm4759, %v4746, %v4748
    %v4762 = vsel %vm4759, %v4748, %v4750
    %v4763 = vsel %vm4759, %v4752, %v4754
    %v4764 = vsel %vm4759, %v4754, %v4756
    %v4765 = vsel %vm4759, %v4756, %v4758
    %v4773 = vsel %vm3354, %v4750, 0
    %v4776 = vsel %vm3354, %v4758, 0
    %4778 = vmatprep.subr.bf16.mxu0 %v4288
    %4779 = vmatpush1.bf16.msra.mxu0 %v4287
    %4780 = vmatprep.subr.bf16.mxu0 %v4292
    %4781 = vmatpush1.bf16.msra.mxu0 %v4291
    %4782 = vmatprep.subr.bf16.mxu0 %v4296
    %4783 = vmatpush1.bf16.msra.mxu0 %v4295
    %4784 = vmatprep.subr.bf16.mxu0 %v4300
    %4785 = vmatpush1.bf16.msra.mxu0 %v4299
    %4786 = vmatprep.subr.bf16.mxu0 %v4304
    %4787 = vmatpush1.bf16.msra.mxu0 %v4303
    %4788 = vmatprep.subr.bf16.mxu0 %v4308
    %4789 = vmatpush1.bf16.msra.mxu0 %v4307
    %4790 = vmatprep.subr.bf16.mxu0 %v4312
    %4791 = vmatpush1.bf16.msra.mxu0 %v4311
    %4792 = vmatprep.subr.bf16.mxu0 %v4316
    %4793 = vmatpush1.bf16.msra.mxu0 %v4315
    %4794 = vmatprep.subr.bf16.mxu0 %v4320
    %4795 = vmatpush1.bf16.msra.mxu0 %v4319
    %4796 = vmatprep.subr.bf16.mxu0 %v4324
    %4797 = vmatpush1.bf16.msra.mxu0 %v4323
    %4798 = vmatprep.subr.bf16.mxu0 %v4328
    %4799 = vmatpush1.bf16.msra.mxu0 %v4327
    %4800 = vmatprep.subr.bf16.mxu0 %v4332
    %4801 = vmatpush1.bf16.msra.mxu0 %v4331
    %4802 = vmatprep.subr.bf16.mxu0 %v4336
    %4803 = vmatpush1.bf16.msra.mxu0 %v4335
    %4804 = vmatprep.subr.bf16.mxu0 %v4340
    %4805 = vmatpush1.bf16.msra.mxu0 %v4339
    %4806 = vmatprep.subr.bf16.mxu0 %v4344
    %4807 = vmatpush1.bf16.msra.mxu0 %v4343
    %4808 = vmatprep.subr.bf16.mxu0 %v4348
    %4809 = vmatpush1.bf16.msra.mxu0 %v4347
    %4810 = vmatprep.mubr.bf16.mxu0 %v4761
    %4811 = vmatmul.mubr.bf16.gmra.mrb[0].mxu0 %v4760
    %v4812 = vpop.f32.mrb[0].mxu0
    %v4813 = vadd.f32 0.0, %v4812
    %v4814 = vpop.f32.mrb[0].mxu0
    %v4815 = vadd.f32 0.0, %v4814
    %v4816 = vpop.f32.mrb[0].mxu0
    %v4817 = vadd.f32 0.0, %v4816
    %v4818 = vpop.f32.mrb[0].mxu0
    %v4819 = vadd.f32 0.0, %v4818
    %4820 = vmatprep.mubr.bf16.mxu0 %v4764
    %4821 = vmatmul.mubr.bf16.gmra.mrb[0].mxu0 %v4763
    %v4822 = vpop.f32.mrb[0].mxu0
    %v4823 = vadd.f32 0.0, %v4822
    %v4824 = vpop.f32.mrb[0].mxu0
    %v4825 = vadd.f32 0.0, %v4824
    %v4826 = vpop.f32.mrb[0].mxu0
    %v4827 = vadd.f32 0.0, %v4826
    %v4828 = vpop.f32.mrb[0].mxu0
    %v4829 = vadd.f32 0.0, %v4828
    %4830 = vdwg.mxu0
    %4831 = vmatprep.subr.bf16.mxu0 %v4352
    %4832 = vmatpush1.bf16.msra.mxu0 %v4351
    %4833 = vmatprep.subr.bf16.mxu0 %v4356
    %4834 = vmatpush1.bf16.msra.mxu0 %v4355
    %4835 = vmatprep.subr.bf16.mxu0 %v4360
    %4836 = vmatpush1.bf16.msra.mxu0 %v4359
    %4837 = vmatprep.subr.bf16.mxu0 %v4364
    %4838 = vmatpush1.bf16.msra.mxu0 %v4363
    %4839 = vmatprep.subr.bf16.mxu0 %v4368
    %4840 = vmatpush1.bf16.msra.mxu0 %v4367
    %4841 = vmatprep.subr.bf16.mxu0 %v4372
    %4842 = vmatpush1.bf16.msra.mxu0 %v4371
    %4843 = vmatprep.subr.bf16.mxu0 %v4376
    %4844 = vmatpush1.bf16.msra.mxu0 %v4375
    %4845 = vmatprep.subr.bf16.mxu0 %v4380
    %4846 = vmatpush1.bf16.msra.mxu0 %v4379
    %4847 = vmatprep.subr.bf16.mxu0 %v4384
    %4848 = vmatpush1.bf16.msra.mxu0 %v4383
    %4849 = vmatprep.subr.bf16.mxu0 %v4388
    %4850 = vmatpush1.bf16.msra.mxu0 %v4387
    %4851 = vmatprep.subr.bf16.mxu0 %v4509
    %4852 = vmatpush1.bf16.msra.mxu0 %v4506
    %4853 = vmatprep.subr.bf16.mxu0 0
    %4854 = vmatpush1.bf16.msra.mxu0 0
    %4855 = vmatprep.subr.bf16.mxu0 0
    %4856 = vmatpush1.bf16.msra.mxu0 0
    %4857 = vmatprep.subr.bf16.mxu0 0
    %4858 = vmatpush1.bf16.msra.mxu0 0
    %4859 = vmatprep.subr.bf16.mxu0 0
    %4860 = vmatpush1.bf16.msra.mxu0 0
    %4861 = vmatprep.subr.bf16.mxu0 0
    %4862 = vmatpush1.bf16.msra.mxu0 0
    %4863 = vmatprep.mubr.bf16.mxu0 %v4773
    %4864 = vmatmul.mubr.bf16.gmra.mrb[0].mxu0 %v4762
    %v4865 = vpop.f32.mrb[0].mxu0
    %v4866 = vadd.f32 %v4813, %v4865
    %v4867 = vpop.f32.mrb[0].mxu0
    %v4868 = vadd.f32 %v4815, %v4867
    %v4869 = vpop.f32.mrb[0].mxu0
    %v4870 = vadd.f32 %v4817, %v4869
    %v4871 = vpop.f32.mrb[0].mxu0
    %v4872 = vadd.f32 %v4819, %v4871
    %4873 = vmatprep.mubr.bf16.mxu0 %v4776
    %4874 = vmatmul.mubr.bf16.gmra.mrb[0].mxu0 %v4765
    %v4875 = vpop.f32.mrb[0].mxu0
    %v4876 = vadd.f32 %v4823, %v4875
    %v4877 = vpop.f32.mrb[0].mxu0
    %v4878 = vadd.f32 %v4825, %v4877
    %v4879 = vpop.f32.mrb[0].mxu0
    %v4880 = vadd.f32 %v4827, %v4879
    %v4881 = vpop.f32.mrb[0].mxu0
    %v4882 = vadd.f32 %v4829, %v4881
    %4883 = vdwg.mxu0
    %4884 = vmatprep.subr.bf16.mxu0 %v4290
    %4885 = vmatpush1.bf16.msra.mxu0 %v4289
    %4886 = vmatprep.subr.bf16.mxu0 %v4294
    %4887 = vmatpush1.bf16.msra.mxu0 %v4293
    %4888 = vmatprep.subr.bf16.mxu0 %v4298
    %4889 = vmatpush1.bf16.msra.mxu0 %v4297
    %4890 = vmatprep.subr.bf16.mxu0 %v4302
    %4891 = vmatpush1.bf16.msra.mxu0 %v4301
    %4892 = vmatprep.subr.bf16.mxu0 %v4306
    %4893 = vmatpush1.bf16.msra.mxu0 %v4305
    %4894 = vmatprep.subr.bf16.mxu0 %v4310
    %4895 = vmatpush1.bf16.msra.mxu0 %v4309
    %4896 = vmatprep.subr.bf16.mxu0 %v4314
    %4897 = vmatpush1.bf16.msra.mxu0 %v4313
    %4898 = vmatprep.subr.bf16.mxu0 %v4318
    %4899 = vmatpush1.bf16.msra.mxu0 %v4317
    %4900 = vmatprep.subr.bf16.mxu0 %v4322
    %4901 = vmatpush1.bf16.msra.mxu0 %v4321
    %4902 = vmatprep.subr.bf16.mxu0 %v4326
    %4903 = vmatpush1.bf16.msra.mxu0 %v4325
    %4904 = vmatprep.subr.bf16.mxu0 %v4330
    %4905 = vmatpush1.bf16.msra.mxu0 %v4329
    %4906 = vmatprep.subr.bf16.mxu0 %v4334
    %4907 = vmatpush1.bf16.msra.mxu0 %v4333
    %4908 = vmatprep.subr.bf16.mxu0 %v4338
    %4909 = vmatpush1.bf16.msra.mxu0 %v4337
    %4910 = vmatprep.subr.bf16.mxu0 %v4342
    %4911 = vmatpush1.bf16.msra.mxu0 %v4341
    %4912 = vmatprep.subr.bf16.mxu0 %v4346
    %4913 = vmatpush1.bf16.msra.mxu0 %v4345
    %4914 = vmatprep.subr.bf16.mxu0 %v4350
    %4915 = vmatpush1.bf16.msra.mxu0 %v4349
    %4916 = vmatprep.mubr.bf16.mxu0 %v4761
    %4917 = vmatmul.mubr.bf16.gmra.mrb[0].mxu0 %v4760
    %v4918 = vpop.f32.mrb[0].mxu0
    %v4919 = vadd.f32 0.0, %v4918
    %v4920 = vpop.f32.mrb[0].mxu0
    %v4921 = vadd.f32 0.0, %v4920
    %v4922 = vpop.f32.mrb[0].mxu0
    %v4923 = vadd.f32 0.0, %v4922
    %v4924 = vpop.f32.mrb[0].mxu0
    %v4925 = vadd.f32 0.0, %v4924
    %4926 = vmatprep.mubr.bf16.mxu0 %v4764
    %4927 = vmatmul.mubr.bf16.gmra.mrb[0].mxu0 %v4763
    %v4928 = vpop.f32.mrb[0].mxu0
    %v4929 = vadd.f32 0.0, %v4928
    %v4930 = vpop.f32.mrb[0].mxu0
    %v4931 = vadd.f32 0.0, %v4930
    %v4932 = vpop.f32.mrb[0].mxu0
    %v4933 = vadd.f32 0.0, %v4932
    %v4934 = vpop.f32.mrb[0].mxu0
    %v4935 = vadd.f32 0.0, %v4934
    %4936 = vdwg.mxu0
    %4937 = vmatprep.subr.bf16.mxu0 %v4354
    %4938 = vmatpush1.bf16.msra.mxu0 %v4353
    %4939 = vmatprep.subr.bf16.mxu0 %v4358
    %4940 = vmatpush1.bf16.msra.mxu0 %v4357
    %4941 = vmatprep.subr.bf16.mxu0 %v4362
    %4942 = vmatpush1.bf16.msra.mxu0 %v4361
    %4943 = vmatprep.subr.bf16.mxu0 %v4366
    %4944 = vmatpush1.bf16.msra.mxu0 %v4365
    %4945 = vmatprep.subr.bf16.mxu0 %v4370
    %4946 = vmatpush1.bf16.msra.mxu0 %v4369
    %4947 = vmatprep.subr.bf16.mxu0 %v4374
    %4948 = vmatpush1.bf16.msra.mxu0 %v4373
    %4949 = vmatprep.subr.bf16.mxu0 %v4378
    %4950 = vmatpush1.bf16.msra.mxu0 %v4377
    %4951 = vmatprep.subr.bf16.mxu0 %v4382
    %4952 = vmatpush1.bf16.msra.mxu0 %v4381
    %4953 = vmatprep.subr.bf16.mxu0 %v4386
    %4954 = vmatpush1.bf16.msra.mxu0 %v4385
    %4955 = vmatprep.subr.bf16.mxu0 %v4390
    %4956 = vmatpush1.bf16.msra.mxu0 %v4389
    %4957 = vmatprep.subr.bf16.mxu0 %v4515
    %4958 = vmatpush1.bf16.msra.mxu0 %v4512
    %4959 = vmatprep.subr.bf16.mxu0 0
    %4960 = vmatpush1.bf16.msra.mxu0 0
    %4961 = vmatprep.subr.bf16.mxu0 0
    %4962 = vmatpush1.bf16.msra.mxu0 0
    %4963 = vmatprep.subr.bf16.mxu0 0
    %4964 = vmatpush1.bf16.msra.mxu0 0
    %4965 = vmatprep.subr.bf16.mxu0 0
    %4966 = vmatpush1.bf16.msra.mxu0 0
    %4967 = vmatprep.subr.bf16.mxu0 0
    %4968 = vmatpush1.bf16.msra.mxu0 0
    %4969 = vmatprep.mubr.bf16.mxu0 %v4773
    %4970 = vmatmul.mubr.bf16.gmra.mrb[0].mxu0 %v4762
    %v4971 = vpop.f32.mrb[0].mxu0
    %v4972 = vadd.f32 %v4919, %v4971
    %v4973 = vpop.f32.mrb[0].mxu0
    %v4974 = vadd.f32 %v4921, %v4973
    %v4975 = vpop.f32.mrb[0].mxu0
    %v4976 = vadd.f32 %v4923, %v4975
    %v4977 = vpop.f32.mrb[0].mxu0
    %v4978 = vadd.f32 %v4925, %v4977
    %4979 = vmatprep.mubr.bf16.mxu0 %v4776
    %4980 = vmatmul.mubr.bf16.gmra.mrb[0].mxu0 %v4765
    %v4981 = vpop.f32.mrb[0].mxu0
    %v4982 = vadd.f32 %v4929, %v4981
    %v4983 = vpop.f32.mrb[0].mxu0
    %v4984 = vadd.f32 %v4931, %v4983
    %v4985 = vpop.f32.mrb[0].mxu0
    %v4986 = vadd.f32 %v4933, %v4985
    %v4987 = vpop.f32.mrb[0].mxu0
    %v4988 = vadd.f32 %v4935, %v4987
    %4989 = vdwg.mxu0
    %5006 = vrot.lane.b32.xlu0 %v4866, 100
    %v5007 = vpop.permute.xlu0 %5006
    %5008 = vrot.lane.b32.xlu0 %v4868, 100
    %v5009 = vpop.permute.xlu0 %5008
    %5010 = vrot.lane.b32.xlu0 %v4972, 100
    %v5011 = vpop.permute.xlu0 %5010
    %5012 = vrot.lane.b32.xlu0 %v4974, 100
    %v5013 = vpop.permute.xlu0 %5012
    %5014 = vrot.lane.b32.xlu0 %v4870, 100
    %v5015 = vpop.permute.xlu0 %5014
    %5016 = vrot.lane.b32.xlu0 %v4872, 100
    %v5017 = vpop.permute.xlu0 %5016
    %5018 = vrot.lane.b32.xlu0 %v4976, 100
    %v5019 = vpop.permute.xlu0 %5018
    %5020 = vrot.lane.b32.xlu0 %v4978, 100
    %v5021 = vpop.permute.xlu0 %5020
    %5022 = vrot.lane.b32.xlu0 %v4876, 100
    %v5023 = vpop.permute.xlu0 %5022
    %5024 = vrot.lane.b32.xlu0 %v4878, 100
    %v5025 = vpop.permute.xlu0 %5024
    %5026 = vrot.lane.b32.xlu0 %v4982, 100
    %v5027 = vpop.permute.xlu0 %5026
    %5028 = vrot.lane.b32.xlu0 %v4984, 100
    %v5029 = vpop.permute.xlu0 %5028
    %5030 = vrot.lane.b32.xlu0 %v4880, 100
    %v5031 = vpop.permute.xlu0 %5030
    %5032 = vrot.lane.b32.xlu0 %v4882, 100
    %v5033 = vpop.permute.xlu0 %5032
    %5034 = vrot.lane.b32.xlu0 %v4986, 100
    %v5035 = vpop.permute.xlu0 %5034
    %5036 = vrot.lane.b32.xlu0 %v4988, 100
    %v5037 = vpop.permute.xlu0 %5036
    %v5038 = vsel %vm1488, %v5007, %v5009
    %v5039 = vsel %vm1488, %v5009, %v5011
    %v5040 = vsel %vm1488, %v5011, %v5013
    %v5041 = vsel %vm1488, %v5015, %v5017
    %v5042 = vsel %vm1488, %v5017, %v5019
    %v5043 = vsel %vm1488, %v5019, %v5021
    %v5044 = vsel %vm1488, %v5023, %v5025
    %v5045 = vsel %vm1488, %v5025, %v5027
    %v5046 = vsel %vm1488, %v5027, %v5029
    %v5047 = vsel %vm1488, %v5031, %v5033
    %v5048 = vsel %vm1488, %v5033, %v5035
    %v5049 = vsel %vm1488, %v5035, %v5037
    %v5054 = vsel %vm1488, %v4713, %v5007
    %v5055 = vsel %vm1488, %v4717, %v5015
    %v5056 = vsel %vm1488, %v4723, %v5023
    %v5057 = vsel %vm1488, %v4727, %v5031
    %5062 = vrot.lane.b32.xlu0 %v5054, 82
    %v5063 = vpop.permute.xlu0 %5062
    %5064 = vrot.lane.b32.xlu0 %v5038, 82
    %v5065 = vpop.permute.xlu0 %5064
    %5066 = vrot.lane.b32.xlu0 %v5039, 82
    %v5067 = vpop.permute.xlu0 %5066
    %5068 = vrot.lane.b32.xlu0 %v5040, 82
    %v5069 = vpop.permute.xlu0 %5068
    %5070 = vrot.lane.b32.xlu0 %v5013, 82
    %v5071 = vpop.permute.xlu0 %5070
    %5072 = vrot.lane.b32.xlu0 %v5055, 82
    %v5073 = vpop.permute.xlu0 %5072
    %5074 = vrot.lane.b32.xlu0 %v5041, 82
    %v5075 = vpop.permute.xlu0 %5074
    %5076 = vrot.lane.b32.xlu0 %v5042, 82
    %v5077 = vpop.permute.xlu0 %5076
    %5078 = vrot.lane.b32.xlu0 %v5043, 82
    %v5079 = vpop.permute.xlu0 %5078
    %5080 = vrot.lane.b32.xlu0 %v5021, 82
    %v5081 = vpop.permute.xlu0 %5080
    %5082 = vrot.lane.b32.xlu0 %v5056, 82
    %v5083 = vpop.permute.xlu0 %5082
    %5084 = vrot.lane.b32.xlu0 %v5044, 82
    %v5085 = vpop.permute.xlu0 %5084
    %5086 = vrot.lane.b32.xlu0 %v5045, 82
    %v5087 = vpop.permute.xlu0 %5086
    %5088 = vrot.lane.b32.xlu0 %v5046, 82
    %v5089 = vpop.permute.xlu0 %5088
    %5090 = vrot.lane.b32.xlu0 %v5029, 82
    %v5091 = vpop.permute.xlu0 %5090
    %5092 = vrot.lane.b32.xlu0 %v5057, 82
    %v5093 = vpop.permute.xlu0 %5092
    %5094 = vrot.lane.b32.xlu0 %v5047, 82
    %v5095 = vpop.permute.xlu0 %5094
    %5096 = vrot.lane.b32.xlu0 %v5048, 82
    %v5097 = vpop.permute.xlu0 %5096
    %5098 = vrot.lane.b32.xlu0 %v5049, 82
    %v5099 = vpop.permute.xlu0 %5098
    %5100 = vrot.lane.b32.xlu0 %v5037, 82
    %v5101 = vpop.permute.xlu0 %5100
    %vm5102 = vcmask 670720
    %v5103 = vsel %vm5102, %v5063, %v5065
    %v5104 = vsel %vm5102, %v5065, %v5067
    %v5105 = vsel %vm5102, %v5067, %v5069
    %v5106 = vsel %vm5102, %v5069, %v5071
    %v5107 = vsel %vm5102, %v5073, %v5075
    %v5108 = vsel %vm5102, %v5075, %v5077
    %v5109 = vsel %vm5102, %v5077, %v5079
    %v5110 = vsel %vm5102, %v5079, %v5081
    %v5111 = vsel %vm5102, %v5083, %v5085
    %v5112 = vsel %vm5102, %v5085, %v5087
    %v5113 = vsel %vm5102, %v5087, %v5089
    %v5114 = vsel %vm5102, %v5089, %v5091
    %v5115 = vsel %vm5102, %v5093, %v5095
    %v5116 = vsel %vm5102, %v5095, %v5097
    %v5117 = vsel %vm5102, %v5097, %v5099
    %v5118 = vsel %vm5102, %v5099, %v5101
    %vm5135 = vcmask 441344
    %v5136 = vsel %vm5135, %v5054, %v5103
    %v5137 = vsel %vm5135, %v5055, %v5107
    %v5138 = vsel %vm5135, %v5056, %v5111
    %v5139 = vsel %vm5135, %v5057, %v5115
    %5152 = vrot.lane.b32.xlu0 %v4605, 127
    %v5153 = vpop.permute.xlu0 %5152
    %5154 = vrot.lane.b32.xlu0 %v4607, 127
    %v5155 = vpop.permute.xlu0 %5154
    %5156 = vrot.lane.b32.xlu0 %v4711, 127
    %v5157 = vpop.permute.xlu0 %5156
    %5158 = vrot.lane.b32.xlu0 %v5054, 127
    %v5159 = vpop.permute.xlu0 %5158
    %5160 = vrot.lane.b32.xlu0 %v4609, 127
    %v5161 = vpop.permute.xlu0 %5160
    %5162 = vrot.lane.b32.xlu0 %v4611, 127
    %v5163 = vpop.permute.xlu0 %5162
    %5164 = vrot.lane.b32.xlu0 %v4715, 127
    %v5165 = vpop.permute.xlu0 %5164
    %5166 = vrot.lane.b32.xlu0 %v5055, 127
    %v5167 = vpop.permute.xlu0 %5166
    %5168 = vrot.lane.b32.xlu0 %v4615, 127
    %v5169 = vpop.permute.xlu0 %5168
    %5170 = vrot.lane.b32.xlu0 %v4617, 127
    %v5171 = vpop.permute.xlu0 %5170
    %5172 = vrot.lane.b32.xlu0 %v4721, 127
    %v5173 = vpop.permute.xlu0 %5172
    %5174 = vrot.lane.b32.xlu0 %v5056, 127
    %v5175 = vpop.permute.xlu0 %5174
    %5176 = vrot.lane.b32.xlu0 %v4619, 127
    %v5177 = vpop.permute.xlu0 %5176
    %5178 = vrot.lane.b32.xlu0 %v4621, 127
    %v5179 = vpop.permute.xlu0 %5178
    %5180 = vrot.lane.b32.xlu0 %v4725, 127
    %v5181 = vpop.permute.xlu0 %5180
    %5182 = vrot.lane.b32.xlu0 %v5057, 127
    %v5183 = vpop.permute.xlu0 %5182
    %v5184 = vsel %vm226, %v5153, %v5155
    %v5185 = vsel %vm226, %v5155, %v5157
    %v5186 = vsel %vm226, %v5157, %v5159
    %v5187 = vsel %vm226, %v5161, %v5163
    %v5188 = vsel %vm226, %v5163, %v5165
    %v5189 = vsel %vm226, %v5165, %v5167
    %v5190 = vsel %vm226, %v5169, %v5171
    %v5191 = vsel %vm226, %v5171, %v5173
    %v5192 = vsel %vm226, %v5173, %v5175
    %v5193 = vsel %vm226, %v5177, %v5179
    %v5194 = vsel %vm226, %v5179, %v5181
    %v5195 = vsel %vm226, %v5181, %v5183
    %5212 = vrot.lane.b32.xlu0 %v5054, 81
    %v5213 = vpop.permute.xlu0 %5212
    %5214 = vrot.lane.b32.xlu0 %v5038, 81
    %v5215 = vpop.permute.xlu0 %5214
    %5216 = vrot.lane.b32.xlu0 %v5039, 81
    %v5217 = vpop.permute.xlu0 %5216
    %5218 = vrot.lane.b32.xlu0 %v5040, 81
    %v5219 = vpop.permute.xlu0 %5218
    %5220 = vrot.lane.b32.xlu0 %v5013, 81
    %v5221 = vpop.permute.xlu0 %5220
    %5222 = vrot.lane.b32.xlu0 %v5055, 81
    %v5223 = vpop.permute.xlu0 %5222
    %5224 = vrot.lane.b32.xlu0 %v5041, 81
    %v5225 = vpop.permute.xlu0 %5224
    %5226 = vrot.lane.b32.xlu0 %v5042, 81
    %v5227 = vpop.permute.xlu0 %5226
    %5228 = vrot.lane.b32.xlu0 %v5043, 81
    %v5229 = vpop.permute.xlu0 %5228
    %5230 = vrot.lane.b32.xlu0 %v5021, 81
    %v5231 = vpop.permute.xlu0 %5230
    %5232 = vrot.lane.b32.xlu0 %v5056, 81
    %v5233 = vpop.permute.xlu0 %5232
    %5234 = vrot.lane.b32.xlu0 %v5044, 81
    %v5235 = vpop.permute.xlu0 %5234
    %5236 = vrot.lane.b32.xlu0 %v5045, 81
    %v5237 = vpop.permute.xlu0 %5236
    %5238 = vrot.lane.b32.xlu0 %v5046, 81
    %v5239 = vpop.permute.xlu0 %5238
    %5240 = vrot.lane.b32.xlu0 %v5029, 81
    %v5241 = vpop.permute.xlu0 %5240
    %5242 = vrot.lane.b32.xlu0 %v5057, 81
    %v5243 = vpop.permute.xlu0 %5242
    %5244 = vrot.lane.b32.xlu0 %v5047, 81
    %v5245 = vpop.permute.xlu0 %5244
    %5246 = vrot.lane.b32.xlu0 %v5048, 81
    %v5247 = vpop.permute.xlu0 %5246
    %5248 = vrot.lane.b32.xlu0 %v5049, 81
    %v5249 = vpop.permute.xlu0 %5248
    %5250 = vrot.lane.b32.xlu0 %v5037, 81
    %v5251 = vpop.permute.xlu0 %5250
    %vm5252 = vcmask 662528
    %v5253 = vsel %vm5252, %v5213, %v5215
    %v5254 = vsel %vm5252, %v5215, %v5217
    %v5255 = vsel %vm5252, %v5217, %v5219
    %v5256 = vsel %vm5252, %v5219, %v5221
    %v5257 = vsel %vm5252, %v5223, %v5225
    %v5258 = vsel %vm5252, %v5225, %v5227
    %v5259 = vsel %vm5252, %v5227, %v5229
    %v5260 = vsel %vm5252, %v5229, %v5231
    %v5261 = vsel %vm5252, %v5233, %v5235
    %v5262 = vsel %vm5252, %v5235, %v5237
    %v5263 = vsel %vm5252, %v5237, %v5239
    %v5264 = vsel %vm5252, %v5239, %v5241
    %v5265 = vsel %vm5252, %v5243, %v5245
    %v5266 = vsel %vm5252, %v5245, %v5247
    %v5267 = vsel %vm5252, %v5247, %v5249
    %v5268 = vsel %vm5252, %v5249, %v5251
    %v5285 = vsel %vm5135, %v5159, %v5253
    %v5286 = vsel %vm5135, %v5167, %v5257
    %v5287 = vsel %vm5135, %v5175, %v5261
    %v5288 = vsel %vm5135, %v5183, %v5265
    %5289 = vrot.lane.b32.xlu0 %v4605, 126
    %v5290 = vpop.permute.xlu0 %5289
    %5291 = vrot.lane.b32.xlu0 %v4607, 126
    %v5292 = vpop.permute.xlu0 %5291
    %5293 = vrot.lane.b32.xlu0 %v4711, 126
    %v5294 = vpop.permute.xlu0 %5293
    %5295 = vrot.lane.b32.xlu0 %v5054, 126
    %v5296 = vpop.permute.xlu0 %5295
    %5297 = vrot.lane.b32.xlu0 %v4609, 126
    %v5298 = vpop.permute.xlu0 %5297
    %5299 = vrot.lane.b32.xlu0 %v4611, 126
    %v5300 = vpop.permute.xlu0 %5299
    %5301 = vrot.lane.b32.xlu0 %v4715, 126
    %v5302 = vpop.permute.xlu0 %5301
    %5303 = vrot.lane.b32.xlu0 %v5055, 126
    %v5304 = vpop.permute.xlu0 %5303
    %5305 = vrot.lane.b32.xlu0 %v4615, 126
    %v5306 = vpop.permute.xlu0 %5305
    %5307 = vrot.lane.b32.xlu0 %v4617, 126
    %v5308 = vpop.permute.xlu0 %5307
    %5309 = vrot.lane.b32.xlu0 %v4721, 126
    %v5310 = vpop.permute.xlu0 %5309
    %5311 = vrot.lane.b32.xlu0 %v5056, 126
    %v5312 = vpop.permute.xlu0 %5311
    %5313 = vrot.lane.b32.xlu0 %v4619, 126
    %v5314 = vpop.permute.xlu0 %5313
    %5315 = vrot.lane.b32.xlu0 %v4621, 126
    %v5316 = vpop.permute.xlu0 %5315
    %5317 = vrot.lane.b32.xlu0 %v4725, 126
    %v5318 = vpop.permute.xlu0 %5317
    %5319 = vrot.lane.b32.xlu0 %v5057, 126
    %v5320 = vpop.permute.xlu0 %5319
    %v5321 = vsel %vm247, %v5290, %v5292
    %v5322 = vsel %vm247, %v5292, %v5294
    %v5323 = vsel %vm247, %v5294, %v5296
    %v5324 = vsel %vm247, %v5298, %v5300
    %v5325 = vsel %vm247, %v5300, %v5302
    %v5326 = vsel %vm247, %v5302, %v5304
    %v5327 = vsel %vm247, %v5306, %v5308
    %v5328 = vsel %vm247, %v5308, %v5310
    %v5329 = vsel %vm247, %v5310, %v5312
    %v5330 = vsel %vm247, %v5314, %v5316
    %v5331 = vsel %vm247, %v5316, %v5318
    %v5332 = vsel %vm247, %v5318, %v5320
    %5349 = vrot.lane.b32.xlu0 %v5054, 80
    %v5350 = vpop.permute.xlu0 %5349
    %5351 = vrot.lane.b32.xlu0 %v5038, 80
    %v5352 = vpop.permute.xlu0 %5351
    %5353 = vrot.lane.b32.xlu0 %v5039, 80
    %v5354 = vpop.permute.xlu0 %5353
    %5355 = vrot.lane.b32.xlu0 %v5040, 80
    %v5356 = vpop.permute.xlu0 %5355
    %5357 = vrot.lane.b32.xlu0 %v5013, 80
    %v5358 = vpop.permute.xlu0 %5357
    %5359 = vrot.lane.b32.xlu0 %v5055, 80
    %v5360 = vpop.permute.xlu0 %5359
    %5361 = vrot.lane.b32.xlu0 %v5041, 80
    %v5362 = vpop.permute.xlu0 %5361
    %5363 = vrot.lane.b32.xlu0 %v5042, 80
    %v5364 = vpop.permute.xlu0 %5363
    %5365 = vrot.lane.b32.xlu0 %v5043, 80
    %v5366 = vpop.permute.xlu0 %5365
    %5367 = vrot.lane.b32.xlu0 %v5021, 80
    %v5368 = vpop.permute.xlu0 %5367
    %5369 = vrot.lane.b32.xlu0 %v5056, 80
    %v5370 = vpop.permute.xlu0 %5369
    %5371 = vrot.lane.b32.xlu0 %v5044, 80
    %v5372 = vpop.permute.xlu0 %5371
    %5373 = vrot.lane.b32.xlu0 %v5045, 80
    %v5374 = vpop.permute.xlu0 %5373
    %5375 = vrot.lane.b32.xlu0 %v5046, 80
    %v5376 = vpop.permute.xlu0 %5375
    %5377 = vrot.lane.b32.xlu0 %v5029, 80
    %v5378 = vpop.permute.xlu0 %5377
    %5379 = vrot.lane.b32.xlu0 %v5057, 80
    %v5380 = vpop.permute.xlu0 %5379
    %5381 = vrot.lane.b32.xlu0 %v5047, 80
    %v5382 = vpop.permute.xlu0 %5381
    %5383 = vrot.lane.b32.xlu0 %v5048, 80
    %v5384 = vpop.permute.xlu0 %5383
    %5385 = vrot.lane.b32.xlu0 %v5049, 80
    %v5386 = vpop.permute.xlu0 %5385
    %5387 = vrot.lane.b32.xlu0 %v5037, 80
    %v5388 = vpop.permute.xlu0 %5387
    %vm5389 = vcmask 654336
    %v5390 = vsel %vm5389, %v5350, %v5352
    %v5391 = vsel %vm5389, %v5352, %v5354
    %v5392 = vsel %vm5389, %v5354, %v5356
    %v5393 = vsel %vm5389, %v5356, %v5358
    %v5394 = vsel %vm5389, %v5360, %v5362
    %v5395 = vsel %vm5389, %v5362, %v5364
    %v5396 = vsel %vm5389, %v5364, %v5366
    %v5397 = vsel %vm5389, %v5366, %v5368
    %v5398 = vsel %vm5389, %v5370, %v5372
    %v5399 = vsel %vm5389, %v5372, %v5374
    %v5400 = vsel %vm5389, %v5374, %v5376
    %v5401 = vsel %vm5389, %v5376, %v5378
    %v5402 = vsel %vm5389, %v5380, %v5382
    %v5403 = vsel %vm5389, %v5382, %v5384
    %v5404 = vsel %vm5389, %v5384, %v5386
    %v5405 = vsel %vm5389, %v5386, %v5388
    %v5422 = vsel %vm5135, %v5296, %v5390
    %v5423 = vsel %vm5135, %v5304, %v5394
    %v5424 = vsel %vm5135, %v5312, %v5398
    %v5425 = vsel %vm5135, %v5320, %v5402
    %5426 = vrot.lane.b32.xlu0 %v4605, 106
    %v5427 = vpop.permute.xlu0 %5426
    %5428 = vrot.lane.b32.xlu0 %v4607, 106
    %v5429 = vpop.permute.xlu0 %5428
    %5430 = vrot.lane.b32.xlu0 %v4711, 106
    %v5431 = vpop.permute.xlu0 %5430
    %5432 = vrot.lane.b32.xlu0 %v5054, 106
    %v5433 = vpop.permute.xlu0 %5432
    %5434 = vrot.lane.b32.xlu0 %v4609, 106
    %v5435 = vpop.permute.xlu0 %5434
    %5436 = vrot.lane.b32.xlu0 %v4611, 106
    %v5437 = vpop.permute.xlu0 %5436
    %5438 = vrot.lane.b32.xlu0 %v4715, 106
    %v5439 = vpop.permute.xlu0 %5438
    %5440 = vrot.lane.b32.xlu0 %v5055, 106
    %v5441 = vpop.permute.xlu0 %5440
    %5442 = vrot.lane.b32.xlu0 %v4615, 106
    %v5443 = vpop.permute.xlu0 %5442
    %5444 = vrot.lane.b32.xlu0 %v4617, 106
    %v5445 = vpop.permute.xlu0 %5444
    %5446 = vrot.lane.b32.xlu0 %v4721, 106
    %v5447 = vpop.permute.xlu0 %5446
    %5448 = vrot.lane.b32.xlu0 %v5056, 106
    %v5449 = vpop.permute.xlu0 %5448
    %5450 = vrot.lane.b32.xlu0 %v4619, 106
    %v5451 = vpop.permute.xlu0 %5450
    %5452 = vrot.lane.b32.xlu0 %v4621, 106
    %v5453 = vpop.permute.xlu0 %5452
    %5454 = vrot.lane.b32.xlu0 %v4725, 106
    %v5455 = vpop.permute.xlu0 %5454
    %5456 = vrot.lane.b32.xlu0 %v5057, 106
    %v5457 = vpop.permute.xlu0 %5456
    %v5458 = vsel %vm1513, %v5427, %v5429
    %v5459 = vsel %vm1513, %v5429, %v5431
    %v5460 = vsel %vm1513, %v5431, %v5433
    %v5461 = vsel %vm1513, %v5435, %v5437
    %v5462 = vsel %vm1513, %v5437, %v5439
    %v5463 = vsel %vm1513, %v5439, %v5441
    %v5464 = vsel %vm1513, %v5443, %v5445
    %v5465 = vsel %vm1513, %v5445, %v5447
    %v5466 = vsel %vm1513, %v5447, %v5449
    %v5467 = vsel %vm1513, %v5451, %v5453
    %v5468 = vsel %vm1513, %v5453, %v5455
    %v5469 = vsel %vm1513, %v5455, %v5457
    %5486 = vrot.lane.b32.xlu0 %v5054, 60
    %v5487 = vpop.permute.xlu0 %5486
    %5488 = vrot.lane.b32.xlu0 %v5038, 60
    %v5489 = vpop.permute.xlu0 %5488
    %5490 = vrot.lane.b32.xlu0 %v5039, 60
    %v5491 = vpop.permute.xlu0 %5490
    %5492 = vrot.lane.b32.xlu0 %v5040, 60
    %v5493 = vpop.permute.xlu0 %5492
    %5494 = vrot.lane.b32.xlu0 %v5013, 60
    %v5495 = vpop.permute.xlu0 %5494
    %5496 = vrot.lane.b32.xlu0 %v5055, 60
    %v5497 = vpop.permute.xlu0 %5496
    %5498 = vrot.lane.b32.xlu0 %v5041, 60
    %v5499 = vpop.permute.xlu0 %5498
    %5500 = vrot.lane.b32.xlu0 %v5042, 60
    %v5501 = vpop.permute.xlu0 %5500
    %5502 = vrot.lane.b32.xlu0 %v5043, 60
    %v5503 = vpop.permute.xlu0 %5502
    %5504 = vrot.lane.b32.xlu0 %v5021, 60
    %v5505 = vpop.permute.xlu0 %5504
    %5506 = vrot.lane.b32.xlu0 %v5056, 60
    %v5507 = vpop.permute.xlu0 %5506
    %5508 = vrot.lane.b32.xlu0 %v5044, 60
    %v5509 = vpop.permute.xlu0 %5508
    %5510 = vrot.lane.b32.xlu0 %v5045, 60
    %v5511 = vpop.permute.xlu0 %5510
    %5512 = vrot.lane.b32.xlu0 %v5046, 60
    %v5513 = vpop.permute.xlu0 %5512
    %5514 = vrot.lane.b32.xlu0 %v5029, 60
    %v5515 = vpop.permute.xlu0 %5514
    %5516 = vrot.lane.b32.xlu0 %v5057, 60
    %v5517 = vpop.permute.xlu0 %5516
    %5518 = vrot.lane.b32.xlu0 %v5047, 60
    %v5519 = vpop.permute.xlu0 %5518
    %5520 = vrot.lane.b32.xlu0 %v5048, 60
    %v5521 = vpop.permute.xlu0 %5520
    %5522 = vrot.lane.b32.xlu0 %v5049, 60
    %v5523 = vpop.permute.xlu0 %5522
    %5524 = vrot.lane.b32.xlu0 %v5037, 60
    %v5525 = vpop.permute.xlu0 %5524
    %vm5526 = vcmask 490496
    %v5527 = vsel %vm5526, %v5487, %v5489
    %v5528 = vsel %vm5526, %v5489, %v5491
    %v5529 = vsel %vm5526, %v5491, %v5493
    %v5530 = vsel %vm5526, %v5493, %v5495
    %v5531 = vsel %vm5526, %v5497, %v5499
    %v5532 = vsel %vm5526, %v5499, %v5501
    %v5533 = vsel %vm5526, %v5501, %v5503
    %v5534 = vsel %vm5526, %v5503, %v5505
    %v5535 = vsel %vm5526, %v5507, %v5509
    %v5536 = vsel %vm5526, %v5509, %v5511
    %v5537 = vsel %vm5526, %v5511, %v5513
    %v5538 = vsel %vm5526, %v5513, %v5515
    %v5539 = vsel %vm5526, %v5517, %v5519
    %v5540 = vsel %vm5526, %v5519, %v5521
    %v5541 = vsel %vm5526, %v5521, %v5523
    %v5542 = vsel %vm5526, %v5523, %v5525
    %v5559 = vsel %vm5135, %v5433, %v5527
    %v5560 = vsel %vm5135, %v5441, %v5531
    %v5561 = vsel %vm5135, %v5449, %v5535
    %v5562 = vsel %vm5135, %v5457, %v5539
    %5563 = vrot.lane.b32.xlu0 %v4605, 105
    %v5564 = vpop.permute.xlu0 %5563
    %5565 = vrot.lane.b32.xlu0 %v4607, 105
    %v5566 = vpop.permute.xlu0 %5565
    %5567 = vrot.lane.b32.xlu0 %v4711, 105
    %v5568 = vpop.permute.xlu0 %5567
    %5569 = vrot.lane.b32.xlu0 %v5054, 105
    %v5570 = vpop.permute.xlu0 %5569
    %5571 = vrot.lane.b32.xlu0 %v4609, 105
    %v5572 = vpop.permute.xlu0 %5571
    %5573 = vrot.lane.b32.xlu0 %v4611, 105
    %v5574 = vpop.permute.xlu0 %5573
    %5575 = vrot.lane.b32.xlu0 %v4715, 105
    %v5576 = vpop.permute.xlu0 %5575
    %5577 = vrot.lane.b32.xlu0 %v5055, 105
    %v5578 = vpop.permute.xlu0 %5577
    %5579 = vrot.lane.b32.xlu0 %v4615, 105
    %v5580 = vpop.permute.xlu0 %5579
    %5581 = vrot.lane.b32.xlu0 %v4617, 105
    %v5582 = vpop.permute.xlu0 %5581
    %5583 = vrot.lane.b32.xlu0 %v4721, 105
    %v5584 = vpop.permute.xlu0 %5583
    %5585 = vrot.lane.b32.xlu0 %v5056, 105
    %v5586 = vpop.permute.xlu0 %5585
    %5587 = vrot.lane.b32.xlu0 %v4619, 105
    %v5588 = vpop.permute.xlu0 %5587
    %5589 = vrot.lane.b32.xlu0 %v4621, 105
    %v5590 = vpop.permute.xlu0 %5589
    %5591 = vrot.lane.b32.xlu0 %v4725, 105
    %v5592 = vpop.permute.xlu0 %5591
    %5593 = vrot.lane.b32.xlu0 %v5057, 105
    %v5594 = vpop.permute.xlu0 %5593
    %v5595 = vsel %vm1559, %v5564, %v5566
    %v5596 = vsel %vm1559, %v5566, %v5568
    %v5597 = vsel %vm1559, %v5568, %v5570
    %v5598 = vsel %vm1559, %v5572, %v5574
    %v5599 = vsel %vm1559, %v5574, %v5576
    %v5600 = vsel %vm1559, %v5576, %v5578
    %v5601 = vsel %vm1559, %v5580, %v5582
    %v5602 = vsel %vm1559, %v5582, %v5584
    %v5603 = vsel %vm1559, %v5584, %v5586
    %v5604 = vsel %vm1559, %v5588, %v5590
    %v5605 = vsel %vm1559, %v5590, %v5592
    %v5606 = vsel %vm1559, %v5592, %v5594
    %5623 = vrot.lane.b32.xlu0 %v5054, 59
    %v5624 = vpop.permute.xlu0 %5623
    %5625 = vrot.lane.b32.xlu0 %v5038, 59
    %v5626 = vpop.permute.xlu0 %5625
    %5627 = vrot.lane.b32.xlu0 %v5039, 59
    %v5628 = vpop.permute.xlu0 %5627
    %5629 = vrot.lane.b32.xlu0 %v5040, 59
    %v5630 = vpop.permute.xlu0 %5629
    %5631 = vrot.lane.b32.xlu0 %v5013, 59
    %v5632 = vpop.permute.xlu0 %5631
    %5633 = vrot.lane.b32.xlu0 %v5055, 59
    %v5634 = vpop.permute.xlu0 %5633
    %5635 = vrot.lane.b32.xlu0 %v5041, 59
    %v5636 = vpop.permute.xlu0 %5635
    %5637 = vrot.lane.b32.xlu0 %v5042, 59
    %v5638 = vpop.permute.xlu0 %5637
    %5639 = vrot.lane.b32.xlu0 %v5043, 59
    %v5640 = vpop.permute.xlu0 %5639
    %5641 = vrot.lane.b32.xlu0 %v5021, 59
    %v5642 = vpop.permute.xlu0 %5641
    %5643 = vrot.lane.b32.xlu0 %v5056, 59
    %v5644 = vpop.permute.xlu0 %5643
    %5645 = vrot.lane.b32.xlu0 %v5044, 59
    %v5646 = vpop.permute.xlu0 %5645
    %5647 = vrot.lane.b32.xlu0 %v5045, 59
    %v5648 = vpop.permute.xlu0 %5647
    %5649 = vrot.lane.b32.xlu0 %v5046, 59
    %v5650 = vpop.permute.xlu0 %5649
    %5651 = vrot.lane.b32.xlu0 %v5029, 59
    %v5652 = vpop.permute.xlu0 %5651
    %5653 = vrot.lane.b32.xlu0 %v5057, 59
    %v5654 = vpop.permute.xlu0 %5653
    %5655 = vrot.lane.b32.xlu0 %v5047, 59
    %v5656 = vpop.permute.xlu0 %5655
    %5657 = vrot.lane.b32.xlu0 %v5048, 59
    %v5658 = vpop.permute.xlu0 %5657
    %5659 = vrot.lane.b32.xlu0 %v5049, 59
    %v5660 = vpop.permute.xlu0 %5659
    %5661 = vrot.lane.b32.xlu0 %v5037, 59
    %v5662 = vpop.permute.xlu0 %5661
    %vm5663 = vcmask 482304
    %v5664 = vsel %vm5663, %v5624, %v5626
    %v5665 = vsel %vm5663, %v5626, %v5628
    %v5666 = vsel %vm5663, %v5628, %v5630
    %v5667 = vsel %vm5663, %v5630, %v5632
    %v5668 = vsel %vm5663, %v5634, %v5636
    %v5669 = vsel %vm5663, %v5636, %v5638
    %v5670 = vsel %vm5663, %v5638, %v5640
    %v5671 = vsel %vm5663, %v5640, %v5642
    %v5672 = vsel %vm5663, %v5644, %v5646
    %v5673 = vsel %vm5663, %v5646, %v5648
    %v5674 = vsel %vm5663, %v5648, %v5650
    %v5675 = vsel %vm5663, %v5650, %v5652
    %v5676 = vsel %vm5663, %v5654, %v5656
    %v5677 = vsel %vm5663, %v5656, %v5658
    %v5678 = vsel %vm5663, %v5658, %v5660
    %v5679 = vsel %vm5663, %v5660, %v5662
    %v5696 = vsel %vm5135, %v5570, %v5664
    %v5697 = vsel %vm5135, %v5578, %v5668
    %v5698 = vsel %vm5135, %v5586, %v5672
    %v5699 = vsel %vm5135, %v5594, %v5676
    %5700 = vrot.lane.b32.xlu0 %v4605, 104
    %v5701 = vpop.permute.xlu0 %5700
    %5702 = vrot.lane.b32.xlu0 %v4607, 104
    %v5703 = vpop.permute.xlu0 %5702
    %5704 = vrot.lane.b32.xlu0 %v4711, 104
    %v5705 = vpop.permute.xlu0 %5704
    %5706 = vrot.lane.b32.xlu0 %v5054, 104
    %v5707 = vpop.permute.xlu0 %5706
    %5708 = vrot.lane.b32.xlu0 %v4609, 104
    %v5709 = vpop.permute.xlu0 %5708
    %5710 = vrot.lane.b32.xlu0 %v4611, 104
    %v5711 = vpop.permute.xlu0 %5710
    %5712 = vrot.lane.b32.xlu0 %v4715, 104
    %v5713 = vpop.permute.xlu0 %5712
    %5714 = vrot.lane.b32.xlu0 %v5055, 104
    %v5715 = vpop.permute.xlu0 %5714
    %5716 = vrot.lane.b32.xlu0 %v4615, 104
    %v5717 = vpop.permute.xlu0 %5716
    %5718 = vrot.lane.b32.xlu0 %v4617, 104
    %v5719 = vpop.permute.xlu0 %5718
    %5720 = vrot.lane.b32.xlu0 %v4721, 104
    %v5721 = vpop.permute.xlu0 %5720
    %5722 = vrot.lane.b32.xlu0 %v5056, 104
    %v5723 = vpop.permute.xlu0 %5722
    %5724 = vrot.lane.b32.xlu0 %v4619, 104
    %v5725 = vpop.permute.xlu0 %5724
    %5726 = vrot.lane.b32.xlu0 %v4621, 104
    %v5727 = vpop.permute.xlu0 %5726
    %5728 = vrot.lane.b32.xlu0 %v4725, 104
    %v5729 = vpop.permute.xlu0 %5728
    %5730 = vrot.lane.b32.xlu0 %v5057, 104
    %v5731 = vpop.permute.xlu0 %5730
    %v5732 = vsel %vm1604, %v5701, %v5703
    %v5733 = vsel %vm1604, %v5703, %v5705
    %v5734 = vsel %vm1604, %v5705, %v5707
    %v5735 = vsel %vm1604, %v5709, %v5711
    %v5736 = vsel %vm1604, %v5711, %v5713
    %v5737 = vsel %vm1604, %v5713, %v5715
    %v5738 = vsel %vm1604, %v5717, %v5719
    %v5739 = vsel %vm1604, %v5719, %v5721
    %v5740 = vsel %vm1604, %v5721, %v5723
    %v5741 = vsel %vm1604, %v5725, %v5727
    %v5742 = vsel %vm1604, %v5727, %v5729
    %v5743 = vsel %vm1604, %v5729, %v5731
    %5760 = vrot.lane.b32.xlu0 %v5054, 58
    %v5761 = vpop.permute.xlu0 %5760
    %5762 = vrot.lane.b32.xlu0 %v5038, 58
    %v5763 = vpop.permute.xlu0 %5762
    %5764 = vrot.lane.b32.xlu0 %v5039, 58
    %v5765 = vpop.permute.xlu0 %5764
    %5766 = vrot.lane.b32.xlu0 %v5040, 58
    %v5767 = vpop.permute.xlu0 %5766
    %5768 = vrot.lane.b32.xlu0 %v5013, 58
    %v5769 = vpop.permute.xlu0 %5768
    %5770 = vrot.lane.b32.xlu0 %v5055, 58
    %v5771 = vpop.permute.xlu0 %5770
    %5772 = vrot.lane.b32.xlu0 %v5041, 58
    %v5773 = vpop.permute.xlu0 %5772
    %5774 = vrot.lane.b32.xlu0 %v5042, 58
    %v5775 = vpop.permute.xlu0 %5774
    %5776 = vrot.lane.b32.xlu0 %v5043, 58
    %v5777 = vpop.permute.xlu0 %5776
    %5778 = vrot.lane.b32.xlu0 %v5021, 58
    %v5779 = vpop.permute.xlu0 %5778
    %5780 = vrot.lane.b32.xlu0 %v5056, 58
    %v5781 = vpop.permute.xlu0 %5780
    %5782 = vrot.lane.b32.xlu0 %v5044, 58
    %v5783 = vpop.permute.xlu0 %5782
    %5784 = vrot.lane.b32.xlu0 %v5045, 58
    %v5785 = vpop.permute.xlu0 %5784
    %5786 = vrot.lane.b32.xlu0 %v5046, 58
    %v5787 = vpop.permute.xlu0 %5786
    %5788 = vrot.lane.b32.xlu0 %v5029, 58
    %v5789 = vpop.permute.xlu0 %5788
    %5790 = vrot.lane.b32.xlu0 %v5057, 58
    %v5791 = vpop.permute.xlu0 %5790
    %5792 = vrot.lane.b32.xlu0 %v5047, 58
    %v5793 = vpop.permute.xlu0 %5792
    %5794 = vrot.lane.b32.xlu0 %v5048, 58
    %v5795 = vpop.permute.xlu0 %5794
    %5796 = vrot.lane.b32.xlu0 %v5049, 58
    %v5797 = vpop.permute.xlu0 %5796
    %5798 = vrot.lane.b32.xlu0 %v5037, 58
    %v5799 = vpop.permute.xlu0 %5798
    %vm5800 = vcmask 474112
    %v5801 = vsel %vm5800, %v5761, %v5763
    %v5802 = vsel %vm5800, %v5763, %v5765
    %v5803 = vsel %vm5800, %v5765, %v5767
    %v5804 = vsel %vm5800, %v5767, %v5769
    %v5805 = vsel %vm5800, %v5771, %v5773
    %v5806 = vsel %vm5800, %v5773, %v5775
    %v5807 = vsel %vm5800, %v5775, %v5777
    %v5808 = vsel %vm5800, %v5777, %v5779
    %v5809 = vsel %vm5800, %v5781, %v5783
    %v5810 = vsel %vm5800, %v5783, %v5785
    %v5811 = vsel %vm5800, %v5785, %v5787
    %v5812 = vsel %vm5800, %v5787, %v5789
    %v5813 = vsel %vm5800, %v5791, %v5793
    %v5814 = vsel %vm5800, %v5793, %v5795
    %v5815 = vsel %vm5800, %v5795, %v5797
    %v5816 = vsel %vm5800, %v5797, %v5799
    %v5833 = vsel %vm5135, %v5707, %v5801
    %v5834 = vsel %vm5135, %v5715, %v5805
    %v5835 = vsel %vm5135, %v5723, %v5809
    %v5836 = vsel %vm5135, %v5731, %v5813
    %5837 = vrot.lane.b32.xlu0 %v4605, 84
    %v5838 = vpop.permute.xlu0 %5837
    %5839 = vrot.lane.b32.xlu0 %v4607, 84
    %v5840 = vpop.permute.xlu0 %5839
    %5841 = vrot.lane.b32.xlu0 %v4711, 84
    %v5842 = vpop.permute.xlu0 %5841
    %5843 = vrot.lane.b32.xlu0 %v5054, 84
    %v5844 = vpop.permute.xlu0 %5843
    %5845 = vrot.lane.b32.xlu0 %v4609, 84
    %v5846 = vpop.permute.xlu0 %5845
    %5847 = vrot.lane.b32.xlu0 %v4611, 84
    %v5848 = vpop.permute.xlu0 %5847
    %5849 = vrot.lane.b32.xlu0 %v4715, 84
    %v5850 = vpop.permute.xlu0 %5849
    %5851 = vrot.lane.b32.xlu0 %v5055, 84
    %v5852 = vpop.permute.xlu0 %5851
    %5853 = vrot.lane.b32.xlu0 %v4615, 84
    %v5854 = vpop.permute.xlu0 %5853
    %5855 = vrot.lane.b32.xlu0 %v4617, 84
    %v5856 = vpop.permute.xlu0 %5855
    %5857 = vrot.lane.b32.xlu0 %v4721, 84
    %v5858 = vpop.permute.xlu0 %5857
    %5859 = vrot.lane.b32.xlu0 %v5056, 84
    %v5860 = vpop.permute.xlu0 %5859
    %5861 = vrot.lane.b32.xlu0 %v4619, 84
    %v5862 = vpop.permute.xlu0 %5861
    %5863 = vrot.lane.b32.xlu0 %v4621, 84
    %v5864 = vpop.permute.xlu0 %5863
    %5865 = vrot.lane.b32.xlu0 %v4725, 84
    %v5866 = vpop.permute.xlu0 %5865
    %5867 = vrot.lane.b32.xlu0 %v5057, 84
    %v5868 = vpop.permute.xlu0 %5867
    %v5869 = vsel %vm1866, %v5838, %v5840
    %v5870 = vsel %vm1866, %v5840, %v5842
    %v5871 = vsel %vm1866, %v5842, %v5844
    %v5872 = vsel %vm1866, %v5846, %v5848
    %v5873 = vsel %vm1866, %v5848, %v5850
    %v5874 = vsel %vm1866, %v5850, %v5852
    %v5875 = vsel %vm1866, %v5854, %v5856
    %v5876 = vsel %vm1866, %v5856, %v5858
    %v5877 = vsel %vm1866, %v5858, %v5860
    %v5878 = vsel %vm1866, %v5862, %v5864
    %v5879 = vsel %vm1866, %v5864, %v5866
    %v5880 = vsel %vm1866, %v5866, %v5868
    %5897 = vrot.lane.b32.xlu0 %v5038, 38
    %v5898 = vpop.permute.xlu0 %5897
    %5899 = vrot.lane.b32.xlu0 %v5039, 38
    %v5900 = vpop.permute.xlu0 %5899
    %5901 = vrot.lane.b32.xlu0 %v5040, 38
    %v5902 = vpop.permute.xlu0 %5901
    %5903 = vrot.lane.b32.xlu0 %v5013, 38
    %v5904 = vpop.permute.xlu0 %5903
    %5905 = vrot.lane.b32.xlu0 %v5041, 38
    %v5906 = vpop.permute.xlu0 %5905
    %5907 = vrot.lane.b32.xlu0 %v5042, 38
    %v5908 = vpop.permute.xlu0 %5907
    %5909 = vrot.lane.b32.xlu0 %v5043, 38
    %v5910 = vpop.permute.xlu0 %5909
    %5911 = vrot.lane.b32.xlu0 %v5021, 38
    %v5912 = vpop.permute.xlu0 %5911
    %5913 = vrot.lane.b32.xlu0 %v5044, 38
    %v5914 = vpop.permute.xlu0 %5913
    %5915 = vrot.lane.b32.xlu0 %v5045, 38
    %v5916 = vpop.permute.xlu0 %5915
    %5917 = vrot.lane.b32.xlu0 %v5046, 38
    %v5918 = vpop.permute.xlu0 %5917
    %5919 = vrot.lane.b32.xlu0 %v5029, 38
    %v5920 = vpop.permute.xlu0 %5919
    %5921 = vrot.lane.b32.xlu0 %v5047, 38
    %v5922 = vpop.permute.xlu0 %5921
    %5923 = vrot.lane.b32.xlu0 %v5048, 38
    %v5924 = vpop.permute.xlu0 %5923
    %5925 = vrot.lane.b32.xlu0 %v5049, 38
    %v5926 = vpop.permute.xlu0 %5925
    %5927 = vrot.lane.b32.xlu0 %v5037, 38
    %v5928 = vpop.permute.xlu0 %5927
    %vm5929 = vcmask 310272
    %v5930 = vsel %vm5929, %v5898, %v5900
    %v5931 = vsel %vm5929, %v5900, %v5902
    %v5932 = vsel %vm5929, %v5902, %v5904
    %v5933 = vsel %vm5929, %v5906, %v5908
    %v5934 = vsel %vm5929, %v5908, %v5910
    %v5935 = vsel %vm5929, %v5910, %v5912
    %v5936 = vsel %vm5929, %v5914, %v5916
    %v5937 = vsel %vm5929, %v5916, %v5918
    %v5938 = vsel %vm5929, %v5918, %v5920
    %v5939 = vsel %vm5929, %v5922, %v5924
    %v5940 = vsel %vm5929, %v5924, %v5926
    %v5941 = vsel %vm5929, %v5926, %v5928
    %v5958 = vsel %vm5135, %v5844, %v5898
    %v5959 = vsel %vm5135, %v5852, %v5906
    %v5960 = vsel %vm5135, %v5860, %v5914
    %v5961 = vsel %vm5135, %v5868, %v5922
    %5962 = vrot.lane.b32.xlu0 %v4605, 83
    %v5963 = vpop.permute.xlu0 %5962
    %5964 = vrot.lane.b32.xlu0 %v4607, 83
    %v5965 = vpop.permute.xlu0 %5964
    %5966 = vrot.lane.b32.xlu0 %v4711, 83
    %v5967 = vpop.permute.xlu0 %5966
    %5968 = vrot.lane.b32.xlu0 %v5054, 83
    %v5969 = vpop.permute.xlu0 %5968
    %5970 = vrot.lane.b32.xlu0 %v4609, 83
    %v5971 = vpop.permute.xlu0 %5970
    %5972 = vrot.lane.b32.xlu0 %v4611, 83
    %v5973 = vpop.permute.xlu0 %5972
    %5974 = vrot.lane.b32.xlu0 %v4715, 83
    %v5975 = vpop.permute.xlu0 %5974
    %5976 = vrot.lane.b32.xlu0 %v5055, 83
    %v5977 = vpop.permute.xlu0 %5976
    %5978 = vrot.lane.b32.xlu0 %v4615, 83
    %v5979 = vpop.permute.xlu0 %5978
    %5980 = vrot.lane.b32.xlu0 %v4617, 83
    %v5981 = vpop.permute.xlu0 %5980
    %5982 = vrot.lane.b32.xlu0 %v4721, 83
    %v5983 = vpop.permute.xlu0 %5982
    %5984 = vrot.lane.b32.xlu0 %v5056, 83
    %v5985 = vpop.permute.xlu0 %5984
    %5986 = vrot.lane.b32.xlu0 %v4619, 83
    %v5987 = vpop.permute.xlu0 %5986
    %5988 = vrot.lane.b32.xlu0 %v4621, 83
    %v5989 = vpop.permute.xlu0 %5988
    %5990 = vrot.lane.b32.xlu0 %v4725, 83
    %v5991 = vpop.permute.xlu0 %5990
    %5992 = vrot.lane.b32.xlu0 %v5057, 83
    %v5993 = vpop.permute.xlu0 %5992
    %vm5994 = vcmask 678912
    %v5995 = vsel %vm5994, %v5963, %v5965
    %v5996 = vsel %vm5994, %v5965, %v5967
    %v5997 = vsel %vm5994, %v5967, %v5969
    %v5998 = vsel %vm5994, %v5971, %v5973
    %v5999 = vsel %vm5994, %v5973, %v5975
    %v6000 = vsel %vm5994, %v5975, %v5977
    %v6001 = vsel %vm5994, %v5979, %v5981
    %v6002 = vsel %vm5994, %v5981, %v5983
    %v6003 = vsel %vm5994, %v5983, %v5985
    %v6004 = vsel %vm5994, %v5987, %v5989
    %v6005 = vsel %vm5994, %v5989, %v5991
    %v6006 = vsel %vm5994, %v5991, %v5993
    %6023 = vrot.lane.b32.xlu0 %v5038, 37
    %v6024 = vpop.permute.xlu0 %6023
    %6025 = vrot.lane.b32.xlu0 %v5039, 37
    %v6026 = vpop.permute.xlu0 %6025
    %6027 = vrot.lane.b32.xlu0 %v5040, 37
    %v6028 = vpop.permute.xlu0 %6027
    %6029 = vrot.lane.b32.xlu0 %v5013, 37
    %v6030 = vpop.permute.xlu0 %6029
    %6031 = vrot.lane.b32.xlu0 %v5041, 37
    %v6032 = vpop.permute.xlu0 %6031
    %6033 = vrot.lane.b32.xlu0 %v5042, 37
    %v6034 = vpop.permute.xlu0 %6033
    %6035 = vrot.lane.b32.xlu0 %v5043, 37
    %v6036 = vpop.permute.xlu0 %6035
    %6037 = vrot.lane.b32.xlu0 %v5021, 37
    %v6038 = vpop.permute.xlu0 %6037
    %6039 = vrot.lane.b32.xlu0 %v5044, 37
    %v6040 = vpop.permute.xlu0 %6039
    %6041 = vrot.lane.b32.xlu0 %v5045, 37
    %v6042 = vpop.permute.xlu0 %6041
    %6043 = vrot.lane.b32.xlu0 %v5046, 37
    %v6044 = vpop.permute.xlu0 %6043
    %6045 = vrot.lane.b32.xlu0 %v5029, 37
    %v6046 = vpop.permute.xlu0 %6045
    %6047 = vrot.lane.b32.xlu0 %v5047, 37
    %v6048 = vpop.permute.xlu0 %6047
    %6049 = vrot.lane.b32.xlu0 %v5048, 37
    %v6050 = vpop.permute.xlu0 %6049
    %6051 = vrot.lane.b32.xlu0 %v5049, 37
    %v6052 = vpop.permute.xlu0 %6051
    %6053 = vrot.lane.b32.xlu0 %v5037, 37
    %v6054 = vpop.permute.xlu0 %6053
    %vm6055 = vcmask 302080
    %v6056 = vsel %vm6055, %v6024, %v6026
    %v6057 = vsel %vm6055, %v6026, %v6028
    %v6058 = vsel %vm6055, %v6028, %v6030
    %v6059 = vsel %vm6055, %v6032, %v6034
    %v6060 = vsel %vm6055, %v6034, %v6036
    %v6061 = vsel %vm6055, %v6036, %v6038
    %v6062 = vsel %vm6055, %v6040, %v6042
    %v6063 = vsel %vm6055, %v6042, %v6044
    %v6064 = vsel %vm6055, %v6044, %v6046
    %v6065 = vsel %vm6055, %v6048, %v6050
    %v6066 = vsel %vm6055, %v6050, %v6052
    %v6067 = vsel %vm6055, %v6052, %v6054
    %v6084 = vsel %vm5135, %v5969, %v6024
    %v6085 = vsel %vm5135, %v5977, %v6032
    %v6086 = vsel %vm5135, %v5985, %v6040
    %v6087 = vsel %vm5135, %v5993, %v6048
    %6088 = vrot.lane.b32.xlu0 %v4605, 82
    %v6089 = vpop.permute.xlu0 %6088
    %6090 = vrot.lane.b32.xlu0 %v4607, 82
    %v6091 = vpop.permute.xlu0 %6090
    %6092 = vrot.lane.b32.xlu0 %v4711, 82
    %v6093 = vpop.permute.xlu0 %6092
    %6094 = vrot.lane.b32.xlu0 %v4609, 82
    %v6095 = vpop.permute.xlu0 %6094
    %6096 = vrot.lane.b32.xlu0 %v4611, 82
    %v6097 = vpop.permute.xlu0 %6096
    %6098 = vrot.lane.b32.xlu0 %v4715, 82
    %v6099 = vpop.permute.xlu0 %6098
    %6100 = vrot.lane.b32.xlu0 %v4615, 82
    %v6101 = vpop.permute.xlu0 %6100
    %6102 = vrot.lane.b32.xlu0 %v4617, 82
    %v6103 = vpop.permute.xlu0 %6102
    %6104 = vrot.lane.b32.xlu0 %v4721, 82
    %v6105 = vpop.permute.xlu0 %6104
    %6106 = vrot.lane.b32.xlu0 %v4619, 82
    %v6107 = vpop.permute.xlu0 %6106
    %6108 = vrot.lane.b32.xlu0 %v4621, 82
    %v6109 = vpop.permute.xlu0 %6108
    %6110 = vrot.lane.b32.xlu0 %v4725, 82
    %v6111 = vpop.permute.xlu0 %6110
    %v6112 = vsel %vm5102, %v6089, %v6091
    %v6113 = vsel %vm5102, %v6091, %v6093
    %v6114 = vsel %vm5102, %v6093, %v5063
    %v6115 = vsel %vm5102, %v6095, %v6097
    %v6116 = vsel %vm5102, %v6097, %v6099
    %v6117 = vsel %vm5102, %v6099, %v5073
    %v6118 = vsel %vm5102, %v6101, %v6103
    %v6119 = vsel %vm5102, %v6103, %v6105
    %v6120 = vsel %vm5102, %v6105, %v5083
    %v6121 = vsel %vm5102, %v6107, %v6109
    %v6122 = vsel %vm5102, %v6109, %v6111
    %v6123 = vsel %vm5102, %v6111, %v5093
    %6140 = vrot.lane.b32.xlu0 %v5038, 36
    %v6141 = vpop.permute.xlu0 %6140
    %6142 = vrot.lane.b32.xlu0 %v5039, 36
    %v6143 = vpop.permute.xlu0 %6142
    %6144 = vrot.lane.b32.xlu0 %v5040, 36
    %v6145 = vpop.permute.xlu0 %6144
    %6146 = vrot.lane.b32.xlu0 %v5013, 36
    %v6147 = vpop.permute.xlu0 %6146
    %6148 = vrot.lane.b32.xlu0 %v5041, 36
    %v6149 = vpop.permute.xlu0 %6148
    %6150 = vrot.lane.b32.xlu0 %v5042, 36
    %v6151 = vpop.permute.xlu0 %6150
    %6152 = vrot.lane.b32.xlu0 %v5043, 36
    %v6153 = vpop.permute.xlu0 %6152
    %6154 = vrot.lane.b32.xlu0 %v5021, 36
    %v6155 = vpop.permute.xlu0 %6154
    %6156 = vrot.lane.b32.xlu0 %v5044, 36
    %v6157 = vpop.permute.xlu0 %6156
    %6158 = vrot.lane.b32.xlu0 %v5045, 36
    %v6159 = vpop.permute.xlu0 %6158
    %6160 = vrot.lane.b32.xlu0 %v5046, 36
    %v6161 = vpop.permute.xlu0 %6160
    %6162 = vrot.lane.b32.xlu0 %v5029, 36
    %v6163 = vpop.permute.xlu0 %6162
    %6164 = vrot.lane.b32.xlu0 %v5047, 36
    %v6165 = vpop.permute.xlu0 %6164
    %6166 = vrot.lane.b32.xlu0 %v5048, 36
    %v6167 = vpop.permute.xlu0 %6166
    %6168 = vrot.lane.b32.xlu0 %v5049, 36
    %v6169 = vpop.permute.xlu0 %6168
    %6170 = vrot.lane.b32.xlu0 %v5037, 36
    %v6171 = vpop.permute.xlu0 %6170
    %v6172 = vsel %vm2265, %v6141, %v6143
    %v6173 = vsel %vm2265, %v6143, %v6145
    %v6174 = vsel %vm2265, %v6145, %v6147
    %v6175 = vsel %vm2265, %v6149, %v6151
    %v6176 = vsel %vm2265, %v6151, %v6153
    %v6177 = vsel %vm2265, %v6153, %v6155
    %v6178 = vsel %vm2265, %v6157, %v6159
    %v6179 = vsel %vm2265, %v6159, %v6161
    %v6180 = vsel %vm2265, %v6161, %v6163
    %v6181 = vsel %vm2265, %v6165, %v6167
    %v6182 = vsel %vm2265, %v6167, %v6169
    %v6183 = vsel %vm2265, %v6169, %v6171
    %v6200 = vsel %vm5135, %v5063, %v6141
    %v6201 = vsel %vm5135, %v5073, %v6149
    %v6202 = vsel %vm5135, %v5083, %v6157
    %v6203 = vsel %vm5135, %v5093, %v6165
    %v6204 = vpack.c.bf16 %v4609, %v4605
    %v6205 = vpack.c.bf16 %v4611, %v4607
    %v6206 = vpack.c.bf16 %v4715, %v4711
    %v6207 = vpack.c.bf16 %v5137, %v5136
    %v6208 = vpack.c.bf16 %v5108, %v5104
    %v6209 = vpack.c.bf16 %v5109, %v5105
    %v6210 = vpack.c.bf16 %v5110, %v5106
    %v6211 = vpack.c.bf16 %v4619, %v4615
    %v6212 = vpack.c.bf16 %v4621, %v4617
    %v6213 = vpack.c.bf16 %v4725, %v4721
    %v6214 = vpack.c.bf16 %v5139, %v5138
    %v6215 = vpack.c.bf16 %v5116, %v5112
    %v6216 = vpack.c.bf16 %v5117, %v5113
    %v6217 = vpack.c.bf16 %v5118, %v5114
    %v6218 = vpack.c.bf16 %v5187, %v5184
    %v6219 = vpack.c.bf16 %v5188, %v5185
    %v6220 = vpack.c.bf16 %v5189, %v5186
    %v6221 = vpack.c.bf16 %v5286, %v5285
    %v6222 = vpack.c.bf16 %v5258, %v5254
    %v6223 = vpack.c.bf16 %v5259, %v5255
    %v6224 = vpack.c.bf16 %v5260, %v5256
    %v6225 = vpack.c.bf16 %v5193, %v5190
    %v6226 = vpack.c.bf16 %v5194, %v5191
    %v6227 = vpack.c.bf16 %v5195, %v5192
    %v6228 = vpack.c.bf16 %v5288, %v5287
    %v6229 = vpack.c.bf16 %v5266, %v5262
    %v6230 = vpack.c.bf16 %v5267, %v5263
    %v6231 = vpack.c.bf16 %v5268, %v5264
    %v6232 = vpack.c.bf16 %v5324, %v5321
    %v6233 = vpack.c.bf16 %v5325, %v5322
    %v6234 = vpack.c.bf16 %v5326, %v5323
    %v6235 = vpack.c.bf16 %v5423, %v5422
    %v6236 = vpack.c.bf16 %v5395, %v5391
    %v6237 = vpack.c.bf16 %v5396, %v5392
    %v6238 = vpack.c.bf16 %v5397, %v5393
    %v6239 = vpack.c.bf16 %v5330, %v5327
    %v6240 = vpack.c.bf16 %v5331, %v5328
    %v6241 = vpack.c.bf16 %v5332, %v5329
    %v6242 = vpack.c.bf16 %v5425, %v5424
    %v6243 = vpack.c.bf16 %v5403, %v5399
    %v6244 = vpack.c.bf16 %v5404, %v5400
    %v6245 = vpack.c.bf16 %v5405, %v5401
    %v6246 = vpack.c.bf16 %v5461, %v5458
    %v6247 = vpack.c.bf16 %v5462, %v5459
    %v6248 = vpack.c.bf16 %v5463, %v5460
    %v6249 = vpack.c.bf16 %v5560, %v5559
    %v6250 = vpack.c.bf16 %v5532, %v5528
    %v6251 = vpack.c.bf16 %v5533, %v5529
    %v6252 = vpack.c.bf16 %v5534, %v5530
    %v6253 = vpack.c.bf16 %v5467, %v5464
    %v6254 = vpack.c.bf16 %v5468, %v5465
    %v6255 = vpack.c.bf16 %v5469, %v5466
    %v6256 = vpack.c.bf16 %v5562, %v5561
    %v6257 = vpack.c.bf16 %v5540, %v5536
    %v6258 = vpack.c.bf16 %v5541, %v5537
    %v6259 = vpack.c.bf16 %v5542, %v5538
    %v6260 = vpack.c.bf16 %v5598, %v5595
    %v6261 = vpack.c.bf16 %v5599, %v5596
    %v6262 = vpack.c.bf16 %v5600, %v5597
    %v6263 = vpack.c.bf16 %v5697, %v5696
    %v6264 = vpack.c.bf16 %v5669, %v5665
    %v6265 = vpack.c.bf16 %v5670, %v5666
    %v6266 = vpack.c.bf16 %v5671, %v5667
    %v6267 = vpack.c.bf16 %v5604, %v5601
    %v6268 = vpack.c.bf16 %v5605, %v5602
    %v6269 = vpack.c.bf16 %v5606, %v5603
    %v6270 = vpack.c.bf16 %v5699, %v5698
    %v6271 = vpack.c.bf16 %v5677, %v5673
    %v6272 = vpack.c.bf16 %v5678, %v5674
    %v6273 = vpack.c.bf16 %v5679, %v5675
    %v6274 = vpack.c.bf16 %v5735, %v5732
    %v6275 = vpack.c.bf16 %v5736, %v5733
    %v6276 = vpack.c.bf16 %v5737, %v5734
    %v6277 = vpack.c.bf16 %v5834, %v5833
    %v6278 = vpack.c.bf16 %v5806, %v5802
    %v6279 = vpack.c.bf16 %v5807, %v5803
    %v6280 = vpack.c.bf16 %v5808, %v5804
    %v6281 = vpack.c.bf16 %v5741, %v5738
    %v6282 = vpack.c.bf16 %v5742, %v5739
    %v6283 = vpack.c.bf16 %v5743, %v5740
    %v6284 = vpack.c.bf16 %v5836, %v5835
    %v6285 = vpack.c.bf16 %v5814, %v5810
    %v6286 = vpack.c.bf16 %v5815, %v5811
    %v6287 = vpack.c.bf16 %v5816, %v5812
    %v6288 = vpack.c.bf16 %v5872, %v5869
    %v6289 = vpack.c.bf16 %v5873, %v5870
    %v6290 = vpack.c.bf16 %v5874, %v5871
    %v6291 = vpack.c.bf16 %v5959, %v5958
    %v6292 = vpack.c.bf16 %v5933, %v5930
    %v6293 = vpack.c.bf16 %v5934, %v5931
    %v6294 = vpack.c.bf16 %v5935, %v5932
    %v6295 = vpack.c.bf16 %v5878, %v5875
    %v6296 = vpack.c.bf16 %v5879, %v5876
    %v6297 = vpack.c.bf16 %v5880, %v5877
    %v6298 = vpack.c.bf16 %v5961, %v5960
    %v6299 = vpack.c.bf16 %v5939, %v5936
    %v6300 = vpack.c.bf16 %v5940, %v5937
    %v6301 = vpack.c.bf16 %v5941, %v5938
    %v6302 = vpack.c.bf16 %v5998, %v5995
    %v6303 = vpack.c.bf16 %v5999, %v5996
    %v6304 = vpack.c.bf16 %v6000, %v5997
    %v6305 = vpack.c.bf16 %v6085, %v6084
    %v6306 = vpack.c.bf16 %v6059, %v6056
    %v6307 = vpack.c.bf16 %v6060, %v6057
    %v6308 = vpack.c.bf16 %v6061, %v6058
    %v6309 = vpack.c.bf16 %v6004, %v6001
    %v6310 = vpack.c.bf16 %v6005, %v6002
    %v6311 = vpack.c.bf16 %v6006, %v6003
    %v6312 = vpack.c.bf16 %v6087, %v6086
    %v6313 = vpack.c.bf16 %v6065, %v6062
    %v6314 = vpack.c.bf16 %v6066, %v6063
    %v6315 = vpack.c.bf16 %v6067, %v6064
    %v6316 = vpack.c.bf16 %v6115, %v6112
    %v6317 = vpack.c.bf16 %v6116, %v6113
    %v6318 = vpack.c.bf16 %v6117, %v6114
    %v6319 = vpack.c.bf16 %v6201, %v6200
    %v6320 = vpack.c.bf16 %v6175, %v6172
    %v6321 = vpack.c.bf16 %v6176, %v6173
    %v6322 = vpack.c.bf16 %v6177, %v6174
    %v6323 = vpack.c.bf16 %v6121, %v6118
    %v6324 = vpack.c.bf16 %v6122, %v6119
    %v6325 = vpack.c.bf16 %v6123, %v6120
    %v6326 = vpack.c.bf16 %v6203, %v6202
    %v6327 = vpack.c.bf16 %v6181, %v6178
    %v6328 = vpack.c.bf16 %v6182, %v6179
    %v6329 = vpack.c.bf16 %v6183, %v6180
    %v6330 = vld [vmem:[#allocation14] sm:$0x7]
    %v6331 = vld [vmem:[#allocation2] sm:$0x1]
    %6333 = vset.pattern.permute.xlu0 0
    %6334 = vperm.xlu0 %6333, %v6331
    %v6335 = vpop.permute.xlu0 %6334
    %v6337 = vlaneseq
    %v6338 = vshrl.u32 %v6337, 7
    %v6339 = vsub.s32 0, %v6338
    %v6340 = vrot.slane %v6335, %v6339
    %v6343 = vunpack.c.l.s4 1966171168
    %v6344 = vunpack.c.0.s8 %v6343
    %v6345 = vlaneseq
    %v6346 = vshrl.u32 %v6345, 7
    %v6347 = vsub.s32 %v6344, %v6346
    %v6348 = vrot.slane %v6330, %v6347
    %v6349 = vcombine.high %v6348, %v6348
    %v6351 = vunpack.c.l.s4 1966171168
    %v6352 = vunpack.c.0.s8 %v6351
    %v6353 = vlaneseq
    %v6354 = vshrl.u32 %v6353, 7
    %v6355 = vsub.s32 %v6352, %v6354
    %v6356 = vrot.slane %v6348, %v6355
    %v6358 = vunpack.c.l.s4 1966171168
    %v6359 = vunpack.c.0.s8 %v6358
    %v6360 = vlaneseq
    %v6361 = vshrl.u32 %v6360, 7
    %v6362 = vsub.s32 %v6359, %v6361
    %v6363 = vrot.slane %v6349, %v6362
    %v6364 = vcombine.high %v6356, %v6356
    %v6368 = vsel %vm1950, %v6364, 0
    %6370 = vmatprep.subr.bf16.mxu0 %v6205
    %6371 = vmatpush1.bf16.msra.mxu0 %v6204
    %6372 = vmatprep.subr.bf16.mxu0 %v6212
    %6373 = vmatpush1.bf16.msra.mxu0 %v6211
    %6374 = vmatprep.subr.bf16.mxu0 %v6219
    %6375 = vmatpush1.bf16.msra.mxu0 %v6218
    %6376 = vmatprep.subr.bf16.mxu0 %v6226
    %6377 = vmatpush1.bf16.msra.mxu0 %v6225
    %6378 = vmatprep.subr.bf16.mxu0 %v6233
    %6379 = vmatpush1.bf16.msra.mxu0 %v6232
    %6380 = vmatprep.subr.bf16.mxu0 %v6240
    %6381 = vmatpush1.bf16.msra.mxu0 %v6239
    %6382 = vmatprep.subr.bf16.mxu0 %v6247
    %6383 = vmatpush1.bf16.msra.mxu0 %v6246
    %6384 = vmatprep.subr.bf16.mxu0 %v6254
    %6385 = vmatpush1.bf16.msra.mxu0 %v6253
    %6386 = vmatprep.subr.bf16.mxu0 %v6261
    %6387 = vmatpush1.bf16.msra.mxu0 %v6260
    %6388 = vmatprep.subr.bf16.mxu0 %v6268
    %6389 = vmatpush1.bf16.msra.mxu0 %v6267
    %6390 = vmatprep.subr.bf16.mxu0 %v6275
    %6391 = vmatpush1.bf16.msra.mxu0 %v6274
    %6392 = vmatprep.subr.bf16.mxu0 %v6282
    %6393 = vmatpush1.bf16.msra.mxu0 %v6281
    %6394 = vmatprep.subr.bf16.mxu0 %v6289
    %6395 = vmatpush1.bf16.msra.mxu0 %v6288
    %6396 = vmatprep.subr.bf16.mxu0 %v6296
    %6397 = vmatpush1.bf16.msra.mxu0 %v6295
    %6398 = vmatprep.subr.bf16.mxu0 %v6303
    %6399 = vmatpush1.bf16.msra.mxu0 %v6302
    %6400 = vmatprep.subr.bf16.mxu0 %v6310
    %6401 = vmatpush1.bf16.msra.mxu0 %v6309
    %6402 = vmatprep.mubr.bf16.mxu0 %v6363
    %6403 = vmatmul.mubr.bf16.gmra.mrb[0].mxu0 %v6356
    %v6404 = vpop.f32.mrb[0].mxu0
    %v6405 = vadd.f32 %v6340, %v6404
    %v6406 = vpop.f32.mrb[0].mxu0
    %v6407 = vadd.f32 %v6340, %v6406
    %v6408 = vpop.f32.mrb[0].mxu0
    %v6409 = vpop.f32.mrb[0].mxu0
    %6410 = vdwg.mxu0
    %6411 = vmatprep.subr.bf16.mxu0 %v6317
    %6412 = vmatpush1.bf16.msra.mxu0 %v6316
    %6413 = vmatprep.subr.bf16.mxu0 %v6324
    %6414 = vmatpush1.bf16.msra.mxu0 %v6323
    %6415 = vmatprep.subr.bf16.mxu0 0
    %6416 = vmatpush1.bf16.msra.mxu0 0
    %6417 = vmatprep.subr.bf16.mxu0 0
    %6418 = vmatpush1.bf16.msra.mxu0 0
    %6419 = vmatprep.subr.bf16.mxu0 0
    %6420 = vmatpush1.bf16.msra.mxu0 0
    %6421 = vmatprep.subr.bf16.mxu0 0
    %6422 = vmatpush1.bf16.msra.mxu0 0
    %6423 = vmatprep.subr.bf16.mxu0 0
    %6424 = vmatpush1.bf16.msra.mxu0 0
    %6425 = vmatprep.subr.bf16.mxu0 0
    %6426 = vmatpush1.bf16.msra.mxu0 0
    %6427 = vmatprep.subr.bf16.mxu0 0
    %6428 = vmatpush1.bf16.msra.mxu0 0
    %6429 = vmatprep.subr.bf16.mxu0 0
    %6430 = vmatpush1.bf16.msra.mxu0 0
    %6431 = vmatprep.subr.bf16.mxu0 0
    %6432 = vmatpush1.bf16.msra.mxu0 0
    %6433 = vmatprep.subr.bf16.mxu0 0
    %6434 = vmatpush1.bf16.msra.mxu0 0
    %6435 = vmatprep.subr.bf16.mxu0 0
    %6436 = vmatpush1.bf16.msra.mxu0 0
    %6437 = vmatprep.subr.bf16.mxu0 0
    %6438 = vmatpush1.bf16.msra.mxu0 0
    %6439 = vmatprep.subr.bf16.mxu0 0
    %6440 = vmatpush1.bf16.msra.mxu0 0
    %6441 = vmatprep.subr.bf16.mxu0 0
    %6442 = vmatpush1.bf16.msra.mxu0 0
    %6443 = vmatprep.mubr.bf16.mxu0 0
    %6444 = vmatmul.mubr.bf16.gmra.mrb[0].mxu0 %v6368
    %v6445 = vpop.f32.mrb[0].mxu0
    %v6446 = vadd.f32 %v6405, %v6445
    %v6447 = vpop.f32.mrb[0].mxu0
    %v6448 = vadd.f32 %v6407, %v6447
    %v6449 = vpop.f32.mrb[0].mxu0
    %v6450 = vpop.f32.mrb[0].mxu0
    %6451 = vdwg.mxu0
    %6452 = vmatprep.subr.bf16.mxu0 %v6207
    %6453 = vmatpush1.bf16.msra.mxu0 %v6206
    %6454 = vmatprep.subr.bf16.mxu0 %v6214
    %6455 = vmatpush1.bf16.msra.mxu0 %v6213
    %6456 = vmatprep.subr.bf16.mxu0 %v6221
    %6457 = vmatpush1.bf16.msra.mxu0 %v6220
    %6458 = vmatprep.subr.bf16.mxu0 %v6228
    %6459 = vmatpush1.bf16.msra.mxu0 %v6227
    %6460 = vmatprep.subr.bf16.mxu0 %v6235
    %6461 = vmatpush1.bf16.msra.mxu0 %v6234
    %6462 = vmatprep.subr.bf16.mxu0 %v6242
    %6463 = vmatpush1.bf16.msra.mxu0 %v6241
    %6464 = vmatprep.subr.bf16.mxu0 %v6249
    %6465 = vmatpush1.bf16.msra.mxu0 %v6248
    %6466 = vmatprep.subr.bf16.mxu0 %v6256
    %6467 = vmatpush1.bf16.msra.mxu0 %v6255
    %6468 = vmatprep.subr.bf16.mxu0 %v6263
    %6469 = vmatpush1.bf16.msra.mxu0 %v6262
    %6470 = vmatprep.subr.bf16.mxu0 %v6270
    %6471 = vmatpush1.bf16.msra.mxu0 %v6269
    %6472 = vmatprep.subr.bf16.mxu0 %v6277
    %6473 = vmatpush1.bf16.msra.mxu0 %v6276
    %6474 = vmatprep.subr.bf16.mxu0 %v6284
    %6475 = vmatpush1.bf16.msra.mxu0 %v6283
    %6476 = vmatprep.subr.bf16.mxu0 %v6291
    %6477 = vmatpush1.bf16.msra.mxu0 %v6290
    %6478 = vmatprep.subr.bf16.mxu0 %v6298
    %6479 = vmatpush1.bf16.msra.mxu0 %v6297
    %6480 = vmatprep.subr.bf16.mxu0 %v6305
    %6481 = vmatpush1.bf16.msra.mxu0 %v6304
    %6482 = vmatprep.subr.bf16.mxu0 %v6312
    %6483 = vmatpush1.bf16.msra.mxu0 %v6311
    %6484 = vmatprep.mubr.bf16.mxu0 %v6363
    %6485 = vmatmul.mubr.bf16.gmra.mrb[0].mxu0 %v6356
    %v6486 = vpop.f32.mrb[0].mxu0
    %v6487 = vadd.f32 %v6340, %v6486
    %v6488 = vpop.f32.mrb[0].mxu0
    %v6489 = vadd.f32 %v6340, %v6488
    %v6490 = vpop.f32.mrb[0].mxu0
    %v6491 = vpop.f32.mrb[0].mxu0
    %6492 = vdwg.mxu0
    %6493 = vmatprep.subr.bf16.mxu0 %v6319
    %6494 = vmatpush1.bf16.msra.mxu0 %v6318
    %6495 = vmatprep.subr.bf16.mxu0 %v6326
    %6496 = vmatpush1.bf16.msra.mxu0 %v6325
    %6497 = vmatprep.subr.bf16.mxu0 0
    %6498 = vmatpush1.bf16.msra.mxu0 0
    %6499 = vmatprep.subr.bf16.mxu0 0
    %6500 = vmatpush1.bf16.msra.mxu0 0
    %6501 = vmatprep.subr.bf16.mxu0 0
    %6502 = vmatpush1.bf16.msra.mxu0 0
    %6503 = vmatprep.subr.bf16.mxu0 0
    %6504 = vmatpush1.bf16.msra.mxu0 0
    %6505 = vmatprep.subr.bf16.mxu0 0
    %6506 = vmatpush1.bf16.msra.mxu0 0
    %6507 = vmatprep.subr.bf16.mxu0 0
    %6508 = vmatpush1.bf16.msra.mxu0 0
    %6509 = vmatprep.subr.bf16.mxu0 0
    %6510 = vmatpush1.bf16.msra.mxu0 0
    %6511 = vmatprep.subr.bf16.mxu0 0
    %6512 = vmatpush1.bf16.msra.mxu0 0
    %6513 = vmatprep.subr.bf16.mxu0 0
    %6514 = vmatpush1.bf16.msra.mxu0 0
    %6515 = vmatprep.subr.bf16.mxu0 0
    %6516 = vmatpush1.bf16.msra.mxu0 0
    %6517 = vmatprep.subr.bf16.mxu0 0
    %6518 = vmatpush1.bf16.msra.mxu0 0
    %6519 = vmatprep.subr.bf16.mxu0 0
    %6520 = vmatpush1.bf16.msra.mxu0 0
    %6521 = vmatprep.subr.bf16.mxu0 0
    %6522 = vmatpush1.bf16.msra.mxu0 0
    %6523 = vmatprep.subr.bf16.mxu0 0
    %6524 = vmatpush1.bf16.msra.mxu0 0
    %6525 = vmatprep.mubr.bf16.mxu0 0
    %6526 = vmatmul.mubr.bf16.gmra.mrb[0].mxu0 %v6368
    %v6527 = vpop.f32.mrb[0].mxu0
    %v6528 = vadd.f32 %v6487, %v6527
    %v6529 = vpop.f32.mrb[0].mxu0
    %v6530 = vadd.f32 %v6489, %v6529
    %v6531 = vpop.f32.mrb[0].mxu0
    %v6532 = vpop.f32.mrb[0].mxu0
    %6533 = vdwg.mxu0
    %6534 = vmatprep.subr.bf16.mxu0 %v6209
    %6535 = vmatpush1.bf16.msra.mxu0 %v6208
    %6536 = vmatprep.subr.bf16.mxu0 %v6216
    %6537 = vmatpush1.bf16.msra.mxu0 %v6215
    %6538 = vmatprep.subr.bf16.mxu0 %v6223
    %6539 = vmatpush1.bf16.msra.mxu0 %v6222
    %6540 = vmatprep.subr.bf16.mxu0 %v6230
    %6541 = vmatpush1.bf16.msra.mxu0 %v6229
    %6542 = vmatprep.subr.bf16.mxu0 %v6237
    %6543 = vmatpush1.bf16.msra.mxu0 %v6236
    %6544 = vmatprep.subr.bf16.mxu0 %v6244
    %6545 = vmatpush1.bf16.msra.mxu0 %v6243
    %6546 = vmatprep.subr.bf16.mxu0 %v6251
    %6547 = vmatpush1.bf16.msra.mxu0 %v6250
    %6548 = vmatprep.subr.bf16.mxu0 %v6258
    %6549 = vmatpush1.bf16.msra.mxu0 %v6257
    %6550 = vmatprep.subr.bf16.mxu0 %v6265
    %6551 = vmatpush1.bf16.msra.mxu0 %v6264
    %6552 = vmatprep.subr.bf16.mxu0 %v6272
    %6553 = vmatpush1.bf16.msra.mxu0 %v6271
    %6554 = vmatprep.subr.bf16.mxu0 %v6279
    %6555 = vmatpush1.bf16.msra.mxu0 %v6278
    %6556 = vmatprep.subr.bf16.mxu0 %v6286
    %6557 = vmatpush1.bf16.msra.mxu0 %v6285
    %6558 = vmatprep.subr.bf16.mxu0 %v6293
    %6559 = vmatpush1.bf16.msra.mxu0 %v6292
    %6560 = vmatprep.subr.bf16.mxu0 %v6300
    %6561 = vmatpush1.bf16.msra.mxu0 %v6299
    %6562 = vmatprep.subr.bf16.mxu0 %v6307
    %6563 = vmatpush1.bf16.msra.mxu0 %v6306
    %6564 = vmatprep.subr.bf16.mxu0 %v6314
    %6565 = vmatpush1.bf16.msra.mxu0 %v6313
    %6566 = vmatprep.mubr.bf16.mxu0 %v6363
    %6567 = vmatmul.mubr.bf16.gmra.mrb[0].mxu0 %v6356
    %v6568 = vpop.f32.mrb[0].mxu0
    %v6569 = vadd.f32 %v6340, %v6568
    %v6570 = vpop.f32.mrb[0].mxu0
    %v6571 = vadd.f32 %v6340, %v6570
    %v6572 = vpop.f32.mrb[0].mxu0
    %v6573 = vpop.f32.mrb[0].mxu0
    %6574 = vdwg.mxu0
    %6575 = vmatprep.subr.bf16.mxu0 %v6321
    %6576 = vmatpush1.bf16.msra.mxu0 %v6320
    %6577 = vmatprep.subr.bf16.mxu0 %v6328
    %6578 = vmatpush1.bf16.msra.mxu0 %v6327
    %6579 = vmatprep.subr.bf16.mxu0 0
    %6580 = vmatpush1.bf16.msra.mxu0 0
    %6581 = vmatprep.subr.bf16.mxu0 0
    %6582 = vmatpush1.bf16.msra.mxu0 0
    %6583 = vmatprep.subr.bf16.mxu0 0
    %6584 = vmatpush1.bf16.msra.mxu0 0
    %6585 = vmatprep.subr.bf16.mxu0 0
    %6586 = vmatpush1.bf16.msra.mxu0 0
    %6587 = vmatprep.subr.bf16.mxu0 0
    %6588 = vmatpush1.bf16.msra.mxu0 0
    %6589 = vmatprep.subr.bf16.mxu0 0
    %6590 = vmatpush1.bf16.msra.mxu0 0
    %6591 = vmatprep.subr.bf16.mxu0 0
    %6592 = vmatpush1.bf16.msra.mxu0 0
    %6593 = vmatprep.subr.bf16.mxu0 0
    %6594 = vmatpush1.bf16.msra.mxu0 0
    %6595 = vmatprep.subr.bf16.mxu0 0
    %6596 = vmatpush1.bf16.msra.mxu0 0
    %6597 = vmatprep.subr.bf16.mxu0 0
    %6598 = vmatpush1.bf16.msra.mxu0 0
    %6599 = vmatprep.subr.bf16.mxu0 0
    %6600 = vmatpush1.bf16.msra.mxu0 0
    %6601 = vmatprep.subr.bf16.mxu0 0
    %6602 = vmatpush1.bf16.msra.mxu0 0
    %6603 = vmatprep.subr.bf16.mxu0 0
    %6604 = vmatpush1.bf16.msra.mxu0 0
    %6605 = vmatprep.subr.bf16.mxu0 0
    %6606 = vmatpush1.bf16.msra.mxu0 0
    %6607 = vmatprep.mubr.bf16.mxu0 0
    %6608 = vmatmul.mubr.bf16.gmra.mrb[0].mxu0 %v6368
    %v6609 = vpop.f32.mrb[0].mxu0
    %v6610 = vadd.f32 %v6569, %v6609
    %v6611 = vpop.f32.mrb[0].mxu0
    %v6612 = vadd.f32 %v6571, %v6611
    %v6613 = vpop.f32.mrb[0].mxu0
    %v6614 = vpop.f32.mrb[0].mxu0
    %6615 = vdwg.mxu0
    %6616 = vmatprep.subr.bf16.mxu0 0
    %6617 = vmatpush1.bf16.msra.mxu0 %v6210
    %6618 = vmatprep.subr.bf16.mxu0 0
    %6619 = vmatpush1.bf16.msra.mxu0 %v6217
    %6620 = vmatprep.subr.bf16.mxu0 0
    %6621 = vmatpush1.bf16.msra.mxu0 %v6224
    %6622 = vmatprep.subr.bf16.mxu0 0
    %6623 = vmatpush1.bf16.msra.mxu0 %v6231
    %6624 = vmatprep.subr.bf16.mxu0 0
    %6625 = vmatpush1.bf16.msra.mxu0 %v6238
    %6626 = vmatprep.subr.bf16.mxu0 0
    %6627 = vmatpush1.bf16.msra.mxu0 %v6245
    %6628 = vmatprep.subr.bf16.mxu0 0
    %6629 = vmatpush1.bf16.msra.mxu0 %v6252
    %6630 = vmatprep.subr.bf16.mxu0 0
    %6631 = vmatpush1.bf16.msra.mxu0 %v6259
    %6632 = vmatprep.subr.bf16.mxu0 0
    %6633 = vmatpush1.bf16.msra.mxu0 %v6266
    %6634 = vmatprep.subr.bf16.mxu0 0
    %6635 = vmatpush1.bf16.msra.mxu0 %v6273
    %6636 = vmatprep.subr.bf16.mxu0 0
    %6637 = vmatpush1.bf16.msra.mxu0 %v6280
    %6638 = vmatprep.subr.bf16.mxu0 0
    %6639 = vmatpush1.bf16.msra.mxu0 %v6287
    %6640 = vmatprep.subr.bf16.mxu0 0
    %6641 = vmatpush1.bf16.msra.mxu0 %v6294
    %6642 = vmatprep.subr.bf16.mxu0 0
    %6643 = vmatpush1.bf16.msra.mxu0 %v6301
    %6644 = vmatprep.subr.bf16.mxu0 0
    %6645 = vmatpush1.bf16.msra.mxu0 %v6308
    %6646 = vmatprep.subr.bf16.mxu0 0
    %6647 = vmatpush1.bf16.msra.mxu0 %v6315
    %6648 = vmatprep.mubr.bf16.mxu0 %v6363
    %6649 = vmatmul.mubr.bf16.gmra.mrb[0].mxu0 %v6356
    %v6650 = vpop.f32.mrb[0].mxu0
    %v6651 = vadd.f32 %v6340, %v6650
    %v6652 = vpop.f32.mrb[0].mxu0
    %v6653 = vpop.f32.mrb[0].mxu0
    %v6654 = vpop.f32.mrb[0].mxu0
    %6655 = vdwg.mxu0
    %6656 = vmatprep.subr.bf16.mxu0 0
    %6657 = vmatpush1.bf16.msra.mxu0 %v6322
    %6658 = vmatprep.subr.bf16.mxu0 0
    %6659 = vmatpush1.bf16.msra.mxu0 %v6329
    %6660 = vmatprep.subr.bf16.mxu0 0
    %6661 = vmatpush1.bf16.msra.mxu0 0
    %6662 = vmatprep.subr.bf16.mxu0 0
    %6663 = vmatpush1.bf16.msra.mxu0 0
    %6664 = vmatprep.subr.bf16.mxu0 0
    %6665 = vmatpush1.bf16.msra.mxu0 0
    %6666 = vmatprep.subr.bf16.mxu0 0
    %6667 = vmatpush1.bf16.msra.mxu0 0
    %6668 = vmatprep.subr.bf16.mxu0 0
    %6669 = vmatpush1.bf16.msra.mxu0 0
    %6670 = vmatprep.subr.bf16.mxu0 0
    %6671 = vmatpush1.bf16.msra.mxu0 0
    %6672 = vmatprep.subr.bf16.mxu0 0
    %6673 = vmatpush1.bf16.msra.mxu0 0
    %6674 = vmatprep.subr.bf16.mxu0 0
    %6675 = vmatpush1.bf16.msra.mxu0 0
    %6676 = vmatprep.subr.bf16.mxu0 0
    %6677 = vmatpush1.bf16.msra.mxu0 0
    %6678 = vmatprep.subr.bf16.mxu0 0
    %6679 = vmatpush1.bf16.msra.mxu0 0
    %6680 = vmatprep.subr.bf16.mxu0 0
    %6681 = vmatpush1.bf16.msra.mxu0 0
    %6682 = vmatprep.subr.bf16.mxu0 0
    %6683 = vmatpush1.bf16.msra.mxu0 0
    %6684 = vmatprep.subr.bf16.mxu0 0
    %6685 = vmatpush1.bf16.msra.mxu0 0
    %6686 = vmatprep.subr.bf16.mxu0 0
    %6687 = vmatpush1.bf16.msra.mxu0 0
    %6688 = vmatprep.mubr.bf16.mxu0 0
    %6689 = vmatmul.mubr.bf16.gmra.mrb[0].mxu0 %v6368
    %v6690 = vpop.f32.mrb[0].mxu0
    %v6691 = vadd.f32 %v6651, %v6690
    %v6692 = vpop.f32.mrb[0].mxu0
    %v6693 = vpop.f32.mrb[0].mxu0
    %v6694 = vpop.f32.mrb[0].mxu0
    %6695 = vdwg.mxu0
    %6697 = vrot.lane.b32.xlu0 %v6446, 126
    %v6698 = vpop.permute.xlu0 %6697
    %6700 = vrot.lane.b32.xlu0 %v6446, 124
    %v6701 = vpop.permute.xlu0 %6700
    %6703 = vrot.lane.b32.xlu0 %v6446, 122
    %v6704 = vpop.permute.xlu0 %6703
    %6706 = vrot.lane.b32.xlu0 %v6446, 120
    %v6707 = vpop.permute.xlu0 %6706
    %6710 = vrot.lane.b32.xlu0 %v6446, 118
    %v6711 = vpop.permute.xlu0 %6710
    %6712 = vrot.lane.b32.xlu0 %v6448, 118
    %v6713 = vpop.permute.xlu0 %6712
    %v6714 = vsel %vm2177, %v6711, %v6713
    %6716 = vrot.lane.b32.xlu0 %v6448, 116
    %v6717 = vpop.permute.xlu0 %6716
    %6719 = vrot.lane.b32.xlu0 %v6448, 114
    %v6720 = vpop.permute.xlu0 %6719
    %6722 = vrot.lane.b32.xlu0 %v6448, 112
    %v6723 = vpop.permute.xlu0 %6722
    %6725 = vrot.lane.b32.xlu0 %v6448, 110
    %v6726 = vpop.permute.xlu0 %6725
    %6728 = vrot.lane.b32.xlu0 %v6448, 108
    %v6729 = vpop.permute.xlu0 %6728
    %6732 = vrot.lane.b32.xlu0 %v6448, 106
    %v6733 = vpop.permute.xlu0 %6732
    %6734 = vrot.lane.b32.xlu0 %v6528, 106
    %v6735 = vpop.permute.xlu0 %6734
    %v6736 = vsel %vm1513, %v6733, %v6735
    %6738 = vrot.lane.b32.xlu0 %v6528, 104
    %v6739 = vpop.permute.xlu0 %6738
    %6741 = vrot.lane.b32.xlu0 %v6528, 102
    %v6742 = vpop.permute.xlu0 %6741
    %6744 = vrot.lane.b32.xlu0 %v6528, 100
    %v6745 = vpop.permute.xlu0 %6744
    %6747 = vrot.lane.b32.xlu0 %v6528, 98
    %v6748 = vpop.permute.xlu0 %6747
    %vm6750 = vcmask 162816
    %v6751 = vsel %vm6750, %v6446, %v6698
    %vm6752 = vcmask 326656
    %v6753 = vsel %vm6752, %v6751, %v6701
    %v6754 = vsel %vm5526, %v6753, %v6704
    %v6755 = vsel %vm5389, %v6754, %v6707
    %v6756 = vsel %vm1488, %v6755, %v6714
    %v6757 = vsel %vm385, %v6756, %v6717
    %v6758 = vsel %vm278, %v6717, %v6720
    %v6759 = vsel %vm1950, %v6758, %v6723
    %vm6760 = vcmask 424960
    %v6761 = vsel %vm6760, %v6759, %v6726
    %v6762 = vsel %vm2646, %v6761, %v6729
    %v6763 = vsel %vm331, %v6762, %v6736
    %vm6764 = vcmask 916480
    %v6765 = vsel %vm6764, %v6763, %v6739
    %vm6766 = vcmask 31744
    %v6767 = vsel %vm6766, %v6739, %v6742
    %vm6768 = vcmask 195584
    %v6769 = vsel %vm6768, %v6767, %v6745
    %vm6770 = vcmask 359424
    %v6771 = vsel %vm6770, %v6769, %v6748
    %6772 = vrot.lane.b32.xlu0 %v6528, 32
    %v6773 = vpop.permute.xlu0 %6772
    %6776 = vrot.lane.b32.xlu0 %v6528, 30
    %v6777 = vpop.permute.xlu0 %6776
    %6778 = vrot.lane.b32.xlu0 %v6530, 30
    %v6779 = vpop.permute.xlu0 %6778
    %v6780 = vsel %vm213, %v6777, %v6779
    %6782 = vrot.lane.b32.xlu0 %v6530, 28
    %v6783 = vpop.permute.xlu0 %6782
    %6785 = vrot.lane.b32.xlu0 %v6530, 26
    %v6786 = vpop.permute.xlu0 %6785
    %v6788 = vsel %vm6750, %v6773, %v6780
    %v6789 = vsel %vm6752, %v6788, %v6783
    %v6790 = vsel %vm5526, %v6789, %v6786
    %6792 = vrot.lane.b32.xlu0 %v6790, 64
    %v6793 = vpop.permute.xlu0 %6792
    %v6795 = vsel %vm3612, %v6771, %v6793
    %v6796 = vsub.f32 0.0, %v6757
    %v6797 = vsub.f32 0.0, %v6765
    %v6798 = vsub.f32 0.0, %v6795
    %v6799 = vsub.f32 0.0, %v6793
    %v6800 = vmul.f32 %v6796, 1.442695
    %v6801 = vpow.pop %v6800
    %v6802 = vmul.f32 %v6797, 1.442695
    %v6803 = vpow.pop %v6802
    %v6804 = vmul.f32 %v6798, 1.442695
    %v6805 = vpow.pop %v6804
    %v6806 = vmul.f32 %v6799, 1.442695
    %v6807 = vpow.pop %v6806
    %v6808 = vadd.f32 %v6801, 1.0
    %v6809 = vadd.f32 %v6803, 1.0
    %v6810 = vadd.f32 %v6805, 1.0
    %v6811 = vadd.f32 %v6807, 1.0
    %v6812 = vrcp.pop %v6808
    %v6813 = vrcp.pop %v6809
    %v6814 = vrcp.pop %v6810
    %v6815 = vrcp.pop %v6811
    %v6820 = vcombine.low %v6812, %v6813
    %v6821 = vcombine.low %v6814, %v6815
    %v6823 = vunpack.c.l.s4 1966171168
    %v6824 = vunpack.c.0.s8 %v6823
    %v6825 = vlaneseq
    %v6826 = vshrl.u32 %v6825, 7
    %v6827 = vsub.s32 %v6824, %v6826
    %v6828 = vrot.slane %v6820, %v6827
    %v6830 = vunpack.c.l.s4 1966171168
    %v6831 = vunpack.c.0.s8 %v6830
    %v6832 = vlaneseq
    %v6833 = vshrl.u32 %v6832, 7
    %v6834 = vsub.s32 %v6831, %v6833
    %v6835 = vrot.slane %v6821, %v6834
    %v6836 = vcombine.low %v6828, %v6835
    %v6838 = vunpack.c.l.s4 1966171168
    %v6839 = vunpack.c.0.s8 %v6838
    %v6840 = vlaneseq
    %v6841 = vshrl.u32 %v6840, 7
    %v6842 = vsub.s32 %v6839, %v6841
    %v6843 = vrot.slane %v6836, %v6842
    %v6845 = vlaneseq
    %vm6846 = vcmp.ge.s32.totalorder %v6845, 0
    %vm6847 = vcmp.lt.s32.totalorder %v6845, 400
    %vm6848 = vmand %vm6846, %vm6847
    %6849 = vst.msk [vmem:[%s21] sm:$0xf] %vm6848, %v6843
    %6850 = vrot.lane.b32.xlu0 %v6530, 74
    %v6851 = vpop.permute.xlu0 %6850
    %6853 = vrot.lane.b32.xlu0 %v6530, 72
    %v6854 = vpop.permute.xlu0 %6853
    %6856 = vrot.lane.b32.xlu0 %v6530, 70
    %v6857 = vpop.permute.xlu0 %6856
    %6860 = vrot.lane.b32.xlu0 %v6530, 68
    %v6861 = vpop.permute.xlu0 %6860
    %6862 = vrot.lane.b32.xlu0 %v6610, 68
    %v6863 = vpop.permute.xlu0 %6862
    %vm6864 = vcmask 556032
    %v6865 = vsel %vm6864, %v6861, %v6863
    %6867 = vrot.lane.b32.xlu0 %v6610, 66
    %v6868 = vpop.permute.xlu0 %6867
    %6870 = vrot.lane.b32.xlu0 %v6610, 64
    %v6871 = vpop.permute.xlu0 %6870
    %6873 = vrot.lane.b32.xlu0 %v6610, 62
    %v6874 = vpop.permute.xlu0 %6873
    %6876 = vrot.lane.b32.xlu0 %v6610, 60
    %v6877 = vpop.permute.xlu0 %6876
    %6879 = vrot.lane.b32.xlu0 %v6610, 58
    %v6880 = vpop.permute.xlu0 %6879
    %6883 = vrot.lane.b32.xlu0 %v6610, 56
    %v6884 = vpop.permute.xlu0 %6883
    %6885 = vrot.lane.b32.xlu0 %v6612, 56
    %v6886 = vpop.permute.xlu0 %6885
    %vm6887 = vcmask 457728
    %v6888 = vsel %vm6887, %v6884, %v6886
    %6890 = vrot.lane.b32.xlu0 %v6612, 54
    %v6891 = vpop.permute.xlu0 %6890
    %6893 = vrot.lane.b32.xlu0 %v6612, 52
    %v6894 = vpop.permute.xlu0 %6893
    %6896 = vrot.lane.b32.xlu0 %v6612, 50
    %v6897 = vpop.permute.xlu0 %6896
    %6899 = vrot.lane.b32.xlu0 %v6612, 48
    %v6900 = vpop.permute.xlu0 %6899
    %6902 = vrot.lane.b32.xlu0 %v6612, 46
    %v6903 = vpop.permute.xlu0 %6902
    %6906 = vrot.lane.b32.xlu0 %v6691, 44
    %v6907 = vpop.permute.xlu0 %6906
    %v6909 = vsel %vm6750, %v6851, %v6854
    %v6910 = vsel %vm6752, %v6909, %v6857
    %v6911 = vsel %vm5526, %v6910, %v6865
    %v6912 = vsel %vm5389, %v6911, %v6868
    %v6913 = vsel %vm1488, %v6912, %v6871
    %v6914 = vsel %vm385, %v6913, %v6874
    %v6915 = vsel %vm278, %v6874, %v6877
    %v6916 = vsel %vm1950, %v6915, %v6880
    %v6917 = vsel %vm6760, %v6916, %v6888
    %v6918 = vsel %vm2646, %v6917, %v6891
    %v6919 = vsel %vm331, %v6918, %v6894
    %v6920 = vsel %vm6764, %v6919, %v6897
    %v6921 = vsel %vm6766, %v6897, %v6900
    %v6922 = vsel %vm6768, %v6921, %v6903
    %v6923 = vsel %vm6770, %v6922, %v6907
    %6924 = vrot.lane.b32.xlu0 %v6691, 106
    %v6925 = vpop.permute.xlu0 %6924
    %6927 = vrot.lane.b32.xlu0 %v6691, 104
    %v6928 = vpop.permute.xlu0 %6927
    %6930 = vrot.lane.b32.xlu0 %v6691, 102
    %v6931 = vpop.permute.xlu0 %6930
    %6933 = vrot.lane.b32.xlu0 %v6691, 100
    %v6934 = vpop.permute.xlu0 %6933
    %v6936 = vsel %vm6750, %v6925, %v6928
    %v6937 = vsel %vm6752, %v6936, %v6931
    %v6938 = vsel %vm5526, %v6937, %v6934
    %6940 = vrot.lane.b32.xlu0 %v6938, 64
    %v6941 = vpop.permute.xlu0 %6940
    %v6943 = vsel %vm3612, %v6923, %v6941
    %v6944 = vsub.f32 0.0, %v6914
    %v6945 = vsub.f32 0.0, %v6920
    %v6946 = vsub.f32 0.0, %v6943
    %v6947 = vsub.f32 0.0, %v6941
    %v6948 = vmul.f32 %v6944, 1.442695
    %v6949 = vpow.pop %v6948
    %v6950 = vmul.f32 %v6945, 1.442695
    %v6951 = vpow.pop %v6950
    %v6952 = vmul.f32 %v6946, 1.442695
    %v6953 = vpow.pop %v6952
    %v6954 = vmul.f32 %v6947, 1.442695
    %v6955 = vpow.pop %v6954
    %v6956 = vadd.f32 %v6949, 1.0
    %v6957 = vadd.f32 %v6951, 1.0
    %v6958 = vadd.f32 %v6953, 1.0
    %v6959 = vadd.f32 %v6955, 1.0
    %v6960 = vrcp.pop %v6956
    %v6961 = vrcp.pop %v6957
    %v6962 = vrcp.pop %v6958
    %v6963 = vrcp.pop %v6959
    %v6968 = vcombine.low %v6960, %v6961
    %v6969 = vcombine.low %v6962, %v6963
    %v6971 = vunpack.c.l.s4 1966171168
    %v6972 = vunpack.c.0.s8 %v6971
    %v6973 = vlaneseq
    %v6974 = vshrl.u32 %v6973, 7
    %v6975 = vsub.s32 %v6972, %v6974
    %v6976 = vrot.slane %v6968, %v6975
    %v6978 = vunpack.c.l.s4 1966171168
    %v6979 = vunpack.c.0.s8 %v6978
    %v6980 = vlaneseq
    %v6981 = vshrl.u32 %v6980, 7
    %v6982 = vsub.s32 %v6979, %v6981
    %v6983 = vrot.slane %v6969, %v6982
    %v6984 = vcombine.low %v6976, %v6983
    %v6986 = vunpack.c.l.s4 1966171168
    %v6987 = vunpack.c.0.s8 %v6986
    %v6988 = vlaneseq
    %v6989 = vshrl.u32 %v6988, 7
    %v6990 = vsub.s32 %v6987, %v6989
    %v6991 = vrot.slane %v6984, %v6990
    %s6993 = scalar_lea.vmem %s21, 4
    %6994 = vst.msk [vmem:[%s6993] sm:$0xf] %vm6848, %v6991
    // Predicated region
    $region118: #{cdae_forward.1} parent=1 // pred_check
      _
    $region119: #{cdae_forward.1} parent=1 // pred_check_branch
      %6996 = sbr.rel (0) target = $region121
    $region120: #{cdae_forward.1} parent=1 // pred_region
      _
    $region121: #{cdae_forward.1} parent=1 // pred_fallthru
      _
    // Predicated region
    $region122: #{cdae_forward.1} parent=1 // pred_check
      _
    $region123: #{cdae_forward.1} parent=1 // pred_check_branch
      %6998 = sbr.rel (0) target = $region125
    $region124: #{cdae_forward.1} parent=1 // pred_region
      _
    $region125: #{cdae_forward.1} parent=1 // pred_fallthru
      _
    %6999 = vsyncpa [#allocation4], 1
    %7000 = vsyncpa [#allocation6], 1
    %7001 = vsyncpa [#allocation9], 1
    %7002 = vsyncpa [#allocation12], 1
    %7003 = vsyncpa [#allocation15], 1

</llo_original>
